<compile_context>
chip_gen: v7x
topology: tpu7x:2x2x1
jax: 0.10.0
libtpu: 0.0.40
codegen_flags: <defaults>
</compile_context>

<pallas_src>
import jax
import jax.numpy as jnp
from jax.experimental import pallas as pl
from jax.experimental.pallas import tpu as pltpu

K_SIZE = 4
LRELU_SLOPE = 0.2
BN_EPS = 1e-5
VMEM_LIMIT_BYTES = 32 * 1024 * 1024   # safe on v5e/v6e/v7x; real use is ~2 MiB


# ----------------------------- Pallas kernels -----------------------------

def _conv_stats_kernel(p_ref, w_ref, y_ref, sum_ref, sq_ref):
    """One (parity, M-tile) bf16 matmul with f32 accumulation + BN stats.

    Grid = (parity, m_step).  sum/sq are per-parity (8, Coutp) resident blocks
    revisited along the inner ("arbitrary") axis; every sublane row holds the
    same per-parity total (broadcast accumulate -> full, unmasked block).
    """
    i = pl.program_id(1)
    y = jnp.dot(p_ref[...], w_ref[...], preferred_element_type=jnp.float32)
    y_ref[...] = y.astype(y_ref.dtype)

    @pl.when(i == 0)
    def _():
        sum_ref[...] = jnp.zeros_like(sum_ref)
        sq_ref[...] = jnp.zeros_like(sq_ref)

    sum_ref[...] = sum_ref[...] + jnp.sum(y, axis=0, keepdims=True)
    sq_ref[...] = sq_ref[...] + jnp.sum(y * y, axis=0, keepdims=True)


def _conv_tanh_kernel(b_ref, w_ref, pt_ref, o_ref):
    """Final layer, transposed: (8, K) @ (K, tn) -> (8, tn), + bias, tanh.

    Only sublane row 0 is a real output channel (Cout = 1); the position
    dimension sits on lanes, so stores are lane-dense with no 128x padding.
    """
    y = jnp.dot(w_ref[...], pt_ref[...], preferred_element_type=jnp.float32)
    o_ref[...] = jnp.tanh(y + b_ref[...])


def _dense_kernel(x_ref, w_ref, o_ref):
    """Layer 1: ConvTranspose2d(nc, 512, 4, stride=1) on a 1x1 input is just
    x (B, nc) @ W (nc, 16*512)."""
    o_ref[...] = jnp.dot(x_ref[...], w_ref[...],
                         preferred_element_type=jnp.float32)


# ----------------------------- Pallas wrappers -----------------------------

def _round_up(n, mult):
    return ((n + mult - 1) // mult) * mult


def _pick_tile(m, unit, cap):
    """Largest multiple of `unit` (<= cap, <= m//2 when possible) dividing m,
    so there are >=2 inner steps for the pipeline to overlap DMA with.
    Falls back to m itself (full-dim block, always legal) if m % unit != 0."""
    if m % unit != 0 or m <= unit:
        return m
    limit = min(cap, max(unit, m // 2))
    best = unit
    d = unit
    while d <= limit:
        if m % d == 0:
            best = d
        d += unit
    return best


def _conv_stats(patches, w_p, tm):
    """patches (P, M, K) bf16 @ w_p (P, K, Coutp) bf16 -> y (P, M, Coutp) bf16
    plus per-parity f32 stats (P, 8, Coutp) (every sublane row = the total)."""
    P, M, K = patches.shape
    coutp = w_p.shape[2]
    assert M % tm == 0
    return pl.pallas_call(
        _conv_stats_kernel,
        out_shape=(
            jax.ShapeDtypeStruct((P, M, coutp), jnp.bfloat16),
            jax.ShapeDtypeStruct((P, 8, coutp), jnp.float32),
            jax.ShapeDtypeStruct((P, 8, coutp), jnp.float32),
        ),
        grid_spec=pltpu.PrefetchScalarGridSpec(
            num_scalar_prefetch=0,
            grid=(P, M // tm),
            in_specs=[
                pl.BlockSpec((None, tm, K), lambda p, i: (p, i, 0)),
                pl.BlockSpec((None, K, coutp), lambda p, i: (p, 0, 0)),
            ],
            out_specs=(
                pl.BlockSpec((None, tm, coutp), lambda p, i: (p, i, 0)),
                pl.BlockSpec((None, 8, coutp), lambda p, i: (p, 0, 0)),
                pl.BlockSpec((None, 8, coutp), lambda p, i: (p, 0, 0)),
            ),
        ),
        compiler_params=pltpu.CompilerParams(
            dimension_semantics=("parallel", "arbitrary"),
            vmem_limit_bytes=VMEM_LIMIT_BYTES,
        ),
    )(patches, w_p)


def _conv_tanh(bias_col, w_t, pt, tn):
    """w_t (P, 8, K) bf16 @ pt (P, K, M) bf16 -> (P, 8, M) f32 (+bias, tanh)."""
    P, K, M = pt.shape
    rows = w_t.shape[1]
    assert M % tn == 0
    return pl.pallas_call(
        _conv_tanh_kernel,
        out_shape=jax.ShapeDtypeStruct((P, rows, M), jnp.float32),
        grid_spec=pltpu.PrefetchScalarGridSpec(
            num_scalar_prefetch=0,
            grid=(P, M // tn),
            in_specs=[
                pl.BlockSpec((rows, 1), lambda p, i: (0, 0)),
                pl.BlockSpec((None, rows, K), lambda p, i: (p, 0, 0)),
                pl.BlockSpec((None, K, tn), lambda p, i: (p, 0, i)),
            ],
            out_specs=pl.BlockSpec((None, rows, tn), lambda p, i: (p, 0, i)),
        ),
        compiler_params=pltpu.CompilerParams(
            dimension_semantics=("parallel", "parallel"),
            vmem_limit_bytes=VMEM_LIMIT_BYTES,
        ),
    )(bias_col, w_t, pt)


def _dense(x, w):
    """x (Bp, nc) f32 @ w (nc, N) f32 -> (Bp, N) f32 in one step (tiny)."""
    bp, nc = x.shape
    n = w.shape[1]
    return pl.pallas_call(
        _dense_kernel,
        out_shape=jax.ShapeDtypeStruct((bp, n), jnp.float32),
        grid_spec=pltpu.PrefetchScalarGridSpec(
            num_scalar_prefetch=0,
            grid=(1,),
            in_specs=[
                pl.BlockSpec((bp, nc), lambda i: (0, 0)),
                pl.BlockSpec((nc, n), lambda i: (0, 0)),
            ],
            out_specs=pl.BlockSpec((bp, n), lambda i: (0, 0)),
        ),
        compiler_params=pltpu.CompilerParams(
            dimension_semantics=("arbitrary",),
            vmem_limit_bytes=VMEM_LIMIT_BYTES,
        ),
    )(x, w)


# ------------------------------ XLA glue ------------------------------------
# Patch gather, parity interleave and the BN affine + LeakyReLU are cheap
# element-wise / layout ops that XLA fuses together between the Pallas convs.

def _parity_patches(a, transpose_k=False):
    """Stride-2 / pad-1 / k=4 ConvTranspose2d as 4 parity sub-convs.

    a: (B, H, W, C) bf16 NHWC ->
      transpose_k=False: (4, B*H*W, 4*C)   rows = positions, K = (tap, c)
      transpose_k=True : (4, 4*C, B*H*W)   K on sublanes, positions on lanes
    parity p = py*2 + px; tap = dr*2 + dc.
    """
    B, H, W, C = a.shape
    ap = jnp.pad(a, ((0, 0), (1, 1), (1, 1), (0, 0)))
    outs = []
    for py in range(2):
        for px in range(2):
            taps = [ap[:, py + dr:py + dr + H, px + dc:px + dc + W, :]
                    for dr in range(2) for dc in range(2)]      # (B,H,W,C) each
            if transpose_k:
                t = jnp.stack(taps, axis=0)                     # (4,B,H,W,C)
                t = jnp.transpose(t, (0, 4, 1, 2, 3))           # (4,C,B,H,W)
                outs.append(t.reshape(4 * C, B * H * W))
            else:
                t = jnp.stack(taps, axis=3)                     # (B,H,W,4,C)
                outs.append(t.reshape(B * H * W, 4 * C))
    return jnp.stack(outs, axis=0)


def _parity_weight(w, coutp):
    """PyTorch ConvTranspose2d weight (Cin, Cout, 4, 4) -> (4, 4*Cin, Coutp).

    Sub-kernel for output parity (py, px), window offset (dr, dc):
        W[:, :, (3 if py==0 else 2) - 2*dr, (3 if px==0 else 2) - 2*dc]
    Cout is zero-padded to coutp (lane-dense outputs; pad channels stay 0).
    """
    cin, cout = w.shape[0], w.shape[1]
    subs = []
    for py in range(2):
        for px in range(2):
            taps = []
            for dr in range(2):
                for dc in range(2):
                    kh = (3 if py == 0 else 2) - 2 * dr
                    kw = (3 if px == 0 else 2) - 2 * dc
                    taps.append(w[:, :, kh, kw])                # (Cin, Cout)
            subs.append(jnp.stack(taps, axis=0))                # (4, Cin, Cout)
    wp = jnp.stack(subs, axis=0).reshape(4, 4 * cin, cout)
    if coutp != cout:
        wp = jnp.pad(wp, ((0, 0), (0, 0), (0, coutp - cout)))
    return wp


def _interleave(y, B, H, W, cout):
    """(4, B*H*W, Cout) parity-major -> (B, 2H, 2W, Cout) NHWC."""
    y = y.reshape(2, 2, B, H, W, cout)
    y = jnp.transpose(y, (2, 3, 0, 4, 1, 5))        # (B, H, py, W, px, Cout)
    return y.reshape(B, 2 * H, 2 * W, cout)


def _bn_lrelu(y_f32, ssum, sqsum, n):
    """Training-mode BatchNorm (gamma=1, beta=0) + LeakyReLU(0.2)."""
    mean = ssum / n
    var = jnp.maximum(sqsum / n - mean * mean, 0.0)   # biased var, clamped >= 0
    scale = jax.lax.rsqrt(var + BN_EPS)
    y = y_f32 * scale + (-mean * scale)
    return jnp.where(y >= 0, y, LRELU_SLOPE * y)


# ------------------------------- Layers -------------------------------------

def deconv1x1_bn_lrelu(x2d, w):
    """Layer 1: (B, nc) noise -> (B, 4, 4, 512) bf16 NHWC (ConvT(s1)+BN+LReLU).
    The conv bias is dropped (it cancels exactly through batch-norm)."""
    B, nc = x2d.shape
    cout = w.shape[1]
    w_mat = jnp.transpose(w, (0, 2, 3, 1)).reshape(nc, K_SIZE * K_SIZE * cout)
    bp = _round_up(B, 8)
    xpad = jnp.pad(x2d.astype(jnp.float32), ((0, bp - B), (0, 0)))
    y = _dense(xpad, w_mat.astype(jnp.float32))[:B]            # (B, 16*cout) f32
    y = y.reshape(B * K_SIZE * K_SIZE, cout)
    n = float(B * K_SIZE * K_SIZE)
    a = _bn_lrelu(y, jnp.sum(y, axis=0), jnp.sum(y * y, axis=0), n)
    return a.reshape(B, K_SIZE, K_SIZE, cout).astype(jnp.bfloat16)


def deconv_s2_bn_lrelu(a, w):
    """(B,H,W,Cin) bf16 NHWC -> (B,2H,2W,Cout) bf16 NHWC.
    ConvT(k4,s2,p1) + training-mode BN + LeakyReLU(0.2); conv bias dropped."""
    B, H, W, _ = a.shape
    cout = w.shape[1]
    coutp = _round_up(cout, 128)
    patches = _parity_patches(a)                               # (4, Mp, 4*Cin) bf16
    w_p = _parity_weight(w, coutp).astype(jnp.bfloat16)        # (4, 4*Cin, Coutp)
    Mp = B * H * W
    y, s, sq = _conv_stats(patches, w_p, _pick_tile(Mp, 8, 512))
    n = float(4 * Mp)
    yn = _bn_lrelu(y[:, :, :cout].astype(jnp.float32),
                   jnp.sum(s[:, 0, :cout], axis=0),
                   jnp.sum(sq[:, 0, :cout], axis=0), n).astype(jnp.bfloat16)
    return _interleave(yn, B, H, W, cout)


def deconv_s2_tanh(a, w, b):
    """(B,H,W,64) bf16 NHWC -> (B,2H,2W) f32.  ConvT(k4,s2,p1) + Tanh."""
    B, H, W, _ = a.shape
    cout = w.shape[1]                                          # 1
    rows = 8
    pt = _parity_patches(a, transpose_k=True)                  # (4, 4*Cin, Mp)
    w_t = jnp.transpose(_parity_weight(w, cout), (0, 2, 1))    # (4, 1, 4*Cin)
    w_t = jnp.pad(w_t, ((0, 0), (0, rows - cout), (0, 0))).astype(jnp.bfloat16)
    b_col = jnp.broadcast_to(b.astype(jnp.float32).reshape(1, 1), (rows, 1))
    Mp = B * H * W
    yt = _conv_tanh(b_col, w_t, pt, _pick_tile(Mp, 128, 512))  # (4, 8, Mp) f32
    y0 = yt[:, 0, :].reshape(2, 2, B, H, W)
    y0 = jnp.transpose(y0, (2, 3, 0, 4, 1))                    # (B, H, py, W, px)
    return y0.reshape(B, 2 * H, 2 * W)


# ------------------------------- Model --------------------------------------

def init_params(key, nc):
    layers = [(nc, 512), (512, 256), (256, 128), (128, 64), (64, 1)]
    params = []
    for cin, cout in layers:
        key, k1, k2 = jax.random.split(key, 3)
        bound = 1.0 / float(jnp.sqrt(cin * K_SIZE * K_SIZE))
        w = jax.random.uniform(k1, (cin, cout, K_SIZE, K_SIZE), jnp.float32,
                               -bound, bound)
        b = jax.random.uniform(k2, (cout,), jnp.float32, -bound, bound)
        params.append((w, b))
    return params


def gmodel_forward(x, params):
    """x: (B, nc, 1, 1) NCHW -> (B, 1, 64, 64) NCHW (matches PyTorch Gmodel).
    Biases of BN layers are unused: they cancel through training-mode BN."""
    (w1, _b1), (w2, _b2), (w3, _b3), (w4, _b4), (w5, b5) = params
    B, nc = x.shape[0], x.shape[1]
    h = deconv1x1_bn_lrelu(x.reshape(B, nc), w1)     # (B, 4, 4, 512)
    h = deconv_s2_bn_lrelu(h, w2)                    # (B, 8, 8, 256)
    h = deconv_s2_bn_lrelu(h, w3)                    # (B, 16, 16, 128)
    h = deconv_s2_bn_lrelu(h, w4)                    # (B, 32, 32, 64)
    h = deconv_s2_tanh(h, w5, b5)                    # (B, 64, 64)
    return h[:, None, :, :]                          # (B, 1, 64, 64) NCHW


if __name__ == "__main__":
    key = jax.random.PRNGKey(0)
    nc, B = 8, 2
    kx, kp = jax.random.split(key)
    x = jax.random.normal(kx, (B, nc, 1, 1), jnp.float32)
    params = init_params(kp, nc)

    out = jax.jit(gmodel_forward)(x, params)
    out = jax.block_until_ready(out)

    assert out.shape == (B, 1, 64, 64), out.shape
    assert bool(jnp.all(jnp.isfinite(out)))
    assert bool(jnp.all(jnp.abs(out) <= 1.0 + 1e-5))   # tanh range
    print("KERNEL_OK")
</pallas_src>

<mosaic_0001>
module attributes {stable_mosaic.version = 11 : i64} {
  func.func @_dense_kernel(%arg0: i32, %arg1: memref<8x8xf32, #tpu.memory_space<vmem>>, %arg2: memref<8x8192xf32, #tpu.memory_space<vmem>>, %arg3: memref<8x8192xf32, #tpu.memory_space<vmem>>) attributes {dimension_semantics = [#tpu.dimension_semantics<arbitrary>], iteration_bounds = array<i64: 1>, scalar_prefetch = 0 : i64, scratch_operands = 0 : i64, tpu.core_type = #tpu.core_type<tc>, window_params = [{pipeline_mode = #tpu.pipeline_mode<synchronous>, transform_indices = @transform_0, window_bounds = array<i64: 8, 8>}, {pipeline_mode = #tpu.pipeline_mode<synchronous>, transform_indices = @transform_1, window_bounds = array<i64: 8, 8192>}, {pipeline_mode = #tpu.pipeline_mode<synchronous>, transform_indices = @transform_2, window_bounds = array<i64: 8, 8192>}]} {
    %c0 = arith.constant 0 : index
    %c0_0 = arith.constant 0 : index
    %0 = vector.load %arg1[%c0, %c0_0] : memref<8x8xf32, #tpu.memory_space<vmem>>, vector<8x8xf32>
    %c0_1 = arith.constant 0 : index
    %c0_2 = arith.constant 0 : index
    %1 = vector.load %arg2[%c0_1, %c0_2] : memref<8x8192xf32, #tpu.memory_space<vmem>>, vector<8x8192xf32>
    %cst = arith.constant dense<0.000000e+00> : vector<8x8192xf32>
    %2 = tpu.matmul %0, %1, %cst {dimension_numbers = #tpu.dot_dimension_numbers<[1], [0], [0], [1], [0, 0, 1, 1], [], []>} : vector<8x8xf32>, vector<8x8192xf32>, vector<8x8192xf32> -> vector<8x8192xf32>
    %c0_3 = arith.constant 0 : index
    %c0_4 = arith.constant 0 : index
    %3 = vector.load %arg3[%c0_3, %c0_4] : memref<8x8192xf32, #tpu.memory_space<vmem>>, vector<8x8192xf32>
    tpu.vector_store %arg3[%c0_3, %c0_4], %2 {strides = array<i32>} : memref<8x8192xf32, #tpu.memory_space<vmem>>, vector<8x8192xf32>,
    return
  }
  func.func @transform_0(%arg0: i32) -> (i32, i32) {
    %c0_i32 = arith.constant 0 : i32
    %c0_i32_0 = arith.constant 0 : i32
    %c0_i32_1 = arith.constant 0 : i32
    return %c0_i32, %c0_i32_0 : i32, i32
  }
  func.func @transform_1(%arg0: i32) -> (i32, i32) {
    %c0_i32 = arith.constant 0 : i32
    %c0_i32_0 = arith.constant 0 : i32
    %c0_i32_1 = arith.constant 0 : i32
    return %c0_i32, %c0_i32_0 : i32, i32
  }
  func.func @transform_2(%arg0: i32) -> (i32, i32) {
    %c0_i32 = arith.constant 0 : i32
    %c0_i32_0 = arith.constant 0 : i32
    %c0_i32_1 = arith.constant 0 : i32
    return %c0_i32, %c0_i32_0 : i32, i32
  }
}

module attributes {stable_mosaic.version = 11 : i64} {
  func.func @_conv_stats_kernel(%arg0: i32, %arg1: i32, %arg2: memref<1x16x2048xbf16, #tpu.memory_space<vmem>>, %arg3: memref<1x2048x256xbf16, #tpu.memory_space<vmem>>, %arg4: memref<1x16x256xbf16, #tpu.memory_space<vmem>>, %arg5: memref<1x8x256xf32, #tpu.memory_space<vmem>>, %arg6: memref<1x8x256xf32, #tpu.memory_space<vmem>>) attributes {dimension_semantics = [#tpu.dimension_semantics<parallel>, #tpu.dimension_semantics<arbitrary>], iteration_bounds = array<i64: 4, 2>, scalar_prefetch = 0 : i64, scratch_operands = 0 : i64, tpu.core_type = #tpu.core_type<tc>, window_params = [{transform_indices = @transform_0, window_bounds = array<i64: 1, 16, 2048>}, {transform_indices = @transform_1, window_bounds = array<i64: 1, 2048, 256>}, {transform_indices = @transform_2, window_bounds = array<i64: 1, 16, 256>}, {transform_indices = @transform_3, window_bounds = array<i64: 1, 8, 256>}, {transform_indices = @transform_4, window_bounds = array<i64: 1, 8, 256>}]} {
    %c0 = arith.constant 0 : index
    %c0_0 = arith.constant 0 : index
    %c0_1 = arith.constant 0 : index
    %0 = vector.load %arg2[%c0, %c0_0, %c0_1] : memref<1x16x2048xbf16, #tpu.memory_space<vmem>>, vector<1x16x2048xbf16>
    %1 = vector.shape_cast %0 : vector<1x16x2048xbf16> to vector<16x2048xbf16>
    %c0_2 = arith.constant 0 : index
    %c0_3 = arith.constant 0 : index
    %c0_4 = arith.constant 0 : index
    %2 = vector.load %arg3[%c0_2, %c0_3, %c0_4] : memref<1x2048x256xbf16, #tpu.memory_space<vmem>>, vector<1x2048x256xbf16>
    %3 = vector.shape_cast %2 : vector<1x2048x256xbf16> to vector<2048x256xbf16>
    %cst = arith.constant dense<0.000000e+00> : vector<16x256xf32>
    %4 = tpu.matmul %1, %3, %cst {dimension_numbers = #tpu.dot_dimension_numbers<[1], [0], [0], [1], [0, 0, 1, 1], [], []>} : vector<16x2048xbf16>, vector<2048x256xbf16>, vector<16x256xf32> -> vector<16x256xf32>
    %5 = arith.truncf %4 : vector<16x256xf32> to vector<16x256xbf16>
    %c0_5 = arith.constant 0 : index
    %c0_6 = arith.constant 0 : index
    %c0_7 = arith.constant 0 : index
    %6 = vector.load %arg4[%c0_5, %c0_6, %c0_7] : memref<1x16x256xbf16, #tpu.memory_space<vmem>>, vector<1x16x256xbf16>
    %7 = vector.shape_cast %6 : vector<1x16x256xbf16> to vector<16x256xbf16>
    %8 = vector.shape_cast %5 : vector<16x256xbf16> to vector<1x16x256xbf16>
    tpu.vector_store %arg4[%c0_5, %c0_6, %c0_7], %8 {strides = array<i32>} : memref<1x16x256xbf16, #tpu.memory_space<vmem>>, vector<1x16x256xbf16>,
    %c0_i32 = arith.constant 0 : i32
    %9 = arith.cmpi eq, %arg1, %c0_i32 : i32
    %10 = arith.extui %9 : i1 to i32
    %c0_i32_8 = arith.constant 0 : i32
    %11 = arith.cmpi ne, %10, %c0_i32_8 : i32
    scf.if %11 {
      %cst_23 = arith.constant 0.000000e+00 : f32
      %31 = vector.broadcast %cst_23 : f32 to vector<8x256xf32>
      %c0_24 = arith.constant 0 : index
      %c0_25 = arith.constant 0 : index
      %c0_26 = arith.constant 0 : index
      %32 = vector.load %arg5[%c0_24, %c0_25, %c0_26] : memref<1x8x256xf32, #tpu.memory_space<vmem>>, vector<1x8x256xf32>
      %33 = vector.shape_cast %32 : vector<1x8x256xf32> to vector<8x256xf32>
      %34 = vector.shape_cast %31 : vector<8x256xf32> to vector<1x8x256xf32>
      tpu.vector_store %arg5[%c0_24, %c0_25, %c0_26], %34 {strides = array<i32>} : memref<1x8x256xf32, #tpu.memory_space<vmem>>, vector<1x8x256xf32>,
      %cst_27 = arith.constant 0.000000e+00 : f32
      %35 = vector.broadcast %cst_27 : f32 to vector<8x256xf32>
      %c0_28 = arith.constant 0 : index
      %c0_29 = arith.constant 0 : index
      %c0_30 = arith.constant 0 : index
      %36 = vector.load %arg6[%c0_28, %c0_29, %c0_30] : memref<1x8x256xf32, #tpu.memory_space<vmem>>, vector<1x8x256xf32>
      %37 = vector.shape_cast %36 : vector<1x8x256xf32> to vector<8x256xf32>
      %38 = vector.shape_cast %35 : vector<8x256xf32> to vector<1x8x256xf32>
      tpu.vector_store %arg6[%c0_28, %c0_29, %c0_30], %38 {strides = array<i32>} : memref<1x8x256xf32, #tpu.memory_space<vmem>>, vector<1x8x256xf32>,
    } else {
    }
    %c0_9 = arith.constant 0 : index
    %c0_10 = arith.constant 0 : index
    %c0_11 = arith.constant 0 : index
    %12 = vector.load %arg5[%c0_9, %c0_10, %c0_11] : memref<1x8x256xf32, #tpu.memory_space<vmem>>, vector<1x8x256xf32>
    %13 = vector.shape_cast %12 : vector<1x8x256xf32> to vector<8x256xf32>
    %cst_12 = arith.constant dense<0.000000e+00> : vector<256xf32>
    %14 = vector.multi_reduction <add>, %4, %cst_12 [0] : vector<16x256xf32> to vector<256xf32>
    %15 = vector.shape_cast %14 : vector<256xf32> to vector<1x256xf32>
    %16 = vector.broadcast %15 : vector<1x256xf32> to vector<8x256xf32>
    %17 = arith.addf %13, %16 : vector<8x256xf32>
    %c0_13 = arith.constant 0 : index
    %c0_14 = arith.constant 0 : index
    %c0_15 = arith.constant 0 : index
    %18 = vector.load %arg5[%c0_13, %c0_14, %c0_15] : memref<1x8x256xf32, #tpu.memory_space<vmem>>, vector<1x8x256xf32>
    %19 = vector.shape_cast %18 : vector<1x8x256xf32> to vector<8x256xf32>
    %20 = vector.shape_cast %17 : vector<8x256xf32> to vector<1x8x256xf32>
    tpu.vector_store %arg5[%c0_13, %c0_14, %c0_15], %20 {strides = array<i32>} : memref<1x8x256xf32, #tpu.memory_space<vmem>>, vector<1x8x256xf32>,
    %c0_16 = arith.constant 0 : index
    %c0_17 = arith.constant 0 : index
    %c0_18 = arith.constant 0 : index
    %21 = vector.load %arg6[%c0_16, %c0_17, %c0_18] : memref<1x8x256xf32, #tpu.memory_space<vmem>>, vector<1x8x256xf32>
    %22 = vector.shape_cast %21 : vector<1x8x256xf32> to vector<8x256xf32>
    %23 = arith.mulf %4, %4 : vector<16x256xf32>
    %cst_19 = arith.constant dense<0.000000e+00> : vector<256xf32>
    %24 = vector.multi_reduction <add>, %23, %cst_19 [0] : vector<16x256xf32> to vector<256xf32>
    %25 = vector.shape_cast %24 : vector<256xf32> to vector<1x256xf32>
    %26 = vector.broadcast %25 : vector<1x256xf32> to vector<8x256xf32>
    %27 = arith.addf %22, %26 : vector<8x256xf32>
    %c0_20 = arith.constant 0 : index
    %c0_21 = arith.constant 0 : index
    %c0_22 = arith.constant 0 : index
    %28 = vector.load %arg6[%c0_20, %c0_21, %c0_22] : memref<1x8x256xf32, #tpu.memory_space<vmem>>, vector<1x8x256xf32>
    %29 = vector.shape_cast %28 : vector<1x8x256xf32> to vector<8x256xf32>
    %30 = vector.shape_cast %27 : vector<8x256xf32> to vector<1x8x256xf32>
    tpu.vector_store %arg6[%c0_20, %c0_21, %c0_22], %30 {strides = array<i32>} : memref<1x8x256xf32, #tpu.memory_space<vmem>>, vector<1x8x256xf32>,
    return
  }
  func.func @transform_0(%arg0: i32, %arg1: i32) -> (i32, i32, i32) {
    %c0_i32 = arith.constant 0 : i32
    %c0_i32_0 = arith.constant 0 : i32
    return %arg0, %arg1, %c0_i32 : i32, i32, i32
  }
  func.func @transform_1(%arg0: i32, %arg1: i32) -> (i32, i32, i32) {
    %c0_i32 = arith.constant 0 : i32
    %c0_i32_0 = arith.constant 0 : i32
    %c0_i32_1 = arith.constant 0 : i32
    return %arg0, %c0_i32, %c0_i32_0 : i32, i32, i32
  }
  func.func @transform_2(%arg0: i32, %arg1: i32) -> (i32, i32, i32) {
    %c0_i32 = arith.constant 0 : i32
    %c0_i32_0 = arith.constant 0 : i32
    return %arg0, %arg1, %c0_i32 : i32, i32, i32
  }
  func.func @transform_3(%arg0: i32, %arg1: i32) -> (i32, i32, i32) {
    %c0_i32 = arith.constant 0 : i32
    %c0_i32_0 = arith.constant 0 : i32
    %c0_i32_1 = arith.constant 0 : i32
    return %arg0, %c0_i32, %c0_i32_0 : i32, i32, i32
  }
  func.func @transform_4(%arg0: i32, %arg1: i32) -> (i32, i32, i32) {
    %c0_i32 = arith.constant 0 : i32
    %c0_i32_0 = arith.constant 0 : i32
    %c0_i32_1 = arith.constant 0 : i32
    return %arg0, %c0_i32, %c0_i32_0 : i32, i32, i32
  }
}

module attributes {stable_mosaic.version = 11 : i64} {
  func.func @_conv_stats_kernel(%arg0: i32, %arg1: i32, %arg2: memref<1x64x1024xbf16, #tpu.memory_space<vmem>>, %arg3: memref<1x1024x128xbf16, #tpu.memory_space<vmem>>, %arg4: memref<1x64x128xbf16, #tpu.memory_space<vmem>>, %arg5: memref<1x8x128xf32, #tpu.memory_space<vmem>>, %arg6: memref<1x8x128xf32, #tpu.memory_space<vmem>>) attributes {dimension_semantics = [#tpu.dimension_semantics<parallel>, #tpu.dimension_semantics<arbitrary>], iteration_bounds = array<i64: 4, 2>, scalar_prefetch = 0 : i64, scratch_operands = 0 : i64, tpu.core_type = #tpu.core_type<tc>, window_params = [{transform_indices = @transform_0, window_bounds = array<i64: 1, 64, 1024>}, {transform_indices = @transform_1, window_bounds = array<i64: 1, 1024, 128>}, {transform_indices = @transform_2, window_bounds = array<i64: 1, 64, 128>}, {transform_indices = @transform_3, window_bounds = array<i64: 1, 8, 128>}, {transform_indices = @transform_4, window_bounds = array<i64: 1, 8, 128>}]} {
    %c0 = arith.constant 0 : index
    %c0_0 = arith.constant 0 : index
    %c0_1 = arith.constant 0 : index
    %0 = vector.load %arg2[%c0, %c0_0, %c0_1] : memref<1x64x1024xbf16, #tpu.memory_space<vmem>>, vector<1x64x1024xbf16>
    %1 = vector.shape_cast %0 : vector<1x64x1024xbf16> to vector<64x1024xbf16>
    %c0_2 = arith.constant 0 : index
    %c0_3 = arith.constant 0 : index
    %c0_4 = arith.constant 0 : index
    %2 = vector.load %arg3[%c0_2, %c0_3, %c0_4] : memref<1x1024x128xbf16, #tpu.memory_space<vmem>>, vector<1x1024x128xbf16>
    %3 = vector.shape_cast %2 : vector<1x1024x128xbf16> to vector<1024x128xbf16>
    %cst = arith.constant dense<0.000000e+00> : vector<64x128xf32>
    %4 = tpu.matmul %1, %3, %cst {dimension_numbers = #tpu.dot_dimension_numbers<[1], [0], [0], [1], [0, 0, 1, 1], [], []>} : vector<64x1024xbf16>, vector<1024x128xbf16>, vector<64x128xf32> -> vector<64x128xf32>
    %5 = arith.truncf %4 : vector<64x128xf32> to vector<64x128xbf16>
    %c0_5 = arith.constant 0 : index
    %c0_6 = arith.constant 0 : index
    %c0_7 = arith.constant 0 : index
    %6 = vector.load %arg4[%c0_5, %c0_6, %c0_7] : memref<1x64x128xbf16, #tpu.memory_space<vmem>>, vector<1x64x128xbf16>
    %7 = vector.shape_cast %6 : vector<1x64x128xbf16> to vector<64x128xbf16>
    %8 = vector.shape_cast %5 : vector<64x128xbf16> to vector<1x64x128xbf16>
    tpu.vector_store %arg4[%c0_5, %c0_6, %c0_7], %8 {strides = array<i32>} : memref<1x64x128xbf16, #tpu.memory_space<vmem>>, vector<1x64x128xbf16>,
    %c0_i32 = arith.constant 0 : i32
    %9 = arith.cmpi eq, %arg1, %c0_i32 : i32
    %10 = arith.extui %9 : i1 to i32
    %c0_i32_8 = arith.constant 0 : i32
    %11 = arith.cmpi ne, %10, %c0_i32_8 : i32
    scf.if %11 {
      %cst_23 = arith.constant 0.000000e+00 : f32
      %31 = vector.broadcast %cst_23 : f32 to vector<8x128xf32>
      %c0_24 = arith.constant 0 : index
      %c0_25 = arith.constant 0 : index
      %c0_26 = arith.constant 0 : index
      %32 = vector.load %arg5[%c0_24, %c0_25, %c0_26] : memref<1x8x128xf32, #tpu.memory_space<vmem>>, vector<1x8x128xf32>
      %33 = vector.shape_cast %32 : vector<1x8x128xf32> to vector<8x128xf32>
      %34 = vector.shape_cast %31 : vector<8x128xf32> to vector<1x8x128xf32>
      tpu.vector_store %arg5[%c0_24, %c0_25, %c0_26], %34 {strides = array<i32>} : memref<1x8x128xf32, #tpu.memory_space<vmem>>, vector<1x8x128xf32>,
      %cst_27 = arith.constant 0.000000e+00 : f32
      %35 = vector.broadcast %cst_27 : f32 to vector<8x128xf32>
      %c0_28 = arith.constant 0 : index
      %c0_29 = arith.constant 0 : index
      %c0_30 = arith.constant 0 : index
      %36 = vector.load %arg6[%c0_28, %c0_29, %c0_30] : memref<1x8x128xf32, #tpu.memory_space<vmem>>, vector<1x8x128xf32>
      %37 = vector.shape_cast %36 : vector<1x8x128xf32> to vector<8x128xf32>
      %38 = vector.shape_cast %35 : vector<8x128xf32> to vector<1x8x128xf32>
      tpu.vector_store %arg6[%c0_28, %c0_29, %c0_30], %38 {strides = array<i32>} : memref<1x8x128xf32, #tpu.memory_space<vmem>>, vector<1x8x128xf32>,
    } else {
    }
    %c0_9 = arith.constant 0 : index
    %c0_10 = arith.constant 0 : index
    %c0_11 = arith.constant 0 : index
    %12 = vector.load %arg5[%c0_9, %c0_10, %c0_11] : memref<1x8x128xf32, #tpu.memory_space<vmem>>, vector<1x8x128xf32>
    %13 = vector.shape_cast %12 : vector<1x8x128xf32> to vector<8x128xf32>
    %cst_12 = arith.constant dense<0.000000e+00> : vector<128xf32>
    %14 = vector.multi_reduction <add>, %4, %cst_12 [0] : vector<64x128xf32> to vector<128xf32>
    %15 = vector.shape_cast %14 : vector<128xf32> to vector<1x128xf32>
    %16 = vector.broadcast %15 : vector<1x128xf32> to vector<8x128xf32>
    %17 = arith.addf %13, %16 : vector<8x128xf32>
    %c0_13 = arith.constant 0 : index
    %c0_14 = arith.constant 0 : index
    %c0_15 = arith.constant 0 : index
    %18 = vector.load %arg5[%c0_13, %c0_14, %c0_15] : memref<1x8x128xf32, #tpu.memory_space<vmem>>, vector<1x8x128xf32>
    %19 = vector.shape_cast %18 : vector<1x8x128xf32> to vector<8x128xf32>
    %20 = vector.shape_cast %17 : vector<8x128xf32> to vector<1x8x128xf32>
    tpu.vector_store %arg5[%c0_13, %c0_14, %c0_15], %20 {strides = array<i32>} : memref<1x8x128xf32, #tpu.memory_space<vmem>>, vector<1x8x128xf32>,
    %c0_16 = arith.constant 0 : index
    %c0_17 = arith.constant 0 : index
    %c0_18 = arith.constant 0 : index
    %21 = vector.load %arg6[%c0_16, %c0_17, %c0_18] : memref<1x8x128xf32, #tpu.memory_space<vmem>>, vector<1x8x128xf32>
    %22 = vector.shape_cast %21 : vector<1x8x128xf32> to vector<8x128xf32>
    %23 = arith.mulf %4, %4 : vector<64x128xf32>
    %cst_19 = arith.constant dense<0.000000e+00> : vector<128xf32>
    %24 = vector.multi_reduction <add>, %23, %cst_19 [0] : vector<64x128xf32> to vector<128xf32>
    %25 = vector.shape_cast %24 : vector<128xf32> to vector<1x128xf32>
    %26 = vector.broadcast %25 : vector<1x128xf32> to vector<8x128xf32>
    %27 = arith.addf %22, %26 : vector<8x128xf32>
    %c0_20 = arith.constant 0 : index
    %c0_21 = arith.constant 0 : index
    %c0_22 = arith.constant 0 : index
    %28 = vector.load %arg6[%c0_20, %c0_21, %c0_22] : memref<1x8x128xf32, #tpu.memory_space<vmem>>, vector<1x8x128xf32>
    %29 = vector.shape_cast %28 : vector<1x8x128xf32> to vector<8x128xf32>
    %30 = vector.shape_cast %27 : vector<8x128xf32> to vector<1x8x128xf32>
    tpu.vector_store %arg6[%c0_20, %c0_21, %c0_22], %30 {strides = array<i32>} : memref<1x8x128xf32, #tpu.memory_space<vmem>>, vector<1x8x128xf32>,
    return
  }
  func.func @transform_0(%arg0: i32, %arg1: i32) -> (i32, i32, i32) {
    %c0_i32 = arith.constant 0 : i32
    %c0_i32_0 = arith.constant 0 : i32
    return %arg0, %arg1, %c0_i32 : i32, i32, i32
  }
  func.func @transform_1(%arg0: i32, %arg1: i32) -> (i32, i32, i32) {
    %c0_i32 = arith.constant 0 : i32
    %c0_i32_0 = arith.constant 0 : i32
    %c0_i32_1 = arith.constant 0 : i32
    return %arg0, %c0_i32, %c0_i32_0 : i32, i32, i32
  }
  func.func @transform_2(%arg0: i32, %arg1: i32) -> (i32, i32, i32) {
    %c0_i32 = arith.constant 0 : i32
    %c0_i32_0 = arith.constant 0 : i32
    return %arg0, %arg1, %c0_i32 : i32, i32, i32
  }
  func.func @transform_3(%arg0: i32, %arg1: i32) -> (i32, i32, i32) {
    %c0_i32 = arith.constant 0 : i32
    %c0_i32_0 = arith.constant 0 : i32
    %c0_i32_1 = arith.constant 0 : i32
    return %arg0, %c0_i32, %c0_i32_0 : i32, i32, i32
  }
  func.func @transform_4(%arg0: i32, %arg1: i32) -> (i32, i32, i32) {
    %c0_i32 = arith.constant 0 : i32
    %c0_i32_0 = arith.constant 0 : i32
    %c0_i32_1 = arith.constant 0 : i32
    return %arg0, %c0_i32, %c0_i32_0 : i32, i32, i32
  }
}

module attributes {stable_mosaic.version = 11 : i64} {
  func.func @_conv_stats_kernel(%arg0: i32, %arg1: i32, %arg2: memref<1x256x512xbf16, #tpu.memory_space<vmem>>, %arg3: memref<1x512x128xbf16, #tpu.memory_space<vmem>>, %arg4: memref<1x256x128xbf16, #tpu.memory_space<vmem>>, %arg5: memref<1x8x128xf32, #tpu.memory_space<vmem>>, %arg6: memref<1x8x128xf32, #tpu.memory_space<vmem>>) attributes {dimension_semantics = [#tpu.dimension_semantics<parallel>, #tpu.dimension_semantics<arbitrary>], iteration_bounds = array<i64: 4, 2>, scalar_prefetch = 0 : i64, scratch_operands = 0 : i64, tpu.core_type = #tpu.core_type<tc>, window_params = [{transform_indices = @transform_0, window_bounds = array<i64: 1, 256, 512>}, {transform_indices = @transform_1, window_bounds = array<i64: 1, 512, 128>}, {transform_indices = @transform_2, window_bounds = array<i64: 1, 256, 128>}, {transform_indices = @transform_3, window_bounds = array<i64: 1, 8, 128>}, {transform_indices = @transform_4, window_bounds = array<i64: 1, 8, 128>}]} {
    %c0 = arith.constant 0 : index
    %c0_0 = arith.constant 0 : index
    %c0_1 = arith.constant 0 : index
    %0 = vector.load %arg2[%c0, %c0_0, %c0_1] : memref<1x256x512xbf16, #tpu.memory_space<vmem>>, vector<1x256x512xbf16>
    %1 = vector.shape_cast %0 : vector<1x256x512xbf16> to vector<256x512xbf16>
    %c0_2 = arith.constant 0 : index
    %c0_3 = arith.constant 0 : index
    %c0_4 = arith.constant 0 : index
    %2 = vector.load %arg3[%c0_2, %c0_3, %c0_4] : memref<1x512x128xbf16, #tpu.memory_space<vmem>>, vector<1x512x128xbf16>
    %3 = vector.shape_cast %2 : vector<1x512x128xbf16> to vector<512x128xbf16>
    %cst = arith.constant dense<0.000000e+00> : vector<256x128xf32>
    %4 = tpu.matmul %1, %3, %cst {dimension_numbers = #tpu.dot_dimension_numbers<[1], [0], [0], [1], [0, 0, 1, 1], [], []>} : vector<256x512xbf16>, vector<512x128xbf16>, vector<256x128xf32> -> vector<256x128xf32>
    %5 = arith.truncf %4 : vector<256x128xf32> to vector<256x128xbf16>
    %c0_5 = arith.constant 0 : index
    %c0_6 = arith.constant 0 : index
    %c0_7 = arith.constant 0 : index
    %6 = vector.load %arg4[%c0_5, %c0_6, %c0_7] : memref<1x256x128xbf16, #tpu.memory_space<vmem>>, vector<1x256x128xbf16>
    %7 = vector.shape_cast %6 : vector<1x256x128xbf16> to vector<256x128xbf16>
    %8 = vector.shape_cast %5 : vector<256x128xbf16> to vector<1x256x128xbf16>
    tpu.vector_store %arg4[%c0_5, %c0_6, %c0_7], %8 {strides = array<i32>} : memref<1x256x128xbf16, #tpu.memory_space<vmem>>, vector<1x256x128xbf16>,
    %c0_i32 = arith.constant 0 : i32
    %9 = arith.cmpi eq, %arg1, %c0_i32 : i32
    %10 = arith.extui %9 : i1 to i32
    %c0_i32_8 = arith.constant 0 : i32
    %11 = arith.cmpi ne, %10, %c0_i32_8 : i32
    scf.if %11 {
      %cst_23 = arith.constant 0.000000e+00 : f32
      %31 = vector.broadcast %cst_23 : f32 to vector<8x128xf32>
      %c0_24 = arith.constant 0 : index
      %c0_25 = arith.constant 0 : index
      %c0_26 = arith.constant 0 : index
      %32 = vector.load %arg5[%c0_24, %c0_25, %c0_26] : memref<1x8x128xf32, #tpu.memory_space<vmem>>, vector<1x8x128xf32>
      %33 = vector.shape_cast %32 : vector<1x8x128xf32> to vector<8x128xf32>
      %34 = vector.shape_cast %31 : vector<8x128xf32> to vector<1x8x128xf32>
      tpu.vector_store %arg5[%c0_24, %c0_25, %c0_26], %34 {strides = array<i32>} : memref<1x8x128xf32, #tpu.memory_space<vmem>>, vector<1x8x128xf32>,
      %cst_27 = arith.constant 0.000000e+00 : f32
      %35 = vector.broadcast %cst_27 : f32 to vector<8x128xf32>
      %c0_28 = arith.constant 0 : index
      %c0_29 = arith.constant 0 : index
      %c0_30 = arith.constant 0 : index
      %36 = vector.load %arg6[%c0_28, %c0_29, %c0_30] : memref<1x8x128xf32, #tpu.memory_space<vmem>>, vector<1x8x128xf32>
      %37 = vector.shape_cast %36 : vector<1x8x128xf32> to vector<8x128xf32>
      %38 = vector.shape_cast %35 : vector<8x128xf32> to vector<1x8x128xf32>
      tpu.vector_store %arg6[%c0_28, %c0_29, %c0_30], %38 {strides = array<i32>} : memref<1x8x128xf32, #tpu.memory_space<vmem>>, vector<1x8x128xf32>,
    } else {
    }
    %c0_9 = arith.constant 0 : index
    %c0_10 = arith.constant 0 : index
    %c0_11 = arith.constant 0 : index
    %12 = vector.load %arg5[%c0_9, %c0_10, %c0_11] : memref<1x8x128xf32, #tpu.memory_space<vmem>>, vector<1x8x128xf32>
    %13 = vector.shape_cast %12 : vector<1x8x128xf32> to vector<8x128xf32>
    %cst_12 = arith.constant dense<0.000000e+00> : vector<128xf32>
    %14 = vector.multi_reduction <add>, %4, %cst_12 [0] : vector<256x128xf32> to vector<128xf32>
    %15 = vector.shape_cast %14 : vector<128xf32> to vector<1x128xf32>
    %16 = vector.broadcast %15 : vector<1x128xf32> to vector<8x128xf32>
    %17 = arith.addf %13, %16 : vector<8x128xf32>
    %c0_13 = arith.constant 0 : index
    %c0_14 = arith.constant 0 : index
    %c0_15 = arith.constant 0 : index
    %18 = vector.load %arg5[%c0_13, %c0_14, %c0_15] : memref<1x8x128xf32, #tpu.memory_space<vmem>>, vector<1x8x128xf32>
    %19 = vector.shape_cast %18 : vector<1x8x128xf32> to vector<8x128xf32>
    %20 = vector.shape_cast %17 : vector<8x128xf32> to vector<1x8x128xf32>
    tpu.vector_store %arg5[%c0_13, %c0_14, %c0_15], %20 {strides = array<i32>} : memref<1x8x128xf32, #tpu.memory_space<vmem>>, vector<1x8x128xf32>,
    %c0_16 = arith.constant 0 : index
    %c0_17 = arith.constant 0 : index
    %c0_18 = arith.constant 0 : index
    %21 = vector.load %arg6[%c0_16, %c0_17, %c0_18] : memref<1x8x128xf32, #tpu.memory_space<vmem>>, vector<1x8x128xf32>
    %22 = vector.shape_cast %21 : vector<1x8x128xf32> to vector<8x128xf32>
    %23 = arith.mulf %4, %4 : vector<256x128xf32>
    %cst_19 = arith.constant dense<0.000000e+00> : vector<128xf32>
    %24 = vector.multi_reduction <add>, %23, %cst_19 [0] : vector<256x128xf32> to vector<128xf32>
    %25 = vector.shape_cast %24 : vector<128xf32> to vector<1x128xf32>
    %26 = vector.broadcast %25 : vector<1x128xf32> to vector<8x128xf32>
    %27 = arith.addf %22, %26 : vector<8x128xf32>
    %c0_20 = arith.constant 0 : index
    %c0_21 = arith.constant 0 : index
    %c0_22 = arith.constant 0 : index
    %28 = vector.load %arg6[%c0_20, %c0_21, %c0_22] : memref<1x8x128xf32, #tpu.memory_space<vmem>>, vector<1x8x128xf32>
    %29 = vector.shape_cast %28 : vector<1x8x128xf32> to vector<8x128xf32>
    %30 = vector.shape_cast %27 : vector<8x128xf32> to vector<1x8x128xf32>
    tpu.vector_store %arg6[%c0_20, %c0_21, %c0_22], %30 {strides = array<i32>} : memref<1x8x128xf32, #tpu.memory_space<vmem>>, vector<1x8x128xf32>,
    return
  }
  func.func @transform_0(%arg0: i32, %arg1: i32) -> (i32, i32, i32) {
    %c0_i32 = arith.constant 0 : i32
    %c0_i32_0 = arith.constant 0 : i32
    return %arg0, %arg1, %c0_i32 : i32, i32, i32
  }
  func.func @transform_1(%arg0: i32, %arg1: i32) -> (i32, i32, i32) {
    %c0_i32 = arith.constant 0 : i32
    %c0_i32_0 = arith.constant 0 : i32
    %c0_i32_1 = arith.constant 0 : i32
    return %arg0, %c0_i32, %c0_i32_0 : i32, i32, i32
  }
  func.func @transform_2(%arg0: i32, %arg1: i32) -> (i32, i32, i32) {
    %c0_i32 = arith.constant 0 : i32
    %c0_i32_0 = arith.constant 0 : i32
    return %arg0, %arg1, %c0_i32 : i32, i32, i32
  }
  func.func @transform_3(%arg0: i32, %arg1: i32) -> (i32, i32, i32) {
    %c0_i32 = arith.constant 0 : i32
    %c0_i32_0 = arith.constant 0 : i32
    %c0_i32_1 = arith.constant 0 : i32
    return %arg0, %c0_i32, %c0_i32_0 : i32, i32, i32
  }
  func.func @transform_4(%arg0: i32, %arg1: i32) -> (i32, i32, i32) {
    %c0_i32 = arith.constant 0 : i32
    %c0_i32_0 = arith.constant 0 : i32
    %c0_i32_1 = arith.constant 0 : i32
    return %arg0, %c0_i32, %c0_i32_0 : i32, i32, i32
  }
}

module attributes {stable_mosaic.version = 11 : i64} {
  func.func @_conv_tanh_kernel(%arg0: i32, %arg1: i32, %arg2: memref<8x1xf32, #tpu.memory_space<vmem>>, %arg3: memref<1x8x256xbf16, #tpu.memory_space<vmem>>, %arg4: memref<1x256x512xbf16, #tpu.memory_space<vmem>>, %arg5: memref<1x8x512xf32, #tpu.memory_space<vmem>>) attributes {dimension_semantics = [#tpu.dimension_semantics<parallel>, #tpu.dimension_semantics<parallel>], iteration_bounds = array<i64: 4, 4>, scalar_prefetch = 0 : i64, scratch_operands = 0 : i64, tpu.core_type = #tpu.core_type<tc>, window_params = [{pipeline_mode = #tpu.pipeline_mode<synchronous>, transform_indices = @transform_0, window_bounds = array<i64: 8, 1>}, {transform_indices = @transform_1, window_bounds = array<i64: 1, 8, 256>}, {transform_indices = @transform_2, window_bounds = array<i64: 1, 256, 512>}, {transform_indices = @transform_3, window_bounds = array<i64: 1, 8, 512>}]} {
    %c0 = arith.constant 0 : index
    %c0_0 = arith.constant 0 : index
    %c0_1 = arith.constant 0 : index
    %0 = vector.load %arg3[%c0, %c0_0, %c0_1] : memref<1x8x256xbf16, #tpu.memory_space<vmem>>, vector<1x8x256xbf16>
    %1 = vector.shape_cast %0 : vector<1x8x256xbf16> to vector<8x256xbf16>
    %c0_2 = arith.constant 0 : index
    %c0_3 = arith.constant 0 : index
    %c0_4 = arith.constant 0 : index
    %2 = vector.load %arg4[%c0_2, %c0_3, %c0_4] : memref<1x256x512xbf16, #tpu.memory_space<vmem>>, vector<1x256x512xbf16>
    %3 = vector.shape_cast %2 : vector<1x256x512xbf16> to vector<256x512xbf16>
    %cst = arith.constant dense<0.000000e+00> : vector<8x512xf32>
    %4 = tpu.matmul %1, %3, %cst {dimension_numbers = #tpu.dot_dimension_numbers<[1], [0], [0], [1], [0, 0, 1, 1], [], []>} : vector<8x256xbf16>, vector<256x512xbf16>, vector<8x512xf32> -> vector<8x512xf32>
    %c0_5 = arith.constant 0 : index
    %c0_6 = arith.constant 0 : index
    %5 = vector.load %arg2[%c0_5, %c0_6] : memref<8x1xf32, #tpu.memory_space<vmem>>, vector<8x1xf32>
    %6 = vector.broadcast %5 : vector<8x1xf32> to vector<8x512xf32>
    %7 = arith.addf %4, %6 : vector<8x512xf32>
    %8 = math.tanh %7 : vector<8x512xf32>
    %c0_7 = arith.constant 0 : index
    %c0_8 = arith.constant 0 : index
    %c0_9 = arith.constant 0 : index
    %9 = vector.load %arg5[%c0_7, %c0_8, %c0_9] : memref<1x8x512xf32, #tpu.memory_space<vmem>>, vector<1x8x512xf32>
    %10 = vector.shape_cast %9 : vector<1x8x512xf32> to vector<8x512xf32>
    %11 = vector.shape_cast %8 : vector<8x512xf32> to vector<1x8x512xf32>
    tpu.vector_store %arg5[%c0_7, %c0_8, %c0_9], %11 {strides = array<i32>} : memref<1x8x512xf32, #tpu.memory_space<vmem>>, vector<1x8x512xf32>,
    return
  }
  func.func @transform_0(%arg0: i32, %arg1: i32) -> (i32, i32) {
    %c0_i32 = arith.constant 0 : i32
    %c0_i32_0 = arith.constant 0 : i32
    %c0_i32_1 = arith.constant 0 : i32
    return %c0_i32, %c0_i32_0 : i32, i32
  }
  func.func @transform_1(%arg0: i32, %arg1: i32) -> (i32, i32, i32) {
    %c0_i32 = arith.constant 0 : i32
    %c0_i32_0 = arith.constant 0 : i32
    %c0_i32_1 = arith.constant 0 : i32
    return %arg0, %c0_i32, %c0_i32_0 : i32, i32, i32
  }
  func.func @transform_2(%arg0: i32, %arg1: i32) -> (i32, i32, i32) {
    %c0_i32 = arith.constant 0 : i32
    %c0_i32_0 = arith.constant 0 : i32
    return %arg0, %c0_i32, %arg1 : i32, i32, i32
  }
  func.func @transform_3(%arg0: i32, %arg1: i32) -> (i32, i32, i32) {
    %c0_i32 = arith.constant 0 : i32
    %c0_i32_0 = arith.constant 0 : i32
    return %arg0, %c0_i32, %arg1 : i32, i32, i32
  }
}

</mosaic_0001>

<llo_original>
// kernel: gmodel_forward.5
$region0: #{gmodel_forward.5}
  #allocation0 [shape = 'u32[]', space=smem, size = 0x4, offset = 0x4, fixed_abs, tag = 'smem constant byte address 0x4 - core index']
  #allocation1 [shape = 'u32[144,128]{1,0:T(1,128)}', space=vmem, size = 0x12000, scoped, tag = 'internal scratch']
  %s0 = inlined_call_operand.vmem [shape: f32[8,8], index: 0, kind: input, shape index: {}]
  %s1 = inlined_call_operand.vmem [shape: f32[8,8192], index: 1, kind: input, shape index: {}]
  %s2 = inlined_call_operand.vmem [shape: f32[8,8192], index: 2, kind: output, shape index: {}]
  %s3 = sld [smem:[#allocation0]]
  $region18: #{gmodel_forward.5} parent=0
    _
  %s5 = ssub.s32 1, %s3
  %s6 = scalar_select 0, %s5, %s3
  // Predicated region
  $region2: #{gmodel_forward.5} parent=0 // pred_check
    _
  $region3: #{gmodel_forward.5} parent=0 // pred_check_branch
    %8 = sbr.rel (0) target = $region5
  $region4: #{gmodel_forward.5} parent=0 // pred_region
    _
  $region5: #{gmodel_forward.5} parent=0 // pred_fallthru
    _
  // Predicated region
  $region6: #{gmodel_forward.5} parent=0 // pred_check
    _
  $region7: #{gmodel_forward.5} parent=0 // pred_check_branch
    %10 = sbr.rel (0) target = $region9
  $region8: #{gmodel_forward.5} parent=0 // pred_region
    _
  $region9: #{gmodel_forward.5} parent=0 // pred_fallthru
    _
  %v11 = vld [vmem:[%s0] sm:$0xff]
  %v12 = vld [vmem:[%s1] sm:$0xff]
  %v13 = vld [vmem:[%s1 + $0x8] sm:$0xff]
  %v14 = vld [vmem:[%s1 + $0x10] sm:$0xff]
  %v15 = vld [vmem:[%s1 + $0x18] sm:$0xff]
  %v16 = vld [vmem:[%s1 + $0x20] sm:$0xff]
  %v17 = vld [vmem:[%s1 + $0x28] sm:$0xff]
  %v18 = vld [vmem:[%s1 + $0x30] sm:$0xff]
  %v19 = vld [vmem:[%s1 + $0x38] sm:$0xff]
  %v20 = vld [vmem:[%s1 + $0x40] sm:$0xff]
  %v21 = vld [vmem:[%s1 + $0x48] sm:$0xff]
  %v22 = vld [vmem:[%s1 + $0x50] sm:$0xff]
  %v23 = vld [vmem:[%s1 + $0x58] sm:$0xff]
  %v24 = vld [vmem:[%s1 + $0x60] sm:$0xff]
  %v25 = vld [vmem:[%s1 + $0x68] sm:$0xff]
  %v26 = vld [vmem:[%s1 + $0x70] sm:$0xff]
  %v27 = vld [vmem:[%s1 + $0x78] sm:$0xff]
  %v28 = vld [vmem:[%s1 + $0x80] sm:$0xff]
  %v29 = vld [vmem:[%s1 + $0x88] sm:$0xff]
  %v30 = vld [vmem:[%s1 + $0x90] sm:$0xff]
  %v31 = vld [vmem:[%s1 + $0x98] sm:$0xff]
  %v32 = vld [vmem:[%s1 + $0xa0] sm:$0xff]
  %v33 = vld [vmem:[%s1 + $0xa8] sm:$0xff]
  %v34 = vld [vmem:[%s1 + $0xb0] sm:$0xff]
  %v35 = vld [vmem:[%s1 + $0xb8] sm:$0xff]
  %v36 = vld [vmem:[%s1 + $0xc0] sm:$0xff]
  %v37 = vld [vmem:[%s1 + $0xc8] sm:$0xff]
  %v38 = vld [vmem:[%s1 + $0xd0] sm:$0xff]
  %v39 = vld [vmem:[%s1 + $0xd8] sm:$0xff]
  %v40 = vld [vmem:[%s1 + $0xe0] sm:$0xff]
  %v41 = vld [vmem:[%s1 + $0xe8] sm:$0xff]
  %v42 = vld [vmem:[%s1 + $0xf0] sm:$0xff]
  %v43 = vld [vmem:[%s1 + $0xf8] sm:$0xff]
  %v44 = vld [vmem:[%s1 + $0x100] sm:$0xff]
  %v45 = vld [vmem:[%s1 + $0x108] sm:$0xff]
  %v46 = vld [vmem:[%s1 + $0x110] sm:$0xff]
  %v47 = vld [vmem:[%s1 + $0x118] sm:$0xff]
  %v48 = vld [vmem:[%s1 + $0x120] sm:$0xff]
  %v49 = vld [vmem:[%s1 + $0x128] sm:$0xff]
  %v50 = vld [vmem:[%s1 + $0x130] sm:$0xff]
  %v51 = vld [vmem:[%s1 + $0x138] sm:$0xff]
  %v52 = vld [vmem:[%s1 + $0x140] sm:$0xff]
  %v53 = vld [vmem:[%s1 + $0x148] sm:$0xff]
  %v54 = vld [vmem:[%s1 + $0x150] sm:$0xff]
  %v55 = vld [vmem:[%s1 + $0x158] sm:$0xff]
  %v56 = vld [vmem:[%s1 + $0x160] sm:$0xff]
  %v57 = vld [vmem:[%s1 + $0x168] sm:$0xff]
  %v58 = vld [vmem:[%s1 + $0x170] sm:$0xff]
  %v59 = vld [vmem:[%s1 + $0x178] sm:$0xff]
  %v60 = vld [vmem:[%s1 + $0x180] sm:$0xff]
  %v61 = vld [vmem:[%s1 + $0x188] sm:$0xff]
  %v62 = vld [vmem:[%s1 + $0x190] sm:$0xff]
  %v63 = vld [vmem:[%s1 + $0x198] sm:$0xff]
  %v64 = vld [vmem:[%s1 + $0x1a0] sm:$0xff]
  %v65 = vld [vmem:[%s1 + $0x1a8] sm:$0xff]
  %v66 = vld [vmem:[%s1 + $0x1b0] sm:$0xff]
  %v67 = vld [vmem:[%s1 + $0x1b8] sm:$0xff]
  %v68 = vld [vmem:[%s1 + $0x1c0] sm:$0xff]
  %v69 = vld [vmem:[%s1 + $0x1c8] sm:$0xff]
  %v70 = vld [vmem:[%s1 + $0x1d0] sm:$0xff]
  %v71 = vld [vmem:[%s1 + $0x1d8] sm:$0xff]
  %v72 = vld [vmem:[%s1 + $0x1e0] sm:$0xff]
  %v73 = vld [vmem:[%s1 + $0x1e8] sm:$0xff]
  %v74 = vld [vmem:[%s1 + $0x1f0] sm:$0xff]
  %v75 = vld [vmem:[%s1 + $0x1f8] sm:$0xff]
  %vm76 = vcmask 64512
  %v78 = vsel %vm76, %v11, 0
  %80 = vmatprep.subr.mxu0 %v13
  %81 = vmatpush1.msra.mxu0 %v12
  %82 = vmatprep.subr.mxu0 0.0
  %83 = vmatpush1.msra.mxu0 0.0
  %84 = vmatprep.subr.mxu0 0.0
  %85 = vmatpush1.msra.mxu0 0.0
  %86 = vmatprep.subr.mxu0 0.0
  %87 = vmatpush1.msra.mxu0 0.0
  %88 = vmatprep.subr.mxu0 0.0
  %89 = vmatpush1.msra.mxu0 0.0
  %90 = vmatprep.subr.mxu0 0.0
  %91 = vmatpush1.msra.mxu0 0.0
  %92 = vmatprep.subr.mxu0 0.0
  %93 = vmatpush1.msra.mxu0 0.0
  %94 = vmatprep.subr.mxu0 0.0
  %95 = vmatpush1.msra.mxu0 0.0
  %96 = vmatprep.subr.mxu0 0.0
  %97 = vmatpush1.msra.mxu0 0.0
  %98 = vmatprep.subr.mxu0 0.0
  %99 = vmatpush1.msra.mxu0 0.0
  %100 = vmatprep.subr.mxu0 0.0
  %101 = vmatpush1.msra.mxu0 0.0
  %102 = vmatprep.subr.mxu0 0.0
  %103 = vmatpush1.msra.mxu0 0.0
  %104 = vmatprep.subr.mxu0 0.0
  %105 = vmatpush1.msra.mxu0 0.0
  %106 = vmatprep.subr.mxu0 0.0
  %107 = vmatpush1.msra.mxu0 0.0
  %108 = vmatprep.subr.mxu0 0.0
  %109 = vmatpush1.msra.mxu0 0.0
  %110 = vmatprep.subr.mxu0 0.0
  %111 = vmatpush1.msra.mxu0 0.0
  %112 = vmatprep.subr.mxu0 0.0
  %113 = vmatpush1.msra.mxu0 0.0
  %114 = vmatprep.subr.mxu0 0.0
  %115 = vmatpush1.msra.mxu0 0.0
  %116 = vmatprep.subr.mxu0 0.0
  %117 = vmatpush1.msra.mxu0 0.0
  %118 = vmatprep.subr.mxu0 0.0
  %119 = vmatpush1.msra.mxu0 0.0
  %120 = vmatprep.subr.mxu0 0.0
  %121 = vmatpush1.msra.mxu0 0.0
  %122 = vmatprep.subr.mxu0 0.0
  %123 = vmatpush1.msra.mxu0 0.0
  %124 = vmatprep.subr.mxu0 0.0
  %125 = vmatpush1.msra.mxu0 0.0
  %126 = vmatprep.subr.mxu0 0.0
  %127 = vmatpush1.msra.mxu0 0.0
  %128 = vmatprep.subr.mxu0 0.0
  %129 = vmatpush1.msra.mxu0 0.0
  %130 = vmatprep.subr.mxu0 0.0
  %131 = vmatpush1.msra.mxu0 0.0
  %132 = vmatprep.subr.mxu0 0.0
  %133 = vmatpush1.msra.mxu0 0.0
  %134 = vmatprep.subr.mxu0 0.0
  %135 = vmatpush1.msra.mxu0 0.0
  %136 = vmatprep.subr.mxu0 0.0
  %137 = vmatpush1.msra.mxu0 0.0
  %138 = vmatprep.subr.mxu0 0.0
  %139 = vmatpush1.msra.mxu0 0.0
  %140 = vmatprep.subr.mxu0 0.0
  %141 = vmatpush1.msra.mxu0 0.0
  %142 = vmatprep.subr.mxu0 0.0
  %143 = vmatpush1.msra.mxu0 0.0
  %144 = vmatprep.mubr.f32.mxu0 0.0
  %145 = vmatmul.mubr.f32.gmra.mrb[0].mxu0 %v78
  %v146 = vpop.f32.mrb[0].mxu0
  %v147 = vadd.f32 0.0, %v146
  %v148 = vpop.f32.mrb[0].mxu0
  %v149 = vadd.f32 0.0, %v148
  %150 = vdwg.mxu0
  %151 = vmatprep.subr.mxu0 %v15
  %152 = vmatpush1.msra.mxu0 %v14
  %153 = vmatprep.subr.mxu0 0.0
  %154 = vmatpush1.msra.mxu0 0.0
  %155 = vmatprep.subr.mxu0 0.0
  %156 = vmatpush1.msra.mxu0 0.0
  %157 = vmatprep.subr.mxu0 0.0
  %158 = vmatpush1.msra.mxu0 0.0
  %159 = vmatprep.subr.mxu0 0.0
  %160 = vmatpush1.msra.mxu0 0.0
  %161 = vmatprep.subr.mxu0 0.0
  %162 = vmatpush1.msra.mxu0 0.0
  %163 = vmatprep.subr.mxu0 0.0
  %164 = vmatpush1.msra.mxu0 0.0
  %165 = vmatprep.subr.mxu0 0.0
  %166 = vmatpush1.msra.mxu0 0.0
  %167 = vmatprep.subr.mxu0 0.0
  %168 = vmatpush1.msra.mxu0 0.0
  %169 = vmatprep.subr.mxu0 0.0
  %170 = vmatpush1.msra.mxu0 0.0
  %171 = vmatprep.subr.mxu0 0.0
  %172 = vmatpush1.msra.mxu0 0.0
  %173 = vmatprep.subr.mxu0 0.0
  %174 = vmatpush1.msra.mxu0 0.0
  %175 = vmatprep.subr.mxu0 0.0
  %176 = vmatpush1.msra.mxu0 0.0
  %177 = vmatprep.subr.mxu0 0.0
  %178 = vmatpush1.msra.mxu0 0.0
  %179 = vmatprep.subr.mxu0 0.0
  %180 = vmatpush1.msra.mxu0 0.0
  %181 = vmatprep.subr.mxu0 0.0
  %182 = vmatpush1.msra.mxu0 0.0
  %183 = vmatprep.subr.mxu0 0.0
  %184 = vmatpush1.msra.mxu0 0.0
  %185 = vmatprep.subr.mxu0 0.0
  %186 = vmatpush1.msra.mxu0 0.0
  %187 = vmatprep.subr.mxu0 0.0
  %188 = vmatpush1.msra.mxu0 0.0
  %189 = vmatprep.subr.mxu0 0.0
  %190 = vmatpush1.msra.mxu0 0.0
  %191 = vmatprep.subr.mxu0 0.0
  %192 = vmatpush1.msra.mxu0 0.0
  %193 = vmatprep.subr.mxu0 0.0
  %194 = vmatpush1.msra.mxu0 0.0
  %195 = vmatprep.subr.mxu0 0.0
  %196 = vmatpush1.msra.mxu0 0.0
  %197 = vmatprep.subr.mxu0 0.0
  %198 = vmatpush1.msra.mxu0 0.0
  %199 = vmatprep.subr.mxu0 0.0
  %200 = vmatpush1.msra.mxu0 0.0
  %201 = vmatprep.subr.mxu0 0.0
  %202 = vmatpush1.msra.mxu0 0.0
  %203 = vmatprep.subr.mxu0 0.0
  %204 = vmatpush1.msra.mxu0 0.0
  %205 = vmatprep.subr.mxu0 0.0
  %206 = vmatpush1.msra.mxu0 0.0
  %207 = vmatprep.subr.mxu0 0.0
  %208 = vmatpush1.msra.mxu0 0.0
  %209 = vmatprep.subr.mxu0 0.0
  %210 = vmatpush1.msra.mxu0 0.0
  %211 = vmatprep.subr.mxu0 0.0
  %212 = vmatpush1.msra.mxu0 0.0
  %213 = vmatprep.subr.mxu0 0.0
  %214 = vmatpush1.msra.mxu0 0.0
  %215 = vmatprep.mubr.f32.mxu0 0.0
  %216 = vmatmul.mubr.f32.gmra.mrb[0].mxu0 %v78
  %v217 = vpop.f32.mrb[0].mxu0
  %v218 = vadd.f32 0.0, %v217
  %v219 = vpop.f32.mrb[0].mxu0
  %v220 = vadd.f32 0.0, %v219
  %221 = vdwg.mxu0
  %222 = vmatprep.subr.mxu0 %v17
  %223 = vmatpush1.msra.mxu0 %v16
  %224 = vmatprep.subr.mxu0 0.0
  %225 = vmatpush1.msra.mxu0 0.0
  %226 = vmatprep.subr.mxu0 0.0
  %227 = vmatpush1.msra.mxu0 0.0
  %228 = vmatprep.subr.mxu0 0.0
  %229 = vmatpush1.msra.mxu0 0.0
  %230 = vmatprep.subr.mxu0 0.0
  %231 = vmatpush1.msra.mxu0 0.0
  %232 = vmatprep.subr.mxu0 0.0
  %233 = vmatpush1.msra.mxu0 0.0
  %234 = vmatprep.subr.mxu0 0.0
  %235 = vmatpush1.msra.mxu0 0.0
  %236 = vmatprep.subr.mxu0 0.0
  %237 = vmatpush1.msra.mxu0 0.0
  %238 = vmatprep.subr.mxu0 0.0
  %239 = vmatpush1.msra.mxu0 0.0
  %240 = vmatprep.subr.mxu0 0.0
  %241 = vmatpush1.msra.mxu0 0.0
  %242 = vmatprep.subr.mxu0 0.0
  %243 = vmatpush1.msra.mxu0 0.0
  %244 = vmatprep.subr.mxu0 0.0
  %245 = vmatpush1.msra.mxu0 0.0
  %246 = vmatprep.subr.mxu0 0.0
  %247 = vmatpush1.msra.mxu0 0.0
  %248 = vmatprep.subr.mxu0 0.0
  %249 = vmatpush1.msra.mxu0 0.0
  %250 = vmatprep.subr.mxu0 0.0
  %251 = vmatpush1.msra.mxu0 0.0
  %252 = vmatprep.subr.mxu0 0.0
  %253 = vmatpush1.msra.mxu0 0.0
  %254 = vmatprep.subr.mxu0 0.0
  %255 = vmatpush1.msra.mxu0 0.0
  %256 = vmatprep.subr.mxu0 0.0
  %257 = vmatpush1.msra.mxu0 0.0
  %258 = vmatprep.subr.mxu0 0.0
  %259 = vmatpush1.msra.mxu0 0.0
  %260 = vmatprep.subr.mxu0 0.0
  %261 = vmatpush1.msra.mxu0 0.0
  %262 = vmatprep.subr.mxu0 0.0
  %263 = vmatpush1.msra.mxu0 0.0
  %264 = vmatprep.subr.mxu0 0.0
  %265 = vmatpush1.msra.mxu0 0.0
  %266 = vmatprep.subr.mxu0 0.0
  %267 = vmatpush1.msra.mxu0 0.0
  %268 = vmatprep.subr.mxu0 0.0
  %269 = vmatpush1.msra.mxu0 0.0
  %270 = vmatprep.subr.mxu0 0.0
  %271 = vmatpush1.msra.mxu0 0.0
  %272 = vmatprep.subr.mxu0 0.0
  %273 = vmatpush1.msra.mxu0 0.0
  %274 = vmatprep.subr.mxu0 0.0
  %275 = vmatpush1.msra.mxu0 0.0
  %276 = vmatprep.subr.mxu0 0.0
  %277 = vmatpush1.msra.mxu0 0.0
  %278 = vmatprep.subr.mxu0 0.0
  %279 = vmatpush1.msra.mxu0 0.0
  %280 = vmatprep.subr.mxu0 0.0
  %281 = vmatpush1.msra.mxu0 0.0
  %282 = vmatprep.subr.mxu0 0.0
  %283 = vmatpush1.msra.mxu0 0.0
  %284 = vmatprep.subr.mxu0 0.0
  %285 = vmatpush1.msra.mxu0 0.0
  %286 = vmatprep.mubr.f32.mxu0 0.0
  %287 = vmatmul.mubr.f32.gmra.mrb[0].mxu0 %v78
  %v288 = vpop.f32.mrb[0].mxu0
  %v289 = vadd.f32 0.0, %v288
  %v290 = vpop.f32.mrb[0].mxu0
  %v291 = vadd.f32 0.0, %v290
  %292 = vdwg.mxu0
  %293 = vmatprep.subr.mxu0 %v19
  %294 = vmatpush1.msra.mxu0 %v18
  %295 = vmatprep.subr.mxu0 0.0
  %296 = vmatpush1.msra.mxu0 0.0
  %297 = vmatprep.subr.mxu0 0.0
  %298 = vmatpush1.msra.mxu0 0.0
  %299 = vmatprep.subr.mxu0 0.0
  %300 = vmatpush1.msra.mxu0 0.0
  %301 = vmatprep.subr.mxu0 0.0
  %302 = vmatpush1.msra.mxu0 0.0
  %303 = vmatprep.subr.mxu0 0.0
  %304 = vmatpush1.msra.mxu0 0.0
  %305 = vmatprep.subr.mxu0 0.0
  %306 = vmatpush1.msra.mxu0 0.0
  %307 = vmatprep.subr.mxu0 0.0
  %308 = vmatpush1.msra.mxu0 0.0
  %309 = vmatprep.subr.mxu0 0.0
  %310 = vmatpush1.msra.mxu0 0.0
  %311 = vmatprep.subr.mxu0 0.0
  %312 = vmatpush1.msra.mxu0 0.0
  %313 = vmatprep.subr.mxu0 0.0
  %314 = vmatpush1.msra.mxu0 0.0
  %315 = vmatprep.subr.mxu0 0.0
  %316 = vmatpush1.msra.mxu0 0.0
  %317 = vmatprep.subr.mxu0 0.0
  %318 = vmatpush1.msra.mxu0 0.0
  %319 = vmatprep.subr.mxu0 0.0
  %320 = vmatpush1.msra.mxu0 0.0
  %321 = vmatprep.subr.mxu0 0.0
  %322 = vmatpush1.msra.mxu0 0.0
  %323 = vmatprep.subr.mxu0 0.0
  %324 = vmatpush1.msra.mxu0 0.0
  %325 = vmatprep.subr.mxu0 0.0
  %326 = vmatpush1.msra.mxu0 0.0
  %327 = vmatprep.subr.mxu0 0.0
  %328 = vmatpush1.msra.mxu0 0.0
  %329 = vmatprep.subr.mxu0 0.0
  %330 = vmatpush1.msra.mxu0 0.0
  %331 = vmatprep.subr.mxu0 0.0
  %332 = vmatpush1.msra.mxu0 0.0
  %333 = vmatprep.subr.mxu0 0.0
  %334 = vmatpush1.msra.mxu0 0.0
  %335 = vmatprep.subr.mxu0 0.0
  %336 = vmatpush1.msra.mxu0 0.0
  %337 = vmatprep.subr.mxu0 0.0
  %338 = vmatpush1.msra.mxu0 0.0
  %339 = vmatprep.subr.mxu0 0.0
  %340 = vmatpush1.msra.mxu0 0.0
  %341 = vmatprep.subr.mxu0 0.0
  %342 = vmatpush1.msra.mxu0 0.0
  %343 = vmatprep.subr.mxu0 0.0
  %344 = vmatpush1.msra.mxu0 0.0
  %345 = vmatprep.subr.mxu0 0.0
  %346 = vmatpush1.msra.mxu0 0.0
  %347 = vmatprep.subr.mxu0 0.0
  %348 = vmatpush1.msra.mxu0 0.0
  %349 = vmatprep.subr.mxu0 0.0
  %350 = vmatpush1.msra.mxu0 0.0
  %351 = vmatprep.subr.mxu0 0.0
  %352 = vmatpush1.msra.mxu0 0.0
  %353 = vmatprep.subr.mxu0 0.0
  %354 = vmatpush1.msra.mxu0 0.0
  %355 = vmatprep.subr.mxu0 0.0
  %356 = vmatpush1.msra.mxu0 0.0
  %357 = vmatprep.mubr.f32.mxu0 0.0
  %358 = vmatmul.mubr.f32.gmra.mrb[0].mxu0 %v78
  %v359 = vpop.f32.mrb[0].mxu0
  %v360 = vadd.f32 0.0, %v359
  %v361 = vpop.f32.mrb[0].mxu0
  %v362 = vadd.f32 0.0, %v361
  %363 = vdwg.mxu0
  %364 = vmatprep.subr.mxu0 %v21
  %365 = vmatpush1.msra.mxu0 %v20
  %366 = vmatprep.subr.mxu0 0.0
  %367 = vmatpush1.msra.mxu0 0.0
  %368 = vmatprep.subr.mxu0 0.0
  %369 = vmatpush1.msra.mxu0 0.0
  %370 = vmatprep.subr.mxu0 0.0
  %371 = vmatpush1.msra.mxu0 0.0
  %372 = vmatprep.subr.mxu0 0.0
  %373 = vmatpush1.msra.mxu0 0.0
  %374 = vmatprep.subr.mxu0 0.0
  %375 = vmatpush1.msra.mxu0 0.0
  %376 = vmatprep.subr.mxu0 0.0
  %377 = vmatpush1.msra.mxu0 0.0
  %378 = vmatprep.subr.mxu0 0.0
  %379 = vmatpush1.msra.mxu0 0.0
  %380 = vmatprep.subr.mxu0 0.0
  %381 = vmatpush1.msra.mxu0 0.0
  %382 = vmatprep.subr.mxu0 0.0
  %383 = vmatpush1.msra.mxu0 0.0
  %384 = vmatprep.subr.mxu0 0.0
  %385 = vmatpush1.msra.mxu0 0.0
  %386 = vmatprep.subr.mxu0 0.0
  %387 = vmatpush1.msra.mxu0 0.0
  %388 = vmatprep.subr.mxu0 0.0
  %389 = vmatpush1.msra.mxu0 0.0
  %390 = vmatprep.subr.mxu0 0.0
  %391 = vmatpush1.msra.mxu0 0.0
  %392 = vmatprep.subr.mxu0 0.0
  %393 = vmatpush1.msra.mxu0 0.0
  %394 = vmatprep.subr.mxu0 0.0
  %395 = vmatpush1.msra.mxu0 0.0
  %396 = vmatprep.subr.mxu0 0.0
  %397 = vmatpush1.msra.mxu0 0.0
  %398 = vmatprep.subr.mxu0 0.0
  %399 = vmatpush1.msra.mxu0 0.0
  %400 = vmatprep.subr.mxu0 0.0
  %401 = vmatpush1.msra.mxu0 0.0
  %402 = vmatprep.subr.mxu0 0.0
  %403 = vmatpush1.msra.mxu0 0.0
  %404 = vmatprep.subr.mxu0 0.0
  %405 = vmatpush1.msra.mxu0 0.0
  %406 = vmatprep.subr.mxu0 0.0
  %407 = vmatpush1.msra.mxu0 0.0
  %408 = vmatprep.subr.mxu0 0.0
  %409 = vmatpush1.msra.mxu0 0.0
  %410 = vmatprep.subr.mxu0 0.0
  %411 = vmatpush1.msra.mxu0 0.0
  %412 = vmatprep.subr.mxu0 0.0
  %413 = vmatpush1.msra.mxu0 0.0
  %414 = vmatprep.subr.mxu0 0.0
  %415 = vmatpush1.msra.mxu0 0.0
  %416 = vmatprep.subr.mxu0 0.0
  %417 = vmatpush1.msra.mxu0 0.0
  %418 = vmatprep.subr.mxu0 0.0
  %419 = vmatpush1.msra.mxu0 0.0
  %420 = vmatprep.subr.mxu0 0.0
  %421 = vmatpush1.msra.mxu0 0.0
  %422 = vmatprep.subr.mxu0 0.0
  %423 = vmatpush1.msra.mxu0 0.0
  %424 = vmatprep.subr.mxu0 0.0
  %425 = vmatpush1.msra.mxu0 0.0
  %426 = vmatprep.subr.mxu0 0.0
  %427 = vmatpush1.msra.mxu0 0.0
  %428 = vmatprep.mubr.f32.mxu0 0.0
  %429 = vmatmul.mubr.f32.gmra.mrb[0].mxu0 %v78
  %v430 = vpop.f32.mrb[0].mxu0
  %v431 = vadd.f32 0.0, %v430
  %v432 = vpop.f32.mrb[0].mxu0
  %v433 = vadd.f32 0.0, %v432
  %434 = vdwg.mxu0
  %435 = vmatprep.subr.mxu0 %v23
  %436 = vmatpush1.msra.mxu0 %v22
  %437 = vmatprep.subr.mxu0 0.0
  %438 = vmatpush1.msra.mxu0 0.0
  %439 = vmatprep.subr.mxu0 0.0
  %440 = vmatpush1.msra.mxu0 0.0
  %441 = vmatprep.subr.mxu0 0.0
  %442 = vmatpush1.msra.mxu0 0.0
  %443 = vmatprep.subr.mxu0 0.0
  %444 = vmatpush1.msra.mxu0 0.0
  %445 = vmatprep.subr.mxu0 0.0
  %446 = vmatpush1.msra.mxu0 0.0
  %447 = vmatprep.subr.mxu0 0.0
  %448 = vmatpush1.msra.mxu0 0.0
  %449 = vmatprep.subr.mxu0 0.0
  %450 = vmatpush1.msra.mxu0 0.0
  %451 = vmatprep.subr.mxu0 0.0
  %452 = vmatpush1.msra.mxu0 0.0
  %453 = vmatprep.subr.mxu0 0.0
  %454 = vmatpush1.msra.mxu0 0.0
  %455 = vmatprep.subr.mxu0 0.0
  %456 = vmatpush1.msra.mxu0 0.0
  %457 = vmatprep.subr.mxu0 0.0
  %458 = vmatpush1.msra.mxu0 0.0
  %459 = vmatprep.subr.mxu0 0.0
  %460 = vmatpush1.msra.mxu0 0.0
  %461 = vmatprep.subr.mxu0 0.0
  %462 = vmatpush1.msra.mxu0 0.0
  %463 = vmatprep.subr.mxu0 0.0
  %464 = vmatpush1.msra.mxu0 0.0
  %465 = vmatprep.subr.mxu0 0.0
  %466 = vmatpush1.msra.mxu0 0.0
  %467 = vmatprep.subr.mxu0 0.0
  %468 = vmatpush1.msra.mxu0 0.0
  %469 = vmatprep.subr.mxu0 0.0
  %470 = vmatpush1.msra.mxu0 0.0
  %471 = vmatprep.subr.mxu0 0.0
  %472 = vmatpush1.msra.mxu0 0.0
  %473 = vmatprep.subr.mxu0 0.0
  %474 = vmatpush1.msra.mxu0 0.0
  %475 = vmatprep.subr.mxu0 0.0
  %476 = vmatpush1.msra.mxu0 0.0
  %477 = vmatprep.subr.mxu0 0.0
  %478 = vmatpush1.msra.mxu0 0.0
  %479 = vmatprep.subr.mxu0 0.0
  %480 = vmatpush1.msra.mxu0 0.0
  %481 = vmatprep.subr.mxu0 0.0
  %482 = vmatpush1.msra.mxu0 0.0
  %483 = vmatprep.subr.mxu0 0.0
  %484 = vmatpush1.msra.mxu0 0.0
  %485 = vmatprep.subr.mxu0 0.0
  %486 = vmatpush1.msra.mxu0 0.0
  %487 = vmatprep.subr.mxu0 0.0
  %488 = vmatpush1.msra.mxu0 0.0
  %489 = vmatprep.subr.mxu0 0.0
  %490 = vmatpush1.msra.mxu0 0.0
  %491 = vmatprep.subr.mxu0 0.0
  %492 = vmatpush1.msra.mxu0 0.0
  %493 = vmatprep.subr.mxu0 0.0
  %494 = vmatpush1.msra.mxu0 0.0
  %495 = vmatprep.subr.mxu0 0.0
  %496 = vmatpush1.msra.mxu0 0.0
  %497 = vmatprep.subr.mxu0 0.0
  %498 = vmatpush1.msra.mxu0 0.0
  %499 = vmatprep.mubr.f32.mxu0 0.0
  %500 = vmatmul.mubr.f32.gmra.mrb[0].mxu0 %v78
  %v501 = vpop.f32.mrb[0].mxu0
  %v502 = vadd.f32 0.0, %v501
  %v503 = vpop.f32.mrb[0].mxu0
  %v504 = vadd.f32 0.0, %v503
  %505 = vdwg.mxu0
  %506 = vmatprep.subr.mxu0 %v25
  %507 = vmatpush1.msra.mxu0 %v24
  %508 = vmatprep.subr.mxu0 0.0
  %509 = vmatpush1.msra.mxu0 0.0
  %510 = vmatprep.subr.mxu0 0.0
  %511 = vmatpush1.msra.mxu0 0.0
  %512 = vmatprep.subr.mxu0 0.0
  %513 = vmatpush1.msra.mxu0 0.0
  %514 = vmatprep.subr.mxu0 0.0
  %515 = vmatpush1.msra.mxu0 0.0
  %516 = vmatprep.subr.mxu0 0.0
  %517 = vmatpush1.msra.mxu0 0.0
  %518 = vmatprep.subr.mxu0 0.0
  %519 = vmatpush1.msra.mxu0 0.0
  %520 = vmatprep.subr.mxu0 0.0
  %521 = vmatpush1.msra.mxu0 0.0
  %522 = vmatprep.subr.mxu0 0.0
  %523 = vmatpush1.msra.mxu0 0.0
  %524 = vmatprep.subr.mxu0 0.0
  %525 = vmatpush1.msra.mxu0 0.0
  %526 = vmatprep.subr.mxu0 0.0
  %527 = vmatpush1.msra.mxu0 0.0
  %528 = vmatprep.subr.mxu0 0.0
  %529 = vmatpush1.msra.mxu0 0.0
  %530 = vmatprep.subr.mxu0 0.0
  %531 = vmatpush1.msra.mxu0 0.0
  %532 = vmatprep.subr.mxu0 0.0
  %533 = vmatpush1.msra.mxu0 0.0
  %534 = vmatprep.subr.mxu0 0.0
  %535 = vmatpush1.msra.mxu0 0.0
  %536 = vmatprep.subr.mxu0 0.0
  %537 = vmatpush1.msra.mxu0 0.0
  %538 = vmatprep.subr.mxu0 0.0
  %539 = vmatpush1.msra.mxu0 0.0
  %540 = vmatprep.subr.mxu0 0.0
  %541 = vmatpush1.msra.mxu0 0.0
  %542 = vmatprep.subr.mxu0 0.0
  %543 = vmatpush1.msra.mxu0 0.0
  %544 = vmatprep.subr.mxu0 0.0
  %545 = vmatpush1.msra.mxu0 0.0
  %546 = vmatprep.subr.mxu0 0.0
  %547 = vmatpush1.msra.mxu0 0.0
  %548 = vmatprep.subr.mxu0 0.0
  %549 = vmatpush1.msra.mxu0 0.0
  %550 = vmatprep.subr.mxu0 0.0
  %551 = vmatpush1.msra.mxu0 0.0
  %552 = vmatprep.subr.mxu0 0.0
  %553 = vmatpush1.msra.mxu0 0.0
  %554 = vmatprep.subr.mxu0 0.0
  %555 = vmatpush1.msra.mxu0 0.0
  %556 = vmatprep.subr.mxu0 0.0
  %557 = vmatpush1.msra.mxu0 0.0
  %558 = vmatprep.subr.mxu0 0.0
  %559 = vmatpush1.msra.mxu0 0.0
  %560 = vmatprep.subr.mxu0 0.0
  %561 = vmatpush1.msra.mxu0 0.0
  %562 = vmatprep.subr.mxu0 0.0
  %563 = vmatpush1.msra.mxu0 0.0
  %564 = vmatprep.subr.mxu0 0.0
  %565 = vmatpush1.msra.mxu0 0.0
  %566 = vmatprep.subr.mxu0 0.0
  %567 = vmatpush1.msra.mxu0 0.0
  %568 = vmatprep.subr.mxu0 0.0
  %569 = vmatpush1.msra.mxu0 0.0
  %570 = vmatprep.mubr.f32.mxu0 0.0
  %571 = vmatmul.mubr.f32.gmra.mrb[0].mxu0 %v78
  %v572 = vpop.f32.mrb[0].mxu0
  %v573 = vadd.f32 0.0, %v572
  %v574 = vpop.f32.mrb[0].mxu0
  %v575 = vadd.f32 0.0, %v574
  %576 = vdwg.mxu0
  %577 = vmatprep.subr.mxu0 %v27
  %578 = vmatpush1.msra.mxu0 %v26
  %579 = vmatprep.subr.mxu0 0.0
  %580 = vmatpush1.msra.mxu0 0.0
  %581 = vmatprep.subr.mxu0 0.0
  %582 = vmatpush1.msra.mxu0 0.0
  %583 = vmatprep.subr.mxu0 0.0
  %584 = vmatpush1.msra.mxu0 0.0
  %585 = vmatprep.subr.mxu0 0.0
  %586 = vmatpush1.msra.mxu0 0.0
  %587 = vmatprep.subr.mxu0 0.0
  %588 = vmatpush1.msra.mxu0 0.0
  %589 = vmatprep.subr.mxu0 0.0
  %590 = vmatpush1.msra.mxu0 0.0
  %591 = vmatprep.subr.mxu0 0.0
  %592 = vmatpush1.msra.mxu0 0.0
  %593 = vmatprep.subr.mxu0 0.0
  %594 = vmatpush1.msra.mxu0 0.0
  %595 = vmatprep.subr.mxu0 0.0
  %596 = vmatpush1.msra.mxu0 0.0
  %597 = vmatprep.subr.mxu0 0.0
  %598 = vmatpush1.msra.mxu0 0.0
  %599 = vmatprep.subr.mxu0 0.0
  %600 = vmatpush1.msra.mxu0 0.0
  %601 = vmatprep.subr.mxu0 0.0
  %602 = vmatpush1.msra.mxu0 0.0
  %603 = vmatprep.subr.mxu0 0.0
  %604 = vmatpush1.msra.mxu0 0.0
  %605 = vmatprep.subr.mxu0 0.0
  %606 = vmatpush1.msra.mxu0 0.0
  %607 = vmatprep.subr.mxu0 0.0
  %608 = vmatpush1.msra.mxu0 0.0
  %609 = vmatprep.subr.mxu0 0.0
  %610 = vmatpush1.msra.mxu0 0.0
  %611 = vmatprep.subr.mxu0 0.0
  %612 = vmatpush1.msra.mxu0 0.0
  %613 = vmatprep.subr.mxu0 0.0
  %614 = vmatpush1.msra.mxu0 0.0
  %615 = vmatprep.subr.mxu0 0.0
  %616 = vmatpush1.msra.mxu0 0.0
  %617 = vmatprep.subr.mxu0 0.0
  %618 = vmatpush1.msra.mxu0 0.0
  %619 = vmatprep.subr.mxu0 0.0
  %620 = vmatpush1.msra.mxu0 0.0
  %621 = vmatprep.subr.mxu0 0.0
  %622 = vmatpush1.msra.mxu0 0.0
  %623 = vmatprep.subr.mxu0 0.0
  %624 = vmatpush1.msra.mxu0 0.0
  %625 = vmatprep.subr.mxu0 0.0
  %626 = vmatpush1.msra.mxu0 0.0
  %627 = vmatprep.subr.mxu0 0.0
  %628 = vmatpush1.msra.mxu0 0.0
  %629 = vmatprep.subr.mxu0 0.0
  %630 = vmatpush1.msra.mxu0 0.0
  %631 = vmatprep.subr.mxu0 0.0
  %632 = vmatpush1.msra.mxu0 0.0
  %633 = vmatprep.subr.mxu0 0.0
  %634 = vmatpush1.msra.mxu0 0.0
  %635 = vmatprep.subr.mxu0 0.0
  %636 = vmatpush1.msra.mxu0 0.0
  %637 = vmatprep.subr.mxu0 0.0
  %638 = vmatpush1.msra.mxu0 0.0
  %639 = vmatprep.subr.mxu0 0.0
  %640 = vmatpush1.msra.mxu0 0.0
  %641 = vmatprep.mubr.f32.mxu0 0.0
  %642 = vmatmul.mubr.f32.gmra.mrb[0].mxu0 %v78
  %v643 = vpop.f32.mrb[0].mxu0
  %v644 = vadd.f32 0.0, %v643
  %v645 = vpop.f32.mrb[0].mxu0
  %v646 = vadd.f32 0.0, %v645
  %647 = vdwg.mxu0
  %648 = vmatprep.subr.mxu0 %v29
  %649 = vmatpush1.msra.mxu0 %v28
  %650 = vmatprep.subr.mxu0 0.0
  %651 = vmatpush1.msra.mxu0 0.0
  %652 = vmatprep.subr.mxu0 0.0
  %653 = vmatpush1.msra.mxu0 0.0
  %654 = vmatprep.subr.mxu0 0.0
  %655 = vmatpush1.msra.mxu0 0.0
  %656 = vmatprep.subr.mxu0 0.0
  %657 = vmatpush1.msra.mxu0 0.0
  %658 = vmatprep.subr.mxu0 0.0
  %659 = vmatpush1.msra.mxu0 0.0
  %660 = vmatprep.subr.mxu0 0.0
  %661 = vmatpush1.msra.mxu0 0.0
  %662 = vmatprep.subr.mxu0 0.0
  %663 = vmatpush1.msra.mxu0 0.0
  %664 = vmatprep.subr.mxu0 0.0
  %665 = vmatpush1.msra.mxu0 0.0
  %666 = vmatprep.subr.mxu0 0.0
  %667 = vmatpush1.msra.mxu0 0.0
  %668 = vmatprep.subr.mxu0 0.0
  %669 = vmatpush1.msra.mxu0 0.0
  %670 = vmatprep.subr.mxu0 0.0
  %671 = vmatpush1.msra.mxu0 0.0
  %672 = vmatprep.subr.mxu0 0.0
  %673 = vmatpush1.msra.mxu0 0.0
  %674 = vmatprep.subr.mxu0 0.0
  %675 = vmatpush1.msra.mxu0 0.0
  %676 = vmatprep.subr.mxu0 0.0
  %677 = vmatpush1.msra.mxu0 0.0
  %678 = vmatprep.subr.mxu0 0.0
  %679 = vmatpush1.msra.mxu0 0.0
  %680 = vmatprep.subr.mxu0 0.0
  %681 = vmatpush1.msra.mxu0 0.0
  %682 = vmatprep.subr.mxu0 0.0
  %683 = vmatpush1.msra.mxu0 0.0
  %684 = vmatprep.subr.mxu0 0.0
  %685 = vmatpush1.msra.mxu0 0.0
  %686 = vmatprep.subr.mxu0 0.0
  %687 = vmatpush1.msra.mxu0 0.0
  %688 = vmatprep.subr.mxu0 0.0
  %689 = vmatpush1.msra.mxu0 0.0
  %690 = vmatprep.subr.mxu0 0.0
  %691 = vmatpush1.msra.mxu0 0.0
  %692 = vmatprep.subr.mxu0 0.0
  %693 = vmatpush1.msra.mxu0 0.0
  %694 = vmatprep.subr.mxu0 0.0
  %695 = vmatpush1.msra.mxu0 0.0
  %696 = vmatprep.subr.mxu0 0.0
  %697 = vmatpush1.msra.mxu0 0.0
  %698 = vmatprep.subr.mxu0 0.0
  %699 = vmatpush1.msra.mxu0 0.0
  %700 = vmatprep.subr.mxu0 0.0
  %701 = vmatpush1.msra.mxu0 0.0
  %702 = vmatprep.subr.mxu0 0.0
  %703 = vmatpush1.msra.mxu0 0.0
  %704 = vmatprep.subr.mxu0 0.0
  %705 = vmatpush1.msra.mxu0 0.0
  %706 = vmatprep.subr.mxu0 0.0
  %707 = vmatpush1.msra.mxu0 0.0
  %708 = vmatprep.subr.mxu0 0.0
  %709 = vmatpush1.msra.mxu0 0.0
  %710 = vmatprep.subr.mxu0 0.0
  %711 = vmatpush1.msra.mxu0 0.0
  %712 = vmatprep.mubr.f32.mxu0 0.0
  %713 = vmatmul.mubr.f32.gmra.mrb[0].mxu0 %v78
  %v714 = vpop.f32.mrb[0].mxu0
  %v715 = vadd.f32 0.0, %v714
  %v716 = vpop.f32.mrb[0].mxu0
  %v717 = vadd.f32 0.0, %v716
  %718 = vdwg.mxu0
  %719 = vmatprep.subr.mxu0 %v31
  %720 = vmatpush1.msra.mxu0 %v30
  %721 = vmatprep.subr.mxu0 0.0
  %722 = vmatpush1.msra.mxu0 0.0
  %723 = vmatprep.subr.mxu0 0.0
  %724 = vmatpush1.msra.mxu0 0.0
  %725 = vmatprep.subr.mxu0 0.0
  %726 = vmatpush1.msra.mxu0 0.0
  %727 = vmatprep.subr.mxu0 0.0
  %728 = vmatpush1.msra.mxu0 0.0
  %729 = vmatprep.subr.mxu0 0.0
  %730 = vmatpush1.msra.mxu0 0.0
  %731 = vmatprep.subr.mxu0 0.0
  %732 = vmatpush1.msra.mxu0 0.0
  %733 = vmatprep.subr.mxu0 0.0
  %734 = vmatpush1.msra.mxu0 0.0
  %735 = vmatprep.subr.mxu0 0.0
  %736 = vmatpush1.msra.mxu0 0.0
  %737 = vmatprep.subr.mxu0 0.0
  %738 = vmatpush1.msra.mxu0 0.0
  %739 = vmatprep.subr.mxu0 0.0
  %740 = vmatpush1.msra.mxu0 0.0
  %741 = vmatprep.subr.mxu0 0.0
  %742 = vmatpush1.msra.mxu0 0.0
  %743 = vmatprep.subr.mxu0 0.0
  %744 = vmatpush1.msra.mxu0 0.0
  %745 = vmatprep.subr.mxu0 0.0
  %746 = vmatpush1.msra.mxu0 0.0
  %747 = vmatprep.subr.mxu0 0.0
  %748 = vmatpush1.msra.mxu0 0.0
  %749 = vmatprep.subr.mxu0 0.0
  %750 = vmatpush1.msra.mxu0 0.0
  %751 = vmatprep.subr.mxu0 0.0
  %752 = vmatpush1.msra.mxu0 0.0
  %753 = vmatprep.subr.mxu0 0.0
  %754 = vmatpush1.msra.mxu0 0.0
  %755 = vmatprep.subr.mxu0 0.0
  %756 = vmatpush1.msra.mxu0 0.0
  %757 = vmatprep.subr.mxu0 0.0
  %758 = vmatpush1.msra.mxu0 0.0
  %759 = vmatprep.subr.mxu0 0.0
  %760 = vmatpush1.msra.mxu0 0.0
  %761 = vmatprep.subr.mxu0 0.0
  %762 = vmatpush1.msra.mxu0 0.0
  %763 = vmatprep.subr.mxu0 0.0
  %764 = vmatpush1.msra.mxu0 0.0
  %765 = vmatprep.subr.mxu0 0.0
  %766 = vmatpush1.msra.mxu0 0.0
  %767 = vmatprep.subr.mxu0 0.0
  %768 = vmatpush1.msra.mxu0 0.0
  %769 = vmatprep.subr.mxu0 0.0
  %770 = vmatpush1.msra.mxu0 0.0
  %771 = vmatprep.subr.mxu0 0.0
  %772 = vmatpush1.msra.mxu0 0.0
  %773 = vmatprep.subr.mxu0 0.0
  %774 = vmatpush1.msra.mxu0 0.0
  %775 = vmatprep.subr.mxu0 0.0
  %776 = vmatpush1.msra.mxu0 0.0
  %777 = vmatprep.subr.mxu0 0.0
  %778 = vmatpush1.msra.mxu0 0.0
  %779 = vmatprep.subr.mxu0 0.0
  %780 = vmatpush1.msra.mxu0 0.0
  %781 = vmatprep.subr.mxu0 0.0
  %782 = vmatpush1.msra.mxu0 0.0
  %783 = vmatprep.mubr.f32.mxu0 0.0
  %784 = vmatmul.mubr.f32.gmra.mrb[0].mxu0 %v78
  %v785 = vpop.f32.mrb[0].mxu0
  %v786 = vadd.f32 0.0, %v785
  %v787 = vpop.f32.mrb[0].mxu0
  %v788 = vadd.f32 0.0, %v787
  %789 = vdwg.mxu0
  %790 = vmatprep.subr.mxu0 %v33
  %791 = vmatpush1.msra.mxu0 %v32
  %792 = vmatprep.subr.mxu0 0.0
  %793 = vmatpush1.msra.mxu0 0.0
  %794 = vmatprep.subr.mxu0 0.0
  %795 = vmatpush1.msra.mxu0 0.0
  %796 = vmatprep.subr.mxu0 0.0
  %797 = vmatpush1.msra.mxu0 0.0
  %798 = vmatprep.subr.mxu0 0.0
  %799 = vmatpush1.msra.mxu0 0.0
  %800 = vmatprep.subr.mxu0 0.0
  %801 = vmatpush1.msra.mxu0 0.0
  %802 = vmatprep.subr.mxu0 0.0
  %803 = vmatpush1.msra.mxu0 0.0
  %804 = vmatprep.subr.mxu0 0.0
  %805 = vmatpush1.msra.mxu0 0.0
  %806 = vmatprep.subr.mxu0 0.0
  %807 = vmatpush1.msra.mxu0 0.0
  %808 = vmatprep.subr.mxu0 0.0
  %809 = vmatpush1.msra.mxu0 0.0
  %810 = vmatprep.subr.mxu0 0.0
  %811 = vmatpush1.msra.mxu0 0.0
  %812 = vmatprep.subr.mxu0 0.0
  %813 = vmatpush1.msra.mxu0 0.0
  %814 = vmatprep.subr.mxu0 0.0
  %815 = vmatpush1.msra.mxu0 0.0
  %816 = vmatprep.subr.mxu0 0.0
  %817 = vmatpush1.msra.mxu0 0.0
  %818 = vmatprep.subr.mxu0 0.0
  %819 = vmatpush1.msra.mxu0 0.0
  %820 = vmatprep.subr.mxu0 0.0
  %821 = vmatpush1.msra.mxu0 0.0
  %822 = vmatprep.subr.mxu0 0.0
  %823 = vmatpush1.msra.mxu0 0.0
  %824 = vmatprep.subr.mxu0 0.0
  %825 = vmatpush1.msra.mxu0 0.0
  %826 = vmatprep.subr.mxu0 0.0
  %827 = vmatpush1.msra.mxu0 0.0
  %828 = vmatprep.subr.mxu0 0.0
  %829 = vmatpush1.msra.mxu0 0.0
  %830 = vmatprep.subr.mxu0 0.0
  %831 = vmatpush1.msra.mxu0 0.0
  %832 = vmatprep.subr.mxu0 0.0
  %833 = vmatpush1.msra.mxu0 0.0
  %834 = vmatprep.subr.mxu0 0.0
  %835 = vmatpush1.msra.mxu0 0.0
  %836 = vmatprep.subr.mxu0 0.0
  %837 = vmatpush1.msra.mxu0 0.0
  %838 = vmatprep.subr.mxu0 0.0
  %839 = vmatpush1.msra.mxu0 0.0
  %840 = vmatprep.subr.mxu0 0.0
  %841 = vmatpush1.msra.mxu0 0.0
  %842 = vmatprep.subr.mxu0 0.0
  %843 = vmatpush1.msra.mxu0 0.0
  %844 = vmatprep.subr.mxu0 0.0
  %845 = vmatpush1.msra.mxu0 0.0
  %846 = vmatprep.subr.mxu0 0.0
  %847 = vmatpush1.msra.mxu0 0.0
  %848 = vmatprep.subr.mxu0 0.0
  %849 = vmatpush1.msra.mxu0 0.0
  %850 = vmatprep.subr.mxu0 0.0
  %851 = vmatpush1.msra.mxu0 0.0
  %852 = vmatprep.subr.mxu0 0.0
  %853 = vmatpush1.msra.mxu0 0.0
  %854 = vmatprep.mubr.f32.mxu0 0.0
  %855 = vmatmul.mubr.f32.gmra.mrb[0].mxu0 %v78
  %v856 = vpop.f32.mrb[0].mxu0
  %v857 = vadd.f32 0.0, %v856
  %v858 = vpop.f32.mrb[0].mxu0
  %v859 = vadd.f32 0.0, %v858
  %860 = vdwg.mxu0
  %861 = vmatprep.subr.mxu0 %v35
  %862 = vmatpush1.msra.mxu0 %v34
  %863 = vmatprep.subr.mxu0 0.0
  %864 = vmatpush1.msra.mxu0 0.0
  %865 = vmatprep.subr.mxu0 0.0
  %866 = vmatpush1.msra.mxu0 0.0
  %867 = vmatprep.subr.mxu0 0.0
  %868 = vmatpush1.msra.mxu0 0.0
  %869 = vmatprep.subr.mxu0 0.0
  %870 = vmatpush1.msra.mxu0 0.0
  %871 = vmatprep.subr.mxu0 0.0
  %872 = vmatpush1.msra.mxu0 0.0
  %873 = vmatprep.subr.mxu0 0.0
  %874 = vmatpush1.msra.mxu0 0.0
  %875 = vmatprep.subr.mxu0 0.0
  %876 = vmatpush1.msra.mxu0 0.0
  %877 = vmatprep.subr.mxu0 0.0
  %878 = vmatpush1.msra.mxu0 0.0
  %879 = vmatprep.subr.mxu0 0.0
  %880 = vmatpush1.msra.mxu0 0.0
  %881 = vmatprep.subr.mxu0 0.0
  %882 = vmatpush1.msra.mxu0 0.0
  %883 = vmatprep.subr.mxu0 0.0
  %884 = vmatpush1.msra.mxu0 0.0
  %885 = vmatprep.subr.mxu0 0.0
  %886 = vmatpush1.msra.mxu0 0.0
  %887 = vmatprep.subr.mxu0 0.0
  %888 = vmatpush1.msra.mxu0 0.0
  %889 = vmatprep.subr.mxu0 0.0
  %890 = vmatpush1.msra.mxu0 0.0
  %891 = vmatprep.subr.mxu0 0.0
  %892 = vmatpush1.msra.mxu0 0.0
  %893 = vmatprep.subr.mxu0 0.0
  %894 = vmatpush1.msra.mxu0 0.0
  %895 = vmatprep.subr.mxu0 0.0
  %896 = vmatpush1.msra.mxu0 0.0
  %897 = vmatprep.subr.mxu0 0.0
  %898 = vmatpush1.msra.mxu0 0.0
  %899 = vmatprep.subr.mxu0 0.0
  %900 = vmatpush1.msra.mxu0 0.0
  %901 = vmatprep.subr.mxu0 0.0
  %902 = vmatpush1.msra.mxu0 0.0
  %903 = vmatprep.subr.mxu0 0.0
  %904 = vmatpush1.msra.mxu0 0.0
  %905 = vmatprep.subr.mxu0 0.0
  %906 = vmatpush1.msra.mxu0 0.0
  %907 = vmatprep.subr.mxu0 0.0
  %908 = vmatpush1.msra.mxu0 0.0
  %909 = vmatprep.subr.mxu0 0.0
  %910 = vmatpush1.msra.mxu0 0.0
  %911 = vmatprep.subr.mxu0 0.0
  %912 = vmatpush1.msra.mxu0 0.0
  %913 = vmatprep.subr.mxu0 0.0
  %914 = vmatpush1.msra.mxu0 0.0
  %915 = vmatprep.subr.mxu0 0.0
  %916 = vmatpush1.msra.mxu0 0.0
  %917 = vmatprep.subr.mxu0 0.0
  %918 = vmatpush1.msra.mxu0 0.0
  %919 = vmatprep.subr.mxu0 0.0
  %920 = vmatpush1.msra.mxu0 0.0
  %921 = vmatprep.subr.mxu0 0.0
  %922 = vmatpush1.msra.mxu0 0.0
  %923 = vmatprep.subr.mxu0 0.0
  %924 = vmatpush1.msra.mxu0 0.0
  %925 = vmatprep.mubr.f32.mxu0 0.0
  %926 = vmatmul.mubr.f32.gmra.mrb[0].mxu0 %v78
  %v927 = vpop.f32.mrb[0].mxu0
  %v928 = vadd.f32 0.0, %v927
  %v929 = vpop.f32.mrb[0].mxu0
  %v930 = vadd.f32 0.0, %v929
  %931 = vdwg.mxu0
  %932 = vmatprep.subr.mxu0 %v37
  %933 = vmatpush1.msra.mxu0 %v36
  %934 = vmatprep.subr.mxu0 0.0
  %935 = vmatpush1.msra.mxu0 0.0
  %936 = vmatprep.subr.mxu0 0.0
  %937 = vmatpush1.msra.mxu0 0.0
  %938 = vmatprep.subr.mxu0 0.0
  %939 = vmatpush1.msra.mxu0 0.0
  %940 = vmatprep.subr.mxu0 0.0
  %941 = vmatpush1.msra.mxu0 0.0
  %942 = vmatprep.subr.mxu0 0.0
  %943 = vmatpush1.msra.mxu0 0.0
  %944 = vmatprep.subr.mxu0 0.0
  %945 = vmatpush1.msra.mxu0 0.0
  %946 = vmatprep.subr.mxu0 0.0
  %947 = vmatpush1.msra.mxu0 0.0
  %948 = vmatprep.subr.mxu0 0.0
  %949 = vmatpush1.msra.mxu0 0.0
  %950 = vmatprep.subr.mxu0 0.0
  %951 = vmatpush1.msra.mxu0 0.0
  %952 = vmatprep.subr.mxu0 0.0
  %953 = vmatpush1.msra.mxu0 0.0
  %954 = vmatprep.subr.mxu0 0.0
  %955 = vmatpush1.msra.mxu0 0.0
  %956 = vmatprep.subr.mxu0 0.0
  %957 = vmatpush1.msra.mxu0 0.0
  %958 = vmatprep.subr.mxu0 0.0
  %959 = vmatpush1.msra.mxu0 0.0
  %960 = vmatprep.subr.mxu0 0.0
  %961 = vmatpush1.msra.mxu0 0.0
  %962 = vmatprep.subr.mxu0 0.0
  %963 = vmatpush1.msra.mxu0 0.0
  %964 = vmatprep.subr.mxu0 0.0
  %965 = vmatpush1.msra.mxu0 0.0
  %966 = vmatprep.subr.mxu0 0.0
  %967 = vmatpush1.msra.mxu0 0.0
  %968 = vmatprep.subr.mxu0 0.0
  %969 = vmatpush1.msra.mxu0 0.0
  %970 = vmatprep.subr.mxu0 0.0
  %971 = vmatpush1.msra.mxu0 0.0
  %972 = vmatprep.subr.mxu0 0.0
  %973 = vmatpush1.msra.mxu0 0.0
  %974 = vmatprep.subr.mxu0 0.0
  %975 = vmatpush1.msra.mxu0 0.0
  %976 = vmatprep.subr.mxu0 0.0
  %977 = vmatpush1.msra.mxu0 0.0
  %978 = vmatprep.subr.mxu0 0.0
  %979 = vmatpush1.msra.mxu0 0.0
  %980 = vmatprep.subr.mxu0 0.0
  %981 = vmatpush1.msra.mxu0 0.0
  %982 = vmatprep.subr.mxu0 0.0
  %983 = vmatpush1.msra.mxu0 0.0
  %984 = vmatprep.subr.mxu0 0.0
  %985 = vmatpush1.msra.mxu0 0.0
  %986 = vmatprep.subr.mxu0 0.0
  %987 = vmatpush1.msra.mxu0 0.0
  %988 = vmatprep.subr.mxu0 0.0
  %989 = vmatpush1.msra.mxu0 0.0
  %990 = vmatprep.subr.mxu0 0.0
  %991 = vmatpush1.msra.mxu0 0.0
  %992 = vmatprep.subr.mxu0 0.0
  %993 = vmatpush1.msra.mxu0 0.0
  %994 = vmatprep.subr.mxu0 0.0
  %995 = vmatpush1.msra.mxu0 0.0
  %996 = vmatprep.mubr.f32.mxu0 0.0
  %997 = vmatmul.mubr.f32.gmra.mrb[0].mxu0 %v78
  %v998 = vpop.f32.mrb[0].mxu0
  %v999 = vadd.f32 0.0, %v998
  %v1000 = vpop.f32.mrb[0].mxu0
  %v1001 = vadd.f32 0.0, %v1000
  %1002 = vdwg.mxu0
  %1003 = vmatprep.subr.mxu0 %v39
  %1004 = vmatpush1.msra.mxu0 %v38
  %1005 = vmatprep.subr.mxu0 0.0
  %1006 = vmatpush1.msra.mxu0 0.0
  %1007 = vmatprep.subr.mxu0 0.0
  %1008 = vmatpush1.msra.mxu0 0.0
  %1009 = vmatprep.subr.mxu0 0.0
  %1010 = vmatpush1.msra.mxu0 0.0
  %1011 = vmatprep.subr.mxu0 0.0
  %1012 = vmatpush1.msra.mxu0 0.0
  %1013 = vmatprep.subr.mxu0 0.0
  %1014 = vmatpush1.msra.mxu0 0.0
  %1015 = vmatprep.subr.mxu0 0.0
  %1016 = vmatpush1.msra.mxu0 0.0
  %1017 = vmatprep.subr.mxu0 0.0
  %1018 = vmatpush1.msra.mxu0 0.0
  %1019 = vmatprep.subr.mxu0 0.0
  %1020 = vmatpush1.msra.mxu0 0.0
  %1021 = vmatprep.subr.mxu0 0.0
  %1022 = vmatpush1.msra.mxu0 0.0
  %1023 = vmatprep.subr.mxu0 0.0
  %1024 = vmatpush1.msra.mxu0 0.0
  %1025 = vmatprep.subr.mxu0 0.0
  %1026 = vmatpush1.msra.mxu0 0.0
  %1027 = vmatprep.subr.mxu0 0.0
  %1028 = vmatpush1.msra.mxu0 0.0
  %1029 = vmatprep.subr.mxu0 0.0
  %1030 = vmatpush1.msra.mxu0 0.0
  %1031 = vmatprep.subr.mxu0 0.0
  %1032 = vmatpush1.msra.mxu0 0.0
  %1033 = vmatprep.subr.mxu0 0.0
  %1034 = vmatpush1.msra.mxu0 0.0
  %1035 = vmatprep.subr.mxu0 0.0
  %1036 = vmatpush1.msra.mxu0 0.0
  %1037 = vmatprep.subr.mxu0 0.0
  %1038 = vmatpush1.msra.mxu0 0.0
  %1039 = vmatprep.subr.mxu0 0.0
  %1040 = vmatpush1.msra.mxu0 0.0
  %1041 = vmatprep.subr.mxu0 0.0
  %1042 = vmatpush1.msra.mxu0 0.0
  %1043 = vmatprep.subr.mxu0 0.0
  %1044 = vmatpush1.msra.mxu0 0.0
  %1045 = vmatprep.subr.mxu0 0.0
  %1046 = vmatpush1.msra.mxu0 0.0
  %1047 = vmatprep.subr.mxu0 0.0
  %1048 = vmatpush1.msra.mxu0 0.0
  %1049 = vmatprep.subr.mxu0 0.0
  %1050 = vmatpush1.msra.mxu0 0.0
  %1051 = vmatprep.subr.mxu0 0.0
  %1052 = vmatpush1.msra.mxu0 0.0
  %1053 = vmatprep.subr.mxu0 0.0
  %1054 = vmatpush1.msra.mxu0 0.0
  %1055 = vmatprep.subr.mxu0 0.0
  %1056 = vmatpush1.msra.mxu0 0.0
  %1057 = vmatprep.subr.mxu0 0.0
  %1058 = vmatpush1.msra.mxu0 0.0
  %1059 = vmatprep.subr.mxu0 0.0
  %1060 = vmatpush1.msra.mxu0 0.0
  %1061 = vmatprep.subr.mxu0 0.0
  %1062 = vmatpush1.msra.mxu0 0.0
  %1063 = vmatprep.subr.mxu0 0.0
  %1064 = vmatpush1.msra.mxu0 0.0
  %1065 = vmatprep.subr.mxu0 0.0
  %1066 = vmatpush1.msra.mxu0 0.0
  %1067 = vmatprep.mubr.f32.mxu0 0.0
  %1068 = vmatmul.mubr.f32.gmra.mrb[0].mxu0 %v78
  %v1069 = vpop.f32.mrb[0].mxu0
  %v1070 = vadd.f32 0.0, %v1069
  %v1071 = vpop.f32.mrb[0].mxu0
  %v1072 = vadd.f32 0.0, %v1071
  %1073 = vdwg.mxu0
  %1074 = vmatprep.subr.mxu0 %v41
  %1075 = vmatpush1.msra.mxu0 %v40
  %1076 = vmatprep.subr.mxu0 0.0
  %1077 = vmatpush1.msra.mxu0 0.0
  %1078 = vmatprep.subr.mxu0 0.0
  %1079 = vmatpush1.msra.mxu0 0.0
  %1080 = vmatprep.subr.mxu0 0.0
  %1081 = vmatpush1.msra.mxu0 0.0
  %1082 = vmatprep.subr.mxu0 0.0
  %1083 = vmatpush1.msra.mxu0 0.0
  %1084 = vmatprep.subr.mxu0 0.0
  %1085 = vmatpush1.msra.mxu0 0.0
  %1086 = vmatprep.subr.mxu0 0.0
  %1087 = vmatpush1.msra.mxu0 0.0
  %1088 = vmatprep.subr.mxu0 0.0
  %1089 = vmatpush1.msra.mxu0 0.0
  %1090 = vmatprep.subr.mxu0 0.0
  %1091 = vmatpush1.msra.mxu0 0.0
  %1092 = vmatprep.subr.mxu0 0.0
  %1093 = vmatpush1.msra.mxu0 0.0
  %1094 = vmatprep.subr.mxu0 0.0
  %1095 = vmatpush1.msra.mxu0 0.0
  %1096 = vmatprep.subr.mxu0 0.0
  %1097 = vmatpush1.msra.mxu0 0.0
  %1098 = vmatprep.subr.mxu0 0.0
  %1099 = vmatpush1.msra.mxu0 0.0
  %1100 = vmatprep.subr.mxu0 0.0
  %1101 = vmatpush1.msra.mxu0 0.0
  %1102 = vmatprep.subr.mxu0 0.0
  %1103 = vmatpush1.msra.mxu0 0.0
  %1104 = vmatprep.subr.mxu0 0.0
  %1105 = vmatpush1.msra.mxu0 0.0
  %1106 = vmatprep.subr.mxu0 0.0
  %1107 = vmatpush1.msra.mxu0 0.0
  %1108 = vmatprep.subr.mxu0 0.0
  %1109 = vmatpush1.msra.mxu0 0.0
  %1110 = vmatprep.subr.mxu0 0.0
  %1111 = vmatpush1.msra.mxu0 0.0
  %1112 = vmatprep.subr.mxu0 0.0
  %1113 = vmatpush1.msra.mxu0 0.0
  %1114 = vmatprep.subr.mxu0 0.0
  %1115 = vmatpush1.msra.mxu0 0.0
  %1116 = vmatprep.subr.mxu0 0.0
  %1117 = vmatpush1.msra.mxu0 0.0
  %1118 = vmatprep.subr.mxu0 0.0
  %1119 = vmatpush1.msra.mxu0 0.0
  %1120 = vmatprep.subr.mxu0 0.0
  %1121 = vmatpush1.msra.mxu0 0.0
  %1122 = vmatprep.subr.mxu0 0.0
  %1123 = vmatpush1.msra.mxu0 0.0
  %1124 = vmatprep.subr.mxu0 0.0
  %1125 = vmatpush1.msra.mxu0 0.0
  %1126 = vmatprep.subr.mxu0 0.0
  %1127 = vmatpush1.msra.mxu0 0.0
  %1128 = vmatprep.subr.mxu0 0.0
  %1129 = vmatpush1.msra.mxu0 0.0
  %1130 = vmatprep.subr.mxu0 0.0
  %1131 = vmatpush1.msra.mxu0 0.0
  %1132 = vmatprep.subr.mxu0 0.0
  %1133 = vmatpush1.msra.mxu0 0.0
  %1134 = vmatprep.subr.mxu0 0.0
  %1135 = vmatpush1.msra.mxu0 0.0
  %1136 = vmatprep.subr.mxu0 0.0
  %1137 = vmatpush1.msra.mxu0 0.0
  %1138 = vmatprep.mubr.f32.mxu0 0.0
  %1139 = vmatmul.mubr.f32.gmra.mrb[0].mxu0 %v78
  %v1140 = vpop.f32.mrb[0].mxu0
  %v1141 = vadd.f32 0.0, %v1140
  %v1142 = vpop.f32.mrb[0].mxu0
  %v1143 = vadd.f32 0.0, %v1142
  %1144 = vdwg.mxu0
  %1145 = vmatprep.subr.mxu0 %v43
  %1146 = vmatpush1.msra.mxu0 %v42
  %1147 = vmatprep.subr.mxu0 0.0
  %1148 = vmatpush1.msra.mxu0 0.0
  %1149 = vmatprep.subr.mxu0 0.0
  %1150 = vmatpush1.msra.mxu0 0.0
  %1151 = vmatprep.subr.mxu0 0.0
  %1152 = vmatpush1.msra.mxu0 0.0
  %1153 = vmatprep.subr.mxu0 0.0
  %1154 = vmatpush1.msra.mxu0 0.0
  %1155 = vmatprep.subr.mxu0 0.0
  %1156 = vmatpush1.msra.mxu0 0.0
  %1157 = vmatprep.subr.mxu0 0.0
  %1158 = vmatpush1.msra.mxu0 0.0
  %1159 = vmatprep.subr.mxu0 0.0
  %1160 = vmatpush1.msra.mxu0 0.0
  %1161 = vmatprep.subr.mxu0 0.0
  %1162 = vmatpush1.msra.mxu0 0.0
  %1163 = vmatprep.subr.mxu0 0.0
  %1164 = vmatpush1.msra.mxu0 0.0
  %1165 = vmatprep.subr.mxu0 0.0
  %1166 = vmatpush1.msra.mxu0 0.0
  %1167 = vmatprep.subr.mxu0 0.0
  %1168 = vmatpush1.msra.mxu0 0.0
  %1169 = vmatprep.subr.mxu0 0.0
  %1170 = vmatpush1.msra.mxu0 0.0
  %1171 = vmatprep.subr.mxu0 0.0
  %1172 = vmatpush1.msra.mxu0 0.0
  %1173 = vmatprep.subr.mxu0 0.0
  %1174 = vmatpush1.msra.mxu0 0.0
  %1175 = vmatprep.subr.mxu0 0.0
  %1176 = vmatpush1.msra.mxu0 0.0
  %1177 = vmatprep.subr.mxu0 0.0
  %1178 = vmatpush1.msra.mxu0 0.0
  %1179 = vmatprep.subr.mxu0 0.0
  %1180 = vmatpush1.msra.mxu0 0.0
  %1181 = vmatprep.subr.mxu0 0.0
  %1182 = vmatpush1.msra.mxu0 0.0
  %1183 = vmatprep.subr.mxu0 0.0
  %1184 = vmatpush1.msra.mxu0 0.0
  %1185 = vmatprep.subr.mxu0 0.0
  %1186 = vmatpush1.msra.mxu0 0.0
  %1187 = vmatprep.subr.mxu0 0.0
  %1188 = vmatpush1.msra.mxu0 0.0
  %1189 = vmatprep.subr.mxu0 0.0
  %1190 = vmatpush1.msra.mxu0 0.0
  %1191 = vmatprep.subr.mxu0 0.0
  %1192 = vmatpush1.msra.mxu0 0.0
  %1193 = vmatprep.subr.mxu0 0.0
  %1194 = vmatpush1.msra.mxu0 0.0
  %1195 = vmatprep.subr.mxu0 0.0
  %1196 = vmatpush1.msra.mxu0 0.0
  %1197 = vmatprep.subr.mxu0 0.0
  %1198 = vmatpush1.msra.mxu0 0.0
  %1199 = vmatprep.subr.mxu0 0.0
  %1200 = vmatpush1.msra.mxu0 0.0
  %1201 = vmatprep.subr.mxu0 0.0
  %1202 = vmatpush1.msra.mxu0 0.0
  %1203 = vmatprep.subr.mxu0 0.0
  %1204 = vmatpush1.msra.mxu0 0.0
  %1205 = vmatprep.subr.mxu0 0.0
  %1206 = vmatpush1.msra.mxu0 0.0
  %1207 = vmatprep.subr.mxu0 0.0
  %1208 = vmatpush1.msra.mxu0 0.0
  %1209 = vmatprep.mubr.f32.mxu0 0.0
  %1210 = vmatmul.mubr.f32.gmra.mrb[0].mxu0 %v78
  %v1211 = vpop.f32.mrb[0].mxu0
  %v1212 = vadd.f32 0.0, %v1211
  %v1213 = vpop.f32.mrb[0].mxu0
  %v1214 = vadd.f32 0.0, %v1213
  %1215 = vdwg.mxu0
  %1216 = vmatprep.subr.mxu0 %v45
  %1217 = vmatpush1.msra.mxu0 %v44
  %1218 = vmatprep.subr.mxu0 0.0
  %1219 = vmatpush1.msra.mxu0 0.0
  %1220 = vmatprep.subr.mxu0 0.0
  %1221 = vmatpush1.msra.mxu0 0.0
  %1222 = vmatprep.subr.mxu0 0.0
  %1223 = vmatpush1.msra.mxu0 0.0
  %1224 = vmatprep.subr.mxu0 0.0
  %1225 = vmatpush1.msra.mxu0 0.0
  %1226 = vmatprep.subr.mxu0 0.0
  %1227 = vmatpush1.msra.mxu0 0.0
  %1228 = vmatprep.subr.mxu0 0.0
  %1229 = vmatpush1.msra.mxu0 0.0
  %1230 = vmatprep.subr.mxu0 0.0
  %1231 = vmatpush1.msra.mxu0 0.0
  %1232 = vmatprep.subr.mxu0 0.0
  %1233 = vmatpush1.msra.mxu0 0.0
  %1234 = vmatprep.subr.mxu0 0.0
  %1235 = vmatpush1.msra.mxu0 0.0
  %1236 = vmatprep.subr.mxu0 0.0
  %1237 = vmatpush1.msra.mxu0 0.0
  %1238 = vmatprep.subr.mxu0 0.0
  %1239 = vmatpush1.msra.mxu0 0.0
  %1240 = vmatprep.subr.mxu0 0.0
  %1241 = vmatpush1.msra.mxu0 0.0
  %1242 = vmatprep.subr.mxu0 0.0
  %1243 = vmatpush1.msra.mxu0 0.0
  %1244 = vmatprep.subr.mxu0 0.0
  %1245 = vmatpush1.msra.mxu0 0.0
  %1246 = vmatprep.subr.mxu0 0.0
  %1247 = vmatpush1.msra.mxu0 0.0
  %1248 = vmatprep.subr.mxu0 0.0
  %1249 = vmatpush1.msra.mxu0 0.0
  %1250 = vmatprep.subr.mxu0 0.0
  %1251 = vmatpush1.msra.mxu0 0.0
  %1252 = vmatprep.subr.mxu0 0.0
  %1253 = vmatpush1.msra.mxu0 0.0
  %1254 = vmatprep.subr.mxu0 0.0
  %1255 = vmatpush1.msra.mxu0 0.0
  %1256 = vmatprep.subr.mxu0 0.0
  %1257 = vmatpush1.msra.mxu0 0.0
  %1258 = vmatprep.subr.mxu0 0.0
  %1259 = vmatpush1.msra.mxu0 0.0
  %1260 = vmatprep.subr.mxu0 0.0
  %1261 = vmatpush1.msra.mxu0 0.0
  %1262 = vmatprep.subr.mxu0 0.0
  %1263 = vmatpush1.msra.mxu0 0.0
  %1264 = vmatprep.subr.mxu0 0.0
  %1265 = vmatpush1.msra.mxu0 0.0
  %1266 = vmatprep.subr.mxu0 0.0
  %1267 = vmatpush1.msra.mxu0 0.0
  %1268 = vmatprep.subr.mxu0 0.0
  %1269 = vmatpush1.msra.mxu0 0.0
  %1270 = vmatprep.subr.mxu0 0.0
  %1271 = vmatpush1.msra.mxu0 0.0
  %1272 = vmatprep.subr.mxu0 0.0
  %1273 = vmatpush1.msra.mxu0 0.0
  %1274 = vmatprep.subr.mxu0 0.0
  %1275 = vmatpush1.msra.mxu0 0.0
  %1276 = vmatprep.subr.mxu0 0.0
  %1277 = vmatpush1.msra.mxu0 0.0
  %1278 = vmatprep.subr.mxu0 0.0
  %1279 = vmatpush1.msra.mxu0 0.0
  %1280 = vmatprep.mubr.f32.mxu0 0.0
  %1281 = vmatmul.mubr.f32.gmra.mrb[0].mxu0 %v78
  %v1282 = vpop.f32.mrb[0].mxu0
  %v1283 = vadd.f32 0.0, %v1282
  %v1284 = vpop.f32.mrb[0].mxu0
  %v1285 = vadd.f32 0.0, %v1284
  %1286 = vdwg.mxu0
  %1287 = vmatprep.subr.mxu0 %v47
  %1288 = vmatpush1.msra.mxu0 %v46
  %1289 = vmatprep.subr.mxu0 0.0
  %1290 = vmatpush1.msra.mxu0 0.0
  %1291 = vmatprep.subr.mxu0 0.0
  %1292 = vmatpush1.msra.mxu0 0.0
  %1293 = vmatprep.subr.mxu0 0.0
  %1294 = vmatpush1.msra.mxu0 0.0
  %1295 = vmatprep.subr.mxu0 0.0
  %1296 = vmatpush1.msra.mxu0 0.0
  %1297 = vmatprep.subr.mxu0 0.0
  %1298 = vmatpush1.msra.mxu0 0.0
  %1299 = vmatprep.subr.mxu0 0.0
  %1300 = vmatpush1.msra.mxu0 0.0
  %1301 = vmatprep.subr.mxu0 0.0
  %1302 = vmatpush1.msra.mxu0 0.0
  %1303 = vmatprep.subr.mxu0 0.0
  %1304 = vmatpush1.msra.mxu0 0.0
  %1305 = vmatprep.subr.mxu0 0.0
  %1306 = vmatpush1.msra.mxu0 0.0
  %1307 = vmatprep.subr.mxu0 0.0
  %1308 = vmatpush1.msra.mxu0 0.0
  %1309 = vmatprep.subr.mxu0 0.0
  %1310 = vmatpush1.msra.mxu0 0.0
  %1311 = vmatprep.subr.mxu0 0.0
  %1312 = vmatpush1.msra.mxu0 0.0
  %1313 = vmatprep.subr.mxu0 0.0
  %1314 = vmatpush1.msra.mxu0 0.0
  %1315 = vmatprep.subr.mxu0 0.0
  %1316 = vmatpush1.msra.mxu0 0.0
  %1317 = vmatprep.subr.mxu0 0.0
  %1318 = vmatpush1.msra.mxu0 0.0
  %1319 = vmatprep.subr.mxu0 0.0
  %1320 = vmatpush1.msra.mxu0 0.0
  %1321 = vmatprep.subr.mxu0 0.0
  %1322 = vmatpush1.msra.mxu0 0.0
  %1323 = vmatprep.subr.mxu0 0.0
  %1324 = vmatpush1.msra.mxu0 0.0
  %1325 = vmatprep.subr.mxu0 0.0
  %1326 = vmatpush1.msra.mxu0 0.0
  %1327 = vmatprep.subr.mxu0 0.0
  %1328 = vmatpush1.msra.mxu0 0.0
  %1329 = vmatprep.subr.mxu0 0.0
  %1330 = vmatpush1.msra.mxu0 0.0
  %1331 = vmatprep.subr.mxu0 0.0
  %1332 = vmatpush1.msra.mxu0 0.0
  %1333 = vmatprep.subr.mxu0 0.0
  %1334 = vmatpush1.msra.mxu0 0.0
  %1335 = vmatprep.subr.mxu0 0.0
  %1336 = vmatpush1.msra.mxu0 0.0
  %1337 = vmatprep.subr.mxu0 0.0
  %1338 = vmatpush1.msra.mxu0 0.0
  %1339 = vmatprep.subr.mxu0 0.0
  %1340 = vmatpush1.msra.mxu0 0.0
  %1341 = vmatprep.subr.mxu0 0.0
  %1342 = vmatpush1.msra.mxu0 0.0
  %1343 = vmatprep.subr.mxu0 0.0
  %1344 = vmatpush1.msra.mxu0 0.0
  %1345 = vmatprep.subr.mxu0 0.0
  %1346 = vmatpush1.msra.mxu0 0.0
  %1347 = vmatprep.subr.mxu0 0.0
  %1348 = vmatpush1.msra.mxu0 0.0
  %1349 = vmatprep.subr.mxu0 0.0
  %1350 = vmatpush1.msra.mxu0 0.0
  %1351 = vmatprep.mubr.f32.mxu0 0.0
  %1352 = vmatmul.mubr.f32.gmra.mrb[0].mxu0 %v78
  %v1353 = vpop.f32.mrb[0].mxu0
  %v1354 = vadd.f32 0.0, %v1353
  %v1355 = vpop.f32.mrb[0].mxu0
  %v1356 = vadd.f32 0.0, %v1355
  %1357 = vdwg.mxu0
  %1358 = vmatprep.subr.mxu0 %v49
  %1359 = vmatpush1.msra.mxu0 %v48
  %1360 = vmatprep.subr.mxu0 0.0
  %1361 = vmatpush1.msra.mxu0 0.0
  %1362 = vmatprep.subr.mxu0 0.0
  %1363 = vmatpush1.msra.mxu0 0.0
  %1364 = vmatprep.subr.mxu0 0.0
  %1365 = vmatpush1.msra.mxu0 0.0
  %1366 = vmatprep.subr.mxu0 0.0
  %1367 = vmatpush1.msra.mxu0 0.0
  %1368 = vmatprep.subr.mxu0 0.0
  %1369 = vmatpush1.msra.mxu0 0.0
  %1370 = vmatprep.subr.mxu0 0.0
  %1371 = vmatpush1.msra.mxu0 0.0
  %1372 = vmatprep.subr.mxu0 0.0
  %1373 = vmatpush1.msra.mxu0 0.0
  %1374 = vmatprep.subr.mxu0 0.0
  %1375 = vmatpush1.msra.mxu0 0.0
  %1376 = vmatprep.subr.mxu0 0.0
  %1377 = vmatpush1.msra.mxu0 0.0
  %1378 = vmatprep.subr.mxu0 0.0
  %1379 = vmatpush1.msra.mxu0 0.0
  %1380 = vmatprep.subr.mxu0 0.0
  %1381 = vmatpush1.msra.mxu0 0.0
  %1382 = vmatprep.subr.mxu0 0.0
  %1383 = vmatpush1.msra.mxu0 0.0
  %1384 = vmatprep.subr.mxu0 0.0
  %1385 = vmatpush1.msra.mxu0 0.0
  %1386 = vmatprep.subr.mxu0 0.0
  %1387 = vmatpush1.msra.mxu0 0.0
  %1388 = vmatprep.subr.mxu0 0.0
  %1389 = vmatpush1.msra.mxu0 0.0
  %1390 = vmatprep.subr.mxu0 0.0
  %1391 = vmatpush1.msra.mxu0 0.0
  %1392 = vmatprep.subr.mxu0 0.0
  %1393 = vmatpush1.msra.mxu0 0.0
  %1394 = vmatprep.subr.mxu0 0.0
  %1395 = vmatpush1.msra.mxu0 0.0
  %1396 = vmatprep.subr.mxu0 0.0
  %1397 = vmatpush1.msra.mxu0 0.0
  %1398 = vmatprep.subr.mxu0 0.0
  %1399 = vmatpush1.msra.mxu0 0.0
  %1400 = vmatprep.subr.mxu0 0.0
  %1401 = vmatpush1.msra.mxu0 0.0
  %1402 = vmatprep.subr.mxu0 0.0
  %1403 = vmatpush1.msra.mxu0 0.0
  %1404 = vmatprep.subr.mxu0 0.0
  %1405 = vmatpush1.msra.mxu0 0.0
  %1406 = vmatprep.subr.mxu0 0.0
  %1407 = vmatpush1.msra.mxu0 0.0
  %1408 = vmatprep.subr.mxu0 0.0
  %1409 = vmatpush1.msra.mxu0 0.0
  %1410 = vmatprep.subr.mxu0 0.0
  %1411 = vmatpush1.msra.mxu0 0.0
  %1412 = vmatprep.subr.mxu0 0.0
  %1413 = vmatpush1.msra.mxu0 0.0
  %1414 = vmatprep.subr.mxu0 0.0
  %1415 = vmatpush1.msra.mxu0 0.0
  %1416 = vmatprep.subr.mxu0 0.0
  %1417 = vmatpush1.msra.mxu0 0.0
  %1418 = vmatprep.subr.mxu0 0.0
  %1419 = vmatpush1.msra.mxu0 0.0
  %1420 = vmatprep.subr.mxu0 0.0
  %1421 = vmatpush1.msra.mxu0 0.0
  %1422 = vmatprep.mubr.f32.mxu0 0.0
  %1423 = vmatmul.mubr.f32.gmra.mrb[0].mxu0 %v78
  %v1424 = vpop.f32.mrb[0].mxu0
  %v1425 = vadd.f32 0.0, %v1424
  %v1426 = vpop.f32.mrb[0].mxu0
  %v1427 = vadd.f32 0.0, %v1426
  %1428 = vdwg.mxu0
  %1429 = vmatprep.subr.mxu0 %v51
  %1430 = vmatpush1.msra.mxu0 %v50
  %1431 = vmatprep.subr.mxu0 0.0
  %1432 = vmatpush1.msra.mxu0 0.0
  %1433 = vmatprep.subr.mxu0 0.0
  %1434 = vmatpush1.msra.mxu0 0.0
  %1435 = vmatprep.subr.mxu0 0.0
  %1436 = vmatpush1.msra.mxu0 0.0
  %1437 = vmatprep.subr.mxu0 0.0
  %1438 = vmatpush1.msra.mxu0 0.0
  %1439 = vmatprep.subr.mxu0 0.0
  %1440 = vmatpush1.msra.mxu0 0.0
  %1441 = vmatprep.subr.mxu0 0.0
  %1442 = vmatpush1.msra.mxu0 0.0
  %1443 = vmatprep.subr.mxu0 0.0
  %1444 = vmatpush1.msra.mxu0 0.0
  %1445 = vmatprep.subr.mxu0 0.0
  %1446 = vmatpush1.msra.mxu0 0.0
  %1447 = vmatprep.subr.mxu0 0.0
  %1448 = vmatpush1.msra.mxu0 0.0
  %1449 = vmatprep.subr.mxu0 0.0
  %1450 = vmatpush1.msra.mxu0 0.0
  %1451 = vmatprep.subr.mxu0 0.0
  %1452 = vmatpush1.msra.mxu0 0.0
  %1453 = vmatprep.subr.mxu0 0.0
  %1454 = vmatpush1.msra.mxu0 0.0
  %1455 = vmatprep.subr.mxu0 0.0
  %1456 = vmatpush1.msra.mxu0 0.0
  %1457 = vmatprep.subr.mxu0 0.0
  %1458 = vmatpush1.msra.mxu0 0.0
  %1459 = vmatprep.subr.mxu0 0.0
  %1460 = vmatpush1.msra.mxu0 0.0
  %1461 = vmatprep.subr.mxu0 0.0
  %1462 = vmatpush1.msra.mxu0 0.0
  %1463 = vmatprep.subr.mxu0 0.0
  %1464 = vmatpush1.msra.mxu0 0.0
  %1465 = vmatprep.subr.mxu0 0.0
  %1466 = vmatpush1.msra.mxu0 0.0
  %1467 = vmatprep.subr.mxu0 0.0
  %1468 = vmatpush1.msra.mxu0 0.0
  %1469 = vmatprep.subr.mxu0 0.0
  %1470 = vmatpush1.msra.mxu0 0.0
  %1471 = vmatprep.subr.mxu0 0.0
  %1472 = vmatpush1.msra.mxu0 0.0
  %1473 = vmatprep.subr.mxu0 0.0
  %1474 = vmatpush1.msra.mxu0 0.0
  %1475 = vmatprep.subr.mxu0 0.0
  %1476 = vmatpush1.msra.mxu0 0.0
  %1477 = vmatprep.subr.mxu0 0.0
  %1478 = vmatpush1.msra.mxu0 0.0
  %1479 = vmatprep.subr.mxu0 0.0
  %1480 = vmatpush1.msra.mxu0 0.0
  %1481 = vmatprep.subr.mxu0 0.0
  %1482 = vmatpush1.msra.mxu0 0.0
  %1483 = vmatprep.subr.mxu0 0.0
  %1484 = vmatpush1.msra.mxu0 0.0
  %1485 = vmatprep.subr.mxu0 0.0
  %1486 = vmatpush1.msra.mxu0 0.0
  %1487 = vmatprep.subr.mxu0 0.0
  %1488 = vmatpush1.msra.mxu0 0.0
  %1489 = vmatprep.subr.mxu0 0.0
  %1490 = vmatpush1.msra.mxu0 0.0
  %1491 = vmatprep.subr.mxu0 0.0
  %1492 = vmatpush1.msra.mxu0 0.0
  %1493 = vmatprep.mubr.f32.mxu0 0.0
  %1494 = vmatmul.mubr.f32.gmra.mrb[0].mxu0 %v78
  %v1495 = vpop.f32.mrb[0].mxu0
  %v1496 = vadd.f32 0.0, %v1495
  %v1497 = vpop.f32.mrb[0].mxu0
  %v1498 = vadd.f32 0.0, %v1497
  %1499 = vdwg.mxu0
  %1500 = vmatprep.subr.mxu0 %v53
  %1501 = vmatpush1.msra.mxu0 %v52
  %1502 = vmatprep.subr.mxu0 0.0
  %1503 = vmatpush1.msra.mxu0 0.0
  %1504 = vmatprep.subr.mxu0 0.0
  %1505 = vmatpush1.msra.mxu0 0.0
  %1506 = vmatprep.subr.mxu0 0.0
  %1507 = vmatpush1.msra.mxu0 0.0
  %1508 = vmatprep.subr.mxu0 0.0
  %1509 = vmatpush1.msra.mxu0 0.0
  %1510 = vmatprep.subr.mxu0 0.0
  %1511 = vmatpush1.msra.mxu0 0.0
  %1512 = vmatprep.subr.mxu0 0.0
  %1513 = vmatpush1.msra.mxu0 0.0
  %1514 = vmatprep.subr.mxu0 0.0
  %1515 = vmatpush1.msra.mxu0 0.0
  %1516 = vmatprep.subr.mxu0 0.0
  %1517 = vmatpush1.msra.mxu0 0.0
  %1518 = vmatprep.subr.mxu0 0.0
  %1519 = vmatpush1.msra.mxu0 0.0
  %1520 = vmatprep.subr.mxu0 0.0
  %1521 = vmatpush1.msra.mxu0 0.0
  %1522 = vmatprep.subr.mxu0 0.0
  %1523 = vmatpush1.msra.mxu0 0.0
  %1524 = vmatprep.subr.mxu0 0.0
  %1525 = vmatpush1.msra.mxu0 0.0
  %1526 = vmatprep.subr.mxu0 0.0
  %1527 = vmatpush1.msra.mxu0 0.0
  %1528 = vmatprep.subr.mxu0 0.0
  %1529 = vmatpush1.msra.mxu0 0.0
  %1530 = vmatprep.subr.mxu0 0.0
  %1531 = vmatpush1.msra.mxu0 0.0
  %1532 = vmatprep.subr.mxu0 0.0
  %1533 = vmatpush1.msra.mxu0 0.0
  %1534 = vmatprep.subr.mxu0 0.0
  %1535 = vmatpush1.msra.mxu0 0.0
  %1536 = vmatprep.subr.mxu0 0.0
  %1537 = vmatpush1.msra.mxu0 0.0
  %1538 = vmatprep.subr.mxu0 0.0
  %1539 = vmatpush1.msra.mxu0 0.0
  %1540 = vmatprep.subr.mxu0 0.0
  %1541 = vmatpush1.msra.mxu0 0.0
  %1542 = vmatprep.subr.mxu0 0.0
  %1543 = vmatpush1.msra.mxu0 0.0
  %1544 = vmatprep.subr.mxu0 0.0
  %1545 = vmatpush1.msra.mxu0 0.0
  %1546 = vmatprep.subr.mxu0 0.0
  %1547 = vmatpush1.msra.mxu0 0.0
  %1548 = vmatprep.subr.mxu0 0.0
  %1549 = vmatpush1.msra.mxu0 0.0
  %1550 = vmatprep.subr.mxu0 0.0
  %1551 = vmatpush1.msra.mxu0 0.0
  %1552 = vmatprep.subr.mxu0 0.0
  %1553 = vmatpush1.msra.mxu0 0.0
  %1554 = vmatprep.subr.mxu0 0.0
  %1555 = vmatpush1.msra.mxu0 0.0
  %1556 = vmatprep.subr.mxu0 0.0
  %1557 = vmatpush1.msra.mxu0 0.0
  %1558 = vmatprep.subr.mxu0 0.0
  %1559 = vmatpush1.msra.mxu0 0.0
  %1560 = vmatprep.subr.mxu0 0.0
  %1561 = vmatpush1.msra.mxu0 0.0
  %1562 = vmatprep.subr.mxu0 0.0
  %1563 = vmatpush1.msra.mxu0 0.0
  %1564 = vmatprep.mubr.f32.mxu0 0.0
  %1565 = vmatmul.mubr.f32.gmra.mrb[0].mxu0 %v78
  %v1566 = vpop.f32.mrb[0].mxu0
  %v1567 = vadd.f32 0.0, %v1566
  %v1568 = vpop.f32.mrb[0].mxu0
  %v1569 = vadd.f32 0.0, %v1568
  %1570 = vdwg.mxu0
  %1571 = vmatprep.subr.mxu0 %v55
  %1572 = vmatpush1.msra.mxu0 %v54
  %1573 = vmatprep.subr.mxu0 0.0
  %1574 = vmatpush1.msra.mxu0 0.0
  %1575 = vmatprep.subr.mxu0 0.0
  %1576 = vmatpush1.msra.mxu0 0.0
  %1577 = vmatprep.subr.mxu0 0.0
  %1578 = vmatpush1.msra.mxu0 0.0
  %1579 = vmatprep.subr.mxu0 0.0
  %1580 = vmatpush1.msra.mxu0 0.0
  %1581 = vmatprep.subr.mxu0 0.0
  %1582 = vmatpush1.msra.mxu0 0.0
  %1583 = vmatprep.subr.mxu0 0.0
  %1584 = vmatpush1.msra.mxu0 0.0
  %1585 = vmatprep.subr.mxu0 0.0
  %1586 = vmatpush1.msra.mxu0 0.0
  %1587 = vmatprep.subr.mxu0 0.0
  %1588 = vmatpush1.msra.mxu0 0.0
  %1589 = vmatprep.subr.mxu0 0.0
  %1590 = vmatpush1.msra.mxu0 0.0
  %1591 = vmatprep.subr.mxu0 0.0
  %1592 = vmatpush1.msra.mxu0 0.0
  %1593 = vmatprep.subr.mxu0 0.0
  %1594 = vmatpush1.msra.mxu0 0.0
  %1595 = vmatprep.subr.mxu0 0.0
  %1596 = vmatpush1.msra.mxu0 0.0
  %1597 = vmatprep.subr.mxu0 0.0
  %1598 = vmatpush1.msra.mxu0 0.0
  %1599 = vmatprep.subr.mxu0 0.0
  %1600 = vmatpush1.msra.mxu0 0.0
  %1601 = vmatprep.subr.mxu0 0.0
  %1602 = vmatpush1.msra.mxu0 0.0
  %1603 = vmatprep.subr.mxu0 0.0
  %1604 = vmatpush1.msra.mxu0 0.0
  %1605 = vmatprep.subr.mxu0 0.0
  %1606 = vmatpush1.msra.mxu0 0.0
  %1607 = vmatprep.subr.mxu0 0.0
  %1608 = vmatpush1.msra.mxu0 0.0
  %1609 = vmatprep.subr.mxu0 0.0
  %1610 = vmatpush1.msra.mxu0 0.0
  %1611 = vmatprep.subr.mxu0 0.0
  %1612 = vmatpush1.msra.mxu0 0.0
  %1613 = vmatprep.subr.mxu0 0.0
  %1614 = vmatpush1.msra.mxu0 0.0
  %1615 = vmatprep.subr.mxu0 0.0
  %1616 = vmatpush1.msra.mxu0 0.0
  %1617 = vmatprep.subr.mxu0 0.0
  %1618 = vmatpush1.msra.mxu0 0.0
  %1619 = vmatprep.subr.mxu0 0.0
  %1620 = vmatpush1.msra.mxu0 0.0
  %1621 = vmatprep.subr.mxu0 0.0
  %1622 = vmatpush1.msra.mxu0 0.0
  %1623 = vmatprep.subr.mxu0 0.0
  %1624 = vmatpush1.msra.mxu0 0.0
  %1625 = vmatprep.subr.mxu0 0.0
  %1626 = vmatpush1.msra.mxu0 0.0
  %1627 = vmatprep.subr.mxu0 0.0
  %1628 = vmatpush1.msra.mxu0 0.0
  %1629 = vmatprep.subr.mxu0 0.0
  %1630 = vmatpush1.msra.mxu0 0.0
  %1631 = vmatprep.subr.mxu0 0.0
  %1632 = vmatpush1.msra.mxu0 0.0
  %1633 = vmatprep.subr.mxu0 0.0
  %1634 = vmatpush1.msra.mxu0 0.0
  %1635 = vmatprep.mubr.f32.mxu0 0.0
  %1636 = vmatmul.mubr.f32.gmra.mrb[0].mxu0 %v78
  %v1637 = vpop.f32.mrb[0].mxu0
  %v1638 = vadd.f32 0.0, %v1637
  %v1639 = vpop.f32.mrb[0].mxu0
  %v1640 = vadd.f32 0.0, %v1639
  %1641 = vdwg.mxu0
  %1642 = vmatprep.subr.mxu0 %v57
  %1643 = vmatpush1.msra.mxu0 %v56
  %1644 = vmatprep.subr.mxu0 0.0
  %1645 = vmatpush1.msra.mxu0 0.0
  %1646 = vmatprep.subr.mxu0 0.0
  %1647 = vmatpush1.msra.mxu0 0.0
  %1648 = vmatprep.subr.mxu0 0.0
  %1649 = vmatpush1.msra.mxu0 0.0
  %1650 = vmatprep.subr.mxu0 0.0
  %1651 = vmatpush1.msra.mxu0 0.0
  %1652 = vmatprep.subr.mxu0 0.0
  %1653 = vmatpush1.msra.mxu0 0.0
  %1654 = vmatprep.subr.mxu0 0.0
  %1655 = vmatpush1.msra.mxu0 0.0
  %1656 = vmatprep.subr.mxu0 0.0
  %1657 = vmatpush1.msra.mxu0 0.0
  %1658 = vmatprep.subr.mxu0 0.0
  %1659 = vmatpush1.msra.mxu0 0.0
  %1660 = vmatprep.subr.mxu0 0.0
  %1661 = vmatpush1.msra.mxu0 0.0
  %1662 = vmatprep.subr.mxu0 0.0
  %1663 = vmatpush1.msra.mxu0 0.0
  %1664 = vmatprep.subr.mxu0 0.0
  %1665 = vmatpush1.msra.mxu0 0.0
  %1666 = vmatprep.subr.mxu0 0.0
  %1667 = vmatpush1.msra.mxu0 0.0
  %1668 = vmatprep.subr.mxu0 0.0
  %1669 = vmatpush1.msra.mxu0 0.0
  %1670 = vmatprep.subr.mxu0 0.0
  %1671 = vmatpush1.msra.mxu0 0.0
  %1672 = vmatprep.subr.mxu0 0.0
  %1673 = vmatpush1.msra.mxu0 0.0
  %1674 = vmatprep.subr.mxu0 0.0
  %1675 = vmatpush1.msra.mxu0 0.0
  %1676 = vmatprep.subr.mxu0 0.0
  %1677 = vmatpush1.msra.mxu0 0.0
  %1678 = vmatprep.subr.mxu0 0.0
  %1679 = vmatpush1.msra.mxu0 0.0
  %1680 = vmatprep.subr.mxu0 0.0
  %1681 = vmatpush1.msra.mxu0 0.0
  %1682 = vmatprep.subr.mxu0 0.0
  %1683 = vmatpush1.msra.mxu0 0.0
  %1684 = vmatprep.subr.mxu0 0.0
  %1685 = vmatpush1.msra.mxu0 0.0
  %1686 = vmatprep.subr.mxu0 0.0
  %1687 = vmatpush1.msra.mxu0 0.0
  %1688 = vmatprep.subr.mxu0 0.0
  %1689 = vmatpush1.msra.mxu0 0.0
  %1690 = vmatprep.subr.mxu0 0.0
  %1691 = vmatpush1.msra.mxu0 0.0
  %1692 = vmatprep.subr.mxu0 0.0
  %1693 = vmatpush1.msra.mxu0 0.0
  %1694 = vmatprep.subr.mxu0 0.0
  %1695 = vmatpush1.msra.mxu0 0.0
  %1696 = vmatprep.subr.mxu0 0.0
  %1697 = vmatpush1.msra.mxu0 0.0
  %1698 = vmatprep.subr.mxu0 0.0
  %1699 = vmatpush1.msra.mxu0 0.0
  %1700 = vmatprep.subr.mxu0 0.0
  %1701 = vmatpush1.msra.mxu0 0.0
  %1702 = vmatprep.subr.mxu0 0.0
  %1703 = vmatpush1.msra.mxu0 0.0
  %1704 = vmatprep.subr.mxu0 0.0
  %1705 = vmatpush1.msra.mxu0 0.0
  %1706 = vmatprep.mubr.f32.mxu0 0.0
  %1707 = vmatmul.mubr.f32.gmra.mrb[0].mxu0 %v78
  %v1708 = vpop.f32.mrb[0].mxu0
  %v1709 = vadd.f32 0.0, %v1708
  %v1710 = vpop.f32.mrb[0].mxu0
  %v1711 = vadd.f32 0.0, %v1710
  %1712 = vdwg.mxu0
  %1713 = vmatprep.subr.mxu0 %v59
  %1714 = vmatpush1.msra.mxu0 %v58
  %1715 = vmatprep.subr.mxu0 0.0
  %1716 = vmatpush1.msra.mxu0 0.0
  %1717 = vmatprep.subr.mxu0 0.0
  %1718 = vmatpush1.msra.mxu0 0.0
  %1719 = vmatprep.subr.mxu0 0.0
  %1720 = vmatpush1.msra.mxu0 0.0
  %1721 = vmatprep.subr.mxu0 0.0
  %1722 = vmatpush1.msra.mxu0 0.0
  %1723 = vmatprep.subr.mxu0 0.0
  %1724 = vmatpush1.msra.mxu0 0.0
  %1725 = vmatprep.subr.mxu0 0.0
  %1726 = vmatpush1.msra.mxu0 0.0
  %1727 = vmatprep.subr.mxu0 0.0
  %1728 = vmatpush1.msra.mxu0 0.0
  %1729 = vmatprep.subr.mxu0 0.0
  %1730 = vmatpush1.msra.mxu0 0.0
  %1731 = vmatprep.subr.mxu0 0.0
  %1732 = vmatpush1.msra.mxu0 0.0
  %1733 = vmatprep.subr.mxu0 0.0
  %1734 = vmatpush1.msra.mxu0 0.0
  %1735 = vmatprep.subr.mxu0 0.0
  %1736 = vmatpush1.msra.mxu0 0.0
  %1737 = vmatprep.subr.mxu0 0.0
  %1738 = vmatpush1.msra.mxu0 0.0
  %1739 = vmatprep.subr.mxu0 0.0
  %1740 = vmatpush1.msra.mxu0 0.0
  %1741 = vmatprep.subr.mxu0 0.0
  %1742 = vmatpush1.msra.mxu0 0.0
  %1743 = vmatprep.subr.mxu0 0.0
  %1744 = vmatpush1.msra.mxu0 0.0
  %1745 = vmatprep.subr.mxu0 0.0
  %1746 = vmatpush1.msra.mxu0 0.0
  %1747 = vmatprep.subr.mxu0 0.0
  %1748 = vmatpush1.msra.mxu0 0.0
  %1749 = vmatprep.subr.mxu0 0.0
  %1750 = vmatpush1.msra.mxu0 0.0
  %1751 = vmatprep.subr.mxu0 0.0
  %1752 = vmatpush1.msra.mxu0 0.0
  %1753 = vmatprep.subr.mxu0 0.0
  %1754 = vmatpush1.msra.mxu0 0.0
  %1755 = vmatprep.subr.mxu0 0.0
  %1756 = vmatpush1.msra.mxu0 0.0
  %1757 = vmatprep.subr.mxu0 0.0
  %1758 = vmatpush1.msra.mxu0 0.0
  %1759 = vmatprep.subr.mxu0 0.0
  %1760 = vmatpush1.msra.mxu0 0.0
  %1761 = vmatprep.subr.mxu0 0.0
  %1762 = vmatpush1.msra.mxu0 0.0
  %1763 = vmatprep.subr.mxu0 0.0
  %1764 = vmatpush1.msra.mxu0 0.0
  %1765 = vmatprep.subr.mxu0 0.0
  %1766 = vmatpush1.msra.mxu0 0.0
  %1767 = vmatprep.subr.mxu0 0.0
  %1768 = vmatpush1.msra.mxu0 0.0
  %1769 = vmatprep.subr.mxu0 0.0
  %1770 = vmatpush1.msra.mxu0 0.0
  %1771 = vmatprep.subr.mxu0 0.0
  %1772 = vmatpush1.msra.mxu0 0.0
  %1773 = vmatprep.subr.mxu0 0.0
  %1774 = vmatpush1.msra.mxu0 0.0
  %1775 = vmatprep.subr.mxu0 0.0
  %1776 = vmatpush1.msra.mxu0 0.0
  %1777 = vmatprep.mubr.f32.mxu0 0.0
  %1778 = vmatmul.mubr.f32.gmra.mrb[0].mxu0 %v78
  %v1779 = vpop.f32.mrb[0].mxu0
  %v1780 = vadd.f32 0.0, %v1779
  %v1781 = vpop.f32.mrb[0].mxu0
  %v1782 = vadd.f32 0.0, %v1781
  %1783 = vdwg.mxu0
  %1784 = vmatprep.subr.mxu0 %v61
  %1785 = vmatpush1.msra.mxu0 %v60
  %1786 = vmatprep.subr.mxu0 0.0
  %1787 = vmatpush1.msra.mxu0 0.0
  %1788 = vmatprep.subr.mxu0 0.0
  %1789 = vmatpush1.msra.mxu0 0.0
  %1790 = vmatprep.subr.mxu0 0.0
  %1791 = vmatpush1.msra.mxu0 0.0
  %1792 = vmatprep.subr.mxu0 0.0
  %1793 = vmatpush1.msra.mxu0 0.0
  %1794 = vmatprep.subr.mxu0 0.0
  %1795 = vmatpush1.msra.mxu0 0.0
  %1796 = vmatprep.subr.mxu0 0.0
  %1797 = vmatpush1.msra.mxu0 0.0
  %1798 = vmatprep.subr.mxu0 0.0
  %1799 = vmatpush1.msra.mxu0 0.0
  %1800 = vmatprep.subr.mxu0 0.0
  %1801 = vmatpush1.msra.mxu0 0.0
  %1802 = vmatprep.subr.mxu0 0.0
  %1803 = vmatpush1.msra.mxu0 0.0
  %1804 = vmatprep.subr.mxu0 0.0
  %1805 = vmatpush1.msra.mxu0 0.0
  %1806 = vmatprep.subr.mxu0 0.0
  %1807 = vmatpush1.msra.mxu0 0.0
  %1808 = vmatprep.subr.mxu0 0.0
  %1809 = vmatpush1.msra.mxu0 0.0
  %1810 = vmatprep.subr.mxu0 0.0
  %1811 = vmatpush1.msra.mxu0 0.0
  %1812 = vmatprep.subr.mxu0 0.0
  %1813 = vmatpush1.msra.mxu0 0.0
  %1814 = vmatprep.subr.mxu0 0.0
  %1815 = vmatpush1.msra.mxu0 0.0
  %1816 = vmatprep.subr.mxu0 0.0
  %1817 = vmatpush1.msra.mxu0 0.0
  %1818 = vmatprep.subr.mxu0 0.0
  %1819 = vmatpush1.msra.mxu0 0.0
  %1820 = vmatprep.subr.mxu0 0.0
  %1821 = vmatpush1.msra.mxu0 0.0
  %1822 = vmatprep.subr.mxu0 0.0
  %1823 = vmatpush1.msra.mxu0 0.0
  %1824 = vmatprep.subr.mxu0 0.0
  %1825 = vmatpush1.msra.mxu0 0.0
  %1826 = vmatprep.subr.mxu0 0.0
  %1827 = vmatpush1.msra.mxu0 0.0
  %1828 = vmatprep.subr.mxu0 0.0
  %1829 = vmatpush1.msra.mxu0 0.0
  %1830 = vmatprep.subr.mxu0 0.0
  %1831 = vmatpush1.msra.mxu0 0.0
  %1832 = vmatprep.subr.mxu0 0.0
  %1833 = vmatpush1.msra.mxu0 0.0
  %1834 = vmatprep.subr.mxu0 0.0
  %1835 = vmatpush1.msra.mxu0 0.0
  %1836 = vmatprep.subr.mxu0 0.0
  %1837 = vmatpush1.msra.mxu0 0.0
  %1838 = vmatprep.subr.mxu0 0.0
  %1839 = vmatpush1.msra.mxu0 0.0
  %1840 = vmatprep.subr.mxu0 0.0
  %1841 = vmatpush1.msra.mxu0 0.0
  %1842 = vmatprep.subr.mxu0 0.0
  %1843 = vmatpush1.msra.mxu0 0.0
  %1844 = vmatprep.subr.mxu0 0.0
  %1845 = vmatpush1.msra.mxu0 0.0
  %1846 = vmatprep.subr.mxu0 0.0
  %1847 = vmatpush1.msra.mxu0 0.0
  %1848 = vmatprep.mubr.f32.mxu0 0.0
  %1849 = vmatmul.mubr.f32.gmra.mrb[0].mxu0 %v78
  %v1850 = vpop.f32.mrb[0].mxu0
  %v1851 = vadd.f32 0.0, %v1850
  %v1852 = vpop.f32.mrb[0].mxu0
  %v1853 = vadd.f32 0.0, %v1852
  %1854 = vdwg.mxu0
  %1855 = vmatprep.subr.mxu0 %v63
  %1856 = vmatpush1.msra.mxu0 %v62
  %1857 = vmatprep.subr.mxu0 0.0
  %1858 = vmatpush1.msra.mxu0 0.0
  %1859 = vmatprep.subr.mxu0 0.0
  %1860 = vmatpush1.msra.mxu0 0.0
  %1861 = vmatprep.subr.mxu0 0.0
  %1862 = vmatpush1.msra.mxu0 0.0
  %1863 = vmatprep.subr.mxu0 0.0
  %1864 = vmatpush1.msra.mxu0 0.0
  %1865 = vmatprep.subr.mxu0 0.0
  %1866 = vmatpush1.msra.mxu0 0.0
  %1867 = vmatprep.subr.mxu0 0.0
  %1868 = vmatpush1.msra.mxu0 0.0
  %1869 = vmatprep.subr.mxu0 0.0
  %1870 = vmatpush1.msra.mxu0 0.0
  %1871 = vmatprep.subr.mxu0 0.0
  %1872 = vmatpush1.msra.mxu0 0.0
  %1873 = vmatprep.subr.mxu0 0.0
  %1874 = vmatpush1.msra.mxu0 0.0
  %1875 = vmatprep.subr.mxu0 0.0
  %1876 = vmatpush1.msra.mxu0 0.0
  %1877 = vmatprep.subr.mxu0 0.0
  %1878 = vmatpush1.msra.mxu0 0.0
  %1879 = vmatprep.subr.mxu0 0.0
  %1880 = vmatpush1.msra.mxu0 0.0
  %1881 = vmatprep.subr.mxu0 0.0
  %1882 = vmatpush1.msra.mxu0 0.0
  %1883 = vmatprep.subr.mxu0 0.0
  %1884 = vmatpush1.msra.mxu0 0.0
  %1885 = vmatprep.subr.mxu0 0.0
  %1886 = vmatpush1.msra.mxu0 0.0
  %1887 = vmatprep.subr.mxu0 0.0
  %1888 = vmatpush1.msra.mxu0 0.0
  %1889 = vmatprep.subr.mxu0 0.0
  %1890 = vmatpush1.msra.mxu0 0.0
  %1891 = vmatprep.subr.mxu0 0.0
  %1892 = vmatpush1.msra.mxu0 0.0
  %1893 = vmatprep.subr.mxu0 0.0
  %1894 = vmatpush1.msra.mxu0 0.0
  %1895 = vmatprep.subr.mxu0 0.0
  %1896 = vmatpush1.msra.mxu0 0.0
  %1897 = vmatprep.subr.mxu0 0.0
  %1898 = vmatpush1.msra.mxu0 0.0
  %1899 = vmatprep.subr.mxu0 0.0
  %1900 = vmatpush1.msra.mxu0 0.0
  %1901 = vmatprep.subr.mxu0 0.0
  %1902 = vmatpush1.msra.mxu0 0.0
  %1903 = vmatprep.subr.mxu0 0.0
  %1904 = vmatpush1.msra.mxu0 0.0
  %1905 = vmatprep.subr.mxu0 0.0
  %1906 = vmatpush1.msra.mxu0 0.0
  %1907 = vmatprep.subr.mxu0 0.0
  %1908 = vmatpush1.msra.mxu0 0.0
  %1909 = vmatprep.subr.mxu0 0.0
  %1910 = vmatpush1.msra.mxu0 0.0
  %1911 = vmatprep.subr.mxu0 0.0
  %1912 = vmatpush1.msra.mxu0 0.0
  %1913 = vmatprep.subr.mxu0 0.0
  %1914 = vmatpush1.msra.mxu0 0.0
  %1915 = vmatprep.subr.mxu0 0.0
  %1916 = vmatpush1.msra.mxu0 0.0
  %1917 = vmatprep.subr.mxu0 0.0
  %1918 = vmatpush1.msra.mxu0 0.0
  %1919 = vmatprep.mubr.f32.mxu0 0.0
  %1920 = vmatmul.mubr.f32.gmra.mrb[0].mxu0 %v78
  %v1921 = vpop.f32.mrb[0].mxu0
  %v1922 = vadd.f32 0.0, %v1921
  %v1923 = vpop.f32.mrb[0].mxu0
  %v1924 = vadd.f32 0.0, %v1923
  %1925 = vdwg.mxu0
  %1926 = vmatprep.subr.mxu0 %v65
  %1927 = vmatpush1.msra.mxu0 %v64
  %1928 = vmatprep.subr.mxu0 0.0
  %1929 = vmatpush1.msra.mxu0 0.0
  %1930 = vmatprep.subr.mxu0 0.0
  %1931 = vmatpush1.msra.mxu0 0.0
  %1932 = vmatprep.subr.mxu0 0.0
  %1933 = vmatpush1.msra.mxu0 0.0
  %1934 = vmatprep.subr.mxu0 0.0
  %1935 = vmatpush1.msra.mxu0 0.0
  %1936 = vmatprep.subr.mxu0 0.0
  %1937 = vmatpush1.msra.mxu0 0.0
  %1938 = vmatprep.subr.mxu0 0.0
  %1939 = vmatpush1.msra.mxu0 0.0
  %1940 = vmatprep.subr.mxu0 0.0
  %1941 = vmatpush1.msra.mxu0 0.0
  %1942 = vmatprep.subr.mxu0 0.0
  %1943 = vmatpush1.msra.mxu0 0.0
  %1944 = vmatprep.subr.mxu0 0.0
  %1945 = vmatpush1.msra.mxu0 0.0
  %1946 = vmatprep.subr.mxu0 0.0
  %1947 = vmatpush1.msra.mxu0 0.0
  %1948 = vmatprep.subr.mxu0 0.0
  %1949 = vmatpush1.msra.mxu0 0.0
  %1950 = vmatprep.subr.mxu0 0.0
  %1951 = vmatpush1.msra.mxu0 0.0
  %1952 = vmatprep.subr.mxu0 0.0
  %1953 = vmatpush1.msra.mxu0 0.0
  %1954 = vmatprep.subr.mxu0 0.0
  %1955 = vmatpush1.msra.mxu0 0.0
  %1956 = vmatprep.subr.mxu0 0.0
  %1957 = vmatpush1.msra.mxu0 0.0
  %1958 = vmatprep.subr.mxu0 0.0
  %1959 = vmatpush1.msra.mxu0 0.0
  %1960 = vmatprep.subr.mxu0 0.0
  %1961 = vmatpush1.msra.mxu0 0.0
  %1962 = vmatprep.subr.mxu0 0.0
  %1963 = vmatpush1.msra.mxu0 0.0
  %1964 = vmatprep.subr.mxu0 0.0
  %1965 = vmatpush1.msra.mxu0 0.0
  %1966 = vmatprep.subr.mxu0 0.0
  %1967 = vmatpush1.msra.mxu0 0.0
  %1968 = vmatprep.subr.mxu0 0.0
  %1969 = vmatpush1.msra.mxu0 0.0
  %1970 = vmatprep.subr.mxu0 0.0
  %1971 = vmatpush1.msra.mxu0 0.0
  %1972 = vmatprep.subr.mxu0 0.0
  %1973 = vmatpush1.msra.mxu0 0.0
  %1974 = vmatprep.subr.mxu0 0.0
  %1975 = vmatpush1.msra.mxu0 0.0
  %1976 = vmatprep.subr.mxu0 0.0
  %1977 = vmatpush1.msra.mxu0 0.0
  %1978 = vmatprep.subr.mxu0 0.0
  %1979 = vmatpush1.msra.mxu0 0.0
  %1980 = vmatprep.subr.mxu0 0.0
  %1981 = vmatpush1.msra.mxu0 0.0
  %1982 = vmatprep.subr.mxu0 0.0
  %1983 = vmatpush1.msra.mxu0 0.0
  %1984 = vmatprep.subr.mxu0 0.0
  %1985 = vmatpush1.msra.mxu0 0.0
  %1986 = vmatprep.subr.mxu0 0.0
  %1987 = vmatpush1.msra.mxu0 0.0
  %1988 = vmatprep.subr.mxu0 0.0
  %1989 = vmatpush1.msra.mxu0 0.0
  %1990 = vmatprep.mubr.f32.mxu0 0.0
  %1991 = vmatmul.mubr.f32.gmra.mrb[0].mxu0 %v78
  %v1992 = vpop.f32.mrb[0].mxu0
  %v1993 = vadd.f32 0.0, %v1992
  %v1994 = vpop.f32.mrb[0].mxu0
  %v1995 = vadd.f32 0.0, %v1994
  %1996 = vdwg.mxu0
  %1997 = vmatprep.subr.mxu0 %v67
  %1998 = vmatpush1.msra.mxu0 %v66
  %1999 = vmatprep.subr.mxu0 0.0
  %2000 = vmatpush1.msra.mxu0 0.0
  %2001 = vmatprep.subr.mxu0 0.0
  %2002 = vmatpush1.msra.mxu0 0.0
  %2003 = vmatprep.subr.mxu0 0.0
  %2004 = vmatpush1.msra.mxu0 0.0
  %2005 = vmatprep.subr.mxu0 0.0
  %2006 = vmatpush1.msra.mxu0 0.0
  %2007 = vmatprep.subr.mxu0 0.0
  %2008 = vmatpush1.msra.mxu0 0.0
  %2009 = vmatprep.subr.mxu0 0.0
  %2010 = vmatpush1.msra.mxu0 0.0
  %2011 = vmatprep.subr.mxu0 0.0
  %2012 = vmatpush1.msra.mxu0 0.0
  %2013 = vmatprep.subr.mxu0 0.0
  %2014 = vmatpush1.msra.mxu0 0.0
  %2015 = vmatprep.subr.mxu0 0.0
  %2016 = vmatpush1.msra.mxu0 0.0
  %2017 = vmatprep.subr.mxu0 0.0
  %2018 = vmatpush1.msra.mxu0 0.0
  %2019 = vmatprep.subr.mxu0 0.0
  %2020 = vmatpush1.msra.mxu0 0.0
  %2021 = vmatprep.subr.mxu0 0.0
  %2022 = vmatpush1.msra.mxu0 0.0
  %2023 = vmatprep.subr.mxu0 0.0
  %2024 = vmatpush1.msra.mxu0 0.0
  %2025 = vmatprep.subr.mxu0 0.0
  %2026 = vmatpush1.msra.mxu0 0.0
  %2027 = vmatprep.subr.mxu0 0.0
  %2028 = vmatpush1.msra.mxu0 0.0
  %2029 = vmatprep.subr.mxu0 0.0
  %2030 = vmatpush1.msra.mxu0 0.0
  %2031 = vmatprep.subr.mxu0 0.0
  %2032 = vmatpush1.msra.mxu0 0.0
  %2033 = vmatprep.subr.mxu0 0.0
  %2034 = vmatpush1.msra.mxu0 0.0
  %2035 = vmatprep.subr.mxu0 0.0
  %2036 = vmatpush1.msra.mxu0 0.0
  %2037 = vmatprep.subr.mxu0 0.0
  %2038 = vmatpush1.msra.mxu0 0.0
  %2039 = vmatprep.subr.mxu0 0.0
  %2040 = vmatpush1.msra.mxu0 0.0
  %2041 = vmatprep.subr.mxu0 0.0
  %2042 = vmatpush1.msra.mxu0 0.0
  %2043 = vmatprep.subr.mxu0 0.0
  %2044 = vmatpush1.msra.mxu0 0.0
  %2045 = vmatprep.subr.mxu0 0.0
  %2046 = vmatpush1.msra.mxu0 0.0
  %2047 = vmatprep.subr.mxu0 0.0
  %2048 = vmatpush1.msra.mxu0 0.0
  %2049 = vmatprep.subr.mxu0 0.0
  %2050 = vmatpush1.msra.mxu0 0.0
  %2051 = vmatprep.subr.mxu0 0.0
  %2052 = vmatpush1.msra.mxu0 0.0
  %2053 = vmatprep.subr.mxu0 0.0
  %2054 = vmatpush1.msra.mxu0 0.0
  %2055 = vmatprep.subr.mxu0 0.0
  %2056 = vmatpush1.msra.mxu0 0.0
  %2057 = vmatprep.subr.mxu0 0.0
  %2058 = vmatpush1.msra.mxu0 0.0
  %2059 = vmatprep.subr.mxu0 0.0
  %2060 = vmatpush1.msra.mxu0 0.0
  %2061 = vmatprep.mubr.f32.mxu0 0.0
  %2062 = vmatmul.mubr.f32.gmra.mrb[0].mxu0 %v78
  %v2063 = vpop.f32.mrb[0].mxu0
  %v2064 = vadd.f32 0.0, %v2063
  %v2065 = vpop.f32.mrb[0].mxu0
  %v2066 = vadd.f32 0.0, %v2065
  %2067 = vdwg.mxu0
  %2068 = vmatprep.subr.mxu0 %v69
  %2069 = vmatpush1.msra.mxu0 %v68
  %2070 = vmatprep.subr.mxu0 0.0
  %2071 = vmatpush1.msra.mxu0 0.0
  %2072 = vmatprep.subr.mxu0 0.0
  %2073 = vmatpush1.msra.mxu0 0.0
  %2074 = vmatprep.subr.mxu0 0.0
  %2075 = vmatpush1.msra.mxu0 0.0
  %2076 = vmatprep.subr.mxu0 0.0
  %2077 = vmatpush1.msra.mxu0 0.0
  %2078 = vmatprep.subr.mxu0 0.0
  %2079 = vmatpush1.msra.mxu0 0.0
  %2080 = vmatprep.subr.mxu0 0.0
  %2081 = vmatpush1.msra.mxu0 0.0
  %2082 = vmatprep.subr.mxu0 0.0
  %2083 = vmatpush1.msra.mxu0 0.0
  %2084 = vmatprep.subr.mxu0 0.0
  %2085 = vmatpush1.msra.mxu0 0.0
  %2086 = vmatprep.subr.mxu0 0.0
  %2087 = vmatpush1.msra.mxu0 0.0
  %2088 = vmatprep.subr.mxu0 0.0
  %2089 = vmatpush1.msra.mxu0 0.0
  %2090 = vmatprep.subr.mxu0 0.0
  %2091 = vmatpush1.msra.mxu0 0.0
  %2092 = vmatprep.subr.mxu0 0.0
  %2093 = vmatpush1.msra.mxu0 0.0
  %2094 = vmatprep.subr.mxu0 0.0
  %2095 = vmatpush1.msra.mxu0 0.0
  %2096 = vmatprep.subr.mxu0 0.0
  %2097 = vmatpush1.msra.mxu0 0.0
  %2098 = vmatprep.subr.mxu0 0.0
  %2099 = vmatpush1.msra.mxu0 0.0
  %2100 = vmatprep.subr.mxu0 0.0
  %2101 = vmatpush1.msra.mxu0 0.0
  %2102 = vmatprep.subr.mxu0 0.0
  %2103 = vmatpush1.msra.mxu0 0.0
  %2104 = vmatprep.subr.mxu0 0.0
  %2105 = vmatpush1.msra.mxu0 0.0
  %2106 = vmatprep.subr.mxu0 0.0
  %2107 = vmatpush1.msra.mxu0 0.0
  %2108 = vmatprep.subr.mxu0 0.0
  %2109 = vmatpush1.msra.mxu0 0.0
  %2110 = vmatprep.subr.mxu0 0.0
  %2111 = vmatpush1.msra.mxu0 0.0
  %2112 = vmatprep.subr.mxu0 0.0
  %2113 = vmatpush1.msra.mxu0 0.0
  %2114 = vmatprep.subr.mxu0 0.0
  %2115 = vmatpush1.msra.mxu0 0.0
  %2116 = vmatprep.subr.mxu0 0.0
  %2117 = vmatpush1.msra.mxu0 0.0
  %2118 = vmatprep.subr.mxu0 0.0
  %2119 = vmatpush1.msra.mxu0 0.0
  %2120 = vmatprep.subr.mxu0 0.0
  %2121 = vmatpush1.msra.mxu0 0.0
  %2122 = vmatprep.subr.mxu0 0.0
  %2123 = vmatpush1.msra.mxu0 0.0
  %2124 = vmatprep.subr.mxu0 0.0
  %2125 = vmatpush1.msra.mxu0 0.0
  %2126 = vmatprep.subr.mxu0 0.0
  %2127 = vmatpush1.msra.mxu0 0.0
  %2128 = vmatprep.subr.mxu0 0.0
  %2129 = vmatpush1.msra.mxu0 0.0
  %2130 = vmatprep.subr.mxu0 0.0
  %2131 = vmatpush1.msra.mxu0 0.0
  %2132 = vmatprep.mubr.f32.mxu0 0.0
  %2133 = vmatmul.mubr.f32.gmra.mrb[0].mxu0 %v78
  %v2134 = vpop.f32.mrb[0].mxu0
  %v2135 = vadd.f32 0.0, %v2134
  %v2136 = vpop.f32.mrb[0].mxu0
  %v2137 = vadd.f32 0.0, %v2136
  %2138 = vdwg.mxu0
  %2139 = vmatprep.subr.mxu0 %v71
  %2140 = vmatpush1.msra.mxu0 %v70
  %2141 = vmatprep.subr.mxu0 0.0
  %2142 = vmatpush1.msra.mxu0 0.0
  %2143 = vmatprep.subr.mxu0 0.0
  %2144 = vmatpush1.msra.mxu0 0.0
  %2145 = vmatprep.subr.mxu0 0.0
  %2146 = vmatpush1.msra.mxu0 0.0
  %2147 = vmatprep.subr.mxu0 0.0
  %2148 = vmatpush1.msra.mxu0 0.0
  %2149 = vmatprep.subr.mxu0 0.0
  %2150 = vmatpush1.msra.mxu0 0.0
  %2151 = vmatprep.subr.mxu0 0.0
  %2152 = vmatpush1.msra.mxu0 0.0
  %2153 = vmatprep.subr.mxu0 0.0
  %2154 = vmatpush1.msra.mxu0 0.0
  %2155 = vmatprep.subr.mxu0 0.0
  %2156 = vmatpush1.msra.mxu0 0.0
  %2157 = vmatprep.subr.mxu0 0.0
  %2158 = vmatpush1.msra.mxu0 0.0
  %2159 = vmatprep.subr.mxu0 0.0
  %2160 = vmatpush1.msra.mxu0 0.0
  %2161 = vmatprep.subr.mxu0 0.0
  %2162 = vmatpush1.msra.mxu0 0.0
  %2163 = vmatprep.subr.mxu0 0.0
  %2164 = vmatpush1.msra.mxu0 0.0
  %2165 = vmatprep.subr.mxu0 0.0
  %2166 = vmatpush1.msra.mxu0 0.0
  %2167 = vmatprep.subr.mxu0 0.0
  %2168 = vmatpush1.msra.mxu0 0.0
  %2169 = vmatprep.subr.mxu0 0.0
  %2170 = vmatpush1.msra.mxu0 0.0
  %2171 = vmatprep.subr.mxu0 0.0
  %2172 = vmatpush1.msra.mxu0 0.0
  %2173 = vmatprep.subr.mxu0 0.0
  %2174 = vmatpush1.msra.mxu0 0.0
  %2175 = vmatprep.subr.mxu0 0.0
  %2176 = vmatpush1.msra.mxu0 0.0
  %2177 = vmatprep.subr.mxu0 0.0
  %2178 = vmatpush1.msra.mxu0 0.0
  %2179 = vmatprep.subr.mxu0 0.0
  %2180 = vmatpush1.msra.mxu0 0.0
  %2181 = vmatprep.subr.mxu0 0.0
  %2182 = vmatpush1.msra.mxu0 0.0
  %2183 = vmatprep.subr.mxu0 0.0
  %2184 = vmatpush1.msra.mxu0 0.0
  %2185 = vmatprep.subr.mxu0 0.0
  %2186 = vmatpush1.msra.mxu0 0.0
  %2187 = vmatprep.subr.mxu0 0.0
  %2188 = vmatpush1.msra.mxu0 0.0
  %2189 = vmatprep.subr.mxu0 0.0
  %2190 = vmatpush1.msra.mxu0 0.0
  %2191 = vmatprep.subr.mxu0 0.0
  %2192 = vmatpush1.msra.mxu0 0.0
  %2193 = vmatprep.subr.mxu0 0.0
  %2194 = vmatpush1.msra.mxu0 0.0
  %2195 = vmatprep.subr.mxu0 0.0
  %2196 = vmatpush1.msra.mxu0 0.0
  %2197 = vmatprep.subr.mxu0 0.0
  %2198 = vmatpush1.msra.mxu0 0.0
  %2199 = vmatprep.subr.mxu0 0.0
  %2200 = vmatpush1.msra.mxu0 0.0
  %2201 = vmatprep.subr.mxu0 0.0
  %2202 = vmatpush1.msra.mxu0 0.0
  %2203 = vmatprep.mubr.f32.mxu0 0.0
  %2204 = vmatmul.mubr.f32.gmra.mrb[0].mxu0 %v78
  %v2205 = vpop.f32.mrb[0].mxu0
  %v2206 = vadd.f32 0.0, %v2205
  %v2207 = vpop.f32.mrb[0].mxu0
  %v2208 = vadd.f32 0.0, %v2207
  %2209 = vdwg.mxu0
  %2210 = vmatprep.subr.mxu0 %v73
  %2211 = vmatpush1.msra.mxu0 %v72
  %2212 = vmatprep.subr.mxu0 0.0
  %2213 = vmatpush1.msra.mxu0 0.0
  %2214 = vmatprep.subr.mxu0 0.0
  %2215 = vmatpush1.msra.mxu0 0.0
  %2216 = vmatprep.subr.mxu0 0.0
  %2217 = vmatpush1.msra.mxu0 0.0
  %2218 = vmatprep.subr.mxu0 0.0
  %2219 = vmatpush1.msra.mxu0 0.0
  %2220 = vmatprep.subr.mxu0 0.0
  %2221 = vmatpush1.msra.mxu0 0.0
  %2222 = vmatprep.subr.mxu0 0.0
  %2223 = vmatpush1.msra.mxu0 0.0
  %2224 = vmatprep.subr.mxu0 0.0
  %2225 = vmatpush1.msra.mxu0 0.0
  %2226 = vmatprep.subr.mxu0 0.0
  %2227 = vmatpush1.msra.mxu0 0.0
  %2228 = vmatprep.subr.mxu0 0.0
  %2229 = vmatpush1.msra.mxu0 0.0
  %2230 = vmatprep.subr.mxu0 0.0
  %2231 = vmatpush1.msra.mxu0 0.0
  %2232 = vmatprep.subr.mxu0 0.0
  %2233 = vmatpush1.msra.mxu0 0.0
  %2234 = vmatprep.subr.mxu0 0.0
  %2235 = vmatpush1.msra.mxu0 0.0
  %2236 = vmatprep.subr.mxu0 0.0
  %2237 = vmatpush1.msra.mxu0 0.0
  %2238 = vmatprep.subr.mxu0 0.0
  %2239 = vmatpush1.msra.mxu0 0.0
  %2240 = vmatprep.subr.mxu0 0.0
  %2241 = vmatpush1.msra.mxu0 0.0
  %2242 = vmatprep.subr.mxu0 0.0
  %2243 = vmatpush1.msra.mxu0 0.0
  %2244 = vmatprep.subr.mxu0 0.0
  %2245 = vmatpush1.msra.mxu0 0.0
  %2246 = vmatprep.subr.mxu0 0.0
  %2247 = vmatpush1.msra.mxu0 0.0
  %2248 = vmatprep.subr.mxu0 0.0
  %2249 = vmatpush1.msra.mxu0 0.0
  %2250 = vmatprep.subr.mxu0 0.0
  %2251 = vmatpush1.msra.mxu0 0.0
  %2252 = vmatprep.subr.mxu0 0.0
  %2253 = vmatpush1.msra.mxu0 0.0
  %2254 = vmatprep.subr.mxu0 0.0
  %2255 = vmatpush1.msra.mxu0 0.0
  %2256 = vmatprep.subr.mxu0 0.0
  %2257 = vmatpush1.msra.mxu0 0.0
  %2258 = vmatprep.subr.mxu0 0.0
  %2259 = vmatpush1.msra.mxu0 0.0
  %2260 = vmatprep.subr.mxu0 0.0
  %2261 = vmatpush1.msra.mxu0 0.0
  %2262 = vmatprep.subr.mxu0 0.0
  %2263 = vmatpush1.msra.mxu0 0.0
  %2264 = vmatprep.subr.mxu0 0.0
  %2265 = vmatpush1.msra.mxu0 0.0
  %2266 = vmatprep.subr.mxu0 0.0
  %2267 = vmatpush1.msra.mxu0 0.0
  %2268 = vmatprep.subr.mxu0 0.0
  %2269 = vmatpush1.msra.mxu0 0.0
  %2270 = vmatprep.subr.mxu0 0.0
  %2271 = vmatpush1.msra.mxu0 0.0
  %2272 = vmatprep.subr.mxu0 0.0
  %2273 = vmatpush1.msra.mxu0 0.0
  %2274 = vmatprep.mubr.f32.mxu0 0.0
  %2275 = vmatmul.mubr.f32.gmra.mrb[0].mxu0 %v78
  %v2276 = vpop.f32.mrb[0].mxu0
  %v2277 = vadd.f32 0.0, %v2276
  %v2278 = vpop.f32.mrb[0].mxu0
  %v2279 = vadd.f32 0.0, %v2278
  %2280 = vdwg.mxu0
  %2281 = vmatprep.subr.mxu0 %v75
  %2282 = vmatpush1.msra.mxu0 %v74
  %2283 = vmatprep.subr.mxu0 0.0
  %2284 = vmatpush1.msra.mxu0 0.0
  %2285 = vmatprep.subr.mxu0 0.0
  %2286 = vmatpush1.msra.mxu0 0.0
  %2287 = vmatprep.subr.mxu0 0.0
  %2288 = vmatpush1.msra.mxu0 0.0
  %2289 = vmatprep.subr.mxu0 0.0
  %2290 = vmatpush1.msra.mxu0 0.0
  %2291 = vmatprep.subr.mxu0 0.0
  %2292 = vmatpush1.msra.mxu0 0.0
  %2293 = vmatprep.subr.mxu0 0.0
  %2294 = vmatpush1.msra.mxu0 0.0
  %2295 = vmatprep.subr.mxu0 0.0
  %2296 = vmatpush1.msra.mxu0 0.0
  %2297 = vmatprep.subr.mxu0 0.0
  %2298 = vmatpush1.msra.mxu0 0.0
  %2299 = vmatprep.subr.mxu0 0.0
  %2300 = vmatpush1.msra.mxu0 0.0
  %2301 = vmatprep.subr.mxu0 0.0
  %2302 = vmatpush1.msra.mxu0 0.0
  %2303 = vmatprep.subr.mxu0 0.0
  %2304 = vmatpush1.msra.mxu0 0.0
  %2305 = vmatprep.subr.mxu0 0.0
  %2306 = vmatpush1.msra.mxu0 0.0
  %2307 = vmatprep.subr.mxu0 0.0
  %2308 = vmatpush1.msra.mxu0 0.0
  %2309 = vmatprep.subr.mxu0 0.0
  %2310 = vmatpush1.msra.mxu0 0.0
  %2311 = vmatprep.subr.mxu0 0.0
  %2312 = vmatpush1.msra.mxu0 0.0
  %2313 = vmatprep.subr.mxu0 0.0
  %2314 = vmatpush1.msra.mxu0 0.0
  %2315 = vmatprep.subr.mxu0 0.0
  %2316 = vmatpush1.msra.mxu0 0.0
  %2317 = vmatprep.subr.mxu0 0.0
  %2318 = vmatpush1.msra.mxu0 0.0
  %2319 = vmatprep.subr.mxu0 0.0
  %2320 = vmatpush1.msra.mxu0 0.0
  %2321 = vmatprep.subr.mxu0 0.0
  %2322 = vmatpush1.msra.mxu0 0.0
  %2323 = vmatprep.subr.mxu0 0.0
  %2324 = vmatpush1.msra.mxu0 0.0
  %2325 = vmatprep.subr.mxu0 0.0
  %2326 = vmatpush1.msra.mxu0 0.0
  %2327 = vmatprep.subr.mxu0 0.0
  %2328 = vmatpush1.msra.mxu0 0.0
  %2329 = vmatprep.subr.mxu0 0.0
  %2330 = vmatpush1.msra.mxu0 0.0
  %2331 = vmatprep.subr.mxu0 0.0
  %2332 = vmatpush1.msra.mxu0 0.0
  %2333 = vmatprep.subr.mxu0 0.0
  %2334 = vmatpush1.msra.mxu0 0.0
  %2335 = vmatprep.subr.mxu0 0.0
  %2336 = vmatpush1.msra.mxu0 0.0
  %2337 = vmatprep.subr.mxu0 0.0
  %2338 = vmatpush1.msra.mxu0 0.0
  %2339 = vmatprep.subr.mxu0 0.0
  %2340 = vmatpush1.msra.mxu0 0.0
  %2341 = vmatprep.subr.mxu0 0.0
  %2342 = vmatpush1.msra.mxu0 0.0
  %2343 = vmatprep.subr.mxu0 0.0
  %2344 = vmatpush1.msra.mxu0 0.0
  %2345 = vmatprep.mubr.f32.mxu0 0.0
  %2346 = vmatmul.mubr.f32.gmra.mrb[0].mxu0 %v78
  %v2347 = vpop.f32.mrb[0].mxu0
  %v2348 = vadd.f32 0.0, %v2347
  %v2349 = vpop.f32.mrb[0].mxu0
  %v2350 = vadd.f32 0.0, %v2349
  %2351 = vdwg.mxu0
  %2352 = vst [vmem:[%s2] sm:$0xff] %v147
  %2353 = vst [vmem:[%s2 + $0x8] sm:$0xff] %v149
  %2354 = vst [vmem:[%s2 + $0x10] sm:$0xff] %v218
  %2355 = vst [vmem:[%s2 + $0x18] sm:$0xff] %v220
  %2356 = vst [vmem:[%s2 + $0x20] sm:$0xff] %v289
  %2357 = vst [vmem:[%s2 + $0x28] sm:$0xff] %v291
  %2358 = vst [vmem:[%s2 + $0x30] sm:$0xff] %v360
  %2359 = vst [vmem:[%s2 + $0x38] sm:$0xff] %v362
  %2360 = vst [vmem:[%s2 + $0x40] sm:$0xff] %v431
  %2361 = vst [vmem:[%s2 + $0x48] sm:$0xff] %v433
  %2362 = vst [vmem:[%s2 + $0x50] sm:$0xff] %v502
  %2363 = vst [vmem:[%s2 + $0x58] sm:$0xff] %v504
  %2364 = vst [vmem:[%s2 + $0x60] sm:$0xff] %v573
  %2365 = vst [vmem:[%s2 + $0x68] sm:$0xff] %v575
  %2366 = vst [vmem:[%s2 + $0x70] sm:$0xff] %v644
  %2367 = vst [vmem:[%s2 + $0x78] sm:$0xff] %v646
  %2368 = vst [vmem:[%s2 + $0x80] sm:$0xff] %v715
  %2369 = vst [vmem:[%s2 + $0x88] sm:$0xff] %v717
  %2370 = vst [vmem:[%s2 + $0x90] sm:$0xff] %v786
  %2371 = vst [vmem:[%s2 + $0x98] sm:$0xff] %v788
  %2372 = vst [vmem:[%s2 + $0xa0] sm:$0xff] %v857
  %2373 = vst [vmem:[%s2 + $0xa8] sm:$0xff] %v859
  %2374 = vst [vmem:[%s2 + $0xb0] sm:$0xff] %v928
  %2375 = vst [vmem:[%s2 + $0xb8] sm:$0xff] %v930
  %2376 = vst [vmem:[%s2 + $0xc0] sm:$0xff] %v999
  %2377 = vst [vmem:[%s2 + $0xc8] sm:$0xff] %v1001
  %2378 = vst [vmem:[%s2 + $0xd0] sm:$0xff] %v1070
  %2379 = vst [vmem:[%s2 + $0xd8] sm:$0xff] %v1072
  %2380 = vst [vmem:[%s2 + $0xe0] sm:$0xff] %v1141
  %2381 = vst [vmem:[%s2 + $0xe8] sm:$0xff] %v1143
  %2382 = vst [vmem:[%s2 + $0xf0] sm:$0xff] %v1212
  %2383 = vst [vmem:[%s2 + $0xf8] sm:$0xff] %v1214
  %2384 = vst [vmem:[%s2 + $0x100] sm:$0xff] %v1283
  %2385 = vst [vmem:[%s2 + $0x108] sm:$0xff] %v1285
  %2386 = vst [vmem:[%s2 + $0x110] sm:$0xff] %v1354
  %2387 = vst [vmem:[%s2 + $0x118] sm:$0xff] %v1356
  %2388 = vst [vmem:[%s2 + $0x120] sm:$0xff] %v1425
  %2389 = vst [vmem:[%s2 + $0x128] sm:$0xff] %v1427
  %2390 = vst [vmem:[%s2 + $0x130] sm:$0xff] %v1496
  %2391 = vst [vmem:[%s2 + $0x138] sm:$0xff] %v1498
  %2392 = vst [vmem:[%s2 + $0x140] sm:$0xff] %v1567
  %2393 = vst [vmem:[%s2 + $0x148] sm:$0xff] %v1569
  %2394 = vst [vmem:[%s2 + $0x150] sm:$0xff] %v1638
  %2395 = vst [vmem:[%s2 + $0x158] sm:$0xff] %v1640
  %2396 = vst [vmem:[%s2 + $0x160] sm:$0xff] %v1709
  %2397 = vst [vmem:[%s2 + $0x168] sm:$0xff] %v1711
  %2398 = vst [vmem:[%s2 + $0x170] sm:$0xff] %v1780
  %2399 = vst [vmem:[%s2 + $0x178] sm:$0xff] %v1782
  %2400 = vst [vmem:[%s2 + $0x180] sm:$0xff] %v1851
  %2401 = vst [vmem:[%s2 + $0x188] sm:$0xff] %v1853
  %2402 = vst [vmem:[%s2 + $0x190] sm:$0xff] %v1922
  %2403 = vst [vmem:[%s2 + $0x198] sm:$0xff] %v1924
  %2404 = vst [vmem:[%s2 + $0x1a0] sm:$0xff] %v1993
  %2405 = vst [vmem:[%s2 + $0x1a8] sm:$0xff] %v1995
  %2406 = vst [vmem:[%s2 + $0x1b0] sm:$0xff] %v2064
  %2407 = vst [vmem:[%s2 + $0x1b8] sm:$0xff] %v2066
  %2408 = vst [vmem:[%s2 + $0x1c0] sm:$0xff] %v2135
  %2409 = vst [vmem:[%s2 + $0x1c8] sm:$0xff] %v2137
  %2410 = vst [vmem:[%s2 + $0x1d0] sm:$0xff] %v2206
  %2411 = vst [vmem:[%s2 + $0x1d8] sm:$0xff] %v2208
  %2412 = vst [vmem:[%s2 + $0x1e0] sm:$0xff] %v2277
  %2413 = vst [vmem:[%s2 + $0x1e8] sm:$0xff] %v2279
  %2414 = vst [vmem:[%s2 + $0x1f0] sm:$0xff] %v2348
  %2415 = vst [vmem:[%s2 + $0x1f8] sm:$0xff] %v2350
  // Predicated region
  $region10: #{gmodel_forward.5} parent=0 // pred_check
    _
  $region11: #{gmodel_forward.5} parent=0 // pred_check_branch
    %2417 = sbr.rel (0) target = $region13
  $region12: #{gmodel_forward.5} parent=0 // pred_region
    _
  $region13: #{gmodel_forward.5} parent=0 // pred_fallthru
    _
  // Predicated region
  $region14: #{gmodel_forward.5} parent=0 // pred_check
    _
  $region15: #{gmodel_forward.5} parent=0 // pred_check_branch
    %2419 = sbr.rel (0) target = $region17
  $region16: #{gmodel_forward.5} parent=0 // pred_region
    _
  $region17: #{gmodel_forward.5} parent=0 // pred_fallthru
    _

// kernel: gmodel_forward.6
$region0: #{gmodel_forward.6}
  #allocation0 [shape = 'u32[]', space=smem, size = 0x4, offset = 0x4, fixed_abs, tag = 'smem constant byte address 0x4 - core index']
  #allocation1 [shape = 'u32[144,128]{1,0:T(1,128)}', space=vmem, size = 0x12000, scoped, tag = 'internal scratch']
  %s0 = inlined_call_operand.vmem [shape: bf16[4,32,2048], index: 0, kind: input, shape index: {}]
  %s1 = inlined_call_operand.vmem [shape: bf16[4,2048,256], index: 1, kind: input, shape index: {}]
  %s2 = inlined_call_operand.vmem [shape: bf16[4,32,256], index: 2, kind: output, shape index: {0}]
  %s3 = inlined_call_operand.vmem [shape: f32[4,8,256], index: 3, kind: output, shape index: {1}]
  %s4 = inlined_call_operand.vmem [shape: f32[4,8,256], index: 4, kind: output, shape index: {2}]
  %5 = xla_tuple %s2, %s3, %s4
  %s6 = sld [smem:[#allocation0]]
  $region61: #{gmodel_forward.6} parent=0
    _
  %s8 = ssub.s32 1, %s6
  %s9 = scalar_select 0, %s8, %s6
  loop: start=0, step=1, limit=10
  $region2: #{gmodel_forward.6} parent=0 // loop_pre_header
    _
  $region3: #{gmodel_forward.6} parent=0 // loop_header
    %s11 = sphi 0, %s15
    %p12 = scmp.ge.s32.totalorder %s11, 10
    %s18 = sphi 0, %s30
    %s19 = sphi 0, %s26
    %s20 = sphi 0, %s18
    %s21 = sphi 0, %s19
    %s22 = sphi 0, %s20
    %s23 = sphi 0, %s21
    %s35 = sphi 0, %s37
    %s38 = sphi 0, %s35
    %s39 = sphi 0, %s38
    %s55 = sphi 0, %s39
    %s61 = sphi 0, %s63
    %s64 = sphi 0, %s61
    %s65 = sphi 0, %s64
    %s81 = sphi 0, %s65
    %s89 = sphi 0, %s91
    %s92 = sphi 0, %s89
    %s93 = sphi 0, %s92
    %s109 = sphi 0, %s93
    %s115 = sphi 0, %s117
    %s118 = sphi 0, %s115
    %s119 = sphi 0, %s118
    %s135 = sphi 0, %s119
    %s141 = sphi 0, %s143
    %s144 = sphi 0, %s141
    %s145 = sphi 0, %s144
    %s161 = sphi 0, %s145
  $region4: #{gmodel_forward.6} parent=0 // loop_header_branch
    %14 = sbr.rel (%p12) target = $region8
  $region5: #{gmodel_forward.6} parent=0 // loop_body
    %s16 = ssub.s32 %s11, 1
    %s17 = ssub.s32 %s11, 2
    %s24 = sadd.s32 1, %s19
    %p25 = scmp.ge.s32.totalorder %s24, 2
    %s26 = scalar_select %p25, 0, %s24
    %s27 = sadd.s32 1, %s18
    %s28 = scalar_select %p25, %s27, %s18
    %p29 = scmp.ge.s32.totalorder %s28, 4
    %s30 = scalar_select %p29, 0, %s28
    %s31 = ssub.s32 %s18, %s30
    %s32 = ssub.s32 %s19, %s26
    %s33 = sor.u32 %s31, %s32
    %p34 = scmp.eq.s32.totalorder %s33, 0
    %s36 = sadd.s32 %s35, 1
    %s37 = scalar_select %p34, %s35, %s36
    %p40 = pneg %p34
    %p41 = scmp.eq.s32.totalorder %s11, 7
    %p42 = por %p40, %p41
    %p43 = scmp.ne.s32.totalorder %s35, %s38
    %p44 = scmp.eq.s32.totalorder %s11, 0
    %p45 = por %p43, %p44
    %p46 = scmp.ne.s32.totalorder %s35, %s38
    %p47 = scmp.eq.s32.totalorder %s16, 7
    %p48 = por %p46, %p47
    %p49 = scmp.ne.s32.totalorder %s38, %s39
    %p50 = scmp.eq.s32.totalorder %s16, 0
    %p51 = por %p49, %p50
    %p52 = scmp.ne.s32.totalorder %s38, %s39
    %p53 = scmp.eq.s32.totalorder %s17, 7
    %p54 = por %p52, %p53
    %p56 = scmp.ne.s32.totalorder %s39, %s55
    %p57 = scmp.eq.s32.totalorder %s17, 0
    %p58 = por %p56, %p57
    %s59 = ssub.s32 %s18, %s30
    %p60 = scmp.eq.s32.totalorder %s59, 0
    %s62 = sadd.s32 %s61, 1
    %s63 = scalar_select %p60, %s61, %s62
    %p66 = pneg %p60
    %p67 = scmp.eq.s32.totalorder %s11, 7
    %p68 = por %p66, %p67
    %p69 = scmp.ne.s32.totalorder %s61, %s64
    %p70 = scmp.eq.s32.totalorder %s11, 0
    %p71 = por %p69, %p70
    %p72 = scmp.ne.s32.totalorder %s61, %s64
    %p73 = scmp.eq.s32.totalorder %s16, 7
    %p74 = por %p72, %p73
    %p75 = scmp.ne.s32.totalorder %s64, %s65
    %p76 = scmp.eq.s32.totalorder %s16, 0
    %p77 = por %p75, %p76
    %p78 = scmp.ne.s32.totalorder %s64, %s65
    %p79 = scmp.eq.s32.totalorder %s17, 7
    %p80 = por %p78, %p79
    %p82 = scmp.ne.s32.totalorder %s65, %s81
    %p83 = scmp.eq.s32.totalorder %s17, 0
    %p84 = por %p82, %p83
    %s85 = ssub.s32 %s18, %s30
    %s86 = ssub.s32 %s19, %s26
    %s87 = sor.u32 %s85, %s86
    %p88 = scmp.eq.s32.totalorder %s87, 0
    %s90 = sadd.s32 %s89, 1
    %s91 = scalar_select %p88, %s89, %s90
    %p94 = pneg %p88
    %p95 = scmp.eq.s32.totalorder %s11, 7
    %p96 = por %p94, %p95
    %p97 = scmp.ne.s32.totalorder %s89, %s92
    %p98 = scmp.eq.s32.totalorder %s11, 0
    %p99 = por %p97, %p98
    %p100 = scmp.ne.s32.totalorder %s89, %s92
    %p101 = scmp.eq.s32.totalorder %s16, 7
    %p102 = por %p100, %p101
    %p103 = scmp.ne.s32.totalorder %s92, %s93
    %p104 = scmp.eq.s32.totalorder %s16, 0
    %p105 = por %p103, %p104
    %p106 = scmp.ne.s32.totalorder %s92, %s93
    %p107 = scmp.eq.s32.totalorder %s17, 7
    %p108 = por %p106, %p107
    %p110 = scmp.ne.s32.totalorder %s93, %s109
    %p111 = scmp.eq.s32.totalorder %s17, 0
    %p112 = por %p110, %p111
    %s113 = ssub.s32 %s18, %s30
    %p114 = scmp.eq.s32.totalorder %s113, 0
    %s116 = sadd.s32 %s115, 1
    %s117 = scalar_select %p114, %s115, %s116
    %p120 = pneg %p114
    %p121 = scmp.eq.s32.totalorder %s11, 7
    %p122 = por %p120, %p121
    %p123 = scmp.ne.s32.totalorder %s115, %s118
    %p124 = scmp.eq.s32.totalorder %s11, 0
    %p125 = por %p123, %p124
    %p126 = scmp.ne.s32.totalorder %s115, %s118
    %p127 = scmp.eq.s32.totalorder %s16, 7
    %p128 = por %p126, %p127
    %p129 = scmp.ne.s32.totalorder %s118, %s119
    %p130 = scmp.eq.s32.totalorder %s16, 0
    %p131 = por %p129, %p130
    %p132 = scmp.ne.s32.totalorder %s118, %s119
    %p133 = scmp.eq.s32.totalorder %s17, 7
    %p134 = por %p132, %p133
    %p136 = scmp.ne.s32.totalorder %s119, %s135
    %p137 = scmp.eq.s32.totalorder %s17, 0
    %p138 = por %p136, %p137
    %s139 = ssub.s32 %s18, %s30
    %p140 = scmp.eq.s32.totalorder %s139, 0
    %s142 = sadd.s32 %s141, 1
    %s143 = scalar_select %p140, %s141, %s142
    %p146 = pneg %p140
    %p147 = scmp.eq.s32.totalorder %s11, 7
    %p148 = por %p146, %p147
    %p149 = scmp.ne.s32.totalorder %s141, %s144
    %p150 = scmp.eq.s32.totalorder %s11, 0
    %p151 = por %p149, %p150
    %p152 = scmp.ne.s32.totalorder %s141, %s144
    %p153 = scmp.eq.s32.totalorder %s16, 7
    %p154 = por %p152, %p153
    %p155 = scmp.ne.s32.totalorder %s144, %s145
    %p156 = scmp.eq.s32.totalorder %s16, 0
    %p157 = por %p155, %p156
    %p158 = scmp.ne.s32.totalorder %s144, %s145
    %p159 = scmp.eq.s32.totalorder %s17, 7
    %p160 = por %p158, %p159
    %p162 = scmp.ne.s32.totalorder %s145, %s161
    %p163 = scmp.eq.s32.totalorder %s17, 0
    %p164 = por %p162, %p163
    %p165 = scmp.le.s32.totalorder 1, %s11
    %p166 = scmp.lt.s32.totalorder %s11, 9
    %p167 = pnand %p165, %p166
    %p168 = pneg %p167
    // Predicated region
    $region9: #{gmodel_forward.6} parent=5 // pred_check
      _
    $region10: #{gmodel_forward.6} parent=5 // pred_check_branch
      %170 = sbr.rel (%p167) target = $region12
    $region11: #{gmodel_forward.6} parent=5 // pred_region
      %s171 = ssub.s32 %s11, 1
    $region12: #{gmodel_forward.6} parent=5 // pred_fallthru
      _
    %p172 = scmp.lt.s32.totalorder %s11, 8
    // Predicated region
    $region13: #{gmodel_forward.6} parent=5 // pred_check
      %p173 = pneg %p172
    $region14: #{gmodel_forward.6} parent=5 // pred_check_branch
      %175 = sbr.rel (%p173) target = $region16
    $region15: #{gmodel_forward.6} parent=5 // pred_region
      // Predicated region
      $region17: #{gmodel_forward.6} parent=15 // pred_check
        %p176 = pneg %p45
      $region18: #{gmodel_forward.6} parent=15 // pred_check_branch
        %178 = sbr.rel (%p176) target = $region20
      $region19: #{gmodel_forward.6} parent=15 // pred_region
        %s179 = smul.u32 2, %s19
        %p180 = scmp.lt.s32.totalorder %s18, 3
        %s181 = scalar_select %p180, %s18, 3
        %p182 = scmp.lt.s32.totalorder %s179, 3
        %s183 = scalar_select %p182, %s179, 3
        %s184 = smul.addr %s183, 16
        %s185 = smul.addr %s181, 64
        %s186 = sadd.s32 %s184, %s185
        %s187 = smul.addr %s186, 4
        %s188 = scalar_lea.vmem %s0, %s187
        %s189 = smul.u32 2, %s19
      $region20: #{gmodel_forward.6} parent=15 // pred_fallthru
        _
      // Predicated region
      $region21: #{gmodel_forward.6} parent=15 // pred_check
        %p190 = pneg %p71
      $region22: #{gmodel_forward.6} parent=15 // pred_check_branch
        %192 = sbr.rel (%p190) target = $region24
      $region23: #{gmodel_forward.6} parent=15 // pred_region
        %p193 = scmp.lt.s32.totalorder %s18, 3
        %s194 = scalar_select %p193, %s18, 3
        %s195 = smul.addr %s194, 512
        %s196 = smul.addr %s195, 4
        %s197 = scalar_lea.vmem %s1, %s196
      $region24: #{gmodel_forward.6} parent=15 // pred_fallthru
        _
    $region16: #{gmodel_forward.6} parent=5 // pred_fallthru
      _
    %p198 = scmp.le.s32.totalorder 1, %s11
    %p199 = scmp.lt.s32.totalorder %s11, 9
    %p200 = pnand %p198, %p199
    %p201 = pneg %p200
    // Predicated region
    $region25: #{gmodel_forward.6} parent=5 // pred_check
      _
    $region26: #{gmodel_forward.6} parent=5 // pred_check_branch
      %203 = sbr.rel (%p200) target = $region28
    $region27: #{gmodel_forward.6} parent=5 // pred_region
      %s204 = ssub.s32 %s11, 1
      %s205 = smul.u32 2, %s21
      %p206 = scmp.lt.s32.totalorder %s20, 3
      %s207 = scalar_select %p206, %s20, 3
      %p208 = scmp.lt.s32.totalorder %s205, 3
      %s209 = scalar_select %p208, %s205, 3
      %s210 = smul.addr %s209, 16
      %s211 = smul.addr %s207, 64
      %s212 = sadd.s32 %s210, %s211
      %s213 = smul.addr %s212, 4
      %s214 = scalar_lea.vmem %s0, %s213
      %p215 = pneg %p51
      %p216 = pneg %p48
      %p217 = scmp.lt.s32.totalorder %s20, 3
      %s218 = scalar_select %p217, %s20, 3
      %s219 = smul.addr %s218, 512
      %s220 = smul.addr %s219, 4
      %s221 = scalar_lea.vmem %s1, %s220
      %p222 = pneg %p77
      %p223 = pneg %p74
      %p224 = pneg %p105
      %p225 = pneg %p102
      %s226 = smul.u32 2, %s21
      %p227 = scmp.lt.s32.totalorder %s20, 3
      %s228 = scalar_select %p227, %s20, 3
      %p229 = scmp.lt.s32.totalorder %s226, 3
      %s230 = scalar_select %p229, %s226, 3
      %s231 = smul.addr %s230, 2
      %s232 = smul.addr %s228, 8
      %s233 = sadd.s32 %s231, %s232
      %s234 = smul.addr %s233, 4
      %s235 = scalar_lea.vmem %s2, %s234
      %p236 = pneg %p131
      %p237 = pneg %p128
      %p238 = scmp.lt.s32.totalorder %s20, 3
      %s239 = scalar_select %p238, %s20, 3
      %s240 = smul.addr %s239, 2
      %s241 = smul.addr %s240, 8
      %s242 = scalar_lea.vmem %s3, %s241
      %p243 = pneg %p157
      %p244 = pneg %p154
      %p245 = scmp.lt.s32.totalorder %s20, 3
      %s246 = scalar_select %p245, %s20, 3
      %s247 = smul.addr %s246, 2
      %s248 = smul.addr %s247, 8
      %s249 = scalar_lea.vmem %s4, %s248
      %s250 = smul.u32 2, %s21
      %p251 = scmp.lt.s32.totalorder %s20, 3
      %s252 = scalar_select %p251, %s20, 3
      %p253 = scmp.lt.s32.totalorder %s250, 3
      %s254 = scalar_select %p253, %s250, 3
      %s255 = smul.addr %s254, 16
      %s256 = smul.addr %s252, 64
      %s257 = sadd.s32 %s255, %s256
      %s258 = smul.addr %s257, 4
      %s259 = scalar_lea.vmem %s0, %s258
      %s260 = smul.u32 2, %s21
      %p261 = scmp.lt.s32.totalorder %s20, 3
      %s262 = scalar_select %p261, %s20, 3
      %s263 = smul.addr %s262, 512
      %s264 = smul.addr %s263, 4
      %s265 = scalar_lea.vmem %s1, %s264
      %s266 = smul.u32 2, %s21
      %p267 = scmp.lt.s32.totalorder %s20, 3
      %s268 = scalar_select %p267, %s20, 3
      %p269 = scmp.lt.s32.totalorder %s266, 3
      %s270 = scalar_select %p269, %s266, 3
      %s271 = smul.addr %s270, 2
      %s272 = smul.addr %s268, 8
      %s273 = sadd.s32 %s271, %s272
      %s274 = smul.addr %s273, 4
      %s275 = scalar_lea.vmem %s2, %s274
      %s276 = smul.u32 2, %s21
      %p277 = scmp.lt.s32.totalorder %s20, 3
      %s278 = scalar_select %p277, %s20, 3
      %s279 = smul.addr %s278, 2
      %s280 = smul.addr %s279, 8
      %s281 = scalar_lea.vmem %s3, %s280
      %p282 = scmp.lt.s32.totalorder %s20, 3
      %s283 = scalar_select %p282, %s20, 3
      %s284 = smul.addr %s283, 2
      %s285 = smul.addr %s284, 8
      %s286 = scalar_lea.vmem %s4, %s285
      %v287 = vld [vmem:[%s259] sm:$0xff]
      %v288 = vld [vmem:[%s259 + $0x8] sm:$0xff]
      %v289 = vld [vmem:[%s259 + $0x10] sm:$0xff]
      %v290 = vld [vmem:[%s259 + $0x18] sm:$0xff]
      %v291 = vld [vmem:[%s259 + $0x20] sm:$0xff]
      %v292 = vld [vmem:[%s259 + $0x28] sm:$0xff]
      %v293 = vld [vmem:[%s259 + $0x30] sm:$0xff]
      %v294 = vld [vmem:[%s259 + $0x38] sm:$0xff]
      %v295 = vld [vmem:[%s259 + $0x40] sm:$0xff]
      %v296 = vld [vmem:[%s259 + $0x48] sm:$0xff]
      %v297 = vld [vmem:[%s259 + $0x50] sm:$0xff]
      %v298 = vld [vmem:[%s259 + $0x58] sm:$0xff]
      %v299 = vld [vmem:[%s259 + $0x60] sm:$0xff]
      %v300 = vld [vmem:[%s259 + $0x68] sm:$0xff]
      %v301 = vld [vmem:[%s259 + $0x70] sm:$0xff]
      %v302 = vld [vmem:[%s259 + $0x78] sm:$0xff]
      %v303 = vld [vmem:[%s265] sm:$0xff]
      %v304 = vld [vmem:[%s265 + $0x8] sm:$0xff]
      %v305 = vld [vmem:[%s265 + $0x10] sm:$0xff]
      %v306 = vld [vmem:[%s265 + $0x18] sm:$0xff]
      %v307 = vld [vmem:[%s265 + $0x20] sm:$0xff]
      %v308 = vld [vmem:[%s265 + $0x28] sm:$0xff]
      %v309 = vld [vmem:[%s265 + $0x30] sm:$0xff]
      %v310 = vld [vmem:[%s265 + $0x38] sm:$0xff]
      %v311 = vld [vmem:[%s265 + $0x40] sm:$0xff]
      %v312 = vld [vmem:[%s265 + $0x48] sm:$0xff]
      %v313 = vld [vmem:[%s265 + $0x50] sm:$0xff]
      %v314 = vld [vmem:[%s265 + $0x58] sm:$0xff]
      %v315 = vld [vmem:[%s265 + $0x60] sm:$0xff]
      %v316 = vld [vmem:[%s265 + $0x68] sm:$0xff]
      %v317 = vld [vmem:[%s265 + $0x70] sm:$0xff]
      %v318 = vld [vmem:[%s265 + $0x78] sm:$0xff]
      %v319 = vld [vmem:[%s265 + $0x80] sm:$0xff]
      %v320 = vld [vmem:[%s265 + $0x88] sm:$0xff]
      %v321 = vld [vmem:[%s265 + $0x90] sm:$0xff]
      %v322 = vld [vmem:[%s265 + $0x98] sm:$0xff]
      %v323 = vld [vmem:[%s265 + $0xa0] sm:$0xff]
      %v324 = vld [vmem:[%s265 + $0xa8] sm:$0xff]
      %v325 = vld [vmem:[%s265 + $0xb0] sm:$0xff]
      %v326 = vld [vmem:[%s265 + $0xb8] sm:$0xff]
      %v327 = vld [vmem:[%s265 + $0xc0] sm:$0xff]
      %v328 = vld [vmem:[%s265 + $0xc8] sm:$0xff]
      %v329 = vld [vmem:[%s265 + $0xd0] sm:$0xff]
      %v330 = vld [vmem:[%s265 + $0xd8] sm:$0xff]
      %v331 = vld [vmem:[%s265 + $0xe0] sm:$0xff]
      %v332 = vld [vmem:[%s265 + $0xe8] sm:$0xff]
      %v333 = vld [vmem:[%s265 + $0xf0] sm:$0xff]
      %v334 = vld [vmem:[%s265 + $0xf8] sm:$0xff]
      %v335 = vld [vmem:[%s265 + $0x100] sm:$0xff]
      %v336 = vld [vmem:[%s265 + $0x108] sm:$0xff]
      %v337 = vld [vmem:[%s265 + $0x110] sm:$0xff]
      %v338 = vld [vmem:[%s265 + $0x118] sm:$0xff]
      %v339 = vld [vmem:[%s265 + $0x120] sm:$0xff]
      %v340 = vld [vmem:[%s265 + $0x128] sm:$0xff]
      %v341 = vld [vmem:[%s265 + $0x130] sm:$0xff]
      %v342 = vld [vmem:[%s265 + $0x138] sm:$0xff]
      %v343 = vld [vmem:[%s265 + $0x140] sm:$0xff]
      %v344 = vld [vmem:[%s265 + $0x148] sm:$0xff]
      %v345 = vld [vmem:[%s265 + $0x150] sm:$0xff]
      %v346 = vld [vmem:[%s265 + $0x158] sm:$0xff]
      %v347 = vld [vmem:[%s265 + $0x160] sm:$0xff]
      %v348 = vld [vmem:[%s265 + $0x168] sm:$0xff]
      %v349 = vld [vmem:[%s265 + $0x170] sm:$0xff]
      %v350 = vld [vmem:[%s265 + $0x178] sm:$0xff]
      %v351 = vld [vmem:[%s265 + $0x180] sm:$0xff]
      %v352 = vld [vmem:[%s265 + $0x188] sm:$0xff]
      %v353 = vld [vmem:[%s265 + $0x190] sm:$0xff]
      %v354 = vld [vmem:[%s265 + $0x198] sm:$0xff]
      %v355 = vld [vmem:[%s265 + $0x1a0] sm:$0xff]
      %v356 = vld [vmem:[%s265 + $0x1a8] sm:$0xff]
      %v357 = vld [vmem:[%s265 + $0x1b0] sm:$0xff]
      %v358 = vld [vmem:[%s265 + $0x1b8] sm:$0xff]
      %v359 = vld [vmem:[%s265 + $0x1c0] sm:$0xff]
      %v360 = vld [vmem:[%s265 + $0x1c8] sm:$0xff]
      %v361 = vld [vmem:[%s265 + $0x1d0] sm:$0xff]
      %v362 = vld [vmem:[%s265 + $0x1d8] sm:$0xff]
      %v363 = vld [vmem:[%s265 + $0x1e0] sm:$0xff]
      %v364 = vld [vmem:[%s265 + $0x1e8] sm:$0xff]
      %v365 = vld [vmem:[%s265 + $0x1f0] sm:$0xff]
      %v366 = vld [vmem:[%s265 + $0x1f8] sm:$0xff]
      %v367 = vld [vmem:[%s265 + $0x200] sm:$0xff]
      %v368 = vld [vmem:[%s265 + $0x208] sm:$0xff]
      %v369 = vld [vmem:[%s265 + $0x210] sm:$0xff]
      %v370 = vld [vmem:[%s265 + $0x218] sm:$0xff]
      %v371 = vld [vmem:[%s265 + $0x220] sm:$0xff]
      %v372 = vld [vmem:[%s265 + $0x228] sm:$0xff]
      %v373 = vld [vmem:[%s265 + $0x230] sm:$0xff]
      %v374 = vld [vmem:[%s265 + $0x238] sm:$0xff]
      %v375 = vld [vmem:[%s265 + $0x240] sm:$0xff]
      %v376 = vld [vmem:[%s265 + $0x248] sm:$0xff]
      %v377 = vld [vmem:[%s265 + $0x250] sm:$0xff]
      %v378 = vld [vmem:[%s265 + $0x258] sm:$0xff]
      %v379 = vld [vmem:[%s265 + $0x260] sm:$0xff]
      %v380 = vld [vmem:[%s265 + $0x268] sm:$0xff]
      %v381 = vld [vmem:[%s265 + $0x270] sm:$0xff]
      %v382 = vld [vmem:[%s265 + $0x278] sm:$0xff]
      %v383 = vld [vmem:[%s265 + $0x280] sm:$0xff]
      %v384 = vld [vmem:[%s265 + $0x288] sm:$0xff]
      %v385 = vld [vmem:[%s265 + $0x290] sm:$0xff]
      %v386 = vld [vmem:[%s265 + $0x298] sm:$0xff]
      %v387 = vld [vmem:[%s265 + $0x2a0] sm:$0xff]
      %v388 = vld [vmem:[%s265 + $0x2a8] sm:$0xff]
      %v389 = vld [vmem:[%s265 + $0x2b0] sm:$0xff]
      %v390 = vld [vmem:[%s265 + $0x2b8] sm:$0xff]
      %v391 = vld [vmem:[%s265 + $0x2c0] sm:$0xff]
      %v392 = vld [vmem:[%s265 + $0x2c8] sm:$0xff]
      %v393 = vld [vmem:[%s265 + $0x2d0] sm:$0xff]
      %v394 = vld [vmem:[%s265 + $0x2d8] sm:$0xff]
      %v395 = vld [vmem:[%s265 + $0x2e0] sm:$0xff]
      %v396 = vld [vmem:[%s265 + $0x2e8] sm:$0xff]
      %v397 = vld [vmem:[%s265 + $0x2f0] sm:$0xff]
      %v398 = vld [vmem:[%s265 + $0x2f8] sm:$0xff]
      %v399 = vld [vmem:[%s265 + $0x300] sm:$0xff]
      %v400 = vld [vmem:[%s265 + $0x308] sm:$0xff]
      %v401 = vld [vmem:[%s265 + $0x310] sm:$0xff]
      %v402 = vld [vmem:[%s265 + $0x318] sm:$0xff]
      %v403 = vld [vmem:[%s265 + $0x320] sm:$0xff]
      %v404 = vld [vmem:[%s265 + $0x328] sm:$0xff]
      %v405 = vld [vmem:[%s265 + $0x330] sm:$0xff]
      %v406 = vld [vmem:[%s265 + $0x338] sm:$0xff]
      %v407 = vld [vmem:[%s265 + $0x340] sm:$0xff]
      %v408 = vld [vmem:[%s265 + $0x348] sm:$0xff]
      %v409 = vld [vmem:[%s265 + $0x350] sm:$0xff]
      %v410 = vld [vmem:[%s265 + $0x358] sm:$0xff]
      %v411 = vld [vmem:[%s265 + $0x360] sm:$0xff]
      %v412 = vld [vmem:[%s265 + $0x368] sm:$0xff]
      %v413 = vld [vmem:[%s265 + $0x370] sm:$0xff]
      %v414 = vld [vmem:[%s265 + $0x378] sm:$0xff]
      %v415 = vld [vmem:[%s265 + $0x380] sm:$0xff]
      %v416 = vld [vmem:[%s265 + $0x388] sm:$0xff]
      %v417 = vld [vmem:[%s265 + $0x390] sm:$0xff]
      %v418 = vld [vmem:[%s265 + $0x398] sm:$0xff]
      %v419 = vld [vmem:[%s265 + $0x3a0] sm:$0xff]
      %v420 = vld [vmem:[%s265 + $0x3a8] sm:$0xff]
      %v421 = vld [vmem:[%s265 + $0x3b0] sm:$0xff]
      %v422 = vld [vmem:[%s265 + $0x3b8] sm:$0xff]
      %v423 = vld [vmem:[%s265 + $0x3c0] sm:$0xff]
      %v424 = vld [vmem:[%s265 + $0x3c8] sm:$0xff]
      %v425 = vld [vmem:[%s265 + $0x3d0] sm:$0xff]
      %v426 = vld [vmem:[%s265 + $0x3d8] sm:$0xff]
      %v427 = vld [vmem:[%s265 + $0x3e0] sm:$0xff]
      %v428 = vld [vmem:[%s265 + $0x3e8] sm:$0xff]
      %v429 = vld [vmem:[%s265 + $0x3f0] sm:$0xff]
      %v430 = vld [vmem:[%s265 + $0x3f8] sm:$0xff]
      %v431 = vld [vmem:[%s265 + $0x400] sm:$0xff]
      %v432 = vld [vmem:[%s265 + $0x408] sm:$0xff]
      %v433 = vld [vmem:[%s265 + $0x410] sm:$0xff]
      %v434 = vld [vmem:[%s265 + $0x418] sm:$0xff]
      %v435 = vld [vmem:[%s265 + $0x420] sm:$0xff]
      %v436 = vld [vmem:[%s265 + $0x428] sm:$0xff]
      %v437 = vld [vmem:[%s265 + $0x430] sm:$0xff]
      %v438 = vld [vmem:[%s265 + $0x438] sm:$0xff]
      %v439 = vld [vmem:[%s265 + $0x440] sm:$0xff]
      %v440 = vld [vmem:[%s265 + $0x448] sm:$0xff]
      %v441 = vld [vmem:[%s265 + $0x450] sm:$0xff]
      %v442 = vld [vmem:[%s265 + $0x458] sm:$0xff]
      %v443 = vld [vmem:[%s265 + $0x460] sm:$0xff]
      %v444 = vld [vmem:[%s265 + $0x468] sm:$0xff]
      %v445 = vld [vmem:[%s265 + $0x470] sm:$0xff]
      %v446 = vld [vmem:[%s265 + $0x478] sm:$0xff]
      %v447 = vld [vmem:[%s265 + $0x480] sm:$0xff]
      %v448 = vld [vmem:[%s265 + $0x488] sm:$0xff]
      %v449 = vld [vmem:[%s265 + $0x490] sm:$0xff]
      %v450 = vld [vmem:[%s265 + $0x498] sm:$0xff]
      %v451 = vld [vmem:[%s265 + $0x4a0] sm:$0xff]
      %v452 = vld [vmem:[%s265 + $0x4a8] sm:$0xff]
      %v453 = vld [vmem:[%s265 + $0x4b0] sm:$0xff]
      %v454 = vld [vmem:[%s265 + $0x4b8] sm:$0xff]
      %v455 = vld [vmem:[%s265 + $0x4c0] sm:$0xff]
      %v456 = vld [vmem:[%s265 + $0x4c8] sm:$0xff]
      %v457 = vld [vmem:[%s265 + $0x4d0] sm:$0xff]
      %v458 = vld [vmem:[%s265 + $0x4d8] sm:$0xff]
      %v459 = vld [vmem:[%s265 + $0x4e0] sm:$0xff]
      %v460 = vld [vmem:[%s265 + $0x4e8] sm:$0xff]
      %v461 = vld [vmem:[%s265 + $0x4f0] sm:$0xff]
      %v462 = vld [vmem:[%s265 + $0x4f8] sm:$0xff]
      %v463 = vld [vmem:[%s265 + $0x500] sm:$0xff]
      %v464 = vld [vmem:[%s265 + $0x508] sm:$0xff]
      %v465 = vld [vmem:[%s265 + $0x510] sm:$0xff]
      %v466 = vld [vmem:[%s265 + $0x518] sm:$0xff]
      %v467 = vld [vmem:[%s265 + $0x520] sm:$0xff]
      %v468 = vld [vmem:[%s265 + $0x528] sm:$0xff]
      %v469 = vld [vmem:[%s265 + $0x530] sm:$0xff]
      %v470 = vld [vmem:[%s265 + $0x538] sm:$0xff]
      %v471 = vld [vmem:[%s265 + $0x540] sm:$0xff]
      %v472 = vld [vmem:[%s265 + $0x548] sm:$0xff]
      %v473 = vld [vmem:[%s265 + $0x550] sm:$0xff]
      %v474 = vld [vmem:[%s265 + $0x558] sm:$0xff]
      %v475 = vld [vmem:[%s265 + $0x560] sm:$0xff]
      %v476 = vld [vmem:[%s265 + $0x568] sm:$0xff]
      %v477 = vld [vmem:[%s265 + $0x570] sm:$0xff]
      %v478 = vld [vmem:[%s265 + $0x578] sm:$0xff]
      %v479 = vld [vmem:[%s265 + $0x580] sm:$0xff]
      %v480 = vld [vmem:[%s265 + $0x588] sm:$0xff]
      %v481 = vld [vmem:[%s265 + $0x590] sm:$0xff]
      %v482 = vld [vmem:[%s265 + $0x598] sm:$0xff]
      %v483 = vld [vmem:[%s265 + $0x5a0] sm:$0xff]
      %v484 = vld [vmem:[%s265 + $0x5a8] sm:$0xff]
      %v485 = vld [vmem:[%s265 + $0x5b0] sm:$0xff]
      %v486 = vld [vmem:[%s265 + $0x5b8] sm:$0xff]
      %v487 = vld [vmem:[%s265 + $0x5c0] sm:$0xff]
      %v488 = vld [vmem:[%s265 + $0x5c8] sm:$0xff]
      %v489 = vld [vmem:[%s265 + $0x5d0] sm:$0xff]
      %v490 = vld [vmem:[%s265 + $0x5d8] sm:$0xff]
      %v491 = vld [vmem:[%s265 + $0x5e0] sm:$0xff]
      %v492 = vld [vmem:[%s265 + $0x5e8] sm:$0xff]
      %v493 = vld [vmem:[%s265 + $0x5f0] sm:$0xff]
      %v494 = vld [vmem:[%s265 + $0x5f8] sm:$0xff]
      %v495 = vld [vmem:[%s265 + $0x600] sm:$0xff]
      %v496 = vld [vmem:[%s265 + $0x608] sm:$0xff]
      %v497 = vld [vmem:[%s265 + $0x610] sm:$0xff]
      %v498 = vld [vmem:[%s265 + $0x618] sm:$0xff]
      %v499 = vld [vmem:[%s265 + $0x620] sm:$0xff]
      %v500 = vld [vmem:[%s265 + $0x628] sm:$0xff]
      %v501 = vld [vmem:[%s265 + $0x630] sm:$0xff]
      %v502 = vld [vmem:[%s265 + $0x638] sm:$0xff]
      %v503 = vld [vmem:[%s265 + $0x640] sm:$0xff]
      %v504 = vld [vmem:[%s265 + $0x648] sm:$0xff]
      %v505 = vld [vmem:[%s265 + $0x650] sm:$0xff]
      %v506 = vld [vmem:[%s265 + $0x658] sm:$0xff]
      %v507 = vld [vmem:[%s265 + $0x660] sm:$0xff]
      %v508 = vld [vmem:[%s265 + $0x668] sm:$0xff]
      %v509 = vld [vmem:[%s265 + $0x670] sm:$0xff]
      %v510 = vld [vmem:[%s265 + $0x678] sm:$0xff]
      %v511 = vld [vmem:[%s265 + $0x680] sm:$0xff]
      %v512 = vld [vmem:[%s265 + $0x688] sm:$0xff]
      %v513 = vld [vmem:[%s265 + $0x690] sm:$0xff]
      %v514 = vld [vmem:[%s265 + $0x698] sm:$0xff]
      %v515 = vld [vmem:[%s265 + $0x6a0] sm:$0xff]
      %v516 = vld [vmem:[%s265 + $0x6a8] sm:$0xff]
      %v517 = vld [vmem:[%s265 + $0x6b0] sm:$0xff]
      %v518 = vld [vmem:[%s265 + $0x6b8] sm:$0xff]
      %v519 = vld [vmem:[%s265 + $0x6c0] sm:$0xff]
      %v520 = vld [vmem:[%s265 + $0x6c8] sm:$0xff]
      %v521 = vld [vmem:[%s265 + $0x6d0] sm:$0xff]
      %v522 = vld [vmem:[%s265 + $0x6d8] sm:$0xff]
      %v523 = vld [vmem:[%s265 + $0x6e0] sm:$0xff]
      %v524 = vld [vmem:[%s265 + $0x6e8] sm:$0xff]
      %v525 = vld [vmem:[%s265 + $0x6f0] sm:$0xff]
      %v526 = vld [vmem:[%s265 + $0x6f8] sm:$0xff]
      %v527 = vld [vmem:[%s265 + $0x700] sm:$0xff]
      %v528 = vld [vmem:[%s265 + $0x708] sm:$0xff]
      %v529 = vld [vmem:[%s265 + $0x710] sm:$0xff]
      %v530 = vld [vmem:[%s265 + $0x718] sm:$0xff]
      %v531 = vld [vmem:[%s265 + $0x720] sm:$0xff]
      %v532 = vld [vmem:[%s265 + $0x728] sm:$0xff]
      %v533 = vld [vmem:[%s265 + $0x730] sm:$0xff]
      %v534 = vld [vmem:[%s265 + $0x738] sm:$0xff]
      %v535 = vld [vmem:[%s265 + $0x740] sm:$0xff]
      %v536 = vld [vmem:[%s265 + $0x748] sm:$0xff]
      %v537 = vld [vmem:[%s265 + $0x750] sm:$0xff]
      %v538 = vld [vmem:[%s265 + $0x758] sm:$0xff]
      %v539 = vld [vmem:[%s265 + $0x760] sm:$0xff]
      %v540 = vld [vmem:[%s265 + $0x768] sm:$0xff]
      %v541 = vld [vmem:[%s265 + $0x770] sm:$0xff]
      %v542 = vld [vmem:[%s265 + $0x778] sm:$0xff]
      %v543 = vld [vmem:[%s265 + $0x780] sm:$0xff]
      %v544 = vld [vmem:[%s265 + $0x788] sm:$0xff]
      %v545 = vld [vmem:[%s265 + $0x790] sm:$0xff]
      %v546 = vld [vmem:[%s265 + $0x798] sm:$0xff]
      %v547 = vld [vmem:[%s265 + $0x7a0] sm:$0xff]
      %v548 = vld [vmem:[%s265 + $0x7a8] sm:$0xff]
      %v549 = vld [vmem:[%s265 + $0x7b0] sm:$0xff]
      %v550 = vld [vmem:[%s265 + $0x7b8] sm:$0xff]
      %v551 = vld [vmem:[%s265 + $0x7c0] sm:$0xff]
      %v552 = vld [vmem:[%s265 + $0x7c8] sm:$0xff]
      %v553 = vld [vmem:[%s265 + $0x7d0] sm:$0xff]
      %v554 = vld [vmem:[%s265 + $0x7d8] sm:$0xff]
      %v555 = vld [vmem:[%s265 + $0x7e0] sm:$0xff]
      %v556 = vld [vmem:[%s265 + $0x7e8] sm:$0xff]
      %v557 = vld [vmem:[%s265 + $0x7f0] sm:$0xff]
      %v558 = vld [vmem:[%s265 + $0x7f8] sm:$0xff]
      %v575 = vunpack.c.l.b16 %v287
      %v576 = vunpack.c.h.b16 %v287
      %v577 = vunpack.c.l.b16 %v288
      %v578 = vunpack.c.h.b16 %v288
      %v579 = vunpack.c.l.b16 %v289
      %v580 = vunpack.c.h.b16 %v289
      %v581 = vunpack.c.l.b16 %v290
      %v582 = vunpack.c.h.b16 %v290
      %v583 = vunpack.c.l.b16 %v291
      %v584 = vunpack.c.h.b16 %v291
      %v585 = vunpack.c.l.b16 %v292
      %v586 = vunpack.c.h.b16 %v292
      %v587 = vunpack.c.l.b16 %v293
      %v588 = vunpack.c.h.b16 %v293
      %v589 = vunpack.c.l.b16 %v294
      %v590 = vunpack.c.h.b16 %v294
      %v591 = vunpack.c.l.b16 %v295
      %v592 = vunpack.c.h.b16 %v295
      %v593 = vunpack.c.l.b16 %v296
      %v594 = vunpack.c.h.b16 %v296
      %v595 = vunpack.c.l.b16 %v297
      %v596 = vunpack.c.h.b16 %v297
      %v597 = vunpack.c.l.b16 %v298
      %v598 = vunpack.c.h.b16 %v298
      %v599 = vunpack.c.l.b16 %v299
      %v600 = vunpack.c.h.b16 %v299
      %v601 = vunpack.c.l.b16 %v300
      %v602 = vunpack.c.h.b16 %v300
      %v603 = vunpack.c.l.b16 %v301
      %v604 = vunpack.c.h.b16 %v301
      %v605 = vunpack.c.l.b16 %v302
      %v606 = vunpack.c.h.b16 %v302
      %v607 = vpack.c.b16 %v591, %v575
      %v608 = vpack.c.b16 %v592, %v576
      %v609 = vpack.c.b16 %v593, %v577
      %v610 = vpack.c.b16 %v594, %v578
      %v611 = vpack.c.b16 %v595, %v579
      %v612 = vpack.c.b16 %v596, %v580
      %v613 = vpack.c.b16 %v597, %v581
      %v614 = vpack.c.b16 %v598, %v582
      %v615 = vpack.c.b16 %v599, %v583
      %v616 = vpack.c.b16 %v600, %v584
      %v617 = vpack.c.b16 %v601, %v585
      %v618 = vpack.c.b16 %v602, %v586
      %v619 = vpack.c.b16 %v603, %v587
      %v620 = vpack.c.b16 %v604, %v588
      %v621 = vpack.c.b16 %v605, %v589
      %v622 = vpack.c.b16 %v606, %v590
      %v895 = vunpack.c.l.b16 %v303
      %v896 = vunpack.c.h.b16 %v303
      %v897 = vunpack.c.l.b16 %v304
      %v898 = vunpack.c.h.b16 %v304
      %v899 = vunpack.c.l.b16 %v305
      %v900 = vunpack.c.h.b16 %v305
      %v901 = vunpack.c.l.b16 %v306
      %v902 = vunpack.c.h.b16 %v306
      %v903 = vunpack.c.l.b16 %v307
      %v904 = vunpack.c.h.b16 %v307
      %v905 = vunpack.c.l.b16 %v308
      %v906 = vunpack.c.h.b16 %v308
      %v907 = vunpack.c.l.b16 %v309
      %v908 = vunpack.c.h.b16 %v309
      %v909 = vunpack.c.l.b16 %v310
      %v910 = vunpack.c.h.b16 %v310
      %v911 = vunpack.c.l.b16 %v311
      %v912 = vunpack.c.h.b16 %v311
      %v913 = vunpack.c.l.b16 %v312
      %v914 = vunpack.c.h.b16 %v312
      %v915 = vunpack.c.l.b16 %v313
      %v916 = vunpack.c.h.b16 %v313
      %v917 = vunpack.c.l.b16 %v314
      %v918 = vunpack.c.h.b16 %v314
      %v919 = vunpack.c.l.b16 %v315
      %v920 = vunpack.c.h.b16 %v315
      %v921 = vunpack.c.l.b16 %v316
      %v922 = vunpack.c.h.b16 %v316
      %v923 = vunpack.c.l.b16 %v317
      %v924 = vunpack.c.h.b16 %v317
      %v925 = vunpack.c.l.b16 %v318
      %v926 = vunpack.c.h.b16 %v318
      %v927 = vunpack.c.l.b16 %v319
      %v928 = vunpack.c.h.b16 %v319
      %v929 = vunpack.c.l.b16 %v320
      %v930 = vunpack.c.h.b16 %v320
      %v931 = vunpack.c.l.b16 %v321
      %v932 = vunpack.c.h.b16 %v321
      %v933 = vunpack.c.l.b16 %v322
      %v934 = vunpack.c.h.b16 %v322
      %v935 = vunpack.c.l.b16 %v323
      %v936 = vunpack.c.h.b16 %v323
      %v937 = vunpack.c.l.b16 %v324
      %v938 = vunpack.c.h.b16 %v324
      %v939 = vunpack.c.l.b16 %v325
      %v940 = vunpack.c.h.b16 %v325
      %v941 = vunpack.c.l.b16 %v326
      %v942 = vunpack.c.h.b16 %v326
      %v943 = vunpack.c.l.b16 %v327
      %v944 = vunpack.c.h.b16 %v327
      %v945 = vunpack.c.l.b16 %v328
      %v946 = vunpack.c.h.b16 %v328
      %v947 = vunpack.c.l.b16 %v329
      %v948 = vunpack.c.h.b16 %v329
      %v949 = vunpack.c.l.b16 %v330
      %v950 = vunpack.c.h.b16 %v330
      %v951 = vunpack.c.l.b16 %v331
      %v952 = vunpack.c.h.b16 %v331
      %v953 = vunpack.c.l.b16 %v332
      %v954 = vunpack.c.h.b16 %v332
      %v955 = vunpack.c.l.b16 %v333
      %v956 = vunpack.c.h.b16 %v333
      %v957 = vunpack.c.l.b16 %v334
      %v958 = vunpack.c.h.b16 %v334
      %v959 = vunpack.c.l.b16 %v335
      %v960 = vunpack.c.h.b16 %v335
      %v961 = vunpack.c.l.b16 %v336
      %v962 = vunpack.c.h.b16 %v336
      %v963 = vunpack.c.l.b16 %v337
      %v964 = vunpack.c.h.b16 %v337
      %v965 = vunpack.c.l.b16 %v338
      %v966 = vunpack.c.h.b16 %v338
      %v967 = vunpack.c.l.b16 %v339
      %v968 = vunpack.c.h.b16 %v339
      %v969 = vunpack.c.l.b16 %v340
      %v970 = vunpack.c.h.b16 %v340
      %v971 = vunpack.c.l.b16 %v341
      %v972 = vunpack.c.h.b16 %v341
      %v973 = vunpack.c.l.b16 %v342
      %v974 = vunpack.c.h.b16 %v342
      %v975 = vunpack.c.l.b16 %v343
      %v976 = vunpack.c.h.b16 %v343
      %v977 = vunpack.c.l.b16 %v344
      %v978 = vunpack.c.h.b16 %v344
      %v979 = vunpack.c.l.b16 %v345
      %v980 = vunpack.c.h.b16 %v345
      %v981 = vunpack.c.l.b16 %v346
      %v982 = vunpack.c.h.b16 %v346
      %v983 = vunpack.c.l.b16 %v347
      %v984 = vunpack.c.h.b16 %v347
      %v985 = vunpack.c.l.b16 %v348
      %v986 = vunpack.c.h.b16 %v348
      %v987 = vunpack.c.l.b16 %v349
      %v988 = vunpack.c.h.b16 %v349
      %v989 = vunpack.c.l.b16 %v350
      %v990 = vunpack.c.h.b16 %v350
      %v991 = vunpack.c.l.b16 %v351
      %v992 = vunpack.c.h.b16 %v351
      %v993 = vunpack.c.l.b16 %v352
      %v994 = vunpack.c.h.b16 %v352
      %v995 = vunpack.c.l.b16 %v353
      %v996 = vunpack.c.h.b16 %v353
      %v997 = vunpack.c.l.b16 %v354
      %v998 = vunpack.c.h.b16 %v354
      %v999 = vunpack.c.l.b16 %v355
      %v1000 = vunpack.c.h.b16 %v355
      %v1001 = vunpack.c.l.b16 %v356
      %v1002 = vunpack.c.h.b16 %v356
      %v1003 = vunpack.c.l.b16 %v357
      %v1004 = vunpack.c.h.b16 %v357
      %v1005 = vunpack.c.l.b16 %v358
      %v1006 = vunpack.c.h.b16 %v358
      %v1007 = vunpack.c.l.b16 %v359
      %v1008 = vunpack.c.h.b16 %v359
      %v1009 = vunpack.c.l.b16 %v360
      %v1010 = vunpack.c.h.b16 %v360
      %v1011 = vunpack.c.l.b16 %v361
      %v1012 = vunpack.c.h.b16 %v361
      %v1013 = vunpack.c.l.b16 %v362
      %v1014 = vunpack.c.h.b16 %v362
      %v1015 = vunpack.c.l.b16 %v363
      %v1016 = vunpack.c.h.b16 %v363
      %v1017 = vunpack.c.l.b16 %v364
      %v1018 = vunpack.c.h.b16 %v364
      %v1019 = vunpack.c.l.b16 %v365
      %v1020 = vunpack.c.h.b16 %v365
      %v1021 = vunpack.c.l.b16 %v366
      %v1022 = vunpack.c.h.b16 %v366
      %v1023 = vunpack.c.l.b16 %v367
      %v1024 = vunpack.c.h.b16 %v367
      %v1025 = vunpack.c.l.b16 %v368
      %v1026 = vunpack.c.h.b16 %v368
      %v1027 = vunpack.c.l.b16 %v369
      %v1028 = vunpack.c.h.b16 %v369
      %v1029 = vunpack.c.l.b16 %v370
      %v1030 = vunpack.c.h.b16 %v370
      %v1031 = vunpack.c.l.b16 %v371
      %v1032 = vunpack.c.h.b16 %v371
      %v1033 = vunpack.c.l.b16 %v372
      %v1034 = vunpack.c.h.b16 %v372
      %v1035 = vunpack.c.l.b16 %v373
      %v1036 = vunpack.c.h.b16 %v373
      %v1037 = vunpack.c.l.b16 %v374
      %v1038 = vunpack.c.h.b16 %v374
      %v1039 = vunpack.c.l.b16 %v375
      %v1040 = vunpack.c.h.b16 %v375
      %v1041 = vunpack.c.l.b16 %v376
      %v1042 = vunpack.c.h.b16 %v376
      %v1043 = vunpack.c.l.b16 %v377
      %v1044 = vunpack.c.h.b16 %v377
      %v1045 = vunpack.c.l.b16 %v378
      %v1046 = vunpack.c.h.b16 %v378
      %v1047 = vunpack.c.l.b16 %v379
      %v1048 = vunpack.c.h.b16 %v379
      %v1049 = vunpack.c.l.b16 %v380
      %v1050 = vunpack.c.h.b16 %v380
      %v1051 = vunpack.c.l.b16 %v381
      %v1052 = vunpack.c.h.b16 %v381
      %v1053 = vunpack.c.l.b16 %v382
      %v1054 = vunpack.c.h.b16 %v382
      %v1055 = vunpack.c.l.b16 %v383
      %v1056 = vunpack.c.h.b16 %v383
      %v1057 = vunpack.c.l.b16 %v384
      %v1058 = vunpack.c.h.b16 %v384
      %v1059 = vunpack.c.l.b16 %v385
      %v1060 = vunpack.c.h.b16 %v385
      %v1061 = vunpack.c.l.b16 %v386
      %v1062 = vunpack.c.h.b16 %v386
      %v1063 = vunpack.c.l.b16 %v387
      %v1064 = vunpack.c.h.b16 %v387
      %v1065 = vunpack.c.l.b16 %v388
      %v1066 = vunpack.c.h.b16 %v388
      %v1067 = vunpack.c.l.b16 %v389
      %v1068 = vunpack.c.h.b16 %v389
      %v1069 = vunpack.c.l.b16 %v390
      %v1070 = vunpack.c.h.b16 %v390
      %v1071 = vunpack.c.l.b16 %v391
      %v1072 = vunpack.c.h.b16 %v391
      %v1073 = vunpack.c.l.b16 %v392
      %v1074 = vunpack.c.h.b16 %v392
      %v1075 = vunpack.c.l.b16 %v393
      %v1076 = vunpack.c.h.b16 %v393
      %v1077 = vunpack.c.l.b16 %v394
      %v1078 = vunpack.c.h.b16 %v394
      %v1079 = vunpack.c.l.b16 %v395
      %v1080 = vunpack.c.h.b16 %v395
      %v1081 = vunpack.c.l.b16 %v396
      %v1082 = vunpack.c.h.b16 %v396
      %v1083 = vunpack.c.l.b16 %v397
      %v1084 = vunpack.c.h.b16 %v397
      %v1085 = vunpack.c.l.b16 %v398
      %v1086 = vunpack.c.h.b16 %v398
      %v1087 = vunpack.c.l.b16 %v399
      %v1088 = vunpack.c.h.b16 %v399
      %v1089 = vunpack.c.l.b16 %v400
      %v1090 = vunpack.c.h.b16 %v400
      %v1091 = vunpack.c.l.b16 %v401
      %v1092 = vunpack.c.h.b16 %v401
      %v1093 = vunpack.c.l.b16 %v402
      %v1094 = vunpack.c.h.b16 %v402
      %v1095 = vunpack.c.l.b16 %v403
      %v1096 = vunpack.c.h.b16 %v403
      %v1097 = vunpack.c.l.b16 %v404
      %v1098 = vunpack.c.h.b16 %v404
      %v1099 = vunpack.c.l.b16 %v405
      %v1100 = vunpack.c.h.b16 %v405
      %v1101 = vunpack.c.l.b16 %v406
      %v1102 = vunpack.c.h.b16 %v406
      %v1103 = vunpack.c.l.b16 %v407
      %v1104 = vunpack.c.h.b16 %v407
      %v1105 = vunpack.c.l.b16 %v408
      %v1106 = vunpack.c.h.b16 %v408
      %v1107 = vunpack.c.l.b16 %v409
      %v1108 = vunpack.c.h.b16 %v409
      %v1109 = vunpack.c.l.b16 %v410
      %v1110 = vunpack.c.h.b16 %v410
      %v1111 = vunpack.c.l.b16 %v411
      %v1112 = vunpack.c.h.b16 %v411
      %v1113 = vunpack.c.l.b16 %v412
      %v1114 = vunpack.c.h.b16 %v412
      %v1115 = vunpack.c.l.b16 %v413
      %v1116 = vunpack.c.h.b16 %v413
      %v1117 = vunpack.c.l.b16 %v414
      %v1118 = vunpack.c.h.b16 %v414
      %v1119 = vunpack.c.l.b16 %v415
      %v1120 = vunpack.c.h.b16 %v415
      %v1121 = vunpack.c.l.b16 %v416
      %v1122 = vunpack.c.h.b16 %v416
      %v1123 = vunpack.c.l.b16 %v417
      %v1124 = vunpack.c.h.b16 %v417
      %v1125 = vunpack.c.l.b16 %v418
      %v1126 = vunpack.c.h.b16 %v418
      %v1127 = vunpack.c.l.b16 %v419
      %v1128 = vunpack.c.h.b16 %v419
      %v1129 = vunpack.c.l.b16 %v420
      %v1130 = vunpack.c.h.b16 %v420
      %v1131 = vunpack.c.l.b16 %v421
      %v1132 = vunpack.c.h.b16 %v421
      %v1133 = vunpack.c.l.b16 %v422
      %v1134 = vunpack.c.h.b16 %v422
      %v1135 = vunpack.c.l.b16 %v423
      %v1136 = vunpack.c.h.b16 %v423
      %v1137 = vunpack.c.l.b16 %v424
      %v1138 = vunpack.c.h.b16 %v424
      %v1139 = vunpack.c.l.b16 %v425
      %v1140 = vunpack.c.h.b16 %v425
      %v1141 = vunpack.c.l.b16 %v426
      %v1142 = vunpack.c.h.b16 %v426
      %v1143 = vunpack.c.l.b16 %v427
      %v1144 = vunpack.c.h.b16 %v427
      %v1145 = vunpack.c.l.b16 %v428
      %v1146 = vunpack.c.h.b16 %v428
      %v1147 = vunpack.c.l.b16 %v429
      %v1148 = vunpack.c.h.b16 %v429
      %v1149 = vunpack.c.l.b16 %v430
      %v1150 = vunpack.c.h.b16 %v430
      %v1151 = vunpack.c.l.b16 %v431
      %v1152 = vunpack.c.h.b16 %v431
      %v1153 = vunpack.c.l.b16 %v432
      %v1154 = vunpack.c.h.b16 %v432
      %v1155 = vunpack.c.l.b16 %v433
      %v1156 = vunpack.c.h.b16 %v433
      %v1157 = vunpack.c.l.b16 %v434
      %v1158 = vunpack.c.h.b16 %v434
      %v1159 = vunpack.c.l.b16 %v435
      %v1160 = vunpack.c.h.b16 %v435
      %v1161 = vunpack.c.l.b16 %v436
      %v1162 = vunpack.c.h.b16 %v436
      %v1163 = vunpack.c.l.b16 %v437
      %v1164 = vunpack.c.h.b16 %v437
      %v1165 = vunpack.c.l.b16 %v438
      %v1166 = vunpack.c.h.b16 %v438
      %v1167 = vunpack.c.l.b16 %v439
      %v1168 = vunpack.c.h.b16 %v439
      %v1169 = vunpack.c.l.b16 %v440
      %v1170 = vunpack.c.h.b16 %v440
      %v1171 = vunpack.c.l.b16 %v441
      %v1172 = vunpack.c.h.b16 %v441
      %v1173 = vunpack.c.l.b16 %v442
      %v1174 = vunpack.c.h.b16 %v442
      %v1175 = vunpack.c.l.b16 %v443
      %v1176 = vunpack.c.h.b16 %v443
      %v1177 = vunpack.c.l.b16 %v444
      %v1178 = vunpack.c.h.b16 %v444
      %v1179 = vunpack.c.l.b16 %v445
      %v1180 = vunpack.c.h.b16 %v445
      %v1181 = vunpack.c.l.b16 %v446
      %v1182 = vunpack.c.h.b16 %v446
      %v1183 = vunpack.c.l.b16 %v447
      %v1184 = vunpack.c.h.b16 %v447
      %v1185 = vunpack.c.l.b16 %v448
      %v1186 = vunpack.c.h.b16 %v448
      %v1187 = vunpack.c.l.b16 %v449
      %v1188 = vunpack.c.h.b16 %v449
      %v1189 = vunpack.c.l.b16 %v450
      %v1190 = vunpack.c.h.b16 %v450
      %v1191 = vunpack.c.l.b16 %v451
      %v1192 = vunpack.c.h.b16 %v451
      %v1193 = vunpack.c.l.b16 %v452
      %v1194 = vunpack.c.h.b16 %v452
      %v1195 = vunpack.c.l.b16 %v453
      %v1196 = vunpack.c.h.b16 %v453
      %v1197 = vunpack.c.l.b16 %v454
      %v1198 = vunpack.c.h.b16 %v454
      %v1199 = vunpack.c.l.b16 %v455
      %v1200 = vunpack.c.h.b16 %v455
      %v1201 = vunpack.c.l.b16 %v456
      %v1202 = vunpack.c.h.b16 %v456
      %v1203 = vunpack.c.l.b16 %v457
      %v1204 = vunpack.c.h.b16 %v457
      %v1205 = vunpack.c.l.b16 %v458
      %v1206 = vunpack.c.h.b16 %v458
      %v1207 = vunpack.c.l.b16 %v459
      %v1208 = vunpack.c.h.b16 %v459
      %v1209 = vunpack.c.l.b16 %v460
      %v1210 = vunpack.c.h.b16 %v460
      %v1211 = vunpack.c.l.b16 %v461
      %v1212 = vunpack.c.h.b16 %v461
      %v1213 = vunpack.c.l.b16 %v462
      %v1214 = vunpack.c.h.b16 %v462
      %v1215 = vunpack.c.l.b16 %v463
      %v1216 = vunpack.c.h.b16 %v463
      %v1217 = vunpack.c.l.b16 %v464
      %v1218 = vunpack.c.h.b16 %v464
      %v1219 = vunpack.c.l.b16 %v465
      %v1220 = vunpack.c.h.b16 %v465
      %v1221 = vunpack.c.l.b16 %v466
      %v1222 = vunpack.c.h.b16 %v466
      %v1223 = vunpack.c.l.b16 %v467
      %v1224 = vunpack.c.h.b16 %v467
      %v1225 = vunpack.c.l.b16 %v468
      %v1226 = vunpack.c.h.b16 %v468
      %v1227 = vunpack.c.l.b16 %v469
      %v1228 = vunpack.c.h.b16 %v469
      %v1229 = vunpack.c.l.b16 %v470
      %v1230 = vunpack.c.h.b16 %v470
      %v1231 = vunpack.c.l.b16 %v471
      %v1232 = vunpack.c.h.b16 %v471
      %v1233 = vunpack.c.l.b16 %v472
      %v1234 = vunpack.c.h.b16 %v472
      %v1235 = vunpack.c.l.b16 %v473
      %v1236 = vunpack.c.h.b16 %v473
      %v1237 = vunpack.c.l.b16 %v474
      %v1238 = vunpack.c.h.b16 %v474
      %v1239 = vunpack.c.l.b16 %v475
      %v1240 = vunpack.c.h.b16 %v475
      %v1241 = vunpack.c.l.b16 %v476
      %v1242 = vunpack.c.h.b16 %v476
      %v1243 = vunpack.c.l.b16 %v477
      %v1244 = vunpack.c.h.b16 %v477
      %v1245 = vunpack.c.l.b16 %v478
      %v1246 = vunpack.c.h.b16 %v478
      %v1247 = vunpack.c.l.b16 %v479
      %v1248 = vunpack.c.h.b16 %v479
      %v1249 = vunpack.c.l.b16 %v480
      %v1250 = vunpack.c.h.b16 %v480
      %v1251 = vunpack.c.l.b16 %v481
      %v1252 = vunpack.c.h.b16 %v481
      %v1253 = vunpack.c.l.b16 %v482
      %v1254 = vunpack.c.h.b16 %v482
      %v1255 = vunpack.c.l.b16 %v483
      %v1256 = vunpack.c.h.b16 %v483
      %v1257 = vunpack.c.l.b16 %v484
      %v1258 = vunpack.c.h.b16 %v484
      %v1259 = vunpack.c.l.b16 %v485
      %v1260 = vunpack.c.h.b16 %v485
      %v1261 = vunpack.c.l.b16 %v486
      %v1262 = vunpack.c.h.b16 %v486
      %v1263 = vunpack.c.l.b16 %v487
      %v1264 = vunpack.c.h.b16 %v487
      %v1265 = vunpack.c.l.b16 %v488
      %v1266 = vunpack.c.h.b16 %v488
      %v1267 = vunpack.c.l.b16 %v489
      %v1268 = vunpack.c.h.b16 %v489
      %v1269 = vunpack.c.l.b16 %v490
      %v1270 = vunpack.c.h.b16 %v490
      %v1271 = vunpack.c.l.b16 %v491
      %v1272 = vunpack.c.h.b16 %v491
      %v1273 = vunpack.c.l.b16 %v492
      %v1274 = vunpack.c.h.b16 %v492
      %v1275 = vunpack.c.l.b16 %v493
      %v1276 = vunpack.c.h.b16 %v493
      %v1277 = vunpack.c.l.b16 %v494
      %v1278 = vunpack.c.h.b16 %v494
      %v1279 = vunpack.c.l.b16 %v495
      %v1280 = vunpack.c.h.b16 %v495
      %v1281 = vunpack.c.l.b16 %v496
      %v1282 = vunpack.c.h.b16 %v496
      %v1283 = vunpack.c.l.b16 %v497
      %v1284 = vunpack.c.h.b16 %v497
      %v1285 = vunpack.c.l.b16 %v498
      %v1286 = vunpack.c.h.b16 %v498
      %v1287 = vunpack.c.l.b16 %v499
      %v1288 = vunpack.c.h.b16 %v499
      %v1289 = vunpack.c.l.b16 %v500
      %v1290 = vunpack.c.h.b16 %v500
      %v1291 = vunpack.c.l.b16 %v501
      %v1292 = vunpack.c.h.b16 %v501
      %v1293 = vunpack.c.l.b16 %v502
      %v1294 = vunpack.c.h.b16 %v502
      %v1295 = vunpack.c.l.b16 %v503
      %v1296 = vunpack.c.h.b16 %v503
      %v1297 = vunpack.c.l.b16 %v504
      %v1298 = vunpack.c.h.b16 %v504
      %v1299 = vunpack.c.l.b16 %v505
      %v1300 = vunpack.c.h.b16 %v505
      %v1301 = vunpack.c.l.b16 %v506
      %v1302 = vunpack.c.h.b16 %v506
      %v1303 = vunpack.c.l.b16 %v507
      %v1304 = vunpack.c.h.b16 %v507
      %v1305 = vunpack.c.l.b16 %v508
      %v1306 = vunpack.c.h.b16 %v508
      %v1307 = vunpack.c.l.b16 %v509
      %v1308 = vunpack.c.h.b16 %v509
      %v1309 = vunpack.c.l.b16 %v510
      %v1310 = vunpack.c.h.b16 %v510
      %v1311 = vunpack.c.l.b16 %v511
      %v1312 = vunpack.c.h.b16 %v511
      %v1313 = vunpack.c.l.b16 %v512
      %v1314 = vunpack.c.h.b16 %v512
      %v1315 = vunpack.c.l.b16 %v513
      %v1316 = vunpack.c.h.b16 %v513
      %v1317 = vunpack.c.l.b16 %v514
      %v1318 = vunpack.c.h.b16 %v514
      %v1319 = vunpack.c.l.b16 %v515
      %v1320 = vunpack.c.h.b16 %v515
      %v1321 = vunpack.c.l.b16 %v516
      %v1322 = vunpack.c.h.b16 %v516
      %v1323 = vunpack.c.l.b16 %v517
      %v1324 = vunpack.c.h.b16 %v517
      %v1325 = vunpack.c.l.b16 %v518
      %v1326 = vunpack.c.h.b16 %v518
      %v1327 = vunpack.c.l.b16 %v519
      %v1328 = vunpack.c.h.b16 %v519
      %v1329 = vunpack.c.l.b16 %v520
      %v1330 = vunpack.c.h.b16 %v520
      %v1331 = vunpack.c.l.b16 %v521
      %v1332 = vunpack.c.h.b16 %v521
      %v1333 = vunpack.c.l.b16 %v522
      %v1334 = vunpack.c.h.b16 %v522
      %v1335 = vunpack.c.l.b16 %v523
      %v1336 = vunpack.c.h.b16 %v523
      %v1337 = vunpack.c.l.b16 %v524
      %v1338 = vunpack.c.h.b16 %v524
      %v1339 = vunpack.c.l.b16 %v525
      %v1340 = vunpack.c.h.b16 %v525
      %v1341 = vunpack.c.l.b16 %v526
      %v1342 = vunpack.c.h.b16 %v526
      %v1343 = vunpack.c.l.b16 %v527
      %v1344 = vunpack.c.h.b16 %v527
      %v1345 = vunpack.c.l.b16 %v528
      %v1346 = vunpack.c.h.b16 %v528
      %v1347 = vunpack.c.l.b16 %v529
      %v1348 = vunpack.c.h.b16 %v529
      %v1349 = vunpack.c.l.b16 %v530
      %v1350 = vunpack.c.h.b16 %v530
      %v1351 = vunpack.c.l.b16 %v531
      %v1352 = vunpack.c.h.b16 %v531
      %v1353 = vunpack.c.l.b16 %v532
      %v1354 = vunpack.c.h.b16 %v532
      %v1355 = vunpack.c.l.b16 %v533
      %v1356 = vunpack.c.h.b16 %v533
      %v1357 = vunpack.c.l.b16 %v534
      %v1358 = vunpack.c.h.b16 %v534
      %v1359 = vunpack.c.l.b16 %v535
      %v1360 = vunpack.c.h.b16 %v535
      %v1361 = vunpack.c.l.b16 %v536
      %v1362 = vunpack.c.h.b16 %v536
      %v1363 = vunpack.c.l.b16 %v537
      %v1364 = vunpack.c.h.b16 %v537
      %v1365 = vunpack.c.l.b16 %v538
      %v1366 = vunpack.c.h.b16 %v538
      %v1367 = vunpack.c.l.b16 %v539
      %v1368 = vunpack.c.h.b16 %v539
      %v1369 = vunpack.c.l.b16 %v540
      %v1370 = vunpack.c.h.b16 %v540
      %v1371 = vunpack.c.l.b16 %v541
      %v1372 = vunpack.c.h.b16 %v541
      %v1373 = vunpack.c.l.b16 %v542
      %v1374 = vunpack.c.h.b16 %v542
      %v1375 = vunpack.c.l.b16 %v543
      %v1376 = vunpack.c.h.b16 %v543
      %v1377 = vunpack.c.l.b16 %v544
      %v1378 = vunpack.c.h.b16 %v544
      %v1379 = vunpack.c.l.b16 %v545
      %v1380 = vunpack.c.h.b16 %v545
      %v1381 = vunpack.c.l.b16 %v546
      %v1382 = vunpack.c.h.b16 %v546
      %v1383 = vunpack.c.l.b16 %v547
      %v1384 = vunpack.c.h.b16 %v547
      %v1385 = vunpack.c.l.b16 %v548
      %v1386 = vunpack.c.h.b16 %v548
      %v1387 = vunpack.c.l.b16 %v549
      %v1388 = vunpack.c.h.b16 %v549
      %v1389 = vunpack.c.l.b16 %v550
      %v1390 = vunpack.c.h.b16 %v550
      %v1391 = vunpack.c.l.b16 %v551
      %v1392 = vunpack.c.h.b16 %v551
      %v1393 = vunpack.c.l.b16 %v552
      %v1394 = vunpack.c.h.b16 %v552
      %v1395 = vunpack.c.l.b16 %v553
      %v1396 = vunpack.c.h.b16 %v553
      %v1397 = vunpack.c.l.b16 %v554
      %v1398 = vunpack.c.h.b16 %v554
      %v1399 = vunpack.c.l.b16 %v555
      %v1400 = vunpack.c.h.b16 %v555
      %v1401 = vunpack.c.l.b16 %v556
      %v1402 = vunpack.c.h.b16 %v556
      %v1403 = vunpack.c.l.b16 %v557
      %v1404 = vunpack.c.h.b16 %v557
      %v1405 = vunpack.c.l.b16 %v558
      %v1406 = vunpack.c.h.b16 %v558
      %v1407 = vpack.c.b16 %v897, %v895
      %v1408 = vpack.c.b16 %v898, %v896
      %v1409 = vpack.c.b16 %v901, %v899
      %v1410 = vpack.c.b16 %v902, %v900
      %v1411 = vpack.c.b16 %v905, %v903
      %v1412 = vpack.c.b16 %v906, %v904
      %v1413 = vpack.c.b16 %v909, %v907
      %v1414 = vpack.c.b16 %v910, %v908
      %v1415 = vpack.c.b16 %v913, %v911
      %v1416 = vpack.c.b16 %v914, %v912
      %v1417 = vpack.c.b16 %v917, %v915
      %v1418 = vpack.c.b16 %v918, %v916
      %v1419 = vpack.c.b16 %v921, %v919
      %v1420 = vpack.c.b16 %v922, %v920
      %v1421 = vpack.c.b16 %v925, %v923
      %v1422 = vpack.c.b16 %v926, %v924
      %v1423 = vpack.c.b16 %v929, %v927
      %v1424 = vpack.c.b16 %v930, %v928
      %v1425 = vpack.c.b16 %v933, %v931
      %v1426 = vpack.c.b16 %v934, %v932
      %v1427 = vpack.c.b16 %v937, %v935
      %v1428 = vpack.c.b16 %v938, %v936
      %v1429 = vpack.c.b16 %v941, %v939
      %v1430 = vpack.c.b16 %v942, %v940
      %v1431 = vpack.c.b16 %v945, %v943
      %v1432 = vpack.c.b16 %v946, %v944
      %v1433 = vpack.c.b16 %v949, %v947
      %v1434 = vpack.c.b16 %v950, %v948
      %v1435 = vpack.c.b16 %v953, %v951
      %v1436 = vpack.c.b16 %v954, %v952
      %v1437 = vpack.c.b16 %v957, %v955
      %v1438 = vpack.c.b16 %v958, %v956
      %v1439 = vpack.c.b16 %v961, %v959
      %v1440 = vpack.c.b16 %v962, %v960
      %v1441 = vpack.c.b16 %v965, %v963
      %v1442 = vpack.c.b16 %v966, %v964
      %v1443 = vpack.c.b16 %v969, %v967
      %v1444 = vpack.c.b16 %v970, %v968
      %v1445 = vpack.c.b16 %v973, %v971
      %v1446 = vpack.c.b16 %v974, %v972
      %v1447 = vpack.c.b16 %v977, %v975
      %v1448 = vpack.c.b16 %v978, %v976
      %v1449 = vpack.c.b16 %v981, %v979
      %v1450 = vpack.c.b16 %v982, %v980
      %v1451 = vpack.c.b16 %v985, %v983
      %v1452 = vpack.c.b16 %v986, %v984
      %v1453 = vpack.c.b16 %v989, %v987
      %v1454 = vpack.c.b16 %v990, %v988
      %v1455 = vpack.c.b16 %v993, %v991
      %v1456 = vpack.c.b16 %v994, %v992
      %v1457 = vpack.c.b16 %v997, %v995
      %v1458 = vpack.c.b16 %v998, %v996
      %v1459 = vpack.c.b16 %v1001, %v999
      %v1460 = vpack.c.b16 %v1002, %v1000
      %v1461 = vpack.c.b16 %v1005, %v1003
      %v1462 = vpack.c.b16 %v1006, %v1004
      %v1463 = vpack.c.b16 %v1009, %v1007
      %v1464 = vpack.c.b16 %v1010, %v1008
      %v1465 = vpack.c.b16 %v1013, %v1011
      %v1466 = vpack.c.b16 %v1014, %v1012
      %v1467 = vpack.c.b16 %v1017, %v1015
      %v1468 = vpack.c.b16 %v1018, %v1016
      %v1469 = vpack.c.b16 %v1021, %v1019
      %v1470 = vpack.c.b16 %v1022, %v1020
      %v1471 = vpack.c.b16 %v1025, %v1023
      %v1472 = vpack.c.b16 %v1026, %v1024
      %v1473 = vpack.c.b16 %v1029, %v1027
      %v1474 = vpack.c.b16 %v1030, %v1028
      %v1475 = vpack.c.b16 %v1033, %v1031
      %v1476 = vpack.c.b16 %v1034, %v1032
      %v1477 = vpack.c.b16 %v1037, %v1035
      %v1478 = vpack.c.b16 %v1038, %v1036
      %v1479 = vpack.c.b16 %v1041, %v1039
      %v1480 = vpack.c.b16 %v1042, %v1040
      %v1481 = vpack.c.b16 %v1045, %v1043
      %v1482 = vpack.c.b16 %v1046, %v1044
      %v1483 = vpack.c.b16 %v1049, %v1047
      %v1484 = vpack.c.b16 %v1050, %v1048
      %v1485 = vpack.c.b16 %v1053, %v1051
      %v1486 = vpack.c.b16 %v1054, %v1052
      %v1487 = vpack.c.b16 %v1057, %v1055
      %v1488 = vpack.c.b16 %v1058, %v1056
      %v1489 = vpack.c.b16 %v1061, %v1059
      %v1490 = vpack.c.b16 %v1062, %v1060
      %v1491 = vpack.c.b16 %v1065, %v1063
      %v1492 = vpack.c.b16 %v1066, %v1064
      %v1493 = vpack.c.b16 %v1069, %v1067
      %v1494 = vpack.c.b16 %v1070, %v1068
      %v1495 = vpack.c.b16 %v1073, %v1071
      %v1496 = vpack.c.b16 %v1074, %v1072
      %v1497 = vpack.c.b16 %v1077, %v1075
      %v1498 = vpack.c.b16 %v1078, %v1076
      %v1499 = vpack.c.b16 %v1081, %v1079
      %v1500 = vpack.c.b16 %v1082, %v1080
      %v1501 = vpack.c.b16 %v1085, %v1083
      %v1502 = vpack.c.b16 %v1086, %v1084
      %v1503 = vpack.c.b16 %v1089, %v1087
      %v1504 = vpack.c.b16 %v1090, %v1088
      %v1505 = vpack.c.b16 %v1093, %v1091
      %v1506 = vpack.c.b16 %v1094, %v1092
      %v1507 = vpack.c.b16 %v1097, %v1095
      %v1508 = vpack.c.b16 %v1098, %v1096
      %v1509 = vpack.c.b16 %v1101, %v1099
      %v1510 = vpack.c.b16 %v1102, %v1100
      %v1511 = vpack.c.b16 %v1105, %v1103
      %v1512 = vpack.c.b16 %v1106, %v1104
      %v1513 = vpack.c.b16 %v1109, %v1107
      %v1514 = vpack.c.b16 %v1110, %v1108
      %v1515 = vpack.c.b16 %v1113, %v1111
      %v1516 = vpack.c.b16 %v1114, %v1112
      %v1517 = vpack.c.b16 %v1117, %v1115
      %v1518 = vpack.c.b16 %v1118, %v1116
      %v1519 = vpack.c.b16 %v1121, %v1119
      %v1520 = vpack.c.b16 %v1122, %v1120
      %v1521 = vpack.c.b16 %v1125, %v1123
      %v1522 = vpack.c.b16 %v1126, %v1124
      %v1523 = vpack.c.b16 %v1129, %v1127
      %v1524 = vpack.c.b16 %v1130, %v1128
      %v1525 = vpack.c.b16 %v1133, %v1131
      %v1526 = vpack.c.b16 %v1134, %v1132
      %v1527 = vpack.c.b16 %v1137, %v1135
      %v1528 = vpack.c.b16 %v1138, %v1136
      %v1529 = vpack.c.b16 %v1141, %v1139
      %v1530 = vpack.c.b16 %v1142, %v1140
      %v1531 = vpack.c.b16 %v1145, %v1143
      %v1532 = vpack.c.b16 %v1146, %v1144
      %v1533 = vpack.c.b16 %v1149, %v1147
      %v1534 = vpack.c.b16 %v1150, %v1148
      %v1535 = vpack.c.b16 %v1153, %v1151
      %v1536 = vpack.c.b16 %v1154, %v1152
      %v1537 = vpack.c.b16 %v1157, %v1155
      %v1538 = vpack.c.b16 %v1158, %v1156
      %v1539 = vpack.c.b16 %v1161, %v1159
      %v1540 = vpack.c.b16 %v1162, %v1160
      %v1541 = vpack.c.b16 %v1165, %v1163
      %v1542 = vpack.c.b16 %v1166, %v1164
      %v1543 = vpack.c.b16 %v1169, %v1167
      %v1544 = vpack.c.b16 %v1170, %v1168
      %v1545 = vpack.c.b16 %v1173, %v1171
      %v1546 = vpack.c.b16 %v1174, %v1172
      %v1547 = vpack.c.b16 %v1177, %v1175
      %v1548 = vpack.c.b16 %v1178, %v1176
      %v1549 = vpack.c.b16 %v1181, %v1179
      %v1550 = vpack.c.b16 %v1182, %v1180
      %v1551 = vpack.c.b16 %v1185, %v1183
      %v1552 = vpack.c.b16 %v1186, %v1184
      %v1553 = vpack.c.b16 %v1189, %v1187
      %v1554 = vpack.c.b16 %v1190, %v1188
      %v1555 = vpack.c.b16 %v1193, %v1191
      %v1556 = vpack.c.b16 %v1194, %v1192
      %v1557 = vpack.c.b16 %v1197, %v1195
      %v1558 = vpack.c.b16 %v1198, %v1196
      %v1559 = vpack.c.b16 %v1201, %v1199
      %v1560 = vpack.c.b16 %v1202, %v1200
      %v1561 = vpack.c.b16 %v1205, %v1203
      %v1562 = vpack.c.b16 %v1206, %v1204
      %v1563 = vpack.c.b16 %v1209, %v1207
      %v1564 = vpack.c.b16 %v1210, %v1208
      %v1565 = vpack.c.b16 %v1213, %v1211
      %v1566 = vpack.c.b16 %v1214, %v1212
      %v1567 = vpack.c.b16 %v1217, %v1215
      %v1568 = vpack.c.b16 %v1218, %v1216
      %v1569 = vpack.c.b16 %v1221, %v1219
      %v1570 = vpack.c.b16 %v1222, %v1220
      %v1571 = vpack.c.b16 %v1225, %v1223
      %v1572 = vpack.c.b16 %v1226, %v1224
      %v1573 = vpack.c.b16 %v1229, %v1227
      %v1574 = vpack.c.b16 %v1230, %v1228
      %v1575 = vpack.c.b16 %v1233, %v1231
      %v1576 = vpack.c.b16 %v1234, %v1232
      %v1577 = vpack.c.b16 %v1237, %v1235
      %v1578 = vpack.c.b16 %v1238, %v1236
      %v1579 = vpack.c.b16 %v1241, %v1239
      %v1580 = vpack.c.b16 %v1242, %v1240
      %v1581 = vpack.c.b16 %v1245, %v1243
      %v1582 = vpack.c.b16 %v1246, %v1244
      %v1583 = vpack.c.b16 %v1249, %v1247
      %v1584 = vpack.c.b16 %v1250, %v1248
      %v1585 = vpack.c.b16 %v1253, %v1251
      %v1586 = vpack.c.b16 %v1254, %v1252
      %v1587 = vpack.c.b16 %v1257, %v1255
      %v1588 = vpack.c.b16 %v1258, %v1256
      %v1589 = vpack.c.b16 %v1261, %v1259
      %v1590 = vpack.c.b16 %v1262, %v1260
      %v1591 = vpack.c.b16 %v1265, %v1263
      %v1592 = vpack.c.b16 %v1266, %v1264
      %v1593 = vpack.c.b16 %v1269, %v1267
      %v1594 = vpack.c.b16 %v1270, %v1268
      %v1595 = vpack.c.b16 %v1273, %v1271
      %v1596 = vpack.c.b16 %v1274, %v1272
      %v1597 = vpack.c.b16 %v1277, %v1275
      %v1598 = vpack.c.b16 %v1278, %v1276
      %v1599 = vpack.c.b16 %v1281, %v1279
      %v1600 = vpack.c.b16 %v1282, %v1280
      %v1601 = vpack.c.b16 %v1285, %v1283
      %v1602 = vpack.c.b16 %v1286, %v1284
      %v1603 = vpack.c.b16 %v1289, %v1287
      %v1604 = vpack.c.b16 %v1290, %v1288
      %v1605 = vpack.c.b16 %v1293, %v1291
      %v1606 = vpack.c.b16 %v1294, %v1292
      %v1607 = vpack.c.b16 %v1297, %v1295
      %v1608 = vpack.c.b16 %v1298, %v1296
      %v1609 = vpack.c.b16 %v1301, %v1299
      %v1610 = vpack.c.b16 %v1302, %v1300
      %v1611 = vpack.c.b16 %v1305, %v1303
      %v1612 = vpack.c.b16 %v1306, %v1304
      %v1613 = vpack.c.b16 %v1309, %v1307
      %v1614 = vpack.c.b16 %v1310, %v1308
      %v1615 = vpack.c.b16 %v1313, %v1311
      %v1616 = vpack.c.b16 %v1314, %v1312
      %v1617 = vpack.c.b16 %v1317, %v1315
      %v1618 = vpack.c.b16 %v1318, %v1316
      %v1619 = vpack.c.b16 %v1321, %v1319
      %v1620 = vpack.c.b16 %v1322, %v1320
      %v1621 = vpack.c.b16 %v1325, %v1323
      %v1622 = vpack.c.b16 %v1326, %v1324
      %v1623 = vpack.c.b16 %v1329, %v1327
      %v1624 = vpack.c.b16 %v1330, %v1328
      %v1625 = vpack.c.b16 %v1333, %v1331
      %v1626 = vpack.c.b16 %v1334, %v1332
      %v1627 = vpack.c.b16 %v1337, %v1335
      %v1628 = vpack.c.b16 %v1338, %v1336
      %v1629 = vpack.c.b16 %v1341, %v1339
      %v1630 = vpack.c.b16 %v1342, %v1340
      %v1631 = vpack.c.b16 %v1345, %v1343
      %v1632 = vpack.c.b16 %v1346, %v1344
      %v1633 = vpack.c.b16 %v1349, %v1347
      %v1634 = vpack.c.b16 %v1350, %v1348
      %v1635 = vpack.c.b16 %v1353, %v1351
      %v1636 = vpack.c.b16 %v1354, %v1352
      %v1637 = vpack.c.b16 %v1357, %v1355
      %v1638 = vpack.c.b16 %v1358, %v1356
      %v1639 = vpack.c.b16 %v1361, %v1359
      %v1640 = vpack.c.b16 %v1362, %v1360
      %v1641 = vpack.c.b16 %v1365, %v1363
      %v1642 = vpack.c.b16 %v1366, %v1364
      %v1643 = vpack.c.b16 %v1369, %v1367
      %v1644 = vpack.c.b16 %v1370, %v1368
      %v1645 = vpack.c.b16 %v1373, %v1371
      %v1646 = vpack.c.b16 %v1374, %v1372
      %v1647 = vpack.c.b16 %v1377, %v1375
      %v1648 = vpack.c.b16 %v1378, %v1376
      %v1649 = vpack.c.b16 %v1381, %v1379
      %v1650 = vpack.c.b16 %v1382, %v1380
      %v1651 = vpack.c.b16 %v1385, %v1383
      %v1652 = vpack.c.b16 %v1386, %v1384
      %v1653 = vpack.c.b16 %v1389, %v1387
      %v1654 = vpack.c.b16 %v1390, %v1388
      %v1655 = vpack.c.b16 %v1393, %v1391
      %v1656 = vpack.c.b16 %v1394, %v1392
      %v1657 = vpack.c.b16 %v1397, %v1395
      %v1658 = vpack.c.b16 %v1398, %v1396
      %v1659 = vpack.c.b16 %v1401, %v1399
      %v1660 = vpack.c.b16 %v1402, %v1400
      %v1661 = vpack.c.b16 %v1405, %v1403
      %v1662 = vpack.c.b16 %v1406, %v1404
      %1919 = vmatprep.subr.bf16.mxu0 %v1408
      %1920 = vmatpush1.bf16.msra.mxu0 %v1407
      %1921 = vmatprep.subr.bf16.mxu0 %v1410
      %1922 = vmatpush1.bf16.msra.mxu0 %v1409
      %1923 = vmatprep.subr.bf16.mxu0 %v1412
      %1924 = vmatpush1.bf16.msra.mxu0 %v1411
      %1925 = vmatprep.subr.bf16.mxu0 %v1414
      %1926 = vmatpush1.bf16.msra.mxu0 %v1413
      %1927 = vmatprep.subr.bf16.mxu0 %v1416
      %1928 = vmatpush1.bf16.msra.mxu0 %v1415
      %1929 = vmatprep.subr.bf16.mxu0 %v1418
      %1930 = vmatpush1.bf16.msra.mxu0 %v1417
      %1931 = vmatprep.subr.bf16.mxu0 %v1420
      %1932 = vmatpush1.bf16.msra.mxu0 %v1419
      %1933 = vmatprep.subr.bf16.mxu0 %v1422
      %1934 = vmatpush1.bf16.msra.mxu0 %v1421
      %1935 = vmatprep.subr.bf16.mxu0 %v1424
      %1936 = vmatpush1.bf16.msra.mxu0 %v1423
      %1937 = vmatprep.subr.bf16.mxu0 %v1426
      %1938 = vmatpush1.bf16.msra.mxu0 %v1425
      %1939 = vmatprep.subr.bf16.mxu0 %v1428
      %1940 = vmatpush1.bf16.msra.mxu0 %v1427
      %1941 = vmatprep.subr.bf16.mxu0 %v1430
      %1942 = vmatpush1.bf16.msra.mxu0 %v1429
      %1943 = vmatprep.subr.bf16.mxu0 %v1432
      %1944 = vmatpush1.bf16.msra.mxu0 %v1431
      %1945 = vmatprep.subr.bf16.mxu0 %v1434
      %1946 = vmatpush1.bf16.msra.mxu0 %v1433
      %1947 = vmatprep.subr.bf16.mxu0 %v1436
      %1948 = vmatpush1.bf16.msra.mxu0 %v1435
      %1949 = vmatprep.subr.bf16.mxu0 %v1438
      %1950 = vmatpush1.bf16.msra.mxu0 %v1437
      %1951 = vmatprep.mubr.bf16.mxu0 %v608
      %1952 = vmatmul.mubr.bf16.gmra.mrb[0].mxu0 %v607
      %v1953 = vpop.f32.mrb[0].mxu0
      %v1954 = vadd.f32 0.0, %v1953
      %v1955 = vpop.f32.mrb[0].mxu0
      %v1956 = vadd.f32 0.0, %v1955
      %v1957 = vpop.f32.mrb[0].mxu0
      %v1958 = vadd.f32 0.0, %v1957
      %v1959 = vpop.f32.mrb[0].mxu0
      %v1960 = vadd.f32 0.0, %v1959
      %1961 = vdwg.mxu0
      %1962 = vmatprep.subr.bf16.mxu0 %v1440
      %1963 = vmatpush1.bf16.msra.mxu0 %v1439
      %1964 = vmatprep.subr.bf16.mxu0 %v1442
      %1965 = vmatpush1.bf16.msra.mxu0 %v1441
      %1966 = vmatprep.subr.bf16.mxu0 %v1444
      %1967 = vmatpush1.bf16.msra.mxu0 %v1443
      %1968 = vmatprep.subr.bf16.mxu0 %v1446
      %1969 = vmatpush1.bf16.msra.mxu0 %v1445
      %1970 = vmatprep.subr.bf16.mxu0 %v1448
      %1971 = vmatpush1.bf16.msra.mxu0 %v1447
      %1972 = vmatprep.subr.bf16.mxu0 %v1450
      %1973 = vmatpush1.bf16.msra.mxu0 %v1449
      %1974 = vmatprep.subr.bf16.mxu0 %v1452
      %1975 = vmatpush1.bf16.msra.mxu0 %v1451
      %1976 = vmatprep.subr.bf16.mxu0 %v1454
      %1977 = vmatpush1.bf16.msra.mxu0 %v1453
      %1978 = vmatprep.subr.bf16.mxu0 %v1456
      %1979 = vmatpush1.bf16.msra.mxu0 %v1455
      %1980 = vmatprep.subr.bf16.mxu0 %v1458
      %1981 = vmatpush1.bf16.msra.mxu0 %v1457
      %1982 = vmatprep.subr.bf16.mxu0 %v1460
      %1983 = vmatpush1.bf16.msra.mxu0 %v1459
      %1984 = vmatprep.subr.bf16.mxu0 %v1462
      %1985 = vmatpush1.bf16.msra.mxu0 %v1461
      %1986 = vmatprep.subr.bf16.mxu0 %v1464
      %1987 = vmatpush1.bf16.msra.mxu0 %v1463
      %1988 = vmatprep.subr.bf16.mxu0 %v1466
      %1989 = vmatpush1.bf16.msra.mxu0 %v1465
      %1990 = vmatprep.subr.bf16.mxu0 %v1468
      %1991 = vmatpush1.bf16.msra.mxu0 %v1467
      %1992 = vmatprep.subr.bf16.mxu0 %v1470
      %1993 = vmatpush1.bf16.msra.mxu0 %v1469
      %1994 = vmatprep.mubr.bf16.mxu0 %v610
      %1995 = vmatmul.mubr.bf16.gmra.mrb[0].mxu0 %v609
      %v1996 = vpop.f32.mrb[0].mxu0
      %v1997 = vadd.f32 %v1954, %v1996
      %v1998 = vpop.f32.mrb[0].mxu0
      %v1999 = vadd.f32 %v1956, %v1998
      %v2000 = vpop.f32.mrb[0].mxu0
      %v2001 = vadd.f32 %v1958, %v2000
      %v2002 = vpop.f32.mrb[0].mxu0
      %v2003 = vadd.f32 %v1960, %v2002
      %2004 = vdwg.mxu0
      %2005 = vmatprep.subr.bf16.mxu0 %v1472
      %2006 = vmatpush1.bf16.msra.mxu0 %v1471
      %2007 = vmatprep.subr.bf16.mxu0 %v1474
      %2008 = vmatpush1.bf16.msra.mxu0 %v1473
      %2009 = vmatprep.subr.bf16.mxu0 %v1476
      %2010 = vmatpush1.bf16.msra.mxu0 %v1475
      %2011 = vmatprep.subr.bf16.mxu0 %v1478
      %2012 = vmatpush1.bf16.msra.mxu0 %v1477
      %2013 = vmatprep.subr.bf16.mxu0 %v1480
      %2014 = vmatpush1.bf16.msra.mxu0 %v1479
      %2015 = vmatprep.subr.bf16.mxu0 %v1482
      %2016 = vmatpush1.bf16.msra.mxu0 %v1481
      %2017 = vmatprep.subr.bf16.mxu0 %v1484
      %2018 = vmatpush1.bf16.msra.mxu0 %v1483
      %2019 = vmatprep.subr.bf16.mxu0 %v1486
      %2020 = vmatpush1.bf16.msra.mxu0 %v1485
      %2021 = vmatprep.subr.bf16.mxu0 %v1488
      %2022 = vmatpush1.bf16.msra.mxu0 %v1487
      %2023 = vmatprep.subr.bf16.mxu0 %v1490
      %2024 = vmatpush1.bf16.msra.mxu0 %v1489
      %2025 = vmatprep.subr.bf16.mxu0 %v1492
      %2026 = vmatpush1.bf16.msra.mxu0 %v1491
      %2027 = vmatprep.subr.bf16.mxu0 %v1494
      %2028 = vmatpush1.bf16.msra.mxu0 %v1493
      %2029 = vmatprep.subr.bf16.mxu0 %v1496
      %2030 = vmatpush1.bf16.msra.mxu0 %v1495
      %2031 = vmatprep.subr.bf16.mxu0 %v1498
      %2032 = vmatpush1.bf16.msra.mxu0 %v1497
      %2033 = vmatprep.subr.bf16.mxu0 %v1500
      %2034 = vmatpush1.bf16.msra.mxu0 %v1499
      %2035 = vmatprep.subr.bf16.mxu0 %v1502
      %2036 = vmatpush1.bf16.msra.mxu0 %v1501
      %2037 = vmatprep.mubr.bf16.mxu0 %v612
      %2038 = vmatmul.mubr.bf16.gmra.mrb[0].mxu0 %v611
      %v2039 = vpop.f32.mrb[0].mxu0
      %v2040 = vadd.f32 %v1997, %v2039
      %v2041 = vpop.f32.mrb[0].mxu0
      %v2042 = vadd.f32 %v1999, %v2041
      %v2043 = vpop.f32.mrb[0].mxu0
      %v2044 = vadd.f32 %v2001, %v2043
      %v2045 = vpop.f32.mrb[0].mxu0
      %v2046 = vadd.f32 %v2003, %v2045
      %2047 = vdwg.mxu0
      %2048 = vmatprep.subr.bf16.mxu0 %v1504
      %2049 = vmatpush1.bf16.msra.mxu0 %v1503
      %2050 = vmatprep.subr.bf16.mxu0 %v1506
      %2051 = vmatpush1.bf16.msra.mxu0 %v1505
      %2052 = vmatprep.subr.bf16.mxu0 %v1508
      %2053 = vmatpush1.bf16.msra.mxu0 %v1507
      %2054 = vmatprep.subr.bf16.mxu0 %v1510
      %2055 = vmatpush1.bf16.msra.mxu0 %v1509
      %2056 = vmatprep.subr.bf16.mxu0 %v1512
      %2057 = vmatpush1.bf16.msra.mxu0 %v1511
      %2058 = vmatprep.subr.bf16.mxu0 %v1514
      %2059 = vmatpush1.bf16.msra.mxu0 %v1513
      %2060 = vmatprep.subr.bf16.mxu0 %v1516
      %2061 = vmatpush1.bf16.msra.mxu0 %v1515
      %2062 = vmatprep.subr.bf16.mxu0 %v1518
      %2063 = vmatpush1.bf16.msra.mxu0 %v1517
      %2064 = vmatprep.subr.bf16.mxu0 %v1520
      %2065 = vmatpush1.bf16.msra.mxu0 %v1519
      %2066 = vmatprep.subr.bf16.mxu0 %v1522
      %2067 = vmatpush1.bf16.msra.mxu0 %v1521
      %2068 = vmatprep.subr.bf16.mxu0 %v1524
      %2069 = vmatpush1.bf16.msra.mxu0 %v1523
      %2070 = vmatprep.subr.bf16.mxu0 %v1526
      %2071 = vmatpush1.bf16.msra.mxu0 %v1525
      %2072 = vmatprep.subr.bf16.mxu0 %v1528
      %2073 = vmatpush1.bf16.msra.mxu0 %v1527
      %2074 = vmatprep.subr.bf16.mxu0 %v1530
      %2075 = vmatpush1.bf16.msra.mxu0 %v1529
      %2076 = vmatprep.subr.bf16.mxu0 %v1532
      %2077 = vmatpush1.bf16.msra.mxu0 %v1531
      %2078 = vmatprep.subr.bf16.mxu0 %v1534
      %2079 = vmatpush1.bf16.msra.mxu0 %v1533
      %2080 = vmatprep.mubr.bf16.mxu0 %v614
      %2081 = vmatmul.mubr.bf16.gmra.mrb[0].mxu0 %v613
      %v2082 = vpop.f32.mrb[0].mxu0
      %v2083 = vadd.f32 %v2040, %v2082
      %v2084 = vpop.f32.mrb[0].mxu0
      %v2085 = vadd.f32 %v2042, %v2084
      %v2086 = vpop.f32.mrb[0].mxu0
      %v2087 = vadd.f32 %v2044, %v2086
      %v2088 = vpop.f32.mrb[0].mxu0
      %v2089 = vadd.f32 %v2046, %v2088
      %2090 = vdwg.mxu0
      %2091 = vmatprep.subr.bf16.mxu0 %v1536
      %2092 = vmatpush1.bf16.msra.mxu0 %v1535
      %2093 = vmatprep.subr.bf16.mxu0 %v1538
      %2094 = vmatpush1.bf16.msra.mxu0 %v1537
      %2095 = vmatprep.subr.bf16.mxu0 %v1540
      %2096 = vmatpush1.bf16.msra.mxu0 %v1539
      %2097 = vmatprep.subr.bf16.mxu0 %v1542
      %2098 = vmatpush1.bf16.msra.mxu0 %v1541
      %2099 = vmatprep.subr.bf16.mxu0 %v1544
      %2100 = vmatpush1.bf16.msra.mxu0 %v1543
      %2101 = vmatprep.subr.bf16.mxu0 %v1546
      %2102 = vmatpush1.bf16.msra.mxu0 %v1545
      %2103 = vmatprep.subr.bf16.mxu0 %v1548
      %2104 = vmatpush1.bf16.msra.mxu0 %v1547
      %2105 = vmatprep.subr.bf16.mxu0 %v1550
      %2106 = vmatpush1.bf16.msra.mxu0 %v1549
      %2107 = vmatprep.subr.bf16.mxu0 %v1552
      %2108 = vmatpush1.bf16.msra.mxu0 %v1551
      %2109 = vmatprep.subr.bf16.mxu0 %v1554
      %2110 = vmatpush1.bf16.msra.mxu0 %v1553
      %2111 = vmatprep.subr.bf16.mxu0 %v1556
      %2112 = vmatpush1.bf16.msra.mxu0 %v1555
      %2113 = vmatprep.subr.bf16.mxu0 %v1558
      %2114 = vmatpush1.bf16.msra.mxu0 %v1557
      %2115 = vmatprep.subr.bf16.mxu0 %v1560
      %2116 = vmatpush1.bf16.msra.mxu0 %v1559
      %2117 = vmatprep.subr.bf16.mxu0 %v1562
      %2118 = vmatpush1.bf16.msra.mxu0 %v1561
      %2119 = vmatprep.subr.bf16.mxu0 %v1564
      %2120 = vmatpush1.bf16.msra.mxu0 %v1563
      %2121 = vmatprep.subr.bf16.mxu0 %v1566
      %2122 = vmatpush1.bf16.msra.mxu0 %v1565
      %2123 = vmatprep.mubr.bf16.mxu0 %v616
      %2124 = vmatmul.mubr.bf16.gmra.mrb[0].mxu0 %v615
      %v2125 = vpop.f32.mrb[0].mxu0
      %v2126 = vadd.f32 %v2083, %v2125
      %v2127 = vpop.f32.mrb[0].mxu0
      %v2128 = vadd.f32 %v2085, %v2127
      %v2129 = vpop.f32.mrb[0].mxu0
      %v2130 = vadd.f32 %v2087, %v2129
      %v2131 = vpop.f32.mrb[0].mxu0
      %v2132 = vadd.f32 %v2089, %v2131
      %2133 = vdwg.mxu0
      %2134 = vmatprep.subr.bf16.mxu0 %v1568
      %2135 = vmatpush1.bf16.msra.mxu0 %v1567
      %2136 = vmatprep.subr.bf16.mxu0 %v1570
      %2137 = vmatpush1.bf16.msra.mxu0 %v1569
      %2138 = vmatprep.subr.bf16.mxu0 %v1572
      %2139 = vmatpush1.bf16.msra.mxu0 %v1571
      %2140 = vmatprep.subr.bf16.mxu0 %v1574
      %2141 = vmatpush1.bf16.msra.mxu0 %v1573
      %2142 = vmatprep.subr.bf16.mxu0 %v1576
      %2143 = vmatpush1.bf16.msra.mxu0 %v1575
      %2144 = vmatprep.subr.bf16.mxu0 %v1578
      %2145 = vmatpush1.bf16.msra.mxu0 %v1577
      %2146 = vmatprep.subr.bf16.mxu0 %v1580
      %2147 = vmatpush1.bf16.msra.mxu0 %v1579
      %2148 = vmatprep.subr.bf16.mxu0 %v1582
      %2149 = vmatpush1.bf16.msra.mxu0 %v1581
      %2150 = vmatprep.subr.bf16.mxu0 %v1584
      %2151 = vmatpush1.bf16.msra.mxu0 %v1583
      %2152 = vmatprep.subr.bf16.mxu0 %v1586
      %2153 = vmatpush1.bf16.msra.mxu0 %v1585
      %2154 = vmatprep.subr.bf16.mxu0 %v1588
      %2155 = vmatpush1.bf16.msra.mxu0 %v1587
      %2156 = vmatprep.subr.bf16.mxu0 %v1590
      %2157 = vmatpush1.bf16.msra.mxu0 %v1589
      %2158 = vmatprep.subr.bf16.mxu0 %v1592
      %2159 = vmatpush1.bf16.msra.mxu0 %v1591
      %2160 = vmatprep.subr.bf16.mxu0 %v1594
      %2161 = vmatpush1.bf16.msra.mxu0 %v1593
      %2162 = vmatprep.subr.bf16.mxu0 %v1596
      %2163 = vmatpush1.bf16.msra.mxu0 %v1595
      %2164 = vmatprep.subr.bf16.mxu0 %v1598
      %2165 = vmatpush1.bf16.msra.mxu0 %v1597
      %2166 = vmatprep.mubr.bf16.mxu0 %v618
      %2167 = vmatmul.mubr.bf16.gmra.mrb[0].mxu0 %v617
      %v2168 = vpop.f32.mrb[0].mxu0
      %v2169 = vadd.f32 %v2126, %v2168
      %v2170 = vpop.f32.mrb[0].mxu0
      %v2171 = vadd.f32 %v2128, %v2170
      %v2172 = vpop.f32.mrb[0].mxu0
      %v2173 = vadd.f32 %v2130, %v2172
      %v2174 = vpop.f32.mrb[0].mxu0
      %v2175 = vadd.f32 %v2132, %v2174
      %2176 = vdwg.mxu0
      %2177 = vmatprep.subr.bf16.mxu0 %v1600
      %2178 = vmatpush1.bf16.msra.mxu0 %v1599
      %2179 = vmatprep.subr.bf16.mxu0 %v1602
      %2180 = vmatpush1.bf16.msra.mxu0 %v1601
      %2181 = vmatprep.subr.bf16.mxu0 %v1604
      %2182 = vmatpush1.bf16.msra.mxu0 %v1603
      %2183 = vmatprep.subr.bf16.mxu0 %v1606
      %2184 = vmatpush1.bf16.msra.mxu0 %v1605
      %2185 = vmatprep.subr.bf16.mxu0 %v1608
      %2186 = vmatpush1.bf16.msra.mxu0 %v1607
      %2187 = vmatprep.subr.bf16.mxu0 %v1610
      %2188 = vmatpush1.bf16.msra.mxu0 %v1609
      %2189 = vmatprep.subr.bf16.mxu0 %v1612
      %2190 = vmatpush1.bf16.msra.mxu0 %v1611
      %2191 = vmatprep.subr.bf16.mxu0 %v1614
      %2192 = vmatpush1.bf16.msra.mxu0 %v1613
      %2193 = vmatprep.subr.bf16.mxu0 %v1616
      %2194 = vmatpush1.bf16.msra.mxu0 %v1615
      %2195 = vmatprep.subr.bf16.mxu0 %v1618
      %2196 = vmatpush1.bf16.msra.mxu0 %v1617
      %2197 = vmatprep.subr.bf16.mxu0 %v1620
      %2198 = vmatpush1.bf16.msra.mxu0 %v1619
      %2199 = vmatprep.subr.bf16.mxu0 %v1622
      %2200 = vmatpush1.bf16.msra.mxu0 %v1621
      %2201 = vmatprep.subr.bf16.mxu0 %v1624
      %2202 = vmatpush1.bf16.msra.mxu0 %v1623
      %2203 = vmatprep.subr.bf16.mxu0 %v1626
      %2204 = vmatpush1.bf16.msra.mxu0 %v1625
      %2205 = vmatprep.subr.bf16.mxu0 %v1628
      %2206 = vmatpush1.bf16.msra.mxu0 %v1627
      %2207 = vmatprep.subr.bf16.mxu0 %v1630
      %2208 = vmatpush1.bf16.msra.mxu0 %v1629
      %2209 = vmatprep.mubr.bf16.mxu0 %v620
      %2210 = vmatmul.mubr.bf16.gmra.mrb[0].mxu0 %v619
      %v2211 = vpop.f32.mrb[0].mxu0
      %v2212 = vadd.f32 %v2169, %v2211
      %v2213 = vpop.f32.mrb[0].mxu0
      %v2214 = vadd.f32 %v2171, %v2213
      %v2215 = vpop.f32.mrb[0].mxu0
      %v2216 = vadd.f32 %v2173, %v2215
      %v2217 = vpop.f32.mrb[0].mxu0
      %v2218 = vadd.f32 %v2175, %v2217
      %2219 = vdwg.mxu0
      %2220 = vmatprep.subr.bf16.mxu0 %v1632
      %2221 = vmatpush1.bf16.msra.mxu0 %v1631
      %2222 = vmatprep.subr.bf16.mxu0 %v1634
      %2223 = vmatpush1.bf16.msra.mxu0 %v1633
      %2224 = vmatprep.subr.bf16.mxu0 %v1636
      %2225 = vmatpush1.bf16.msra.mxu0 %v1635
      %2226 = vmatprep.subr.bf16.mxu0 %v1638
      %2227 = vmatpush1.bf16.msra.mxu0 %v1637
      %2228 = vmatprep.subr.bf16.mxu0 %v1640
      %2229 = vmatpush1.bf16.msra.mxu0 %v1639
      %2230 = vmatprep.subr.bf16.mxu0 %v1642
      %2231 = vmatpush1.bf16.msra.mxu0 %v1641
      %2232 = vmatprep.subr.bf16.mxu0 %v1644
      %2233 = vmatpush1.bf16.msra.mxu0 %v1643
      %2234 = vmatprep.subr.bf16.mxu0 %v1646
      %2235 = vmatpush1.bf16.msra.mxu0 %v1645
      %2236 = vmatprep.subr.bf16.mxu0 %v1648
      %2237 = vmatpush1.bf16.msra.mxu0 %v1647
      %2238 = vmatprep.subr.bf16.mxu0 %v1650
      %2239 = vmatpush1.bf16.msra.mxu0 %v1649
      %2240 = vmatprep.subr.bf16.mxu0 %v1652
      %2241 = vmatpush1.bf16.msra.mxu0 %v1651
      %2242 = vmatprep.subr.bf16.mxu0 %v1654
      %2243 = vmatpush1.bf16.msra.mxu0 %v1653
      %2244 = vmatprep.subr.bf16.mxu0 %v1656
      %2245 = vmatpush1.bf16.msra.mxu0 %v1655
      %2246 = vmatprep.subr.bf16.mxu0 %v1658
      %2247 = vmatpush1.bf16.msra.mxu0 %v1657
      %2248 = vmatprep.subr.bf16.mxu0 %v1660
      %2249 = vmatpush1.bf16.msra.mxu0 %v1659
      %2250 = vmatprep.subr.bf16.mxu0 %v1662
      %2251 = vmatpush1.bf16.msra.mxu0 %v1661
      %2252 = vmatprep.mubr.bf16.mxu0 %v622
      %2253 = vmatmul.mubr.bf16.gmra.mrb[0].mxu0 %v621
      %v2254 = vpop.f32.mrb[0].mxu0
      %v2255 = vadd.f32 %v2212, %v2254
      %v2256 = vpop.f32.mrb[0].mxu0
      %v2257 = vadd.f32 %v2214, %v2256
      %v2258 = vpop.f32.mrb[0].mxu0
      %v2259 = vadd.f32 %v2216, %v2258
      %v2260 = vpop.f32.mrb[0].mxu0
      %v2261 = vadd.f32 %v2218, %v2260
      %2262 = vdwg.mxu0
      %v2263 = vpack.c.bf16 %v2259, %v2255
      %v2264 = vpack.c.bf16 %v2261, %v2257
      %v2267 = vunpack.c.l.b16 %v2263
      %v2268 = vunpack.c.l.b16 %v2264
      %v2269 = vunpack.c.h.b16 %v2263
      %v2270 = vunpack.c.h.b16 %v2264
      %v2271 = vpack.c.b16 %v2268, %v2267
      %v2272 = vpack.c.b16 %v2270, %v2269
      %2275 = vst [vmem:[%s275] sm:$0xff] %v2271
      %2276 = vst [vmem:[%s275 + $0x8] sm:$0xff] %v2272
      %p2277 = scmp.eq.s32.totalorder %s21, 0
      // Predicated region
      $region29: #{gmodel_forward.6} parent=27 // pred_check
        %p2278 = pneg %p2277
      $region30: #{gmodel_forward.6} parent=27 // pred_check_branch
        %2280 = sbr.rel (%p2278) target = $region32
      $region31: #{gmodel_forward.6} parent=27 // pred_region
        %2281 = vst [vmem:[%s281] sm:$0xff] 0.0
        %2282 = vst [vmem:[%s281 + $0x8] sm:$0xff] 0.0
        %2283 = vst [vmem:[%s286] sm:$0xff] 0.0
        %2284 = vst [vmem:[%s286 + $0x8] sm:$0xff] 0.0
      $region32: #{gmodel_forward.6} parent=27 // pred_fallthru
        _
      %v2285 = vld [vmem:[%s281] sm:$0xff]
      %v2286 = vld [vmem:[%s281 + $0x8] sm:$0xff]
      %v2287 = vadd.f32 %v2255, %v2259
      %v2288 = vrot.slane %v2287, 4
      %v2289 = vadd.f32 %v2287, %v2288
      %v2290 = vrot.slane %v2289, 2
      %v2291 = vadd.f32 %v2289, %v2290
      %v2292 = vrot.slane %v2291, 1
      %v2293 = vadd.f32 %v2291, %v2292
      %v2294 = vadd.f32 %v2257, %v2261
      %v2295 = vrot.slane %v2294, 4
      %v2296 = vadd.f32 %v2294, %v2295
      %v2297 = vrot.slane %v2296, 2
      %v2298 = vadd.f32 %v2296, %v2297
      %v2299 = vrot.slane %v2298, 1
      %v2300 = vadd.f32 %v2298, %v2299
      %v2301 = vadd.f32 %v2285, %v2293
      %v2302 = vadd.f32 %v2286, %v2300
      %2303 = vst [vmem:[%s281] sm:$0xff] %v2301
      %2304 = vst [vmem:[%s281 + $0x8] sm:$0xff] %v2302
      %v2305 = vld [vmem:[%s286] sm:$0xff]
      %v2306 = vld [vmem:[%s286 + $0x8] sm:$0xff]
      %v2307 = vmul.f32 %v2255, %v2255
      %v2308 = vmul.f32 %v2257, %v2257
      %v2309 = vmul.f32 %v2259, %v2259
      %v2310 = vmul.f32 %v2261, %v2261
      %v2311 = vadd.f32 %v2307, %v2309
      %v2312 = vrot.slane %v2311, 4
      %v2313 = vadd.f32 %v2311, %v2312
      %v2314 = vrot.slane %v2313, 2
      %v2315 = vadd.f32 %v2313, %v2314
      %v2316 = vrot.slane %v2315, 1
      %v2317 = vadd.f32 %v2315, %v2316
      %v2318 = vadd.f32 %v2308, %v2310
      %v2319 = vrot.slane %v2318, 4
      %v2320 = vadd.f32 %v2318, %v2319
      %v2321 = vrot.slane %v2320, 2
      %v2322 = vadd.f32 %v2320, %v2321
      %v2323 = vrot.slane %v2322, 1
      %v2324 = vadd.f32 %v2322, %v2323
      %v2325 = vadd.f32 %v2305, %v2317
      %v2326 = vadd.f32 %v2306, %v2324
      %2327 = vst [vmem:[%s286] sm:$0xff] %v2325
      %2328 = vst [vmem:[%s286 + $0x8] sm:$0xff] %v2326
      %s2329 = smul.u32 2, %s21
      %p2330 = scmp.lt.s32.totalorder %s20, 3
      %s2331 = scalar_select %p2330, %s20, 3
      %p2332 = scmp.lt.s32.totalorder %s2329, 3
      %s2333 = scalar_select %p2332, %s2329, 3
      %s2334 = smul.addr %s2333, 2
      %s2335 = smul.addr %s2331, 8
      %s2336 = sadd.s32 %s2334, %s2335
      %s2337 = smul.addr %s2336, 4
      %s2338 = scalar_lea.vmem %s2, %s2337
      %p2339 = scmp.lt.s32.totalorder %s20, 3
      %s2340 = scalar_select %p2339, %s20, 3
      %s2341 = smul.addr %s2340, 2
      %s2342 = smul.addr %s2341, 8
      %s2343 = scalar_lea.vmem %s3, %s2342
      %p2344 = scmp.lt.s32.totalorder %s20, 3
      %s2345 = scalar_select %p2344, %s20, 3
      %s2346 = smul.addr %s2345, 2
      %s2347 = smul.addr %s2346, 8
      %s2348 = scalar_lea.vmem %s4, %s2347
      // Predicated region
      $region33: #{gmodel_forward.6} parent=27 // pred_check
        %p2349 = pneg %p102
      $region34: #{gmodel_forward.6} parent=27 // pred_check_branch
        %2351 = sbr.rel (%p2349) target = $region36
      $region35: #{gmodel_forward.6} parent=27 // pred_region
        %s2352 = smul.u32 2, %s21
      $region36: #{gmodel_forward.6} parent=27 // pred_fallthru
        _
      // Predicated region
      $region37: #{gmodel_forward.6} parent=27 // pred_check
        %p2353 = pneg %p128
      $region38: #{gmodel_forward.6} parent=27 // pred_check_branch
        %2355 = sbr.rel (%p2353) target = $region40
      $region39: #{gmodel_forward.6} parent=27 // pred_region
        _
      $region40: #{gmodel_forward.6} parent=27 // pred_fallthru
        _
      // Predicated region
      $region41: #{gmodel_forward.6} parent=27 // pred_check
        %p2356 = pneg %p154
      $region42: #{gmodel_forward.6} parent=27 // pred_check_branch
        %2358 = sbr.rel (%p2356) target = $region44
      $region43: #{gmodel_forward.6} parent=27 // pred_region
        _
      $region44: #{gmodel_forward.6} parent=27 // pred_fallthru
        _
    $region28: #{gmodel_forward.6} parent=5 // pred_fallthru
      _
    %p2359 = scmp.le.s32.totalorder 2, %s11
    // Predicated region
    $region45: #{gmodel_forward.6} parent=5 // pred_check
      %p2360 = pneg %p2359
    $region46: #{gmodel_forward.6} parent=5 // pred_check_branch
      %2362 = sbr.rel (%p2360) target = $region48
    $region47: #{gmodel_forward.6} parent=5 // pred_region
      %s2363 = ssub.s32 %s11, 2
      // Predicated region
      $region49: #{gmodel_forward.6} parent=47 // pred_check
        %p2364 = pneg %p108
      $region50: #{gmodel_forward.6} parent=47 // pred_check_branch
        %2366 = sbr.rel (%p2364) target = $region52
      $region51: #{gmodel_forward.6} parent=47 // pred_region
        %s2367 = smul.u32 2, %s23
        %p2368 = scmp.lt.s32.totalorder %s22, 3
        %s2369 = scalar_select %p2368, %s22, 3
        %p2370 = scmp.lt.s32.totalorder %s2367, 3
        %s2371 = scalar_select %p2370, %s2367, 3
        %s2372 = smul.addr %s2371, 2
        %s2373 = smul.addr %s2369, 8
        %s2374 = sadd.s32 %s2372, %s2373
        %s2375 = smul.addr %s2374, 4
        %s2376 = scalar_lea.vmem %s2, %s2375
      $region52: #{gmodel_forward.6} parent=47 // pred_fallthru
        _
      // Predicated region
      $region53: #{gmodel_forward.6} parent=47 // pred_check
        %p2377 = pneg %p134
      $region54: #{gmodel_forward.6} parent=47 // pred_check_branch
        %2379 = sbr.rel (%p2377) target = $region56
      $region55: #{gmodel_forward.6} parent=47 // pred_region
        %p2380 = scmp.lt.s32.totalorder %s22, 3
        %s2381 = scalar_select %p2380, %s22, 3
        %s2382 = smul.addr %s2381, 2
        %s2383 = smul.addr %s2382, 8
        %s2384 = scalar_lea.vmem %s3, %s2383
      $region56: #{gmodel_forward.6} parent=47 // pred_fallthru
        _
      // Predicated region
      $region57: #{gmodel_forward.6} parent=47 // pred_check
        %p2385 = pneg %p160
      $region58: #{gmodel_forward.6} parent=47 // pred_check_branch
        %2387 = sbr.rel (%p2385) target = $region60
      $region59: #{gmodel_forward.6} parent=47 // pred_region
        %p2388 = scmp.lt.s32.totalorder %s22, 3
        %s2389 = scalar_select %p2388, %s22, 3
        %s2390 = smul.addr %s2389, 2
        %s2391 = smul.addr %s2390, 8
        %s2392 = scalar_lea.vmem %s4, %s2391
      $region60: #{gmodel_forward.6} parent=47 // pred_fallthru
        _
    $region48: #{gmodel_forward.6} parent=5 // pred_fallthru
      _
  $region6: #{gmodel_forward.6} parent=0 // loop_footer
    %s15 = sadd.s32 1, %s11
  $region7: #{gmodel_forward.6} parent=0 // loop_footer_branch
    %10 = sbr.rel target = $region3
  $region8: #{gmodel_forward.6} parent=0 // loop_exit
    _

// kernel: gmodel_forward.7
$region0: #{gmodel_forward.7}
  #allocation0 [shape = 'u32[]', space=smem, size = 0x4, offset = 0x4, fixed_abs, tag = 'smem constant byte address 0x4 - core index']
  #allocation1 [shape = 'u32[144,128]{1,0:T(1,128)}', space=vmem, size = 0x12000, scoped, tag = 'internal scratch']
  %s0 = inlined_call_operand.vmem [shape: bf16[4,128,1024], index: 0, kind: input, shape index: {}]
  %s1 = inlined_call_operand.vmem [shape: bf16[4,1024,128], index: 1, kind: input, shape index: {}]
  %s2 = inlined_call_operand.vmem [shape: bf16[4,128,128], index: 2, kind: output, shape index: {0}]
  %s3 = inlined_call_operand.vmem [shape: f32[4,8,128], index: 3, kind: output, shape index: {1}]
  %s4 = inlined_call_operand.vmem [shape: f32[4,8,128], index: 4, kind: output, shape index: {2}]
  %5 = xla_tuple %s2, %s3, %s4
  %s6 = sld [smem:[#allocation0]]
  $region61: #{gmodel_forward.7} parent=0
    _
  %s8 = ssub.s32 1, %s6
  %s9 = scalar_select 0, %s8, %s6
  loop: start=0, step=1, limit=10
  $region2: #{gmodel_forward.7} parent=0 // loop_pre_header
    _
  $region3: #{gmodel_forward.7} parent=0 // loop_header
    %s11 = sphi 0, %s15
    %p12 = scmp.ge.s32.totalorder %s11, 10
    %s18 = sphi 0, %s30
    %s19 = sphi 0, %s26
    %s20 = sphi 0, %s18
    %s21 = sphi 0, %s19
    %s22 = sphi 0, %s20
    %s23 = sphi 0, %s21
    %s35 = sphi 0, %s37
    %s38 = sphi 0, %s35
    %s39 = sphi 0, %s38
    %s55 = sphi 0, %s39
    %s61 = sphi 0, %s63
    %s64 = sphi 0, %s61
    %s65 = sphi 0, %s64
    %s81 = sphi 0, %s65
    %s89 = sphi 0, %s91
    %s92 = sphi 0, %s89
    %s93 = sphi 0, %s92
    %s109 = sphi 0, %s93
    %s115 = sphi 0, %s117
    %s118 = sphi 0, %s115
    %s119 = sphi 0, %s118
    %s135 = sphi 0, %s119
    %s141 = sphi 0, %s143
    %s144 = sphi 0, %s141
    %s145 = sphi 0, %s144
    %s161 = sphi 0, %s145
  $region4: #{gmodel_forward.7} parent=0 // loop_header_branch
    %14 = sbr.rel (%p12) target = $region8
  $region5: #{gmodel_forward.7} parent=0 // loop_body
    %s16 = ssub.s32 %s11, 1
    %s17 = ssub.s32 %s11, 2
    %s24 = sadd.s32 1, %s19
    %p25 = scmp.ge.s32.totalorder %s24, 2
    %s26 = scalar_select %p25, 0, %s24
    %s27 = sadd.s32 1, %s18
    %s28 = scalar_select %p25, %s27, %s18
    %p29 = scmp.ge.s32.totalorder %s28, 4
    %s30 = scalar_select %p29, 0, %s28
    %s31 = ssub.s32 %s18, %s30
    %s32 = ssub.s32 %s19, %s26
    %s33 = sor.u32 %s31, %s32
    %p34 = scmp.eq.s32.totalorder %s33, 0
    %s36 = sadd.s32 %s35, 1
    %s37 = scalar_select %p34, %s35, %s36
    %p40 = pneg %p34
    %p41 = scmp.eq.s32.totalorder %s11, 7
    %p42 = por %p40, %p41
    %p43 = scmp.ne.s32.totalorder %s35, %s38
    %p44 = scmp.eq.s32.totalorder %s11, 0
    %p45 = por %p43, %p44
    %p46 = scmp.ne.s32.totalorder %s35, %s38
    %p47 = scmp.eq.s32.totalorder %s16, 7
    %p48 = por %p46, %p47
    %p49 = scmp.ne.s32.totalorder %s38, %s39
    %p50 = scmp.eq.s32.totalorder %s16, 0
    %p51 = por %p49, %p50
    %p52 = scmp.ne.s32.totalorder %s38, %s39
    %p53 = scmp.eq.s32.totalorder %s17, 7
    %p54 = por %p52, %p53
    %p56 = scmp.ne.s32.totalorder %s39, %s55
    %p57 = scmp.eq.s32.totalorder %s17, 0
    %p58 = por %p56, %p57
    %s59 = ssub.s32 %s18, %s30
    %p60 = scmp.eq.s32.totalorder %s59, 0
    %s62 = sadd.s32 %s61, 1
    %s63 = scalar_select %p60, %s61, %s62
    %p66 = pneg %p60
    %p67 = scmp.eq.s32.totalorder %s11, 7
    %p68 = por %p66, %p67
    %p69 = scmp.ne.s32.totalorder %s61, %s64
    %p70 = scmp.eq.s32.totalorder %s11, 0
    %p71 = por %p69, %p70
    %p72 = scmp.ne.s32.totalorder %s61, %s64
    %p73 = scmp.eq.s32.totalorder %s16, 7
    %p74 = por %p72, %p73
    %p75 = scmp.ne.s32.totalorder %s64, %s65
    %p76 = scmp.eq.s32.totalorder %s16, 0
    %p77 = por %p75, %p76
    %p78 = scmp.ne.s32.totalorder %s64, %s65
    %p79 = scmp.eq.s32.totalorder %s17, 7
    %p80 = por %p78, %p79
    %p82 = scmp.ne.s32.totalorder %s65, %s81
    %p83 = scmp.eq.s32.totalorder %s17, 0
    %p84 = por %p82, %p83
    %s85 = ssub.s32 %s18, %s30
    %s86 = ssub.s32 %s19, %s26
    %s87 = sor.u32 %s85, %s86
    %p88 = scmp.eq.s32.totalorder %s87, 0
    %s90 = sadd.s32 %s89, 1
    %s91 = scalar_select %p88, %s89, %s90
    %p94 = pneg %p88
    %p95 = scmp.eq.s32.totalorder %s11, 7
    %p96 = por %p94, %p95
    %p97 = scmp.ne.s32.totalorder %s89, %s92
    %p98 = scmp.eq.s32.totalorder %s11, 0
    %p99 = por %p97, %p98
    %p100 = scmp.ne.s32.totalorder %s89, %s92
    %p101 = scmp.eq.s32.totalorder %s16, 7
    %p102 = por %p100, %p101
    %p103 = scmp.ne.s32.totalorder %s92, %s93
    %p104 = scmp.eq.s32.totalorder %s16, 0
    %p105 = por %p103, %p104
    %p106 = scmp.ne.s32.totalorder %s92, %s93
    %p107 = scmp.eq.s32.totalorder %s17, 7
    %p108 = por %p106, %p107
    %p110 = scmp.ne.s32.totalorder %s93, %s109
    %p111 = scmp.eq.s32.totalorder %s17, 0
    %p112 = por %p110, %p111
    %s113 = ssub.s32 %s18, %s30
    %p114 = scmp.eq.s32.totalorder %s113, 0
    %s116 = sadd.s32 %s115, 1
    %s117 = scalar_select %p114, %s115, %s116
    %p120 = pneg %p114
    %p121 = scmp.eq.s32.totalorder %s11, 7
    %p122 = por %p120, %p121
    %p123 = scmp.ne.s32.totalorder %s115, %s118
    %p124 = scmp.eq.s32.totalorder %s11, 0
    %p125 = por %p123, %p124
    %p126 = scmp.ne.s32.totalorder %s115, %s118
    %p127 = scmp.eq.s32.totalorder %s16, 7
    %p128 = por %p126, %p127
    %p129 = scmp.ne.s32.totalorder %s118, %s119
    %p130 = scmp.eq.s32.totalorder %s16, 0
    %p131 = por %p129, %p130
    %p132 = scmp.ne.s32.totalorder %s118, %s119
    %p133 = scmp.eq.s32.totalorder %s17, 7
    %p134 = por %p132, %p133
    %p136 = scmp.ne.s32.totalorder %s119, %s135
    %p137 = scmp.eq.s32.totalorder %s17, 0
    %p138 = por %p136, %p137
    %s139 = ssub.s32 %s18, %s30
    %p140 = scmp.eq.s32.totalorder %s139, 0
    %s142 = sadd.s32 %s141, 1
    %s143 = scalar_select %p140, %s141, %s142
    %p146 = pneg %p140
    %p147 = scmp.eq.s32.totalorder %s11, 7
    %p148 = por %p146, %p147
    %p149 = scmp.ne.s32.totalorder %s141, %s144
    %p150 = scmp.eq.s32.totalorder %s11, 0
    %p151 = por %p149, %p150
    %p152 = scmp.ne.s32.totalorder %s141, %s144
    %p153 = scmp.eq.s32.totalorder %s16, 7
    %p154 = por %p152, %p153
    %p155 = scmp.ne.s32.totalorder %s144, %s145
    %p156 = scmp.eq.s32.totalorder %s16, 0
    %p157 = por %p155, %p156
    %p158 = scmp.ne.s32.totalorder %s144, %s145
    %p159 = scmp.eq.s32.totalorder %s17, 7
    %p160 = por %p158, %p159
    %p162 = scmp.ne.s32.totalorder %s145, %s161
    %p163 = scmp.eq.s32.totalorder %s17, 0
    %p164 = por %p162, %p163
    %p165 = scmp.le.s32.totalorder 1, %s11
    %p166 = scmp.lt.s32.totalorder %s11, 9
    %p167 = pnand %p165, %p166
    %p168 = pneg %p167
    // Predicated region
    $region9: #{gmodel_forward.7} parent=5 // pred_check
      _
    $region10: #{gmodel_forward.7} parent=5 // pred_check_branch
      %170 = sbr.rel (%p167) target = $region12
    $region11: #{gmodel_forward.7} parent=5 // pred_region
      %s171 = ssub.s32 %s11, 1
    $region12: #{gmodel_forward.7} parent=5 // pred_fallthru
      _
    %p172 = scmp.lt.s32.totalorder %s11, 8
    // Predicated region
    $region13: #{gmodel_forward.7} parent=5 // pred_check
      %p173 = pneg %p172
    $region14: #{gmodel_forward.7} parent=5 // pred_check_branch
      %175 = sbr.rel (%p173) target = $region16
    $region15: #{gmodel_forward.7} parent=5 // pred_region
      // Predicated region
      $region17: #{gmodel_forward.7} parent=15 // pred_check
        %p176 = pneg %p45
      $region18: #{gmodel_forward.7} parent=15 // pred_check_branch
        %178 = sbr.rel (%p176) target = $region20
      $region19: #{gmodel_forward.7} parent=15 // pred_region
        %s179 = smul.u32 8, %s19
        %p180 = scmp.lt.s32.totalorder %s18, 3
        %s181 = scalar_select %p180, %s18, 3
        %p182 = scmp.lt.s32.totalorder %s179, 15
        %s183 = scalar_select %p182, %s179, 15
        %s184 = smul.addr %s183, 8
        %s185 = smul.addr %s181, 128
        %s186 = sadd.s32 %s184, %s185
        %s187 = smul.addr %s186, 4
        %s188 = scalar_lea.vmem %s0, %s187
        %s189 = smul.u32 8, %s19
      $region20: #{gmodel_forward.7} parent=15 // pred_fallthru
        _
      // Predicated region
      $region21: #{gmodel_forward.7} parent=15 // pred_check
        %p190 = pneg %p71
      $region22: #{gmodel_forward.7} parent=15 // pred_check_branch
        %192 = sbr.rel (%p190) target = $region24
      $region23: #{gmodel_forward.7} parent=15 // pred_region
        %p193 = scmp.lt.s32.totalorder %s18, 3
        %s194 = scalar_select %p193, %s18, 3
        %s195 = smul.addr %s194, 128
        %s196 = smul.addr %s195, 4
        %s197 = scalar_lea.vmem %s1, %s196
      $region24: #{gmodel_forward.7} parent=15 // pred_fallthru
        _
    $region16: #{gmodel_forward.7} parent=5 // pred_fallthru
      _
    %p198 = scmp.le.s32.totalorder 1, %s11
    %p199 = scmp.lt.s32.totalorder %s11, 9
    %p200 = pnand %p198, %p199
    %p201 = pneg %p200
    // Predicated region
    $region25: #{gmodel_forward.7} parent=5 // pred_check
      _
    $region26: #{gmodel_forward.7} parent=5 // pred_check_branch
      %203 = sbr.rel (%p200) target = $region28
    $region27: #{gmodel_forward.7} parent=5 // pred_region
      %s204 = ssub.s32 %s11, 1
      %s205 = smul.u32 8, %s21
      %p206 = scmp.lt.s32.totalorder %s20, 3
      %s207 = scalar_select %p206, %s20, 3
      %p208 = scmp.lt.s32.totalorder %s205, 15
      %s209 = scalar_select %p208, %s205, 15
      %s210 = smul.addr %s209, 8
      %s211 = smul.addr %s207, 128
      %s212 = sadd.s32 %s210, %s211
      %s213 = smul.addr %s212, 4
      %s214 = scalar_lea.vmem %s0, %s213
      %p215 = pneg %p51
      %p216 = pneg %p48
      %p217 = scmp.lt.s32.totalorder %s20, 3
      %s218 = scalar_select %p217, %s20, 3
      %s219 = smul.addr %s218, 128
      %s220 = smul.addr %s219, 4
      %s221 = scalar_lea.vmem %s1, %s220
      %p222 = pneg %p77
      %p223 = pneg %p74
      %p224 = pneg %p105
      %p225 = pneg %p102
      %s226 = smul.u32 8, %s21
      %p227 = scmp.lt.s32.totalorder %s20, 3
      %s228 = scalar_select %p227, %s20, 3
      %p229 = scmp.lt.s32.totalorder %s226, 15
      %s230 = scalar_select %p229, %s226, 15
      %s231 = smul.addr %s228, 16
      %s232 = sadd.s32 %s230, %s231
      %s233 = smul.addr %s232, 4
      %s234 = scalar_lea.vmem %s2, %s233
      %p235 = pneg %p131
      %p236 = pneg %p128
      %p237 = scmp.lt.s32.totalorder %s20, 3
      %s238 = scalar_select %p237, %s20, 3
      %s239 = smul.addr %s238, 8
      %s240 = scalar_lea.vmem %s3, %s239
      %p241 = pneg %p157
      %p242 = pneg %p154
      %p243 = scmp.lt.s32.totalorder %s20, 3
      %s244 = scalar_select %p243, %s20, 3
      %s245 = smul.addr %s244, 8
      %s246 = scalar_lea.vmem %s4, %s245
      %s247 = smul.u32 8, %s21
      %p248 = scmp.lt.s32.totalorder %s20, 3
      %s249 = scalar_select %p248, %s20, 3
      %p250 = scmp.lt.s32.totalorder %s247, 15
      %s251 = scalar_select %p250, %s247, 15
      %s252 = smul.addr %s251, 8
      %s253 = smul.addr %s249, 128
      %s254 = sadd.s32 %s252, %s253
      %s255 = smul.addr %s254, 4
      %s256 = scalar_lea.vmem %s0, %s255
      %s257 = smul.u32 8, %s21
      %p258 = scmp.lt.s32.totalorder %s20, 3
      %s259 = scalar_select %p258, %s20, 3
      %s260 = smul.addr %s259, 128
      %s261 = smul.addr %s260, 4
      %s262 = scalar_lea.vmem %s1, %s261
      %s263 = smul.u32 8, %s21
      %p264 = scmp.lt.s32.totalorder %s20, 3
      %s265 = scalar_select %p264, %s20, 3
      %p266 = scmp.lt.s32.totalorder %s263, 15
      %s267 = scalar_select %p266, %s263, 15
      %s268 = smul.addr %s265, 16
      %s269 = sadd.s32 %s267, %s268
      %s270 = smul.addr %s269, 4
      %s271 = scalar_lea.vmem %s2, %s270
      %s272 = smul.u32 8, %s21
      %p273 = scmp.lt.s32.totalorder %s20, 3
      %s274 = scalar_select %p273, %s20, 3
      %s275 = smul.addr %s274, 8
      %s276 = scalar_lea.vmem %s3, %s275
      %p277 = scmp.lt.s32.totalorder %s20, 3
      %s278 = scalar_select %p277, %s20, 3
      %s279 = smul.addr %s278, 8
      %s280 = scalar_lea.vmem %s4, %s279
      %v282 = vld [vmem:[%s256] sm:$0xff]
      %v283 = vld [vmem:[%s256 + $0x8] sm:$0xff]
      %v284 = vld [vmem:[%s256 + $0x10] sm:$0xff]
      %v285 = vld [vmem:[%s256 + $0x18] sm:$0xff]
      %v286 = vld [vmem:[%s256 + $0x20] sm:$0xff]
      %v287 = vld [vmem:[%s256 + $0x28] sm:$0xff]
      %v288 = vld [vmem:[%s256 + $0x30] sm:$0xff]
      %v289 = vld [vmem:[%s256 + $0x38] sm:$0xff]
      %v290 = vld [vmem:[%s256 + $0x40] sm:$0xff]
      %v291 = vld [vmem:[%s256 + $0x48] sm:$0xff]
      %v292 = vld [vmem:[%s256 + $0x50] sm:$0xff]
      %v293 = vld [vmem:[%s256 + $0x58] sm:$0xff]
      %v294 = vld [vmem:[%s256 + $0x60] sm:$0xff]
      %v295 = vld [vmem:[%s256 + $0x68] sm:$0xff]
      %v296 = vld [vmem:[%s256 + $0x70] sm:$0xff]
      %v297 = vld [vmem:[%s256 + $0x78] sm:$0xff]
      %v298 = vld [vmem:[%s256 + $0x80] sm:$0xff]
      %v299 = vld [vmem:[%s256 + $0x88] sm:$0xff]
      %v300 = vld [vmem:[%s256 + $0x90] sm:$0xff]
      %v301 = vld [vmem:[%s256 + $0x98] sm:$0xff]
      %v302 = vld [vmem:[%s256 + $0xa0] sm:$0xff]
      %v303 = vld [vmem:[%s256 + $0xa8] sm:$0xff]
      %v304 = vld [vmem:[%s256 + $0xb0] sm:$0xff]
      %v305 = vld [vmem:[%s256 + $0xb8] sm:$0xff]
      %v306 = vld [vmem:[%s256 + $0xc0] sm:$0xff]
      %v307 = vld [vmem:[%s256 + $0xc8] sm:$0xff]
      %v308 = vld [vmem:[%s256 + $0xd0] sm:$0xff]
      %v309 = vld [vmem:[%s256 + $0xd8] sm:$0xff]
      %v310 = vld [vmem:[%s256 + $0xe0] sm:$0xff]
      %v311 = vld [vmem:[%s256 + $0xe8] sm:$0xff]
      %v312 = vld [vmem:[%s256 + $0xf0] sm:$0xff]
      %v313 = vld [vmem:[%s256 + $0xf8] sm:$0xff]
      %v314 = vld [vmem:[%s262] sm:$0xf]
      %v315 = vld [vmem:[%s262 + $0x4] sm:$0xf]
      %v316 = vld [vmem:[%s262 + $0x8] sm:$0xf]
      %v317 = vld [vmem:[%s262 + $0xc] sm:$0xf]
      %v318 = vld [vmem:[%s262 + $0x10] sm:$0xf]
      %v319 = vld [vmem:[%s262 + $0x14] sm:$0xf]
      %v320 = vld [vmem:[%s262 + $0x18] sm:$0xf]
      %v321 = vld [vmem:[%s262 + $0x1c] sm:$0xf]
      %v322 = vld [vmem:[%s262 + $0x20] sm:$0xf]
      %v323 = vld [vmem:[%s262 + $0x24] sm:$0xf]
      %v324 = vld [vmem:[%s262 + $0x28] sm:$0xf]
      %v325 = vld [vmem:[%s262 + $0x2c] sm:$0xf]
      %v326 = vld [vmem:[%s262 + $0x30] sm:$0xf]
      %v327 = vld [vmem:[%s262 + $0x34] sm:$0xf]
      %v328 = vld [vmem:[%s262 + $0x38] sm:$0xf]
      %v329 = vld [vmem:[%s262 + $0x3c] sm:$0xf]
      %v330 = vld [vmem:[%s262 + $0x40] sm:$0xf]
      %v331 = vld [vmem:[%s262 + $0x44] sm:$0xf]
      %v332 = vld [vmem:[%s262 + $0x48] sm:$0xf]
      %v333 = vld [vmem:[%s262 + $0x4c] sm:$0xf]
      %v334 = vld [vmem:[%s262 + $0x50] sm:$0xf]
      %v335 = vld [vmem:[%s262 + $0x54] sm:$0xf]
      %v336 = vld [vmem:[%s262 + $0x58] sm:$0xf]
      %v337 = vld [vmem:[%s262 + $0x5c] sm:$0xf]
      %v338 = vld [vmem:[%s262 + $0x60] sm:$0xf]
      %v339 = vld [vmem:[%s262 + $0x64] sm:$0xf]
      %v340 = vld [vmem:[%s262 + $0x68] sm:$0xf]
      %v341 = vld [vmem:[%s262 + $0x6c] sm:$0xf]
      %v342 = vld [vmem:[%s262 + $0x70] sm:$0xf]
      %v343 = vld [vmem:[%s262 + $0x74] sm:$0xf]
      %v344 = vld [vmem:[%s262 + $0x78] sm:$0xf]
      %v345 = vld [vmem:[%s262 + $0x7c] sm:$0xf]
      %v346 = vld [vmem:[%s262 + $0x80] sm:$0xf]
      %v347 = vld [vmem:[%s262 + $0x84] sm:$0xf]
      %v348 = vld [vmem:[%s262 + $0x88] sm:$0xf]
      %v349 = vld [vmem:[%s262 + $0x8c] sm:$0xf]
      %v350 = vld [vmem:[%s262 + $0x90] sm:$0xf]
      %v351 = vld [vmem:[%s262 + $0x94] sm:$0xf]
      %v352 = vld [vmem:[%s262 + $0x98] sm:$0xf]
      %v353 = vld [vmem:[%s262 + $0x9c] sm:$0xf]
      %v354 = vld [vmem:[%s262 + $0xa0] sm:$0xf]
      %v355 = vld [vmem:[%s262 + $0xa4] sm:$0xf]
      %v356 = vld [vmem:[%s262 + $0xa8] sm:$0xf]
      %v357 = vld [vmem:[%s262 + $0xac] sm:$0xf]
      %v358 = vld [vmem:[%s262 + $0xb0] sm:$0xf]
      %v359 = vld [vmem:[%s262 + $0xb4] sm:$0xf]
      %v360 = vld [vmem:[%s262 + $0xb8] sm:$0xf]
      %v361 = vld [vmem:[%s262 + $0xbc] sm:$0xf]
      %v362 = vld [vmem:[%s262 + $0xc0] sm:$0xf]
      %v363 = vld [vmem:[%s262 + $0xc4] sm:$0xf]
      %v364 = vld [vmem:[%s262 + $0xc8] sm:$0xf]
      %v365 = vld [vmem:[%s262 + $0xcc] sm:$0xf]
      %v366 = vld [vmem:[%s262 + $0xd0] sm:$0xf]
      %v367 = vld [vmem:[%s262 + $0xd4] sm:$0xf]
      %v368 = vld [vmem:[%s262 + $0xd8] sm:$0xf]
      %v369 = vld [vmem:[%s262 + $0xdc] sm:$0xf]
      %v370 = vld [vmem:[%s262 + $0xe0] sm:$0xf]
      %v371 = vld [vmem:[%s262 + $0xe4] sm:$0xf]
      %v372 = vld [vmem:[%s262 + $0xe8] sm:$0xf]
      %v373 = vld [vmem:[%s262 + $0xec] sm:$0xf]
      %v374 = vld [vmem:[%s262 + $0xf0] sm:$0xf]
      %v375 = vld [vmem:[%s262 + $0xf4] sm:$0xf]
      %v376 = vld [vmem:[%s262 + $0xf8] sm:$0xf]
      %v377 = vld [vmem:[%s262 + $0xfc] sm:$0xf]
      %v378 = vld [vmem:[%s262 + $0x100] sm:$0xf]
      %v379 = vld [vmem:[%s262 + $0x104] sm:$0xf]
      %v380 = vld [vmem:[%s262 + $0x108] sm:$0xf]
      %v381 = vld [vmem:[%s262 + $0x10c] sm:$0xf]
      %v382 = vld [vmem:[%s262 + $0x110] sm:$0xf]
      %v383 = vld [vmem:[%s262 + $0x114] sm:$0xf]
      %v384 = vld [vmem:[%s262 + $0x118] sm:$0xf]
      %v385 = vld [vmem:[%s262 + $0x11c] sm:$0xf]
      %v386 = vld [vmem:[%s262 + $0x120] sm:$0xf]
      %v387 = vld [vmem:[%s262 + $0x124] sm:$0xf]
      %v388 = vld [vmem:[%s262 + $0x128] sm:$0xf]
      %v389 = vld [vmem:[%s262 + $0x12c] sm:$0xf]
      %v390 = vld [vmem:[%s262 + $0x130] sm:$0xf]
      %v391 = vld [vmem:[%s262 + $0x134] sm:$0xf]
      %v392 = vld [vmem:[%s262 + $0x138] sm:$0xf]
      %v393 = vld [vmem:[%s262 + $0x13c] sm:$0xf]
      %v394 = vld [vmem:[%s262 + $0x140] sm:$0xf]
      %v395 = vld [vmem:[%s262 + $0x144] sm:$0xf]
      %v396 = vld [vmem:[%s262 + $0x148] sm:$0xf]
      %v397 = vld [vmem:[%s262 + $0x14c] sm:$0xf]
      %v398 = vld [vmem:[%s262 + $0x150] sm:$0xf]
      %v399 = vld [vmem:[%s262 + $0x154] sm:$0xf]
      %v400 = vld [vmem:[%s262 + $0x158] sm:$0xf]
      %v401 = vld [vmem:[%s262 + $0x15c] sm:$0xf]
      %v402 = vld [vmem:[%s262 + $0x160] sm:$0xf]
      %v403 = vld [vmem:[%s262 + $0x164] sm:$0xf]
      %v404 = vld [vmem:[%s262 + $0x168] sm:$0xf]
      %v405 = vld [vmem:[%s262 + $0x16c] sm:$0xf]
      %v406 = vld [vmem:[%s262 + $0x170] sm:$0xf]
      %v407 = vld [vmem:[%s262 + $0x174] sm:$0xf]
      %v408 = vld [vmem:[%s262 + $0x178] sm:$0xf]
      %v409 = vld [vmem:[%s262 + $0x17c] sm:$0xf]
      %v410 = vld [vmem:[%s262 + $0x180] sm:$0xf]
      %v411 = vld [vmem:[%s262 + $0x184] sm:$0xf]
      %v412 = vld [vmem:[%s262 + $0x188] sm:$0xf]
      %v413 = vld [vmem:[%s262 + $0x18c] sm:$0xf]
      %v414 = vld [vmem:[%s262 + $0x190] sm:$0xf]
      %v415 = vld [vmem:[%s262 + $0x194] sm:$0xf]
      %v416 = vld [vmem:[%s262 + $0x198] sm:$0xf]
      %v417 = vld [vmem:[%s262 + $0x19c] sm:$0xf]
      %v418 = vld [vmem:[%s262 + $0x1a0] sm:$0xf]
      %v419 = vld [vmem:[%s262 + $0x1a4] sm:$0xf]
      %v420 = vld [vmem:[%s262 + $0x1a8] sm:$0xf]
      %v421 = vld [vmem:[%s262 + $0x1ac] sm:$0xf]
      %v422 = vld [vmem:[%s262 + $0x1b0] sm:$0xf]
      %v423 = vld [vmem:[%s262 + $0x1b4] sm:$0xf]
      %v424 = vld [vmem:[%s262 + $0x1b8] sm:$0xf]
      %v425 = vld [vmem:[%s262 + $0x1bc] sm:$0xf]
      %v426 = vld [vmem:[%s262 + $0x1c0] sm:$0xf]
      %v427 = vld [vmem:[%s262 + $0x1c4] sm:$0xf]
      %v428 = vld [vmem:[%s262 + $0x1c8] sm:$0xf]
      %v429 = vld [vmem:[%s262 + $0x1cc] sm:$0xf]
      %v430 = vld [vmem:[%s262 + $0x1d0] sm:$0xf]
      %v431 = vld [vmem:[%s262 + $0x1d4] sm:$0xf]
      %v432 = vld [vmem:[%s262 + $0x1d8] sm:$0xf]
      %v433 = vld [vmem:[%s262 + $0x1dc] sm:$0xf]
      %v434 = vld [vmem:[%s262 + $0x1e0] sm:$0xf]
      %v435 = vld [vmem:[%s262 + $0x1e4] sm:$0xf]
      %v436 = vld [vmem:[%s262 + $0x1e8] sm:$0xf]
      %v437 = vld [vmem:[%s262 + $0x1ec] sm:$0xf]
      %v438 = vld [vmem:[%s262 + $0x1f0] sm:$0xf]
      %v439 = vld [vmem:[%s262 + $0x1f4] sm:$0xf]
      %v440 = vld [vmem:[%s262 + $0x1f8] sm:$0xf]
      %v441 = vld [vmem:[%s262 + $0x1fc] sm:$0xf]
      %v474 = vunpack.c.l.b16 %v282
      %v475 = vunpack.c.h.b16 %v282
      %v476 = vunpack.c.l.b16 %v283
      %v477 = vunpack.c.h.b16 %v283
      %v478 = vunpack.c.l.b16 %v284
      %v479 = vunpack.c.h.b16 %v284
      %v480 = vunpack.c.l.b16 %v285
      %v481 = vunpack.c.h.b16 %v285
      %v482 = vunpack.c.l.b16 %v286
      %v483 = vunpack.c.h.b16 %v286
      %v484 = vunpack.c.l.b16 %v287
      %v485 = vunpack.c.h.b16 %v287
      %v486 = vunpack.c.l.b16 %v288
      %v487 = vunpack.c.h.b16 %v288
      %v488 = vunpack.c.l.b16 %v289
      %v489 = vunpack.c.h.b16 %v289
      %v490 = vunpack.c.l.b16 %v290
      %v491 = vunpack.c.h.b16 %v290
      %v492 = vunpack.c.l.b16 %v291
      %v493 = vunpack.c.h.b16 %v291
      %v494 = vunpack.c.l.b16 %v292
      %v495 = vunpack.c.h.b16 %v292
      %v496 = vunpack.c.l.b16 %v293
      %v497 = vunpack.c.h.b16 %v293
      %v498 = vunpack.c.l.b16 %v294
      %v499 = vunpack.c.h.b16 %v294
      %v500 = vunpack.c.l.b16 %v295
      %v501 = vunpack.c.h.b16 %v295
      %v502 = vunpack.c.l.b16 %v296
      %v503 = vunpack.c.h.b16 %v296
      %v504 = vunpack.c.l.b16 %v297
      %v505 = vunpack.c.h.b16 %v297
      %v506 = vunpack.c.l.b16 %v298
      %v507 = vunpack.c.h.b16 %v298
      %v508 = vunpack.c.l.b16 %v299
      %v509 = vunpack.c.h.b16 %v299
      %v510 = vunpack.c.l.b16 %v300
      %v511 = vunpack.c.h.b16 %v300
      %v512 = vunpack.c.l.b16 %v301
      %v513 = vunpack.c.h.b16 %v301
      %v514 = vunpack.c.l.b16 %v302
      %v515 = vunpack.c.h.b16 %v302
      %v516 = vunpack.c.l.b16 %v303
      %v517 = vunpack.c.h.b16 %v303
      %v518 = vunpack.c.l.b16 %v304
      %v519 = vunpack.c.h.b16 %v304
      %v520 = vunpack.c.l.b16 %v305
      %v521 = vunpack.c.h.b16 %v305
      %v522 = vunpack.c.l.b16 %v306
      %v523 = vunpack.c.h.b16 %v306
      %v524 = vunpack.c.l.b16 %v307
      %v525 = vunpack.c.h.b16 %v307
      %v526 = vunpack.c.l.b16 %v308
      %v527 = vunpack.c.h.b16 %v308
      %v528 = vunpack.c.l.b16 %v309
      %v529 = vunpack.c.h.b16 %v309
      %v530 = vunpack.c.l.b16 %v310
      %v531 = vunpack.c.h.b16 %v310
      %v532 = vunpack.c.l.b16 %v311
      %v533 = vunpack.c.h.b16 %v311
      %v534 = vunpack.c.l.b16 %v312
      %v535 = vunpack.c.h.b16 %v312
      %v536 = vunpack.c.l.b16 %v313
      %v537 = vunpack.c.h.b16 %v313
      %v538 = vpack.c.b16 %v482, %v474
      %v539 = vpack.c.b16 %v483, %v475
      %v540 = vpack.c.b16 %v484, %v476
      %v541 = vpack.c.b16 %v485, %v477
      %v542 = vpack.c.b16 %v486, %v478
      %v543 = vpack.c.b16 %v487, %v479
      %v544 = vpack.c.b16 %v488, %v480
      %v545 = vpack.c.b16 %v489, %v481
      %v546 = vpack.c.b16 %v498, %v490
      %v547 = vpack.c.b16 %v499, %v491
      %v548 = vpack.c.b16 %v500, %v492
      %v549 = vpack.c.b16 %v501, %v493
      %v550 = vpack.c.b16 %v502, %v494
      %v551 = vpack.c.b16 %v503, %v495
      %v552 = vpack.c.b16 %v504, %v496
      %v553 = vpack.c.b16 %v505, %v497
      %v554 = vpack.c.b16 %v514, %v506
      %v555 = vpack.c.b16 %v515, %v507
      %v556 = vpack.c.b16 %v516, %v508
      %v557 = vpack.c.b16 %v517, %v509
      %v558 = vpack.c.b16 %v518, %v510
      %v559 = vpack.c.b16 %v519, %v511
      %v560 = vpack.c.b16 %v520, %v512
      %v561 = vpack.c.b16 %v521, %v513
      %v562 = vpack.c.b16 %v530, %v522
      %v563 = vpack.c.b16 %v531, %v523
      %v564 = vpack.c.b16 %v532, %v524
      %v565 = vpack.c.b16 %v533, %v525
      %v566 = vpack.c.b16 %v534, %v526
      %v567 = vpack.c.b16 %v535, %v527
      %v568 = vpack.c.b16 %v536, %v528
      %v569 = vpack.c.b16 %v537, %v529
      %v730 = vunpack.c.l.b16 %v314
      %v731 = vunpack.c.l.b16 %v315
      %v732 = vunpack.c.l.b16 %v316
      %v733 = vunpack.c.l.b16 %v317
      %v734 = vunpack.c.l.b16 %v318
      %v735 = vunpack.c.l.b16 %v319
      %v736 = vunpack.c.l.b16 %v320
      %v737 = vunpack.c.l.b16 %v321
      %v738 = vunpack.c.l.b16 %v322
      %v739 = vunpack.c.l.b16 %v323
      %v740 = vunpack.c.l.b16 %v324
      %v741 = vunpack.c.l.b16 %v325
      %v742 = vunpack.c.l.b16 %v326
      %v743 = vunpack.c.l.b16 %v327
      %v744 = vunpack.c.l.b16 %v328
      %v745 = vunpack.c.l.b16 %v329
      %v746 = vunpack.c.l.b16 %v330
      %v747 = vunpack.c.l.b16 %v331
      %v748 = vunpack.c.l.b16 %v332
      %v749 = vunpack.c.l.b16 %v333
      %v750 = vunpack.c.l.b16 %v334
      %v751 = vunpack.c.l.b16 %v335
      %v752 = vunpack.c.l.b16 %v336
      %v753 = vunpack.c.l.b16 %v337
      %v754 = vunpack.c.l.b16 %v338
      %v755 = vunpack.c.l.b16 %v339
      %v756 = vunpack.c.l.b16 %v340
      %v757 = vunpack.c.l.b16 %v341
      %v758 = vunpack.c.l.b16 %v342
      %v759 = vunpack.c.l.b16 %v343
      %v760 = vunpack.c.l.b16 %v344
      %v761 = vunpack.c.l.b16 %v345
      %v762 = vunpack.c.l.b16 %v346
      %v763 = vunpack.c.l.b16 %v347
      %v764 = vunpack.c.l.b16 %v348
      %v765 = vunpack.c.l.b16 %v349
      %v766 = vunpack.c.l.b16 %v350
      %v767 = vunpack.c.l.b16 %v351
      %v768 = vunpack.c.l.b16 %v352
      %v769 = vunpack.c.l.b16 %v353
      %v770 = vunpack.c.l.b16 %v354
      %v771 = vunpack.c.l.b16 %v355
      %v772 = vunpack.c.l.b16 %v356
      %v773 = vunpack.c.l.b16 %v357
      %v774 = vunpack.c.l.b16 %v358
      %v775 = vunpack.c.l.b16 %v359
      %v776 = vunpack.c.l.b16 %v360
      %v777 = vunpack.c.l.b16 %v361
      %v778 = vunpack.c.l.b16 %v362
      %v779 = vunpack.c.l.b16 %v363
      %v780 = vunpack.c.l.b16 %v364
      %v781 = vunpack.c.l.b16 %v365
      %v782 = vunpack.c.l.b16 %v366
      %v783 = vunpack.c.l.b16 %v367
      %v784 = vunpack.c.l.b16 %v368
      %v785 = vunpack.c.l.b16 %v369
      %v786 = vunpack.c.l.b16 %v370
      %v787 = vunpack.c.l.b16 %v371
      %v788 = vunpack.c.l.b16 %v372
      %v789 = vunpack.c.l.b16 %v373
      %v790 = vunpack.c.l.b16 %v374
      %v791 = vunpack.c.l.b16 %v375
      %v792 = vunpack.c.l.b16 %v376
      %v793 = vunpack.c.l.b16 %v377
      %v794 = vunpack.c.l.b16 %v378
      %v795 = vunpack.c.l.b16 %v379
      %v796 = vunpack.c.l.b16 %v380
      %v797 = vunpack.c.l.b16 %v381
      %v798 = vunpack.c.l.b16 %v382
      %v799 = vunpack.c.l.b16 %v383
      %v800 = vunpack.c.l.b16 %v384
      %v801 = vunpack.c.l.b16 %v385
      %v802 = vunpack.c.l.b16 %v386
      %v803 = vunpack.c.l.b16 %v387
      %v804 = vunpack.c.l.b16 %v388
      %v805 = vunpack.c.l.b16 %v389
      %v806 = vunpack.c.l.b16 %v390
      %v807 = vunpack.c.l.b16 %v391
      %v808 = vunpack.c.l.b16 %v392
      %v809 = vunpack.c.l.b16 %v393
      %v810 = vunpack.c.l.b16 %v394
      %v811 = vunpack.c.l.b16 %v395
      %v812 = vunpack.c.l.b16 %v396
      %v813 = vunpack.c.l.b16 %v397
      %v814 = vunpack.c.l.b16 %v398
      %v815 = vunpack.c.l.b16 %v399
      %v816 = vunpack.c.l.b16 %v400
      %v817 = vunpack.c.l.b16 %v401
      %v818 = vunpack.c.l.b16 %v402
      %v819 = vunpack.c.l.b16 %v403
      %v820 = vunpack.c.l.b16 %v404
      %v821 = vunpack.c.l.b16 %v405
      %v822 = vunpack.c.l.b16 %v406
      %v823 = vunpack.c.l.b16 %v407
      %v824 = vunpack.c.l.b16 %v408
      %v825 = vunpack.c.l.b16 %v409
      %v826 = vunpack.c.l.b16 %v410
      %v827 = vunpack.c.l.b16 %v411
      %v828 = vunpack.c.l.b16 %v412
      %v829 = vunpack.c.l.b16 %v413
      %v830 = vunpack.c.l.b16 %v414
      %v831 = vunpack.c.l.b16 %v415
      %v832 = vunpack.c.l.b16 %v416
      %v833 = vunpack.c.l.b16 %v417
      %v834 = vunpack.c.l.b16 %v418
      %v835 = vunpack.c.l.b16 %v419
      %v836 = vunpack.c.l.b16 %v420
      %v837 = vunpack.c.l.b16 %v421
      %v838 = vunpack.c.l.b16 %v422
      %v839 = vunpack.c.l.b16 %v423
      %v840 = vunpack.c.l.b16 %v424
      %v841 = vunpack.c.l.b16 %v425
      %v842 = vunpack.c.l.b16 %v426
      %v843 = vunpack.c.l.b16 %v427
      %v844 = vunpack.c.l.b16 %v428
      %v845 = vunpack.c.l.b16 %v429
      %v846 = vunpack.c.l.b16 %v430
      %v847 = vunpack.c.l.b16 %v431
      %v848 = vunpack.c.l.b16 %v432
      %v849 = vunpack.c.l.b16 %v433
      %v850 = vunpack.c.l.b16 %v434
      %v851 = vunpack.c.l.b16 %v435
      %v852 = vunpack.c.l.b16 %v436
      %v853 = vunpack.c.l.b16 %v437
      %v854 = vunpack.c.l.b16 %v438
      %v855 = vunpack.c.l.b16 %v439
      %v856 = vunpack.c.l.b16 %v440
      %v857 = vunpack.c.l.b16 %v441
      %v858 = vpack.c.b16 %v731, %v730
      %v859 = vpack.c.b16 %v733, %v732
      %v860 = vpack.c.b16 %v735, %v734
      %v861 = vpack.c.b16 %v737, %v736
      %v862 = vpack.c.b16 %v739, %v738
      %v863 = vpack.c.b16 %v741, %v740
      %v864 = vpack.c.b16 %v743, %v742
      %v865 = vpack.c.b16 %v745, %v744
      %v866 = vpack.c.b16 %v747, %v746
      %v867 = vpack.c.b16 %v749, %v748
      %v868 = vpack.c.b16 %v751, %v750
      %v869 = vpack.c.b16 %v753, %v752
      %v870 = vpack.c.b16 %v755, %v754
      %v871 = vpack.c.b16 %v757, %v756
      %v872 = vpack.c.b16 %v759, %v758
      %v873 = vpack.c.b16 %v761, %v760
      %v874 = vpack.c.b16 %v763, %v762
      %v875 = vpack.c.b16 %v765, %v764
      %v876 = vpack.c.b16 %v767, %v766
      %v877 = vpack.c.b16 %v769, %v768
      %v878 = vpack.c.b16 %v771, %v770
      %v879 = vpack.c.b16 %v773, %v772
      %v880 = vpack.c.b16 %v775, %v774
      %v881 = vpack.c.b16 %v777, %v776
      %v882 = vpack.c.b16 %v779, %v778
      %v883 = vpack.c.b16 %v781, %v780
      %v884 = vpack.c.b16 %v783, %v782
      %v885 = vpack.c.b16 %v785, %v784
      %v886 = vpack.c.b16 %v787, %v786
      %v887 = vpack.c.b16 %v789, %v788
      %v888 = vpack.c.b16 %v791, %v790
      %v889 = vpack.c.b16 %v793, %v792
      %v890 = vpack.c.b16 %v795, %v794
      %v891 = vpack.c.b16 %v797, %v796
      %v892 = vpack.c.b16 %v799, %v798
      %v893 = vpack.c.b16 %v801, %v800
      %v894 = vpack.c.b16 %v803, %v802
      %v895 = vpack.c.b16 %v805, %v804
      %v896 = vpack.c.b16 %v807, %v806
      %v897 = vpack.c.b16 %v809, %v808
      %v898 = vpack.c.b16 %v811, %v810
      %v899 = vpack.c.b16 %v813, %v812
      %v900 = vpack.c.b16 %v815, %v814
      %v901 = vpack.c.b16 %v817, %v816
      %v902 = vpack.c.b16 %v819, %v818
      %v903 = vpack.c.b16 %v821, %v820
      %v904 = vpack.c.b16 %v823, %v822
      %v905 = vpack.c.b16 %v825, %v824
      %v906 = vpack.c.b16 %v827, %v826
      %v907 = vpack.c.b16 %v829, %v828
      %v908 = vpack.c.b16 %v831, %v830
      %v909 = vpack.c.b16 %v833, %v832
      %v910 = vpack.c.b16 %v835, %v834
      %v911 = vpack.c.b16 %v837, %v836
      %v912 = vpack.c.b16 %v839, %v838
      %v913 = vpack.c.b16 %v841, %v840
      %v914 = vpack.c.b16 %v843, %v842
      %v915 = vpack.c.b16 %v845, %v844
      %v916 = vpack.c.b16 %v847, %v846
      %v917 = vpack.c.b16 %v849, %v848
      %v918 = vpack.c.b16 %v851, %v850
      %v919 = vpack.c.b16 %v853, %v852
      %v920 = vpack.c.b16 %v855, %v854
      %v921 = vpack.c.b16 %v857, %v856
      %986 = vmatprep.subr.bf16.mxu0 0
      %987 = vmatpush1.bf16.msra.mxu0 %v858
      %988 = vmatprep.subr.bf16.mxu0 0
      %989 = vmatpush1.bf16.msra.mxu0 %v859
      %990 = vmatprep.subr.bf16.mxu0 0
      %991 = vmatpush1.bf16.msra.mxu0 %v860
      %992 = vmatprep.subr.bf16.mxu0 0
      %993 = vmatpush1.bf16.msra.mxu0 %v861
      %994 = vmatprep.subr.bf16.mxu0 0
      %995 = vmatpush1.bf16.msra.mxu0 %v862
      %996 = vmatprep.subr.bf16.mxu0 0
      %997 = vmatpush1.bf16.msra.mxu0 %v863
      %998 = vmatprep.subr.bf16.mxu0 0
      %999 = vmatpush1.bf16.msra.mxu0 %v864
      %1000 = vmatprep.subr.bf16.mxu0 0
      %1001 = vmatpush1.bf16.msra.mxu0 %v865
      %1002 = vmatprep.subr.bf16.mxu0 0
      %1003 = vmatpush1.bf16.msra.mxu0 %v866
      %1004 = vmatprep.subr.bf16.mxu0 0
      %1005 = vmatpush1.bf16.msra.mxu0 %v867
      %1006 = vmatprep.subr.bf16.mxu0 0
      %1007 = vmatpush1.bf16.msra.mxu0 %v868
      %1008 = vmatprep.subr.bf16.mxu0 0
      %1009 = vmatpush1.bf16.msra.mxu0 %v869
      %1010 = vmatprep.subr.bf16.mxu0 0
      %1011 = vmatpush1.bf16.msra.mxu0 %v870
      %1012 = vmatprep.subr.bf16.mxu0 0
      %1013 = vmatpush1.bf16.msra.mxu0 %v871
      %1014 = vmatprep.subr.bf16.mxu0 0
      %1015 = vmatpush1.bf16.msra.mxu0 %v872
      %1016 = vmatprep.subr.bf16.mxu0 0
      %1017 = vmatpush1.bf16.msra.mxu0 %v873
      %1018 = vmatprep.mubr.bf16.mxu0 %v539
      %1019 = vmatmul.mubr.bf16.gmra.mrb[0].mxu0 %v538
      %v1020 = vpop.f32.mrb[0].mxu0
      %v1021 = vadd.f32 0.0, %v1020
      %v1022 = vpop.f32.mrb[0].mxu0
      %v1023 = vpop.f32.mrb[0].mxu0
      %v1024 = vadd.f32 0.0, %v1023
      %v1025 = vpop.f32.mrb[0].mxu0
      %1026 = vmatprep.mubr.bf16.mxu0 %v547
      %1027 = vmatmul.mubr.bf16.gmra.mrb[0].mxu0 %v546
      %v1028 = vpop.f32.mrb[0].mxu0
      %v1029 = vadd.f32 0.0, %v1028
      %v1030 = vpop.f32.mrb[0].mxu0
      %v1031 = vpop.f32.mrb[0].mxu0
      %v1032 = vadd.f32 0.0, %v1031
      %v1033 = vpop.f32.mrb[0].mxu0
      %1034 = vmatprep.mubr.bf16.mxu0 %v555
      %1035 = vmatmul.mubr.bf16.gmra.mrb[0].mxu0 %v554
      %v1036 = vpop.f32.mrb[0].mxu0
      %v1037 = vadd.f32 0.0, %v1036
      %v1038 = vpop.f32.mrb[0].mxu0
      %v1039 = vpop.f32.mrb[0].mxu0
      %v1040 = vadd.f32 0.0, %v1039
      %v1041 = vpop.f32.mrb[0].mxu0
      %1042 = vmatprep.mubr.bf16.mxu0 %v563
      %1043 = vmatmul.mubr.bf16.gmra.mrb[0].mxu0 %v562
      %v1044 = vpop.f32.mrb[0].mxu0
      %v1045 = vadd.f32 0.0, %v1044
      %v1046 = vpop.f32.mrb[0].mxu0
      %v1047 = vpop.f32.mrb[0].mxu0
      %v1048 = vadd.f32 0.0, %v1047
      %v1049 = vpop.f32.mrb[0].mxu0
      %1050 = vdwg.mxu0
      %1051 = vmatprep.subr.bf16.mxu0 0
      %1052 = vmatpush1.bf16.msra.mxu0 %v874
      %1053 = vmatprep.subr.bf16.mxu0 0
      %1054 = vmatpush1.bf16.msra.mxu0 %v875
      %1055 = vmatprep.subr.bf16.mxu0 0
      %1056 = vmatpush1.bf16.msra.mxu0 %v876
      %1057 = vmatprep.subr.bf16.mxu0 0
      %1058 = vmatpush1.bf16.msra.mxu0 %v877
      %1059 = vmatprep.subr.bf16.mxu0 0
      %1060 = vmatpush1.bf16.msra.mxu0 %v878
      %1061 = vmatprep.subr.bf16.mxu0 0
      %1062 = vmatpush1.bf16.msra.mxu0 %v879
      %1063 = vmatprep.subr.bf16.mxu0 0
      %1064 = vmatpush1.bf16.msra.mxu0 %v880
      %1065 = vmatprep.subr.bf16.mxu0 0
      %1066 = vmatpush1.bf16.msra.mxu0 %v881
      %1067 = vmatprep.subr.bf16.mxu0 0
      %1068 = vmatpush1.bf16.msra.mxu0 %v882
      %1069 = vmatprep.subr.bf16.mxu0 0
      %1070 = vmatpush1.bf16.msra.mxu0 %v883
      %1071 = vmatprep.subr.bf16.mxu0 0
      %1072 = vmatpush1.bf16.msra.mxu0 %v884
      %1073 = vmatprep.subr.bf16.mxu0 0
      %1074 = vmatpush1.bf16.msra.mxu0 %v885
      %1075 = vmatprep.subr.bf16.mxu0 0
      %1076 = vmatpush1.bf16.msra.mxu0 %v886
      %1077 = vmatprep.subr.bf16.mxu0 0
      %1078 = vmatpush1.bf16.msra.mxu0 %v887
      %1079 = vmatprep.subr.bf16.mxu0 0
      %1080 = vmatpush1.bf16.msra.mxu0 %v888
      %1081 = vmatprep.subr.bf16.mxu0 0
      %1082 = vmatpush1.bf16.msra.mxu0 %v889
      %1083 = vmatprep.mubr.bf16.mxu0 %v541
      %1084 = vmatmul.mubr.bf16.gmra.mrb[0].mxu0 %v540
      %v1085 = vpop.f32.mrb[0].mxu0
      %v1086 = vadd.f32 %v1021, %v1085
      %v1087 = vpop.f32.mrb[0].mxu0
      %v1088 = vpop.f32.mrb[0].mxu0
      %v1089 = vadd.f32 %v1024, %v1088
      %v1090 = vpop.f32.mrb[0].mxu0
      %1091 = vmatprep.mubr.bf16.mxu0 %v549
      %1092 = vmatmul.mubr.bf16.gmra.mrb[0].mxu0 %v548
      %v1093 = vpop.f32.mrb[0].mxu0
      %v1094 = vadd.f32 %v1029, %v1093
      %v1095 = vpop.f32.mrb[0].mxu0
      %v1096 = vpop.f32.mrb[0].mxu0
      %v1097 = vadd.f32 %v1032, %v1096
      %v1098 = vpop.f32.mrb[0].mxu0
      %1099 = vmatprep.mubr.bf16.mxu0 %v557
      %1100 = vmatmul.mubr.bf16.gmra.mrb[0].mxu0 %v556
      %v1101 = vpop.f32.mrb[0].mxu0
      %v1102 = vadd.f32 %v1037, %v1101
      %v1103 = vpop.f32.mrb[0].mxu0
      %v1104 = vpop.f32.mrb[0].mxu0
      %v1105 = vadd.f32 %v1040, %v1104
      %v1106 = vpop.f32.mrb[0].mxu0
      %1107 = vmatprep.mubr.bf16.mxu0 %v565
      %1108 = vmatmul.mubr.bf16.gmra.mrb[0].mxu0 %v564
      %v1109 = vpop.f32.mrb[0].mxu0
      %v1110 = vadd.f32 %v1045, %v1109
      %v1111 = vpop.f32.mrb[0].mxu0
      %v1112 = vpop.f32.mrb[0].mxu0
      %v1113 = vadd.f32 %v1048, %v1112
      %v1114 = vpop.f32.mrb[0].mxu0
      %1115 = vdwg.mxu0
      %1116 = vmatprep.subr.bf16.mxu0 0
      %1117 = vmatpush1.bf16.msra.mxu0 %v890
      %1118 = vmatprep.subr.bf16.mxu0 0
      %1119 = vmatpush1.bf16.msra.mxu0 %v891
      %1120 = vmatprep.subr.bf16.mxu0 0
      %1121 = vmatpush1.bf16.msra.mxu0 %v892
      %1122 = vmatprep.subr.bf16.mxu0 0
      %1123 = vmatpush1.bf16.msra.mxu0 %v893
      %1124 = vmatprep.subr.bf16.mxu0 0
      %1125 = vmatpush1.bf16.msra.mxu0 %v894
      %1126 = vmatprep.subr.bf16.mxu0 0
      %1127 = vmatpush1.bf16.msra.mxu0 %v895
      %1128 = vmatprep.subr.bf16.mxu0 0
      %1129 = vmatpush1.bf16.msra.mxu0 %v896
      %1130 = vmatprep.subr.bf16.mxu0 0
      %1131 = vmatpush1.bf16.msra.mxu0 %v897
      %1132 = vmatprep.subr.bf16.mxu0 0
      %1133 = vmatpush1.bf16.msra.mxu0 %v898
      %1134 = vmatprep.subr.bf16.mxu0 0
      %1135 = vmatpush1.bf16.msra.mxu0 %v899
      %1136 = vmatprep.subr.bf16.mxu0 0
      %1137 = vmatpush1.bf16.msra.mxu0 %v900
      %1138 = vmatprep.subr.bf16.mxu0 0
      %1139 = vmatpush1.bf16.msra.mxu0 %v901
      %1140 = vmatprep.subr.bf16.mxu0 0
      %1141 = vmatpush1.bf16.msra.mxu0 %v902
      %1142 = vmatprep.subr.bf16.mxu0 0
      %1143 = vmatpush1.bf16.msra.mxu0 %v903
      %1144 = vmatprep.subr.bf16.mxu0 0
      %1145 = vmatpush1.bf16.msra.mxu0 %v904
      %1146 = vmatprep.subr.bf16.mxu0 0
      %1147 = vmatpush1.bf16.msra.mxu0 %v905
      %1148 = vmatprep.mubr.bf16.mxu0 %v543
      %1149 = vmatmul.mubr.bf16.gmra.mrb[0].mxu0 %v542
      %v1150 = vpop.f32.mrb[0].mxu0
      %v1151 = vadd.f32 %v1086, %v1150
      %v1152 = vpop.f32.mrb[0].mxu0
      %v1153 = vpop.f32.mrb[0].mxu0
      %v1154 = vadd.f32 %v1089, %v1153
      %v1155 = vpop.f32.mrb[0].mxu0
      %1156 = vmatprep.mubr.bf16.mxu0 %v551
      %1157 = vmatmul.mubr.bf16.gmra.mrb[0].mxu0 %v550
      %v1158 = vpop.f32.mrb[0].mxu0
      %v1159 = vadd.f32 %v1094, %v1158
      %v1160 = vpop.f32.mrb[0].mxu0
      %v1161 = vpop.f32.mrb[0].mxu0
      %v1162 = vadd.f32 %v1097, %v1161
      %v1163 = vpop.f32.mrb[0].mxu0
      %1164 = vmatprep.mubr.bf16.mxu0 %v559
      %1165 = vmatmul.mubr.bf16.gmra.mrb[0].mxu0 %v558
      %v1166 = vpop.f32.mrb[0].mxu0
      %v1167 = vadd.f32 %v1102, %v1166
      %v1168 = vpop.f32.mrb[0].mxu0
      %v1169 = vpop.f32.mrb[0].mxu0
      %v1170 = vadd.f32 %v1105, %v1169
      %v1171 = vpop.f32.mrb[0].mxu0
      %1172 = vmatprep.mubr.bf16.mxu0 %v567
      %1173 = vmatmul.mubr.bf16.gmra.mrb[0].mxu0 %v566
      %v1174 = vpop.f32.mrb[0].mxu0
      %v1175 = vadd.f32 %v1110, %v1174
      %v1176 = vpop.f32.mrb[0].mxu0
      %v1177 = vpop.f32.mrb[0].mxu0
      %v1178 = vadd.f32 %v1113, %v1177
      %v1179 = vpop.f32.mrb[0].mxu0
      %1180 = vdwg.mxu0
      %1181 = vmatprep.subr.bf16.mxu0 0
      %1182 = vmatpush1.bf16.msra.mxu0 %v906
      %1183 = vmatprep.subr.bf16.mxu0 0
      %1184 = vmatpush1.bf16.msra.mxu0 %v907
      %1185 = vmatprep.subr.bf16.mxu0 0
      %1186 = vmatpush1.bf16.msra.mxu0 %v908
      %1187 = vmatprep.subr.bf16.mxu0 0
      %1188 = vmatpush1.bf16.msra.mxu0 %v909
      %1189 = vmatprep.subr.bf16.mxu0 0
      %1190 = vmatpush1.bf16.msra.mxu0 %v910
      %1191 = vmatprep.subr.bf16.mxu0 0
      %1192 = vmatpush1.bf16.msra.mxu0 %v911
      %1193 = vmatprep.subr.bf16.mxu0 0
      %1194 = vmatpush1.bf16.msra.mxu0 %v912
      %1195 = vmatprep.subr.bf16.mxu0 0
      %1196 = vmatpush1.bf16.msra.mxu0 %v913
      %1197 = vmatprep.subr.bf16.mxu0 0
      %1198 = vmatpush1.bf16.msra.mxu0 %v914
      %1199 = vmatprep.subr.bf16.mxu0 0
      %1200 = vmatpush1.bf16.msra.mxu0 %v915
      %1201 = vmatprep.subr.bf16.mxu0 0
      %1202 = vmatpush1.bf16.msra.mxu0 %v916
      %1203 = vmatprep.subr.bf16.mxu0 0
      %1204 = vmatpush1.bf16.msra.mxu0 %v917
      %1205 = vmatprep.subr.bf16.mxu0 0
      %1206 = vmatpush1.bf16.msra.mxu0 %v918
      %1207 = vmatprep.subr.bf16.mxu0 0
      %1208 = vmatpush1.bf16.msra.mxu0 %v919
      %1209 = vmatprep.subr.bf16.mxu0 0
      %1210 = vmatpush1.bf16.msra.mxu0 %v920
      %1211 = vmatprep.subr.bf16.mxu0 0
      %1212 = vmatpush1.bf16.msra.mxu0 %v921
      %1213 = vmatprep.mubr.bf16.mxu0 %v545
      %1214 = vmatmul.mubr.bf16.gmra.mrb[0].mxu0 %v544
      %v1215 = vpop.f32.mrb[0].mxu0
      %v1216 = vadd.f32 %v1151, %v1215
      %v1217 = vpop.f32.mrb[0].mxu0
      %v1218 = vpop.f32.mrb[0].mxu0
      %v1219 = vadd.f32 %v1154, %v1218
      %v1220 = vpop.f32.mrb[0].mxu0
      %1221 = vmatprep.mubr.bf16.mxu0 %v553
      %1222 = vmatmul.mubr.bf16.gmra.mrb[0].mxu0 %v552
      %v1223 = vpop.f32.mrb[0].mxu0
      %v1224 = vadd.f32 %v1159, %v1223
      %v1225 = vpop.f32.mrb[0].mxu0
      %v1226 = vpop.f32.mrb[0].mxu0
      %v1227 = vadd.f32 %v1162, %v1226
      %v1228 = vpop.f32.mrb[0].mxu0
      %1229 = vmatprep.mubr.bf16.mxu0 %v561
      %1230 = vmatmul.mubr.bf16.gmra.mrb[0].mxu0 %v560
      %v1231 = vpop.f32.mrb[0].mxu0
      %v1232 = vadd.f32 %v1167, %v1231
      %v1233 = vpop.f32.mrb[0].mxu0
      %v1234 = vpop.f32.mrb[0].mxu0
      %v1235 = vadd.f32 %v1170, %v1234
      %v1236 = vpop.f32.mrb[0].mxu0
      %1237 = vmatprep.mubr.bf16.mxu0 %v569
      %1238 = vmatmul.mubr.bf16.gmra.mrb[0].mxu0 %v568
      %v1239 = vpop.f32.mrb[0].mxu0
      %v1240 = vadd.f32 %v1175, %v1239
      %v1241 = vpop.f32.mrb[0].mxu0
      %v1242 = vpop.f32.mrb[0].mxu0
      %v1243 = vadd.f32 %v1178, %v1242
      %v1244 = vpop.f32.mrb[0].mxu0
      %1245 = vdwg.mxu0
      %v1246 = vpack.c.bf16 %v1219, %v1216
      %v1247 = vpack.c.bf16 %v1227, %v1224
      %v1248 = vpack.c.bf16 %v1235, %v1232
      %v1249 = vpack.c.bf16 %v1243, %v1240
      %v1254 = vunpack.c.l.b16 %v1246
      %v1255 = vunpack.c.h.b16 %v1246
      %v1256 = vunpack.c.l.b16 %v1247
      %v1257 = vunpack.c.h.b16 %v1247
      %v1258 = vunpack.c.l.b16 %v1248
      %v1259 = vunpack.c.h.b16 %v1248
      %v1260 = vunpack.c.l.b16 %v1249
      %v1261 = vunpack.c.h.b16 %v1249
      %v1262 = vpack.c.b16 %v1254, %v1254
      %v1263 = vpack.c.b16 %v1255, %v1255
      %v1264 = vpack.c.b16 %v1256, %v1256
      %v1265 = vpack.c.b16 %v1257, %v1257
      %v1266 = vpack.c.b16 %v1258, %v1258
      %v1267 = vpack.c.b16 %v1259, %v1259
      %v1268 = vpack.c.b16 %v1260, %v1260
      %v1269 = vpack.c.b16 %v1261, %v1261
      %1278 = vst [vmem:[%s271] sm:$0xf] %v1262
      %1279 = vst [vmem:[%s271 + $0x4] sm:$0xf] %v1263
      %1280 = vst [vmem:[%s271 + $0x8] sm:$0xf] %v1264
      %1281 = vst [vmem:[%s271 + $0xc] sm:$0xf] %v1265
      %1282 = vst [vmem:[%s271 + $0x10] sm:$0xf] %v1266
      %1283 = vst [vmem:[%s271 + $0x14] sm:$0xf] %v1267
      %1284 = vst [vmem:[%s271 + $0x18] sm:$0xf] %v1268
      %1285 = vst [vmem:[%s271 + $0x1c] sm:$0xf] %v1269
      %p1286 = scmp.eq.s32.totalorder %s21, 0
      // Predicated region
      $region29: #{gmodel_forward.7} parent=27 // pred_check
        %p1287 = pneg %p1286
      $region30: #{gmodel_forward.7} parent=27 // pred_check_branch
        %1289 = sbr.rel (%p1287) target = $region32
      $region31: #{gmodel_forward.7} parent=27 // pred_region
        %1290 = vst [vmem:[%s276] sm:$0xff] 0.0
        %1291 = vst [vmem:[%s280] sm:$0xff] 0.0
      $region32: #{gmodel_forward.7} parent=27 // pred_fallthru
        _
      %v1292 = vld [vmem:[%s276] sm:$0xff]
      %v1293 = vadd.f32 %v1216, %v1219
      %v1294 = vadd.f32 %v1293, %v1224
      %v1295 = vadd.f32 %v1294, %v1227
      %v1296 = vadd.f32 %v1295, %v1232
      %v1297 = vadd.f32 %v1296, %v1235
      %v1298 = vadd.f32 %v1297, %v1240
      %v1299 = vadd.f32 %v1298, %v1243
      %v1300 = vrot.slane %v1299, 4
      %v1301 = vadd.f32 %v1299, %v1300
      %v1302 = vrot.slane %v1301, 2
      %v1303 = vadd.f32 %v1301, %v1302
      %v1304 = vrot.slane %v1303, 1
      %v1305 = vadd.f32 %v1303, %v1304
      %v1306 = vadd.f32 %v1292, %v1305
      %1307 = vst [vmem:[%s276] sm:$0xff] %v1306
      %v1308 = vld [vmem:[%s280] sm:$0xff]
      %v1309 = vmul.f32 %v1216, %v1216
      %v1310 = vmul.f32 %v1219, %v1219
      %v1311 = vmul.f32 %v1224, %v1224
      %v1312 = vmul.f32 %v1227, %v1227
      %v1313 = vmul.f32 %v1232, %v1232
      %v1314 = vmul.f32 %v1235, %v1235
      %v1315 = vmul.f32 %v1240, %v1240
      %v1316 = vmul.f32 %v1243, %v1243
      %v1317 = vadd.f32 %v1309, %v1310
      %v1318 = vadd.f32 %v1317, %v1311
      %v1319 = vadd.f32 %v1318, %v1312
      %v1320 = vadd.f32 %v1319, %v1313
      %v1321 = vadd.f32 %v1320, %v1314
      %v1322 = vadd.f32 %v1321, %v1315
      %v1323 = vadd.f32 %v1322, %v1316
      %v1324 = vrot.slane %v1323, 4
      %v1325 = vadd.f32 %v1323, %v1324
      %v1326 = vrot.slane %v1325, 2
      %v1327 = vadd.f32 %v1325, %v1326
      %v1328 = vrot.slane %v1327, 1
      %v1329 = vadd.f32 %v1327, %v1328
      %v1330 = vadd.f32 %v1308, %v1329
      %1331 = vst [vmem:[%s280] sm:$0xff] %v1330
      %s1332 = smul.u32 8, %s21
      %p1333 = scmp.lt.s32.totalorder %s20, 3
      %s1334 = scalar_select %p1333, %s20, 3
      %p1335 = scmp.lt.s32.totalorder %s1332, 15
      %s1336 = scalar_select %p1335, %s1332, 15
      %s1337 = smul.addr %s1334, 16
      %s1338 = sadd.s32 %s1336, %s1337
      %s1339 = smul.addr %s1338, 4
      %s1340 = scalar_lea.vmem %s2, %s1339
      %p1341 = scmp.lt.s32.totalorder %s20, 3
      %s1342 = scalar_select %p1341, %s20, 3
      %s1343 = smul.addr %s1342, 8
      %s1344 = scalar_lea.vmem %s3, %s1343
      %p1345 = scmp.lt.s32.totalorder %s20, 3
      %s1346 = scalar_select %p1345, %s20, 3
      %s1347 = smul.addr %s1346, 8
      %s1348 = scalar_lea.vmem %s4, %s1347
      // Predicated region
      $region33: #{gmodel_forward.7} parent=27 // pred_check
        %p1349 = pneg %p102
      $region34: #{gmodel_forward.7} parent=27 // pred_check_branch
        %1351 = sbr.rel (%p1349) target = $region36
      $region35: #{gmodel_forward.7} parent=27 // pred_region
        %s1352 = smul.u32 8, %s21
      $region36: #{gmodel_forward.7} parent=27 // pred_fallthru
        _
      // Predicated region
      $region37: #{gmodel_forward.7} parent=27 // pred_check
        %p1353 = pneg %p128
      $region38: #{gmodel_forward.7} parent=27 // pred_check_branch
        %1355 = sbr.rel (%p1353) target = $region40
      $region39: #{gmodel_forward.7} parent=27 // pred_region
        _
      $region40: #{gmodel_forward.7} parent=27 // pred_fallthru
        _
      // Predicated region
      $region41: #{gmodel_forward.7} parent=27 // pred_check
        %p1356 = pneg %p154
      $region42: #{gmodel_forward.7} parent=27 // pred_check_branch
        %1358 = sbr.rel (%p1356) target = $region44
      $region43: #{gmodel_forward.7} parent=27 // pred_region
        _
      $region44: #{gmodel_forward.7} parent=27 // pred_fallthru
        _
    $region28: #{gmodel_forward.7} parent=5 // pred_fallthru
      _
    %p1359 = scmp.le.s32.totalorder 2, %s11
    // Predicated region
    $region45: #{gmodel_forward.7} parent=5 // pred_check
      %p1360 = pneg %p1359
    $region46: #{gmodel_forward.7} parent=5 // pred_check_branch
      %1362 = sbr.rel (%p1360) target = $region48
    $region47: #{gmodel_forward.7} parent=5 // pred_region
      %s1363 = ssub.s32 %s11, 2
      // Predicated region
      $region49: #{gmodel_forward.7} parent=47 // pred_check
        %p1364 = pneg %p108
      $region50: #{gmodel_forward.7} parent=47 // pred_check_branch
        %1366 = sbr.rel (%p1364) target = $region52
      $region51: #{gmodel_forward.7} parent=47 // pred_region
        %s1367 = smul.u32 8, %s23
        %p1368 = scmp.lt.s32.totalorder %s22, 3
        %s1369 = scalar_select %p1368, %s22, 3
        %p1370 = scmp.lt.s32.totalorder %s1367, 15
        %s1371 = scalar_select %p1370, %s1367, 15
        %s1372 = smul.addr %s1369, 16
        %s1373 = sadd.s32 %s1371, %s1372
        %s1374 = smul.addr %s1373, 4
        %s1375 = scalar_lea.vmem %s2, %s1374
      $region52: #{gmodel_forward.7} parent=47 // pred_fallthru
        _
      // Predicated region
      $region53: #{gmodel_forward.7} parent=47 // pred_check
        %p1376 = pneg %p134
      $region54: #{gmodel_forward.7} parent=47 // pred_check_branch
        %1378 = sbr.rel (%p1376) target = $region56
      $region55: #{gmodel_forward.7} parent=47 // pred_region
        %p1379 = scmp.lt.s32.totalorder %s22, 3
        %s1380 = scalar_select %p1379, %s22, 3
        %s1381 = smul.addr %s1380, 8
        %s1382 = scalar_lea.vmem %s3, %s1381
      $region56: #{gmodel_forward.7} parent=47 // pred_fallthru
        _
      // Predicated region
      $region57: #{gmodel_forward.7} parent=47 // pred_check
        %p1383 = pneg %p160
      $region58: #{gmodel_forward.7} parent=47 // pred_check_branch
        %1385 = sbr.rel (%p1383) target = $region60
      $region59: #{gmodel_forward.7} parent=47 // pred_region
        %p1386 = scmp.lt.s32.totalorder %s22, 3
        %s1387 = scalar_select %p1386, %s22, 3
        %s1388 = smul.addr %s1387, 8
        %s1389 = scalar_lea.vmem %s4, %s1388
      $region60: #{gmodel_forward.7} parent=47 // pred_fallthru
        _
    $region48: #{gmodel_forward.7} parent=5 // pred_fallthru
      _
  $region6: #{gmodel_forward.7} parent=0 // loop_footer
    %s15 = sadd.s32 1, %s11
  $region7: #{gmodel_forward.7} parent=0 // loop_footer_branch
    %10 = sbr.rel target = $region3
  $region8: #{gmodel_forward.7} parent=0 // loop_exit
    _

// kernel: gmodel_forward.8
$region0: #{gmodel_forward.8}
  #allocation0 [shape = 'u32[]', space=smem, size = 0x4, offset = 0x4, fixed_abs, tag = 'smem constant byte address 0x4 - core index']
  #allocation1 [shape = 'u32[144,128]{1,0:T(1,128)}', space=vmem, size = 0x12000, scoped, tag = 'internal scratch']
  %s0 = inlined_call_operand.vmem [shape: bf16[4,512,512], index: 0, kind: input, shape index: {}]
  %s1 = inlined_call_operand.vmem [shape: bf16[4,512,128], index: 1, kind: input, shape index: {}]
  %s2 = inlined_call_operand.vmem [shape: bf16[4,512,128], index: 2, kind: output, shape index: {0}]
  %s3 = inlined_call_operand.vmem [shape: f32[4,8,128], index: 3, kind: output, shape index: {1}]
  %s4 = inlined_call_operand.vmem [shape: f32[4,8,128], index: 4, kind: output, shape index: {2}]
  %5 = xla_tuple %s2, %s3, %s4
  %s6 = sld [smem:[#allocation0]]
  $region61: #{gmodel_forward.8} parent=0
    _
  %s8 = ssub.s32 1, %s6
  %s9 = scalar_select 0, %s8, %s6
  loop: start=0, step=1, limit=10
  $region2: #{gmodel_forward.8} parent=0 // loop_pre_header
    _
  $region3: #{gmodel_forward.8} parent=0 // loop_header
    %s11 = sphi 0, %s15
    %p12 = scmp.ge.s32.totalorder %s11, 10
    %s18 = sphi 0, %s30
    %s19 = sphi 0, %s26
    %s20 = sphi 0, %s18
    %s21 = sphi 0, %s19
    %s22 = sphi 0, %s20
    %s23 = sphi 0, %s21
    %s35 = sphi 0, %s37
    %s38 = sphi 0, %s35
    %s39 = sphi 0, %s38
    %s55 = sphi 0, %s39
    %s61 = sphi 0, %s63
    %s64 = sphi 0, %s61
    %s65 = sphi 0, %s64
    %s81 = sphi 0, %s65
    %s89 = sphi 0, %s91
    %s92 = sphi 0, %s89
    %s93 = sphi 0, %s92
    %s109 = sphi 0, %s93
    %s115 = sphi 0, %s117
    %s118 = sphi 0, %s115
    %s119 = sphi 0, %s118
    %s135 = sphi 0, %s119
    %s141 = sphi 0, %s143
    %s144 = sphi 0, %s141
    %s145 = sphi 0, %s144
    %s161 = sphi 0, %s145
  $region4: #{gmodel_forward.8} parent=0 // loop_header_branch
    %14 = sbr.rel (%p12) target = $region8
  $region5: #{gmodel_forward.8} parent=0 // loop_body
    %s16 = ssub.s32 %s11, 1
    %s17 = ssub.s32 %s11, 2
    %s24 = sadd.s32 1, %s19
    %p25 = scmp.ge.s32.totalorder %s24, 2
    %s26 = scalar_select %p25, 0, %s24
    %s27 = sadd.s32 1, %s18
    %s28 = scalar_select %p25, %s27, %s18
    %p29 = scmp.ge.s32.totalorder %s28, 4
    %s30 = scalar_select %p29, 0, %s28
    %s31 = ssub.s32 %s18, %s30
    %s32 = ssub.s32 %s19, %s26
    %s33 = sor.u32 %s31, %s32
    %p34 = scmp.eq.s32.totalorder %s33, 0
    %s36 = sadd.s32 %s35, 1
    %s37 = scalar_select %p34, %s35, %s36
    %p40 = pneg %p34
    %p41 = scmp.eq.s32.totalorder %s11, 7
    %p42 = por %p40, %p41
    %p43 = scmp.ne.s32.totalorder %s35, %s38
    %p44 = scmp.eq.s32.totalorder %s11, 0
    %p45 = por %p43, %p44
    %p46 = scmp.ne.s32.totalorder %s35, %s38
    %p47 = scmp.eq.s32.totalorder %s16, 7
    %p48 = por %p46, %p47
    %p49 = scmp.ne.s32.totalorder %s38, %s39
    %p50 = scmp.eq.s32.totalorder %s16, 0
    %p51 = por %p49, %p50
    %p52 = scmp.ne.s32.totalorder %s38, %s39
    %p53 = scmp.eq.s32.totalorder %s17, 7
    %p54 = por %p52, %p53
    %p56 = scmp.ne.s32.totalorder %s39, %s55
    %p57 = scmp.eq.s32.totalorder %s17, 0
    %p58 = por %p56, %p57
    %s59 = ssub.s32 %s18, %s30
    %p60 = scmp.eq.s32.totalorder %s59, 0
    %s62 = sadd.s32 %s61, 1
    %s63 = scalar_select %p60, %s61, %s62
    %p66 = pneg %p60
    %p67 = scmp.eq.s32.totalorder %s11, 7
    %p68 = por %p66, %p67
    %p69 = scmp.ne.s32.totalorder %s61, %s64
    %p70 = scmp.eq.s32.totalorder %s11, 0
    %p71 = por %p69, %p70
    %p72 = scmp.ne.s32.totalorder %s61, %s64
    %p73 = scmp.eq.s32.totalorder %s16, 7
    %p74 = por %p72, %p73
    %p75 = scmp.ne.s32.totalorder %s64, %s65
    %p76 = scmp.eq.s32.totalorder %s16, 0
    %p77 = por %p75, %p76
    %p78 = scmp.ne.s32.totalorder %s64, %s65
    %p79 = scmp.eq.s32.totalorder %s17, 7
    %p80 = por %p78, %p79
    %p82 = scmp.ne.s32.totalorder %s65, %s81
    %p83 = scmp.eq.s32.totalorder %s17, 0
    %p84 = por %p82, %p83
    %s85 = ssub.s32 %s18, %s30
    %s86 = ssub.s32 %s19, %s26
    %s87 = sor.u32 %s85, %s86
    %p88 = scmp.eq.s32.totalorder %s87, 0
    %s90 = sadd.s32 %s89, 1
    %s91 = scalar_select %p88, %s89, %s90
    %p94 = pneg %p88
    %p95 = scmp.eq.s32.totalorder %s11, 7
    %p96 = por %p94, %p95
    %p97 = scmp.ne.s32.totalorder %s89, %s92
    %p98 = scmp.eq.s32.totalorder %s11, 0
    %p99 = por %p97, %p98
    %p100 = scmp.ne.s32.totalorder %s89, %s92
    %p101 = scmp.eq.s32.totalorder %s16, 7
    %p102 = por %p100, %p101
    %p103 = scmp.ne.s32.totalorder %s92, %s93
    %p104 = scmp.eq.s32.totalorder %s16, 0
    %p105 = por %p103, %p104
    %p106 = scmp.ne.s32.totalorder %s92, %s93
    %p107 = scmp.eq.s32.totalorder %s17, 7
    %p108 = por %p106, %p107
    %p110 = scmp.ne.s32.totalorder %s93, %s109
    %p111 = scmp.eq.s32.totalorder %s17, 0
    %p112 = por %p110, %p111
    %s113 = ssub.s32 %s18, %s30
    %p114 = scmp.eq.s32.totalorder %s113, 0
    %s116 = sadd.s32 %s115, 1
    %s117 = scalar_select %p114, %s115, %s116
    %p120 = pneg %p114
    %p121 = scmp.eq.s32.totalorder %s11, 7
    %p122 = por %p120, %p121
    %p123 = scmp.ne.s32.totalorder %s115, %s118
    %p124 = scmp.eq.s32.totalorder %s11, 0
    %p125 = por %p123, %p124
    %p126 = scmp.ne.s32.totalorder %s115, %s118
    %p127 = scmp.eq.s32.totalorder %s16, 7
    %p128 = por %p126, %p127
    %p129 = scmp.ne.s32.totalorder %s118, %s119
    %p130 = scmp.eq.s32.totalorder %s16, 0
    %p131 = por %p129, %p130
    %p132 = scmp.ne.s32.totalorder %s118, %s119
    %p133 = scmp.eq.s32.totalorder %s17, 7
    %p134 = por %p132, %p133
    %p136 = scmp.ne.s32.totalorder %s119, %s135
    %p137 = scmp.eq.s32.totalorder %s17, 0
    %p138 = por %p136, %p137
    %s139 = ssub.s32 %s18, %s30
    %p140 = scmp.eq.s32.totalorder %s139, 0
    %s142 = sadd.s32 %s141, 1
    %s143 = scalar_select %p140, %s141, %s142
    %p146 = pneg %p140
    %p147 = scmp.eq.s32.totalorder %s11, 7
    %p148 = por %p146, %p147
    %p149 = scmp.ne.s32.totalorder %s141, %s144
    %p150 = scmp.eq.s32.totalorder %s11, 0
    %p151 = por %p149, %p150
    %p152 = scmp.ne.s32.totalorder %s141, %s144
    %p153 = scmp.eq.s32.totalorder %s16, 7
    %p154 = por %p152, %p153
    %p155 = scmp.ne.s32.totalorder %s144, %s145
    %p156 = scmp.eq.s32.totalorder %s16, 0
    %p157 = por %p155, %p156
    %p158 = scmp.ne.s32.totalorder %s144, %s145
    %p159 = scmp.eq.s32.totalorder %s17, 7
    %p160 = por %p158, %p159
    %p162 = scmp.ne.s32.totalorder %s145, %s161
    %p163 = scmp.eq.s32.totalorder %s17, 0
    %p164 = por %p162, %p163
    %p165 = scmp.le.s32.totalorder 1, %s11
    %p166 = scmp.lt.s32.totalorder %s11, 9
    %p167 = pnand %p165, %p166
    %p168 = pneg %p167
    // Predicated region
    $region9: #{gmodel_forward.8} parent=5 // pred_check
      _
    $region10: #{gmodel_forward.8} parent=5 // pred_check_branch
      %170 = sbr.rel (%p167) target = $region12
    $region11: #{gmodel_forward.8} parent=5 // pred_region
      %s171 = ssub.s32 %s11, 1
    $region12: #{gmodel_forward.8} parent=5 // pred_fallthru
      _
    %p172 = scmp.lt.s32.totalorder %s11, 8
    // Predicated region
    $region13: #{gmodel_forward.8} parent=5 // pred_check
      %p173 = pneg %p172
    $region14: #{gmodel_forward.8} parent=5 // pred_check_branch
      %175 = sbr.rel (%p173) target = $region16
    $region15: #{gmodel_forward.8} parent=5 // pred_region
      // Predicated region
      $region17: #{gmodel_forward.8} parent=15 // pred_check
        %p176 = pneg %p45
      $region18: #{gmodel_forward.8} parent=15 // pred_check_branch
        %178 = sbr.rel (%p176) target = $region20
      $region19: #{gmodel_forward.8} parent=15 // pred_region
        %s179 = smul.u32 32, %s19
        %p180 = scmp.lt.s32.totalorder %s18, 3
        %s181 = scalar_select %p180, %s18, 3
        %p182 = scmp.lt.s32.totalorder %s179, 63
        %s183 = scalar_select %p182, %s179, 63
        %s184 = smul.addr %s183, 4
        %s185 = smul.addr %s181, 256
        %s186 = sadd.s32 %s184, %s185
        %s187 = smul.addr %s186, 4
        %s188 = scalar_lea.vmem %s0, %s187
        %s189 = smul.u32 32, %s19
      $region20: #{gmodel_forward.8} parent=15 // pred_fallthru
        _
      // Predicated region
      $region21: #{gmodel_forward.8} parent=15 // pred_check
        %p190 = pneg %p71
      $region22: #{gmodel_forward.8} parent=15 // pred_check_branch
        %192 = sbr.rel (%p190) target = $region24
      $region23: #{gmodel_forward.8} parent=15 // pred_region
        %p193 = scmp.lt.s32.totalorder %s18, 3
        %s194 = scalar_select %p193, %s18, 3
        %s195 = smul.addr %s194, 64
        %s196 = smul.addr %s195, 4
        %s197 = scalar_lea.vmem %s1, %s196
      $region24: #{gmodel_forward.8} parent=15 // pred_fallthru
        _
    $region16: #{gmodel_forward.8} parent=5 // pred_fallthru
      _
    %p198 = scmp.le.s32.totalorder 1, %s11
    %p199 = scmp.lt.s32.totalorder %s11, 9
    %p200 = pnand %p198, %p199
    %p201 = pneg %p200
    // Predicated region
    $region25: #{gmodel_forward.8} parent=5 // pred_check
      _
    $region26: #{gmodel_forward.8} parent=5 // pred_check_branch
      %203 = sbr.rel (%p200) target = $region28
    $region27: #{gmodel_forward.8} parent=5 // pred_region
      %s204 = ssub.s32 %s11, 1
      %s205 = smul.u32 32, %s21
      %p206 = scmp.lt.s32.totalorder %s20, 3
      %s207 = scalar_select %p206, %s20, 3
      %p208 = scmp.lt.s32.totalorder %s205, 63
      %s209 = scalar_select %p208, %s205, 63
      %s210 = smul.addr %s209, 4
      %s211 = smul.addr %s207, 256
      %s212 = sadd.s32 %s210, %s211
      %s213 = smul.addr %s212, 4
      %s214 = scalar_lea.vmem %s0, %s213
      %p215 = pneg %p51
      %p216 = pneg %p48
      %p217 = scmp.lt.s32.totalorder %s20, 3
      %s218 = scalar_select %p217, %s20, 3
      %s219 = smul.addr %s218, 64
      %s220 = smul.addr %s219, 4
      %s221 = scalar_lea.vmem %s1, %s220
      %p222 = pneg %p77
      %p223 = pneg %p74
      %p224 = pneg %p105
      %p225 = pneg %p102
      %s226 = smul.u32 32, %s21
      %p227 = scmp.lt.s32.totalorder %s20, 3
      %s228 = scalar_select %p227, %s20, 3
      %p229 = scmp.lt.s32.totalorder %s226, 63
      %s230 = scalar_select %p229, %s226, 63
      %s231 = smul.addr %s228, 64
      %s232 = sadd.s32 %s230, %s231
      %s233 = smul.addr %s232, 4
      %s234 = scalar_lea.vmem %s2, %s233
      %p235 = pneg %p131
      %p236 = pneg %p128
      %p237 = scmp.lt.s32.totalorder %s20, 3
      %s238 = scalar_select %p237, %s20, 3
      %s239 = smul.addr %s238, 8
      %s240 = scalar_lea.vmem %s3, %s239
      %p241 = pneg %p157
      %p242 = pneg %p154
      %p243 = scmp.lt.s32.totalorder %s20, 3
      %s244 = scalar_select %p243, %s20, 3
      %s245 = smul.addr %s244, 8
      %s246 = scalar_lea.vmem %s4, %s245
      %s247 = smul.u32 32, %s21
      %p248 = scmp.lt.s32.totalorder %s20, 3
      %s249 = scalar_select %p248, %s20, 3
      %p250 = scmp.lt.s32.totalorder %s247, 63
      %s251 = scalar_select %p250, %s247, 63
      %s252 = smul.addr %s251, 4
      %s253 = smul.addr %s249, 256
      %s254 = sadd.s32 %s252, %s253
      %s255 = smul.addr %s254, 4
      %s256 = scalar_lea.vmem %s0, %s255
      %s257 = smul.u32 32, %s21
      %p258 = scmp.lt.s32.totalorder %s20, 3
      %s259 = scalar_select %p258, %s20, 3
      %s260 = smul.addr %s259, 64
      %s261 = smul.addr %s260, 4
      %s262 = scalar_lea.vmem %s1, %s261
      %s263 = smul.u32 32, %s21
      %p264 = scmp.lt.s32.totalorder %s20, 3
      %s265 = scalar_select %p264, %s20, 3
      %p266 = scmp.lt.s32.totalorder %s263, 63
      %s267 = scalar_select %p266, %s263, 63
      %s268 = smul.addr %s265, 64
      %s269 = sadd.s32 %s267, %s268
      %s270 = smul.addr %s269, 4
      %s271 = scalar_lea.vmem %s2, %s270
      %s272 = smul.u32 32, %s21
      %p273 = scmp.lt.s32.totalorder %s20, 3
      %s274 = scalar_select %p273, %s20, 3
      %s275 = smul.addr %s274, 8
      %s276 = scalar_lea.vmem %s3, %s275
      %p277 = scmp.lt.s32.totalorder %s20, 3
      %s278 = scalar_select %p277, %s20, 3
      %s279 = smul.addr %s278, 8
      %s280 = scalar_lea.vmem %s4, %s279
      %v282 = vld [vmem:[%s256] sm:$0xff]
      %v283 = vld [vmem:[%s256 + $0x8] sm:$0xff]
      %v284 = vld [vmem:[%s256 + $0x10] sm:$0xff]
      %v285 = vld [vmem:[%s256 + $0x18] sm:$0xff]
      %v286 = vld [vmem:[%s256 + $0x20] sm:$0xff]
      %v287 = vld [vmem:[%s256 + $0x28] sm:$0xff]
      %v288 = vld [vmem:[%s256 + $0x30] sm:$0xff]
      %v289 = vld [vmem:[%s256 + $0x38] sm:$0xff]
      %v290 = vld [vmem:[%s256 + $0x40] sm:$0xff]
      %v291 = vld [vmem:[%s256 + $0x48] sm:$0xff]
      %v292 = vld [vmem:[%s256 + $0x50] sm:$0xff]
      %v293 = vld [vmem:[%s256 + $0x58] sm:$0xff]
      %v294 = vld [vmem:[%s256 + $0x60] sm:$0xff]
      %v295 = vld [vmem:[%s256 + $0x68] sm:$0xff]
      %v296 = vld [vmem:[%s256 + $0x70] sm:$0xff]
      %v297 = vld [vmem:[%s256 + $0x78] sm:$0xff]
      %v298 = vld [vmem:[%s256 + $0x80] sm:$0xff]
      %v299 = vld [vmem:[%s256 + $0x88] sm:$0xff]
      %v300 = vld [vmem:[%s256 + $0x90] sm:$0xff]
      %v301 = vld [vmem:[%s256 + $0x98] sm:$0xff]
      %v302 = vld [vmem:[%s256 + $0xa0] sm:$0xff]
      %v303 = vld [vmem:[%s256 + $0xa8] sm:$0xff]
      %v304 = vld [vmem:[%s256 + $0xb0] sm:$0xff]
      %v305 = vld [vmem:[%s256 + $0xb8] sm:$0xff]
      %v306 = vld [vmem:[%s256 + $0xc0] sm:$0xff]
      %v307 = vld [vmem:[%s256 + $0xc8] sm:$0xff]
      %v308 = vld [vmem:[%s256 + $0xd0] sm:$0xff]
      %v309 = vld [vmem:[%s256 + $0xd8] sm:$0xff]
      %v310 = vld [vmem:[%s256 + $0xe0] sm:$0xff]
      %v311 = vld [vmem:[%s256 + $0xe8] sm:$0xff]
      %v312 = vld [vmem:[%s256 + $0xf0] sm:$0xff]
      %v313 = vld [vmem:[%s256 + $0xf8] sm:$0xff]
      %v314 = vld [vmem:[%s256 + $0x100] sm:$0xff]
      %v315 = vld [vmem:[%s256 + $0x108] sm:$0xff]
      %v316 = vld [vmem:[%s256 + $0x110] sm:$0xff]
      %v317 = vld [vmem:[%s256 + $0x118] sm:$0xff]
      %v318 = vld [vmem:[%s256 + $0x120] sm:$0xff]
      %v319 = vld [vmem:[%s256 + $0x128] sm:$0xff]
      %v320 = vld [vmem:[%s256 + $0x130] sm:$0xff]
      %v321 = vld [vmem:[%s256 + $0x138] sm:$0xff]
      %v322 = vld [vmem:[%s256 + $0x140] sm:$0xff]
      %v323 = vld [vmem:[%s256 + $0x148] sm:$0xff]
      %v324 = vld [vmem:[%s256 + $0x150] sm:$0xff]
      %v325 = vld [vmem:[%s256 + $0x158] sm:$0xff]
      %v326 = vld [vmem:[%s256 + $0x160] sm:$0xff]
      %v327 = vld [vmem:[%s256 + $0x168] sm:$0xff]
      %v328 = vld [vmem:[%s256 + $0x170] sm:$0xff]
      %v329 = vld [vmem:[%s256 + $0x178] sm:$0xff]
      %v330 = vld [vmem:[%s256 + $0x180] sm:$0xff]
      %v331 = vld [vmem:[%s256 + $0x188] sm:$0xff]
      %v332 = vld [vmem:[%s256 + $0x190] sm:$0xff]
      %v333 = vld [vmem:[%s256 + $0x198] sm:$0xff]
      %v334 = vld [vmem:[%s256 + $0x1a0] sm:$0xff]
      %v335 = vld [vmem:[%s256 + $0x1a8] sm:$0xff]
      %v336 = vld [vmem:[%s256 + $0x1b0] sm:$0xff]
      %v337 = vld [vmem:[%s256 + $0x1b8] sm:$0xff]
      %v338 = vld [vmem:[%s256 + $0x1c0] sm:$0xff]
      %v339 = vld [vmem:[%s256 + $0x1c8] sm:$0xff]
      %v340 = vld [vmem:[%s256 + $0x1d0] sm:$0xff]
      %v341 = vld [vmem:[%s256 + $0x1d8] sm:$0xff]
      %v342 = vld [vmem:[%s256 + $0x1e0] sm:$0xff]
      %v343 = vld [vmem:[%s256 + $0x1e8] sm:$0xff]
      %v344 = vld [vmem:[%s256 + $0x1f0] sm:$0xff]
      %v345 = vld [vmem:[%s256 + $0x1f8] sm:$0xff]
      %v346 = vld [vmem:[%s262] sm:$0xf]
      %v347 = vld [vmem:[%s262 + $0x4] sm:$0xf]
      %v348 = vld [vmem:[%s262 + $0x8] sm:$0xf]
      %v349 = vld [vmem:[%s262 + $0xc] sm:$0xf]
      %v350 = vld [vmem:[%s262 + $0x10] sm:$0xf]
      %v351 = vld [vmem:[%s262 + $0x14] sm:$0xf]
      %v352 = vld [vmem:[%s262 + $0x18] sm:$0xf]
      %v353 = vld [vmem:[%s262 + $0x1c] sm:$0xf]
      %v354 = vld [vmem:[%s262 + $0x20] sm:$0xf]
      %v355 = vld [vmem:[%s262 + $0x24] sm:$0xf]
      %v356 = vld [vmem:[%s262 + $0x28] sm:$0xf]
      %v357 = vld [vmem:[%s262 + $0x2c] sm:$0xf]
      %v358 = vld [vmem:[%s262 + $0x30] sm:$0xf]
      %v359 = vld [vmem:[%s262 + $0x34] sm:$0xf]
      %v360 = vld [vmem:[%s262 + $0x38] sm:$0xf]
      %v361 = vld [vmem:[%s262 + $0x3c] sm:$0xf]
      %v362 = vld [vmem:[%s262 + $0x40] sm:$0xf]
      %v363 = vld [vmem:[%s262 + $0x44] sm:$0xf]
      %v364 = vld [vmem:[%s262 + $0x48] sm:$0xf]
      %v365 = vld [vmem:[%s262 + $0x4c] sm:$0xf]
      %v366 = vld [vmem:[%s262 + $0x50] sm:$0xf]
      %v367 = vld [vmem:[%s262 + $0x54] sm:$0xf]
      %v368 = vld [vmem:[%s262 + $0x58] sm:$0xf]
      %v369 = vld [vmem:[%s262 + $0x5c] sm:$0xf]
      %v370 = vld [vmem:[%s262 + $0x60] sm:$0xf]
      %v371 = vld [vmem:[%s262 + $0x64] sm:$0xf]
      %v372 = vld [vmem:[%s262 + $0x68] sm:$0xf]
      %v373 = vld [vmem:[%s262 + $0x6c] sm:$0xf]
      %v374 = vld [vmem:[%s262 + $0x70] sm:$0xf]
      %v375 = vld [vmem:[%s262 + $0x74] sm:$0xf]
      %v376 = vld [vmem:[%s262 + $0x78] sm:$0xf]
      %v377 = vld [vmem:[%s262 + $0x7c] sm:$0xf]
      %v378 = vld [vmem:[%s262 + $0x80] sm:$0xf]
      %v379 = vld [vmem:[%s262 + $0x84] sm:$0xf]
      %v380 = vld [vmem:[%s262 + $0x88] sm:$0xf]
      %v381 = vld [vmem:[%s262 + $0x8c] sm:$0xf]
      %v382 = vld [vmem:[%s262 + $0x90] sm:$0xf]
      %v383 = vld [vmem:[%s262 + $0x94] sm:$0xf]
      %v384 = vld [vmem:[%s262 + $0x98] sm:$0xf]
      %v385 = vld [vmem:[%s262 + $0x9c] sm:$0xf]
      %v386 = vld [vmem:[%s262 + $0xa0] sm:$0xf]
      %v387 = vld [vmem:[%s262 + $0xa4] sm:$0xf]
      %v388 = vld [vmem:[%s262 + $0xa8] sm:$0xf]
      %v389 = vld [vmem:[%s262 + $0xac] sm:$0xf]
      %v390 = vld [vmem:[%s262 + $0xb0] sm:$0xf]
      %v391 = vld [vmem:[%s262 + $0xb4] sm:$0xf]
      %v392 = vld [vmem:[%s262 + $0xb8] sm:$0xf]
      %v393 = vld [vmem:[%s262 + $0xbc] sm:$0xf]
      %v394 = vld [vmem:[%s262 + $0xc0] sm:$0xf]
      %v395 = vld [vmem:[%s262 + $0xc4] sm:$0xf]
      %v396 = vld [vmem:[%s262 + $0xc8] sm:$0xf]
      %v397 = vld [vmem:[%s262 + $0xcc] sm:$0xf]
      %v398 = vld [vmem:[%s262 + $0xd0] sm:$0xf]
      %v399 = vld [vmem:[%s262 + $0xd4] sm:$0xf]
      %v400 = vld [vmem:[%s262 + $0xd8] sm:$0xf]
      %v401 = vld [vmem:[%s262 + $0xdc] sm:$0xf]
      %v402 = vld [vmem:[%s262 + $0xe0] sm:$0xf]
      %v403 = vld [vmem:[%s262 + $0xe4] sm:$0xf]
      %v404 = vld [vmem:[%s262 + $0xe8] sm:$0xf]
      %v405 = vld [vmem:[%s262 + $0xec] sm:$0xf]
      %v406 = vld [vmem:[%s262 + $0xf0] sm:$0xf]
      %v407 = vld [vmem:[%s262 + $0xf4] sm:$0xf]
      %v408 = vld [vmem:[%s262 + $0xf8] sm:$0xf]
      %v409 = vld [vmem:[%s262 + $0xfc] sm:$0xf]
      %v474 = vunpack.c.l.b16 %v282
      %v475 = vunpack.c.h.b16 %v282
      %v476 = vunpack.c.l.b16 %v283
      %v477 = vunpack.c.h.b16 %v283
      %v478 = vunpack.c.l.b16 %v284
      %v479 = vunpack.c.h.b16 %v284
      %v480 = vunpack.c.l.b16 %v285
      %v481 = vunpack.c.h.b16 %v285
      %v482 = vunpack.c.l.b16 %v286
      %v483 = vunpack.c.h.b16 %v286
      %v484 = vunpack.c.l.b16 %v287
      %v485 = vunpack.c.h.b16 %v287
      %v486 = vunpack.c.l.b16 %v288
      %v487 = vunpack.c.h.b16 %v288
      %v488 = vunpack.c.l.b16 %v289
      %v489 = vunpack.c.h.b16 %v289
      %v490 = vunpack.c.l.b16 %v290
      %v491 = vunpack.c.h.b16 %v290
      %v492 = vunpack.c.l.b16 %v291
      %v493 = vunpack.c.h.b16 %v291
      %v494 = vunpack.c.l.b16 %v292
      %v495 = vunpack.c.h.b16 %v292
      %v496 = vunpack.c.l.b16 %v293
      %v497 = vunpack.c.h.b16 %v293
      %v498 = vunpack.c.l.b16 %v294
      %v499 = vunpack.c.h.b16 %v294
      %v500 = vunpack.c.l.b16 %v295
      %v501 = vunpack.c.h.b16 %v295
      %v502 = vunpack.c.l.b16 %v296
      %v503 = vunpack.c.h.b16 %v296
      %v504 = vunpack.c.l.b16 %v297
      %v505 = vunpack.c.h.b16 %v297
      %v506 = vunpack.c.l.b16 %v298
      %v507 = vunpack.c.h.b16 %v298
      %v508 = vunpack.c.l.b16 %v299
      %v509 = vunpack.c.h.b16 %v299
      %v510 = vunpack.c.l.b16 %v300
      %v511 = vunpack.c.h.b16 %v300
      %v512 = vunpack.c.l.b16 %v301
      %v513 = vunpack.c.h.b16 %v301
      %v514 = vunpack.c.l.b16 %v302
      %v515 = vunpack.c.h.b16 %v302
      %v516 = vunpack.c.l.b16 %v303
      %v517 = vunpack.c.h.b16 %v303
      %v518 = vunpack.c.l.b16 %v304
      %v519 = vunpack.c.h.b16 %v304
      %v520 = vunpack.c.l.b16 %v305
      %v521 = vunpack.c.h.b16 %v305
      %v522 = vunpack.c.l.b16 %v306
      %v523 = vunpack.c.h.b16 %v306
      %v524 = vunpack.c.l.b16 %v307
      %v525 = vunpack.c.h.b16 %v307
      %v526 = vunpack.c.l.b16 %v308
      %v527 = vunpack.c.h.b16 %v308
      %v528 = vunpack.c.l.b16 %v309
      %v529 = vunpack.c.h.b16 %v309
      %v530 = vunpack.c.l.b16 %v310
      %v531 = vunpack.c.h.b16 %v310
      %v532 = vunpack.c.l.b16 %v311
      %v533 = vunpack.c.h.b16 %v311
      %v534 = vunpack.c.l.b16 %v312
      %v535 = vunpack.c.h.b16 %v312
      %v536 = vunpack.c.l.b16 %v313
      %v537 = vunpack.c.h.b16 %v313
      %v538 = vunpack.c.l.b16 %v314
      %v539 = vunpack.c.h.b16 %v314
      %v540 = vunpack.c.l.b16 %v315
      %v541 = vunpack.c.h.b16 %v315
      %v542 = vunpack.c.l.b16 %v316
      %v543 = vunpack.c.h.b16 %v316
      %v544 = vunpack.c.l.b16 %v317
      %v545 = vunpack.c.h.b16 %v317
      %v546 = vunpack.c.l.b16 %v318
      %v547 = vunpack.c.h.b16 %v318
      %v548 = vunpack.c.l.b16 %v319
      %v549 = vunpack.c.h.b16 %v319
      %v550 = vunpack.c.l.b16 %v320
      %v551 = vunpack.c.h.b16 %v320
      %v552 = vunpack.c.l.b16 %v321
      %v553 = vunpack.c.h.b16 %v321
      %v554 = vunpack.c.l.b16 %v322
      %v555 = vunpack.c.h.b16 %v322
      %v556 = vunpack.c.l.b16 %v323
      %v557 = vunpack.c.h.b16 %v323
      %v558 = vunpack.c.l.b16 %v324
      %v559 = vunpack.c.h.b16 %v324
      %v560 = vunpack.c.l.b16 %v325
      %v561 = vunpack.c.h.b16 %v325
      %v562 = vunpack.c.l.b16 %v326
      %v563 = vunpack.c.h.b16 %v326
      %v564 = vunpack.c.l.b16 %v327
      %v565 = vunpack.c.h.b16 %v327
      %v566 = vunpack.c.l.b16 %v328
      %v567 = vunpack.c.h.b16 %v328
      %v568 = vunpack.c.l.b16 %v329
      %v569 = vunpack.c.h.b16 %v329
      %v570 = vunpack.c.l.b16 %v330
      %v571 = vunpack.c.h.b16 %v330
      %v572 = vunpack.c.l.b16 %v331
      %v573 = vunpack.c.h.b16 %v331
      %v574 = vunpack.c.l.b16 %v332
      %v575 = vunpack.c.h.b16 %v332
      %v576 = vunpack.c.l.b16 %v333
      %v577 = vunpack.c.h.b16 %v333
      %v578 = vunpack.c.l.b16 %v334
      %v579 = vunpack.c.h.b16 %v334
      %v580 = vunpack.c.l.b16 %v335
      %v581 = vunpack.c.h.b16 %v335
      %v582 = vunpack.c.l.b16 %v336
      %v583 = vunpack.c.h.b16 %v336
      %v584 = vunpack.c.l.b16 %v337
      %v585 = vunpack.c.h.b16 %v337
      %v586 = vunpack.c.l.b16 %v338
      %v587 = vunpack.c.h.b16 %v338
      %v588 = vunpack.c.l.b16 %v339
      %v589 = vunpack.c.h.b16 %v339
      %v590 = vunpack.c.l.b16 %v340
      %v591 = vunpack.c.h.b16 %v340
      %v592 = vunpack.c.l.b16 %v341
      %v593 = vunpack.c.h.b16 %v341
      %v594 = vunpack.c.l.b16 %v342
      %v595 = vunpack.c.h.b16 %v342
      %v596 = vunpack.c.l.b16 %v343
      %v597 = vunpack.c.h.b16 %v343
      %v598 = vunpack.c.l.b16 %v344
      %v599 = vunpack.c.h.b16 %v344
      %v600 = vunpack.c.l.b16 %v345
      %v601 = vunpack.c.h.b16 %v345
      %v602 = vpack.c.b16 %v478, %v474
      %v603 = vpack.c.b16 %v479, %v475
      %v604 = vpack.c.b16 %v480, %v476
      %v605 = vpack.c.b16 %v481, %v477
      %v606 = vpack.c.b16 %v486, %v482
      %v607 = vpack.c.b16 %v487, %v483
      %v608 = vpack.c.b16 %v488, %v484
      %v609 = vpack.c.b16 %v489, %v485
      %v610 = vpack.c.b16 %v494, %v490
      %v611 = vpack.c.b16 %v495, %v491
      %v612 = vpack.c.b16 %v496, %v492
      %v613 = vpack.c.b16 %v497, %v493
      %v614 = vpack.c.b16 %v502, %v498
      %v615 = vpack.c.b16 %v503, %v499
      %v616 = vpack.c.b16 %v504, %v500
      %v617 = vpack.c.b16 %v505, %v501
      %v618 = vpack.c.b16 %v510, %v506
      %v619 = vpack.c.b16 %v511, %v507
      %v620 = vpack.c.b16 %v512, %v508
      %v621 = vpack.c.b16 %v513, %v509
      %v622 = vpack.c.b16 %v518, %v514
      %v623 = vpack.c.b16 %v519, %v515
      %v624 = vpack.c.b16 %v520, %v516
      %v625 = vpack.c.b16 %v521, %v517
      %v626 = vpack.c.b16 %v526, %v522
      %v627 = vpack.c.b16 %v527, %v523
      %v628 = vpack.c.b16 %v528, %v524
      %v629 = vpack.c.b16 %v529, %v525
      %v630 = vpack.c.b16 %v534, %v530
      %v631 = vpack.c.b16 %v535, %v531
      %v632 = vpack.c.b16 %v536, %v532
      %v633 = vpack.c.b16 %v537, %v533
      %v634 = vpack.c.b16 %v542, %v538
      %v635 = vpack.c.b16 %v543, %v539
      %v636 = vpack.c.b16 %v544, %v540
      %v637 = vpack.c.b16 %v545, %v541
      %v638 = vpack.c.b16 %v550, %v546
      %v639 = vpack.c.b16 %v551, %v547
      %v640 = vpack.c.b16 %v552, %v548
      %v641 = vpack.c.b16 %v553, %v549
      %v642 = vpack.c.b16 %v558, %v554
      %v643 = vpack.c.b16 %v559, %v555
      %v644 = vpack.c.b16 %v560, %v556
      %v645 = vpack.c.b16 %v561, %v557
      %v646 = vpack.c.b16 %v566, %v562
      %v647 = vpack.c.b16 %v567, %v563
      %v648 = vpack.c.b16 %v568, %v564
      %v649 = vpack.c.b16 %v569, %v565
      %v650 = vpack.c.b16 %v574, %v570
      %v651 = vpack.c.b16 %v575, %v571
      %v652 = vpack.c.b16 %v576, %v572
      %v653 = vpack.c.b16 %v577, %v573
      %v654 = vpack.c.b16 %v582, %v578
      %v655 = vpack.c.b16 %v583, %v579
      %v656 = vpack.c.b16 %v584, %v580
      %v657 = vpack.c.b16 %v585, %v581
      %v658 = vpack.c.b16 %v590, %v586
      %v659 = vpack.c.b16 %v591, %v587
      %v660 = vpack.c.b16 %v592, %v588
      %v661 = vpack.c.b16 %v593, %v589
      %v662 = vpack.c.b16 %v598, %v594
      %v663 = vpack.c.b16 %v599, %v595
      %v664 = vpack.c.b16 %v600, %v596
      %v665 = vpack.c.b16 %v601, %v597
      %v794 = vunpack.c.l.b16 %v346
      %v795 = vunpack.c.l.b16 %v347
      %v796 = vunpack.c.l.b16 %v348
      %v797 = vunpack.c.l.b16 %v349
      %v798 = vunpack.c.l.b16 %v350
      %v799 = vunpack.c.l.b16 %v351
      %v800 = vunpack.c.l.b16 %v352
      %v801 = vunpack.c.l.b16 %v353
      %v802 = vunpack.c.l.b16 %v354
      %v803 = vunpack.c.l.b16 %v355
      %v804 = vunpack.c.l.b16 %v356
      %v805 = vunpack.c.l.b16 %v357
      %v806 = vunpack.c.l.b16 %v358
      %v807 = vunpack.c.l.b16 %v359
      %v808 = vunpack.c.l.b16 %v360
      %v809 = vunpack.c.l.b16 %v361
      %v810 = vunpack.c.l.b16 %v362
      %v811 = vunpack.c.l.b16 %v363
      %v812 = vunpack.c.l.b16 %v364
      %v813 = vunpack.c.l.b16 %v365
      %v814 = vunpack.c.l.b16 %v366
      %v815 = vunpack.c.l.b16 %v367
      %v816 = vunpack.c.l.b16 %v368
      %v817 = vunpack.c.l.b16 %v369
      %v818 = vunpack.c.l.b16 %v370
      %v819 = vunpack.c.l.b16 %v371
      %v820 = vunpack.c.l.b16 %v372
      %v821 = vunpack.c.l.b16 %v373
      %v822 = vunpack.c.l.b16 %v374
      %v823 = vunpack.c.l.b16 %v375
      %v824 = vunpack.c.l.b16 %v376
      %v825 = vunpack.c.l.b16 %v377
      %v826 = vunpack.c.l.b16 %v378
      %v827 = vunpack.c.l.b16 %v379
      %v828 = vunpack.c.l.b16 %v380
      %v829 = vunpack.c.l.b16 %v381
      %v830 = vunpack.c.l.b16 %v382
      %v831 = vunpack.c.l.b16 %v383
      %v832 = vunpack.c.l.b16 %v384
      %v833 = vunpack.c.l.b16 %v385
      %v834 = vunpack.c.l.b16 %v386
      %v835 = vunpack.c.l.b16 %v387
      %v836 = vunpack.c.l.b16 %v388
      %v837 = vunpack.c.l.b16 %v389
      %v838 = vunpack.c.l.b16 %v390
      %v839 = vunpack.c.l.b16 %v391
      %v840 = vunpack.c.l.b16 %v392
      %v841 = vunpack.c.l.b16 %v393
      %v842 = vunpack.c.l.b16 %v394
      %v843 = vunpack.c.l.b16 %v395
      %v844 = vunpack.c.l.b16 %v396
      %v845 = vunpack.c.l.b16 %v397
      %v846 = vunpack.c.l.b16 %v398
      %v847 = vunpack.c.l.b16 %v399
      %v848 = vunpack.c.l.b16 %v400
      %v849 = vunpack.c.l.b16 %v401
      %v850 = vunpack.c.l.b16 %v402
      %v851 = vunpack.c.l.b16 %v403
      %v852 = vunpack.c.l.b16 %v404
      %v853 = vunpack.c.l.b16 %v405
      %v854 = vunpack.c.l.b16 %v406
      %v855 = vunpack.c.l.b16 %v407
      %v856 = vunpack.c.l.b16 %v408
      %v857 = vunpack.c.l.b16 %v409
      %v858 = vpack.c.b16 %v795, %v794
      %v859 = vpack.c.b16 %v797, %v796
      %v860 = vpack.c.b16 %v799, %v798
      %v861 = vpack.c.b16 %v801, %v800
      %v862 = vpack.c.b16 %v803, %v802
      %v863 = vpack.c.b16 %v805, %v804
      %v864 = vpack.c.b16 %v807, %v806
      %v865 = vpack.c.b16 %v809, %v808
      %v866 = vpack.c.b16 %v811, %v810
      %v867 = vpack.c.b16 %v813, %v812
      %v868 = vpack.c.b16 %v815, %v814
      %v869 = vpack.c.b16 %v817, %v816
      %v870 = vpack.c.b16 %v819, %v818
      %v871 = vpack.c.b16 %v821, %v820
      %v872 = vpack.c.b16 %v823, %v822
      %v873 = vpack.c.b16 %v825, %v824
      %v874 = vpack.c.b16 %v827, %v826
      %v875 = vpack.c.b16 %v829, %v828
      %v876 = vpack.c.b16 %v831, %v830
      %v877 = vpack.c.b16 %v833, %v832
      %v878 = vpack.c.b16 %v835, %v834
      %v879 = vpack.c.b16 %v837, %v836
      %v880 = vpack.c.b16 %v839, %v838
      %v881 = vpack.c.b16 %v841, %v840
      %v882 = vpack.c.b16 %v843, %v842
      %v883 = vpack.c.b16 %v845, %v844
      %v884 = vpack.c.b16 %v847, %v846
      %v885 = vpack.c.b16 %v849, %v848
      %v886 = vpack.c.b16 %v851, %v850
      %v887 = vpack.c.b16 %v853, %v852
      %v888 = vpack.c.b16 %v855, %v854
      %v889 = vpack.c.b16 %v857, %v856
      %922 = vmatprep.subr.bf16.mxu0 0
      %923 = vmatpush1.bf16.msra.mxu0 %v858
      %924 = vmatprep.subr.bf16.mxu0 0
      %925 = vmatpush1.bf16.msra.mxu0 %v859
      %926 = vmatprep.subr.bf16.mxu0 0
      %927 = vmatpush1.bf16.msra.mxu0 %v860
      %928 = vmatprep.subr.bf16.mxu0 0
      %929 = vmatpush1.bf16.msra.mxu0 %v861
      %930 = vmatprep.subr.bf16.mxu0 0
      %931 = vmatpush1.bf16.msra.mxu0 %v862
      %932 = vmatprep.subr.bf16.mxu0 0
      %933 = vmatpush1.bf16.msra.mxu0 %v863
      %934 = vmatprep.subr.bf16.mxu0 0
      %935 = vmatpush1.bf16.msra.mxu0 %v864
      %936 = vmatprep.subr.bf16.mxu0 0
      %937 = vmatpush1.bf16.msra.mxu0 %v865
      %938 = vmatprep.subr.bf16.mxu0 0
      %939 = vmatpush1.bf16.msra.mxu0 %v866
      %940 = vmatprep.subr.bf16.mxu0 0
      %941 = vmatpush1.bf16.msra.mxu0 %v867
      %942 = vmatprep.subr.bf16.mxu0 0
      %943 = vmatpush1.bf16.msra.mxu0 %v868
      %944 = vmatprep.subr.bf16.mxu0 0
      %945 = vmatpush1.bf16.msra.mxu0 %v869
      %946 = vmatprep.subr.bf16.mxu0 0
      %947 = vmatpush1.bf16.msra.mxu0 %v870
      %948 = vmatprep.subr.bf16.mxu0 0
      %949 = vmatpush1.bf16.msra.mxu0 %v871
      %950 = vmatprep.subr.bf16.mxu0 0
      %951 = vmatpush1.bf16.msra.mxu0 %v872
      %952 = vmatprep.subr.bf16.mxu0 0
      %953 = vmatpush1.bf16.msra.mxu0 %v873
      %954 = vmatprep.mubr.bf16.mxu0 %v603
      %955 = vmatmul.mubr.bf16.gmra.mrb[0].mxu0 %v602
      %v956 = vpop.f32.mrb[0].mxu0
      %v957 = vadd.f32 0.0, %v956
      %v958 = vpop.f32.mrb[0].mxu0
      %v959 = vpop.f32.mrb[0].mxu0
      %v960 = vadd.f32 0.0, %v959
      %v961 = vpop.f32.mrb[0].mxu0
      %962 = vmatprep.mubr.bf16.mxu0 %v607
      %963 = vmatmul.mubr.bf16.gmra.mrb[0].mxu0 %v606
      %v964 = vpop.f32.mrb[0].mxu0
      %v965 = vadd.f32 0.0, %v964
      %v966 = vpop.f32.mrb[0].mxu0
      %v967 = vpop.f32.mrb[0].mxu0
      %v968 = vadd.f32 0.0, %v967
      %v969 = vpop.f32.mrb[0].mxu0
      %970 = vmatprep.mubr.bf16.mxu0 %v611
      %971 = vmatmul.mubr.bf16.gmra.mrb[0].mxu0 %v610
      %v972 = vpop.f32.mrb[0].mxu0
      %v973 = vadd.f32 0.0, %v972
      %v974 = vpop.f32.mrb[0].mxu0
      %v975 = vpop.f32.mrb[0].mxu0
      %v976 = vadd.f32 0.0, %v975
      %v977 = vpop.f32.mrb[0].mxu0
      %978 = vmatprep.mubr.bf16.mxu0 %v615
      %979 = vmatmul.mubr.bf16.gmra.mrb[0].mxu0 %v614
      %v980 = vpop.f32.mrb[0].mxu0
      %v981 = vadd.f32 0.0, %v980
      %v982 = vpop.f32.mrb[0].mxu0
      %v983 = vpop.f32.mrb[0].mxu0
      %v984 = vadd.f32 0.0, %v983
      %v985 = vpop.f32.mrb[0].mxu0
      %986 = vmatprep.mubr.bf16.mxu0 %v619
      %987 = vmatmul.mubr.bf16.gmra.mrb[0].mxu0 %v618
      %v988 = vpop.f32.mrb[0].mxu0
      %v989 = vadd.f32 0.0, %v988
      %v990 = vpop.f32.mrb[0].mxu0
      %v991 = vpop.f32.mrb[0].mxu0
      %v992 = vadd.f32 0.0, %v991
      %v993 = vpop.f32.mrb[0].mxu0
      %994 = vmatprep.mubr.bf16.mxu0 %v623
      %995 = vmatmul.mubr.bf16.gmra.mrb[0].mxu0 %v622
      %v996 = vpop.f32.mrb[0].mxu0
      %v997 = vadd.f32 0.0, %v996
      %v998 = vpop.f32.mrb[0].mxu0
      %v999 = vpop.f32.mrb[0].mxu0
      %v1000 = vadd.f32 0.0, %v999
      %v1001 = vpop.f32.mrb[0].mxu0
      %1002 = vmatprep.mubr.bf16.mxu0 %v627
      %1003 = vmatmul.mubr.bf16.gmra.mrb[0].mxu0 %v626
      %v1004 = vpop.f32.mrb[0].mxu0
      %v1005 = vadd.f32 0.0, %v1004
      %v1006 = vpop.f32.mrb[0].mxu0
      %v1007 = vpop.f32.mrb[0].mxu0
      %v1008 = vadd.f32 0.0, %v1007
      %v1009 = vpop.f32.mrb[0].mxu0
      %1010 = vmatprep.mubr.bf16.mxu0 %v631
      %1011 = vmatmul.mubr.bf16.gmra.mrb[0].mxu0 %v630
      %v1012 = vpop.f32.mrb[0].mxu0
      %v1013 = vadd.f32 0.0, %v1012
      %v1014 = vpop.f32.mrb[0].mxu0
      %v1015 = vpop.f32.mrb[0].mxu0
      %v1016 = vadd.f32 0.0, %v1015
      %v1017 = vpop.f32.mrb[0].mxu0
      %1018 = vmatprep.mubr.bf16.mxu0 %v635
      %1019 = vmatmul.mubr.bf16.gmra.mrb[0].mxu0 %v634
      %v1020 = vpop.f32.mrb[0].mxu0
      %v1021 = vadd.f32 0.0, %v1020
      %v1022 = vpop.f32.mrb[0].mxu0
      %v1023 = vpop.f32.mrb[0].mxu0
      %v1024 = vadd.f32 0.0, %v1023
      %v1025 = vpop.f32.mrb[0].mxu0
      %1026 = vmatprep.mubr.bf16.mxu0 %v639
      %1027 = vmatmul.mubr.bf16.gmra.mrb[0].mxu0 %v638
      %v1028 = vpop.f32.mrb[0].mxu0
      %v1029 = vadd.f32 0.0, %v1028
      %v1030 = vpop.f32.mrb[0].mxu0
      %v1031 = vpop.f32.mrb[0].mxu0
      %v1032 = vadd.f32 0.0, %v1031
      %v1033 = vpop.f32.mrb[0].mxu0
      %1034 = vmatprep.mubr.bf16.mxu0 %v643
      %1035 = vmatmul.mubr.bf16.gmra.mrb[0].mxu0 %v642
      %v1036 = vpop.f32.mrb[0].mxu0
      %v1037 = vadd.f32 0.0, %v1036
      %v1038 = vpop.f32.mrb[0].mxu0
      %v1039 = vpop.f32.mrb[0].mxu0
      %v1040 = vadd.f32 0.0, %v1039
      %v1041 = vpop.f32.mrb[0].mxu0
      %1042 = vmatprep.mubr.bf16.mxu0 %v647
      %1043 = vmatmul.mubr.bf16.gmra.mrb[0].mxu0 %v646
      %v1044 = vpop.f32.mrb[0].mxu0
      %v1045 = vadd.f32 0.0, %v1044
      %v1046 = vpop.f32.mrb[0].mxu0
      %v1047 = vpop.f32.mrb[0].mxu0
      %v1048 = vadd.f32 0.0, %v1047
      %v1049 = vpop.f32.mrb[0].mxu0
      %1050 = vmatprep.mubr.bf16.mxu0 %v651
      %1051 = vmatmul.mubr.bf16.gmra.mrb[0].mxu0 %v650
      %v1052 = vpop.f32.mrb[0].mxu0
      %v1053 = vadd.f32 0.0, %v1052
      %v1054 = vpop.f32.mrb[0].mxu0
      %v1055 = vpop.f32.mrb[0].mxu0
      %v1056 = vadd.f32 0.0, %v1055
      %v1057 = vpop.f32.mrb[0].mxu0
      %1058 = vmatprep.mubr.bf16.mxu0 %v655
      %1059 = vmatmul.mubr.bf16.gmra.mrb[0].mxu0 %v654
      %v1060 = vpop.f32.mrb[0].mxu0
      %v1061 = vadd.f32 0.0, %v1060
      %v1062 = vpop.f32.mrb[0].mxu0
      %v1063 = vpop.f32.mrb[0].mxu0
      %v1064 = vadd.f32 0.0, %v1063
      %v1065 = vpop.f32.mrb[0].mxu0
      %1066 = vmatprep.mubr.bf16.mxu0 %v659
      %1067 = vmatmul.mubr.bf16.gmra.mrb[0].mxu0 %v658
      %v1068 = vpop.f32.mrb[0].mxu0
      %v1069 = vadd.f32 0.0, %v1068
      %v1070 = vpop.f32.mrb[0].mxu0
      %v1071 = vpop.f32.mrb[0].mxu0
      %v1072 = vadd.f32 0.0, %v1071
      %v1073 = vpop.f32.mrb[0].mxu0
      %1074 = vmatprep.mubr.bf16.mxu0 %v663
      %1075 = vmatmul.mubr.bf16.gmra.mrb[0].mxu0 %v662
      %v1076 = vpop.f32.mrb[0].mxu0
      %v1077 = vadd.f32 0.0, %v1076
      %v1078 = vpop.f32.mrb[0].mxu0
      %v1079 = vpop.f32.mrb[0].mxu0
      %v1080 = vadd.f32 0.0, %v1079
      %v1081 = vpop.f32.mrb[0].mxu0
      %1082 = vdwg.mxu0
      %1083 = vmatprep.subr.bf16.mxu0 0
      %1084 = vmatpush1.bf16.msra.mxu0 %v874
      %1085 = vmatprep.subr.bf16.mxu0 0
      %1086 = vmatpush1.bf16.msra.mxu0 %v875
      %1087 = vmatprep.subr.bf16.mxu0 0
      %1088 = vmatpush1.bf16.msra.mxu0 %v876
      %1089 = vmatprep.subr.bf16.mxu0 0
      %1090 = vmatpush1.bf16.msra.mxu0 %v877
      %1091 = vmatprep.subr.bf16.mxu0 0
      %1092 = vmatpush1.bf16.msra.mxu0 %v878
      %1093 = vmatprep.subr.bf16.mxu0 0
      %1094 = vmatpush1.bf16.msra.mxu0 %v879
      %1095 = vmatprep.subr.bf16.mxu0 0
      %1096 = vmatpush1.bf16.msra.mxu0 %v880
      %1097 = vmatprep.subr.bf16.mxu0 0
      %1098 = vmatpush1.bf16.msra.mxu0 %v881
      %1099 = vmatprep.subr.bf16.mxu0 0
      %1100 = vmatpush1.bf16.msra.mxu0 %v882
      %1101 = vmatprep.subr.bf16.mxu0 0
      %1102 = vmatpush1.bf16.msra.mxu0 %v883
      %1103 = vmatprep.subr.bf16.mxu0 0
      %1104 = vmatpush1.bf16.msra.mxu0 %v884
      %1105 = vmatprep.subr.bf16.mxu0 0
      %1106 = vmatpush1.bf16.msra.mxu0 %v885
      %1107 = vmatprep.subr.bf16.mxu0 0
      %1108 = vmatpush1.bf16.msra.mxu0 %v886
      %1109 = vmatprep.subr.bf16.mxu0 0
      %1110 = vmatpush1.bf16.msra.mxu0 %v887
      %1111 = vmatprep.subr.bf16.mxu0 0
      %1112 = vmatpush1.bf16.msra.mxu0 %v888
      %1113 = vmatprep.subr.bf16.mxu0 0
      %1114 = vmatpush1.bf16.msra.mxu0 %v889
      %1115 = vmatprep.mubr.bf16.mxu0 %v605
      %1116 = vmatmul.mubr.bf16.gmra.mrb[0].mxu0 %v604
      %v1117 = vpop.f32.mrb[0].mxu0
      %v1118 = vadd.f32 %v957, %v1117
      %v1119 = vpop.f32.mrb[0].mxu0
      %v1120 = vpop.f32.mrb[0].mxu0
      %v1121 = vadd.f32 %v960, %v1120
      %v1122 = vpop.f32.mrb[0].mxu0
      %1123 = vmatprep.mubr.bf16.mxu0 %v609
      %1124 = vmatmul.mubr.bf16.gmra.mrb[0].mxu0 %v608
      %v1125 = vpop.f32.mrb[0].mxu0
      %v1126 = vadd.f32 %v965, %v1125
      %v1127 = vpop.f32.mrb[0].mxu0
      %v1128 = vpop.f32.mrb[0].mxu0
      %v1129 = vadd.f32 %v968, %v1128
      %v1130 = vpop.f32.mrb[0].mxu0
      %1131 = vmatprep.mubr.bf16.mxu0 %v613
      %1132 = vmatmul.mubr.bf16.gmra.mrb[0].mxu0 %v612
      %v1133 = vpop.f32.mrb[0].mxu0
      %v1134 = vadd.f32 %v973, %v1133
      %v1135 = vpop.f32.mrb[0].mxu0
      %v1136 = vpop.f32.mrb[0].mxu0
      %v1137 = vadd.f32 %v976, %v1136
      %v1138 = vpop.f32.mrb[0].mxu0
      %1139 = vmatprep.mubr.bf16.mxu0 %v617
      %1140 = vmatmul.mubr.bf16.gmra.mrb[0].mxu0 %v616
      %v1141 = vpop.f32.mrb[0].mxu0
      %v1142 = vadd.f32 %v981, %v1141
      %v1143 = vpop.f32.mrb[0].mxu0
      %v1144 = vpop.f32.mrb[0].mxu0
      %v1145 = vadd.f32 %v984, %v1144
      %v1146 = vpop.f32.mrb[0].mxu0
      %1147 = vmatprep.mubr.bf16.mxu0 %v621
      %1148 = vmatmul.mubr.bf16.gmra.mrb[0].mxu0 %v620
      %v1149 = vpop.f32.mrb[0].mxu0
      %v1150 = vadd.f32 %v989, %v1149
      %v1151 = vpop.f32.mrb[0].mxu0
      %v1152 = vpop.f32.mrb[0].mxu0
      %v1153 = vadd.f32 %v992, %v1152
      %v1154 = vpop.f32.mrb[0].mxu0
      %1155 = vmatprep.mubr.bf16.mxu0 %v625
      %1156 = vmatmul.mubr.bf16.gmra.mrb[0].mxu0 %v624
      %v1157 = vpop.f32.mrb[0].mxu0
      %v1158 = vadd.f32 %v997, %v1157
      %v1159 = vpop.f32.mrb[0].mxu0
      %v1160 = vpop.f32.mrb[0].mxu0
      %v1161 = vadd.f32 %v1000, %v1160
      %v1162 = vpop.f32.mrb[0].mxu0
      %1163 = vmatprep.mubr.bf16.mxu0 %v629
      %1164 = vmatmul.mubr.bf16.gmra.mrb[0].mxu0 %v628
      %v1165 = vpop.f32.mrb[0].mxu0
      %v1166 = vadd.f32 %v1005, %v1165
      %v1167 = vpop.f32.mrb[0].mxu0
      %v1168 = vpop.f32.mrb[0].mxu0
      %v1169 = vadd.f32 %v1008, %v1168
      %v1170 = vpop.f32.mrb[0].mxu0
      %1171 = vmatprep.mubr.bf16.mxu0 %v633
      %1172 = vmatmul.mubr.bf16.gmra.mrb[0].mxu0 %v632
      %v1173 = vpop.f32.mrb[0].mxu0
      %v1174 = vadd.f32 %v1013, %v1173
      %v1175 = vpop.f32.mrb[0].mxu0
      %v1176 = vpop.f32.mrb[0].mxu0
      %v1177 = vadd.f32 %v1016, %v1176
      %v1178 = vpop.f32.mrb[0].mxu0
      %1179 = vmatprep.mubr.bf16.mxu0 %v637
      %1180 = vmatmul.mubr.bf16.gmra.mrb[0].mxu0 %v636
      %v1181 = vpop.f32.mrb[0].mxu0
      %v1182 = vadd.f32 %v1021, %v1181
      %v1183 = vpop.f32.mrb[0].mxu0
      %v1184 = vpop.f32.mrb[0].mxu0
      %v1185 = vadd.f32 %v1024, %v1184
      %v1186 = vpop.f32.mrb[0].mxu0
      %1187 = vmatprep.mubr.bf16.mxu0 %v641
      %1188 = vmatmul.mubr.bf16.gmra.mrb[0].mxu0 %v640
      %v1189 = vpop.f32.mrb[0].mxu0
      %v1190 = vadd.f32 %v1029, %v1189
      %v1191 = vpop.f32.mrb[0].mxu0
      %v1192 = vpop.f32.mrb[0].mxu0
      %v1193 = vadd.f32 %v1032, %v1192
      %v1194 = vpop.f32.mrb[0].mxu0
      %1195 = vmatprep.mubr.bf16.mxu0 %v645
      %1196 = vmatmul.mubr.bf16.gmra.mrb[0].mxu0 %v644
      %v1197 = vpop.f32.mrb[0].mxu0
      %v1198 = vadd.f32 %v1037, %v1197
      %v1199 = vpop.f32.mrb[0].mxu0
      %v1200 = vpop.f32.mrb[0].mxu0
      %v1201 = vadd.f32 %v1040, %v1200
      %v1202 = vpop.f32.mrb[0].mxu0
      %1203 = vmatprep.mubr.bf16.mxu0 %v649
      %1204 = vmatmul.mubr.bf16.gmra.mrb[0].mxu0 %v648
      %v1205 = vpop.f32.mrb[0].mxu0
      %v1206 = vadd.f32 %v1045, %v1205
      %v1207 = vpop.f32.mrb[0].mxu0
      %v1208 = vpop.f32.mrb[0].mxu0
      %v1209 = vadd.f32 %v1048, %v1208
      %v1210 = vpop.f32.mrb[0].mxu0
      %1211 = vmatprep.mubr.bf16.mxu0 %v653
      %1212 = vmatmul.mubr.bf16.gmra.mrb[0].mxu0 %v652
      %v1213 = vpop.f32.mrb[0].mxu0
      %v1214 = vadd.f32 %v1053, %v1213
      %v1215 = vpop.f32.mrb[0].mxu0
      %v1216 = vpop.f32.mrb[0].mxu0
      %v1217 = vadd.f32 %v1056, %v1216
      %v1218 = vpop.f32.mrb[0].mxu0
      %1219 = vmatprep.mubr.bf16.mxu0 %v657
      %1220 = vmatmul.mubr.bf16.gmra.mrb[0].mxu0 %v656
      %v1221 = vpop.f32.mrb[0].mxu0
      %v1222 = vadd.f32 %v1061, %v1221
      %v1223 = vpop.f32.mrb[0].mxu0
      %v1224 = vpop.f32.mrb[0].mxu0
      %v1225 = vadd.f32 %v1064, %v1224
      %v1226 = vpop.f32.mrb[0].mxu0
      %1227 = vmatprep.mubr.bf16.mxu0 %v661
      %1228 = vmatmul.mubr.bf16.gmra.mrb[0].mxu0 %v660
      %v1229 = vpop.f32.mrb[0].mxu0
      %v1230 = vadd.f32 %v1069, %v1229
      %v1231 = vpop.f32.mrb[0].mxu0
      %v1232 = vpop.f32.mrb[0].mxu0
      %v1233 = vadd.f32 %v1072, %v1232
      %v1234 = vpop.f32.mrb[0].mxu0
      %1235 = vmatprep.mubr.bf16.mxu0 %v665
      %1236 = vmatmul.mubr.bf16.gmra.mrb[0].mxu0 %v664
      %v1237 = vpop.f32.mrb[0].mxu0
      %v1238 = vadd.f32 %v1077, %v1237
      %v1239 = vpop.f32.mrb[0].mxu0
      %v1240 = vpop.f32.mrb[0].mxu0
      %v1241 = vadd.f32 %v1080, %v1240
      %v1242 = vpop.f32.mrb[0].mxu0
      %1243 = vdwg.mxu0
      %v1244 = vpack.c.bf16 %v1121, %v1118
      %v1245 = vpack.c.bf16 %v1129, %v1126
      %v1246 = vpack.c.bf16 %v1137, %v1134
      %v1247 = vpack.c.bf16 %v1145, %v1142
      %v1248 = vpack.c.bf16 %v1153, %v1150
      %v1249 = vpack.c.bf16 %v1161, %v1158
      %v1250 = vpack.c.bf16 %v1169, %v1166
      %v1251 = vpack.c.bf16 %v1177, %v1174
      %v1252 = vpack.c.bf16 %v1185, %v1182
      %v1253 = vpack.c.bf16 %v1193, %v1190
      %v1254 = vpack.c.bf16 %v1201, %v1198
      %v1255 = vpack.c.bf16 %v1209, %v1206
      %v1256 = vpack.c.bf16 %v1217, %v1214
      %v1257 = vpack.c.bf16 %v1225, %v1222
      %v1258 = vpack.c.bf16 %v1233, %v1230
      %v1259 = vpack.c.bf16 %v1241, %v1238
      %v1276 = vunpack.c.l.b16 %v1244
      %v1277 = vunpack.c.h.b16 %v1244
      %v1278 = vunpack.c.l.b16 %v1245
      %v1279 = vunpack.c.h.b16 %v1245
      %v1280 = vunpack.c.l.b16 %v1246
      %v1281 = vunpack.c.h.b16 %v1246
      %v1282 = vunpack.c.l.b16 %v1247
      %v1283 = vunpack.c.h.b16 %v1247
      %v1284 = vunpack.c.l.b16 %v1248
      %v1285 = vunpack.c.h.b16 %v1248
      %v1286 = vunpack.c.l.b16 %v1249
      %v1287 = vunpack.c.h.b16 %v1249
      %v1288 = vunpack.c.l.b16 %v1250
      %v1289 = vunpack.c.h.b16 %v1250
      %v1290 = vunpack.c.l.b16 %v1251
      %v1291 = vunpack.c.h.b16 %v1251
      %v1292 = vunpack.c.l.b16 %v1252
      %v1293 = vunpack.c.h.b16 %v1252
      %v1294 = vunpack.c.l.b16 %v1253
      %v1295 = vunpack.c.h.b16 %v1253
      %v1296 = vunpack.c.l.b16 %v1254
      %v1297 = vunpack.c.h.b16 %v1254
      %v1298 = vunpack.c.l.b16 %v1255
      %v1299 = vunpack.c.h.b16 %v1255
      %v1300 = vunpack.c.l.b16 %v1256
      %v1301 = vunpack.c.h.b16 %v1256
      %v1302 = vunpack.c.l.b16 %v1257
      %v1303 = vunpack.c.h.b16 %v1257
      %v1304 = vunpack.c.l.b16 %v1258
      %v1305 = vunpack.c.h.b16 %v1258
      %v1306 = vunpack.c.l.b16 %v1259
      %v1307 = vunpack.c.h.b16 %v1259
      %v1308 = vpack.c.b16 %v1276, %v1276
      %v1309 = vpack.c.b16 %v1277, %v1277
      %v1310 = vpack.c.b16 %v1278, %v1278
      %v1311 = vpack.c.b16 %v1279, %v1279
      %v1312 = vpack.c.b16 %v1280, %v1280
      %v1313 = vpack.c.b16 %v1281, %v1281
      %v1314 = vpack.c.b16 %v1282, %v1282
      %v1315 = vpack.c.b16 %v1283, %v1283
      %v1316 = vpack.c.b16 %v1284, %v1284
      %v1317 = vpack.c.b16 %v1285, %v1285
      %v1318 = vpack.c.b16 %v1286, %v1286
      %v1319 = vpack.c.b16 %v1287, %v1287
      %v1320 = vpack.c.b16 %v1288, %v1288
      %v1321 = vpack.c.b16 %v1289, %v1289
      %v1322 = vpack.c.b16 %v1290, %v1290
      %v1323 = vpack.c.b16 %v1291, %v1291
      %v1324 = vpack.c.b16 %v1292, %v1292
      %v1325 = vpack.c.b16 %v1293, %v1293
      %v1326 = vpack.c.b16 %v1294, %v1294
      %v1327 = vpack.c.b16 %v1295, %v1295
      %v1328 = vpack.c.b16 %v1296, %v1296
      %v1329 = vpack.c.b16 %v1297, %v1297
      %v1330 = vpack.c.b16 %v1298, %v1298
      %v1331 = vpack.c.b16 %v1299, %v1299
      %v1332 = vpack.c.b16 %v1300, %v1300
      %v1333 = vpack.c.b16 %v1301, %v1301
      %v1334 = vpack.c.b16 %v1302, %v1302
      %v1335 = vpack.c.b16 %v1303, %v1303
      %v1336 = vpack.c.b16 %v1304, %v1304
      %v1337 = vpack.c.b16 %v1305, %v1305
      %v1338 = vpack.c.b16 %v1306, %v1306
      %v1339 = vpack.c.b16 %v1307, %v1307
      %1372 = vst [vmem:[%s271] sm:$0xf] %v1308
      %1373 = vst [vmem:[%s271 + $0x4] sm:$0xf] %v1309
      %1374 = vst [vmem:[%s271 + $0x8] sm:$0xf] %v1310
      %1375 = vst [vmem:[%s271 + $0xc] sm:$0xf] %v1311
      %1376 = vst [vmem:[%s271 + $0x10] sm:$0xf] %v1312
      %1377 = vst [vmem:[%s271 + $0x14] sm:$0xf] %v1313
      %1378 = vst [vmem:[%s271 + $0x18] sm:$0xf] %v1314
      %1379 = vst [vmem:[%s271 + $0x1c] sm:$0xf] %v1315
      %1380 = vst [vmem:[%s271 + $0x20] sm:$0xf] %v1316
      %1381 = vst [vmem:[%s271 + $0x24] sm:$0xf] %v1317
      %1382 = vst [vmem:[%s271 + $0x28] sm:$0xf] %v1318
      %1383 = vst [vmem:[%s271 + $0x2c] sm:$0xf] %v1319
      %1384 = vst [vmem:[%s271 + $0x30] sm:$0xf] %v1320
      %1385 = vst [vmem:[%s271 + $0x34] sm:$0xf] %v1321
      %1386 = vst [vmem:[%s271 + $0x38] sm:$0xf] %v1322
      %1387 = vst [vmem:[%s271 + $0x3c] sm:$0xf] %v1323
      %1388 = vst [vmem:[%s271 + $0x40] sm:$0xf] %v1324
      %1389 = vst [vmem:[%s271 + $0x44] sm:$0xf] %v1325
      %1390 = vst [vmem:[%s271 + $0x48] sm:$0xf] %v1326
      %1391 = vst [vmem:[%s271 + $0x4c] sm:$0xf] %v1327
      %1392 = vst [vmem:[%s271 + $0x50] sm:$0xf] %v1328
      %1393 = vst [vmem:[%s271 + $0x54] sm:$0xf] %v1329
      %1394 = vst [vmem:[%s271 + $0x58] sm:$0xf] %v1330
      %1395 = vst [vmem:[%s271 + $0x5c] sm:$0xf] %v1331
      %1396 = vst [vmem:[%s271 + $0x60] sm:$0xf] %v1332
      %1397 = vst [vmem:[%s271 + $0x64] sm:$0xf] %v1333
      %1398 = vst [vmem:[%s271 + $0x68] sm:$0xf] %v1334
      %1399 = vst [vmem:[%s271 + $0x6c] sm:$0xf] %v1335
      %1400 = vst [vmem:[%s271 + $0x70] sm:$0xf] %v1336
      %1401 = vst [vmem:[%s271 + $0x74] sm:$0xf] %v1337
      %1402 = vst [vmem:[%s271 + $0x78] sm:$0xf] %v1338
      %1403 = vst [vmem:[%s271 + $0x7c] sm:$0xf] %v1339
      %p1404 = scmp.eq.s32.totalorder %s21, 0
      // Predicated region
      $region29: #{gmodel_forward.8} parent=27 // pred_check
        %p1405 = pneg %p1404
      $region30: #{gmodel_forward.8} parent=27 // pred_check_branch
        %1407 = sbr.rel (%p1405) target = $region32
      $region31: #{gmodel_forward.8} parent=27 // pred_region
        %1408 = vst [vmem:[%s276] sm:$0xff] 0.0
        %1409 = vst [vmem:[%s280] sm:$0xff] 0.0
      $region32: #{gmodel_forward.8} parent=27 // pred_fallthru
        _
      %v1410 = vld [vmem:[%s276] sm:$0xff]
      %v1411 = vadd.f32 %v1118, %v1121
      %v1412 = vadd.f32 %v1411, %v1126
      %v1413 = vadd.f32 %v1412, %v1129
      %v1414 = vadd.f32 %v1413, %v1134
      %v1415 = vadd.f32 %v1414, %v1137
      %v1416 = vadd.f32 %v1415, %v1142
      %v1417 = vadd.f32 %v1416, %v1145
      %v1418 = vadd.f32 %v1417, %v1150
      %v1419 = vadd.f32 %v1418, %v1153
      %v1420 = vadd.f32 %v1419, %v1158
      %v1421 = vadd.f32 %v1420, %v1161
      %v1422 = vadd.f32 %v1421, %v1166
      %v1423 = vadd.f32 %v1422, %v1169
      %v1424 = vadd.f32 %v1423, %v1174
      %v1425 = vadd.f32 %v1424, %v1177
      %v1426 = vadd.f32 %v1425, %v1182
      %v1427 = vadd.f32 %v1426, %v1185
      %v1428 = vadd.f32 %v1427, %v1190
      %v1429 = vadd.f32 %v1428, %v1193
      %v1430 = vadd.f32 %v1429, %v1198
      %v1431 = vadd.f32 %v1430, %v1201
      %v1432 = vadd.f32 %v1431, %v1206
      %v1433 = vadd.f32 %v1432, %v1209
      %v1434 = vadd.f32 %v1433, %v1214
      %v1435 = vadd.f32 %v1434, %v1217
      %v1436 = vadd.f32 %v1435, %v1222
      %v1437 = vadd.f32 %v1436, %v1225
      %v1438 = vadd.f32 %v1437, %v1230
      %v1439 = vadd.f32 %v1438, %v1233
      %v1440 = vadd.f32 %v1439, %v1238
      %v1441 = vadd.f32 %v1440, %v1241
      %v1442 = vrot.slane %v1441, 4
      %v1443 = vadd.f32 %v1441, %v1442
      %v1444 = vrot.slane %v1443, 2
      %v1445 = vadd.f32 %v1443, %v1444
      %v1446 = vrot.slane %v1445, 1
      %v1447 = vadd.f32 %v1445, %v1446
      %v1448 = vadd.f32 %v1410, %v1447
      %1449 = vst [vmem:[%s276] sm:$0xff] %v1448
      %v1450 = vld [vmem:[%s280] sm:$0xff]
      %v1451 = vmul.f32 %v1118, %v1118
      %v1452 = vmul.f32 %v1121, %v1121
      %v1453 = vmul.f32 %v1126, %v1126
      %v1454 = vmul.f32 %v1129, %v1129
      %v1455 = vmul.f32 %v1134, %v1134
      %v1456 = vmul.f32 %v1137, %v1137
      %v1457 = vmul.f32 %v1142, %v1142
      %v1458 = vmul.f32 %v1145, %v1145
      %v1459 = vmul.f32 %v1150, %v1150
      %v1460 = vmul.f32 %v1153, %v1153
      %v1461 = vmul.f32 %v1158, %v1158
      %v1462 = vmul.f32 %v1161, %v1161
      %v1463 = vmul.f32 %v1166, %v1166
      %v1464 = vmul.f32 %v1169, %v1169
      %v1465 = vmul.f32 %v1174, %v1174
      %v1466 = vmul.f32 %v1177, %v1177
      %v1467 = vmul.f32 %v1182, %v1182
      %v1468 = vmul.f32 %v1185, %v1185
      %v1469 = vmul.f32 %v1190, %v1190
      %v1470 = vmul.f32 %v1193, %v1193
      %v1471 = vmul.f32 %v1198, %v1198
      %v1472 = vmul.f32 %v1201, %v1201
      %v1473 = vmul.f32 %v1206, %v1206
      %v1474 = vmul.f32 %v1209, %v1209
      %v1475 = vmul.f32 %v1214, %v1214
      %v1476 = vmul.f32 %v1217, %v1217
      %v1477 = vmul.f32 %v1222, %v1222
      %v1478 = vmul.f32 %v1225, %v1225
      %v1479 = vmul.f32 %v1230, %v1230
      %v1480 = vmul.f32 %v1233, %v1233
      %v1481 = vmul.f32 %v1238, %v1238
      %v1482 = vmul.f32 %v1241, %v1241
      %v1483 = vadd.f32 %v1451, %v1452
      %v1484 = vadd.f32 %v1483, %v1453
      %v1485 = vadd.f32 %v1484, %v1454
      %v1486 = vadd.f32 %v1485, %v1455
      %v1487 = vadd.f32 %v1486, %v1456
      %v1488 = vadd.f32 %v1487, %v1457
      %v1489 = vadd.f32 %v1488, %v1458
      %v1490 = vadd.f32 %v1489, %v1459
      %v1491 = vadd.f32 %v1490, %v1460
      %v1492 = vadd.f32 %v1491, %v1461
      %v1493 = vadd.f32 %v1492, %v1462
      %v1494 = vadd.f32 %v1493, %v1463
      %v1495 = vadd.f32 %v1494, %v1464
      %v1496 = vadd.f32 %v1495, %v1465
      %v1497 = vadd.f32 %v1496, %v1466
      %v1498 = vadd.f32 %v1497, %v1467
      %v1499 = vadd.f32 %v1498, %v1468
      %v1500 = vadd.f32 %v1499, %v1469
      %v1501 = vadd.f32 %v1500, %v1470
      %v1502 = vadd.f32 %v1501, %v1471
      %v1503 = vadd.f32 %v1502, %v1472
      %v1504 = vadd.f32 %v1503, %v1473
      %v1505 = vadd.f32 %v1504, %v1474
      %v1506 = vadd.f32 %v1505, %v1475
      %v1507 = vadd.f32 %v1506, %v1476
      %v1508 = vadd.f32 %v1507, %v1477
      %v1509 = vadd.f32 %v1508, %v1478
      %v1510 = vadd.f32 %v1509, %v1479
      %v1511 = vadd.f32 %v1510, %v1480
      %v1512 = vadd.f32 %v1511, %v1481
      %v1513 = vadd.f32 %v1512, %v1482
      %v1514 = vrot.slane %v1513, 4
      %v1515 = vadd.f32 %v1513, %v1514
      %v1516 = vrot.slane %v1515, 2
      %v1517 = vadd.f32 %v1515, %v1516
      %v1518 = vrot.slane %v1517, 1
      %v1519 = vadd.f32 %v1517, %v1518
      %v1520 = vadd.f32 %v1450, %v1519
      %1521 = vst [vmem:[%s280] sm:$0xff] %v1520
      %s1522 = smul.u32 32, %s21
      %p1523 = scmp.lt.s32.totalorder %s20, 3
      %s1524 = scalar_select %p1523, %s20, 3
      %p1525 = scmp.lt.s32.totalorder %s1522, 63
      %s1526 = scalar_select %p1525, %s1522, 63
      %s1527 = smul.addr %s1524, 64
      %s1528 = sadd.s32 %s1526, %s1527
      %s1529 = smul.addr %s1528, 4
      %s1530 = scalar_lea.vmem %s2, %s1529
      %p1531 = scmp.lt.s32.totalorder %s20, 3
      %s1532 = scalar_select %p1531, %s20, 3
      %s1533 = smul.addr %s1532, 8
      %s1534 = scalar_lea.vmem %s3, %s1533
      %p1535 = scmp.lt.s32.totalorder %s20, 3
      %s1536 = scalar_select %p1535, %s20, 3
      %s1537 = smul.addr %s1536, 8
      %s1538 = scalar_lea.vmem %s4, %s1537
      // Predicated region
      $region33: #{gmodel_forward.8} parent=27 // pred_check
        %p1539 = pneg %p102
      $region34: #{gmodel_forward.8} parent=27 // pred_check_branch
        %1541 = sbr.rel (%p1539) target = $region36
      $region35: #{gmodel_forward.8} parent=27 // pred_region
        %s1542 = smul.u32 32, %s21
      $region36: #{gmodel_forward.8} parent=27 // pred_fallthru
        _
      // Predicated region
      $region37: #{gmodel_forward.8} parent=27 // pred_check
        %p1543 = pneg %p128
      $region38: #{gmodel_forward.8} parent=27 // pred_check_branch
        %1545 = sbr.rel (%p1543) target = $region40
      $region39: #{gmodel_forward.8} parent=27 // pred_region
        _
      $region40: #{gmodel_forward.8} parent=27 // pred_fallthru
        _
      // Predicated region
      $region41: #{gmodel_forward.8} parent=27 // pred_check
        %p1546 = pneg %p154
      $region42: #{gmodel_forward.8} parent=27 // pred_check_branch
        %1548 = sbr.rel (%p1546) target = $region44
      $region43: #{gmodel_forward.8} parent=27 // pred_region
        _
      $region44: #{gmodel_forward.8} parent=27 // pred_fallthru
        _
    $region28: #{gmodel_forward.8} parent=5 // pred_fallthru
      _
    %p1549 = scmp.le.s32.totalorder 2, %s11
    // Predicated region
    $region45: #{gmodel_forward.8} parent=5 // pred_check
      %p1550 = pneg %p1549
    $region46: #{gmodel_forward.8} parent=5 // pred_check_branch
      %1552 = sbr.rel (%p1550) target = $region48
    $region47: #{gmodel_forward.8} parent=5 // pred_region
      %s1553 = ssub.s32 %s11, 2
      // Predicated region
      $region49: #{gmodel_forward.8} parent=47 // pred_check
        %p1554 = pneg %p108
      $region50: #{gmodel_forward.8} parent=47 // pred_check_branch
        %1556 = sbr.rel (%p1554) target = $region52
      $region51: #{gmodel_forward.8} parent=47 // pred_region
        %s1557 = smul.u32 32, %s23
        %p1558 = scmp.lt.s32.totalorder %s22, 3
        %s1559 = scalar_select %p1558, %s22, 3
        %p1560 = scmp.lt.s32.totalorder %s1557, 63
        %s1561 = scalar_select %p1560, %s1557, 63
        %s1562 = smul.addr %s1559, 64
        %s1563 = sadd.s32 %s1561, %s1562
        %s1564 = smul.addr %s1563, 4
        %s1565 = scalar_lea.vmem %s2, %s1564
      $region52: #{gmodel_forward.8} parent=47 // pred_fallthru
        _
      // Predicated region
      $region53: #{gmodel_forward.8} parent=47 // pred_check
        %p1566 = pneg %p134
      $region54: #{gmodel_forward.8} parent=47 // pred_check_branch
        %1568 = sbr.rel (%p1566) target = $region56
      $region55: #{gmodel_forward.8} parent=47 // pred_region
        %p1569 = scmp.lt.s32.totalorder %s22, 3
        %s1570 = scalar_select %p1569, %s22, 3
        %s1571 = smul.addr %s1570, 8
        %s1572 = scalar_lea.vmem %s3, %s1571
      $region56: #{gmodel_forward.8} parent=47 // pred_fallthru
        _
      // Predicated region
      $region57: #{gmodel_forward.8} parent=47 // pred_check
        %p1573 = pneg %p160
      $region58: #{gmodel_forward.8} parent=47 // pred_check_branch
        %1575 = sbr.rel (%p1573) target = $region60
      $region59: #{gmodel_forward.8} parent=47 // pred_region
        %p1576 = scmp.lt.s32.totalorder %s22, 3
        %s1577 = scalar_select %p1576, %s22, 3
        %s1578 = smul.addr %s1577, 8
        %s1579 = scalar_lea.vmem %s4, %s1578
      $region60: #{gmodel_forward.8} parent=47 // pred_fallthru
        _
    $region48: #{gmodel_forward.8} parent=5 // pred_fallthru
      _
  $region6: #{gmodel_forward.8} parent=0 // loop_footer
    %s15 = sadd.s32 1, %s11
  $region7: #{gmodel_forward.8} parent=0 // loop_footer_branch
    %10 = sbr.rel target = $region3
  $region8: #{gmodel_forward.8} parent=0 // loop_exit
    _

// kernel: gmodel_forward.9
$region0: #{gmodel_forward.9}
  #allocation0 [shape = 'u32[]', space=smem, size = 0x4, offset = 0x4, fixed_abs, tag = 'smem constant byte address 0x4 - core index']
  #allocation1 [shape = 'u32[144,128]{1,0:T(1,128)}', space=vmem, size = 0x12000, scoped, tag = 'internal scratch']
  %s0 = inlined_call_operand.vmem [shape: f32[8,1], index: 0, kind: input, shape index: {}]
  %s1 = inlined_call_operand.vmem [shape: bf16[4,8,256], index: 1, kind: input, shape index: {}]
  %s2 = inlined_call_operand.vmem [shape: bf16[4,256,2048], index: 2, kind: input, shape index: {}]
  %s3 = inlined_call_operand.vmem [shape: f32[4,8,2048], index: 3, kind: output, shape index: {}]
  %s4 = sld [smem:[#allocation0]]
  $region68: #{gmodel_forward.9} parent=0
    _
  %s6 = ssub.s32 1, %s4
  %s7 = scalar_select 0, %s6, %s4
  $region1: #{gmodel_forward.9} parent=0
    #allocation2 [shape = 'u8[524288]{0}', space=vmem, size = 0x80000, scoped, tag = 'input window, operand 2']
    loop: start=0, step=1, limit=18
    $region2: #{gmodel_forward.9} parent=1 // loop_pre_header
      _
    $region3: #{gmodel_forward.9} parent=1 // loop_header
      %s9 = sphi 0, %s13
      %p10 = scmp.ge.s32.totalorder %s9, 18
      %s16 = sphi 0, %s28
      %s17 = sphi 0, %s24
      %s18 = sphi 0, %s16
      %s19 = sphi 0, %s17
      %s20 = sphi 0, %s18
      %s21 = sphi 0, %s19
      %s29 = sphi 0, %s29
      %s31 = sphi 0, %s29
      %s32 = sphi 0, %s31
      %s46 = sphi 0, %s32
      %s52 = sphi 0, %s54
      %s55 = sphi 0, %s52
      %s56 = sphi 0, %s55
      %s72 = sphi 0, %s56
      %s80 = sphi 0, %s82
      %s83 = sphi 0, %s80
      %s84 = sphi 0, %s83
      %s100 = sphi 0, %s84
      %s108 = sphi 0, %s110
      %s111 = sphi 0, %s108
      %s112 = sphi 0, %s111
      %s128 = sphi 0, %s112
    $region4: #{gmodel_forward.9} parent=1 // loop_header_branch
      %12 = sbr.rel (%p10) target = $region8
    $region5: #{gmodel_forward.9} parent=1 // loop_body
      %s14 = ssub.s32 %s9, 1
      %s15 = ssub.s32 %s9, 2
      %s22 = sadd.s32 1, %s17
      %p23 = scmp.ge.s32.totalorder %s22, 4
      %s24 = scalar_select %p23, 0, %s22
      %s25 = sadd.s32 1, %s16
      %s26 = scalar_select %p23, %s25, %s16
      %p27 = scmp.ge.s32.totalorder %s26, 4
      %s28 = scalar_select %p27, 0, %s26
      %s30 = sadd.s32 %s29, 1
      %p33 = scmp.eq.s32.totalorder %s9, 15
      %p34 = scmp.ne.s32.totalorder %s29, %s31
      %p35 = scmp.eq.s32.totalorder %s9, 0
      %p36 = por %p34, %p35
      %p37 = scmp.ne.s32.totalorder %s29, %s31
      %p38 = scmp.eq.s32.totalorder %s14, 15
      %p39 = por %p37, %p38
      %p40 = scmp.ne.s32.totalorder %s31, %s32
      %p41 = scmp.eq.s32.totalorder %s14, 0
      %p42 = por %p40, %p41
      %p43 = scmp.ne.s32.totalorder %s31, %s32
      %p44 = scmp.eq.s32.totalorder %s15, 15
      %p45 = por %p43, %p44
      %p47 = scmp.ne.s32.totalorder %s32, %s46
      %p48 = scmp.eq.s32.totalorder %s15, 0
      %p49 = por %p47, %p48
      %s50 = ssub.s32 %s16, %s28
      %p51 = scmp.eq.s32.totalorder %s50, 0
      %s53 = sadd.s32 %s52, 1
      %s54 = scalar_select %p51, %s52, %s53
      %p57 = pneg %p51
      %p58 = scmp.eq.s32.totalorder %s9, 15
      %p59 = por %p57, %p58
      %p60 = scmp.ne.s32.totalorder %s52, %s55
      %p61 = scmp.eq.s32.totalorder %s9, 0
      %p62 = por %p60, %p61
      %p63 = scmp.ne.s32.totalorder %s52, %s55
      %p64 = scmp.eq.s32.totalorder %s14, 15
      %p65 = por %p63, %p64
      %p66 = scmp.ne.s32.totalorder %s55, %s56
      %p67 = scmp.eq.s32.totalorder %s14, 0
      %p68 = por %p66, %p67
      %p69 = scmp.ne.s32.totalorder %s55, %s56
      %p70 = scmp.eq.s32.totalorder %s15, 15
      %p71 = por %p69, %p70
      %p73 = scmp.ne.s32.totalorder %s56, %s72
      %p74 = scmp.eq.s32.totalorder %s15, 0
      %p75 = por %p73, %p74
      %s76 = ssub.s32 %s16, %s28
      %s77 = ssub.s32 %s17, %s24
      %s78 = sor.u32 %s76, %s77
      %p79 = scmp.eq.s32.totalorder %s78, 0
      %s81 = sadd.s32 %s80, 1
      %s82 = scalar_select %p79, %s80, %s81
      %p85 = pneg %p79
      %p86 = scmp.eq.s32.totalorder %s9, 15
      %p87 = por %p85, %p86
      %p88 = scmp.ne.s32.totalorder %s80, %s83
      %p89 = scmp.eq.s32.totalorder %s9, 0
      %p90 = por %p88, %p89
      %p91 = scmp.ne.s32.totalorder %s80, %s83
      %p92 = scmp.eq.s32.totalorder %s14, 15
      %p93 = por %p91, %p92
      %p94 = scmp.ne.s32.totalorder %s83, %s84
      %p95 = scmp.eq.s32.totalorder %s14, 0
      %p96 = por %p94, %p95
      %p97 = scmp.ne.s32.totalorder %s83, %s84
      %p98 = scmp.eq.s32.totalorder %s15, 15
      %p99 = por %p97, %p98
      %p101 = scmp.ne.s32.totalorder %s84, %s100
      %p102 = scmp.eq.s32.totalorder %s15, 0
      %p103 = por %p101, %p102
      %s104 = ssub.s32 %s16, %s28
      %s105 = ssub.s32 %s17, %s24
      %s106 = sor.u32 %s104, %s105
      %p107 = scmp.eq.s32.totalorder %s106, 0
      %s109 = sadd.s32 %s108, 1
      %s110 = scalar_select %p107, %s108, %s109
      %p113 = pneg %p107
      %p114 = scmp.eq.s32.totalorder %s9, 15
      %p115 = por %p113, %p114
      %p116 = scmp.ne.s32.totalorder %s108, %s111
      %p117 = scmp.eq.s32.totalorder %s9, 0
      %p118 = por %p116, %p117
      %p119 = scmp.ne.s32.totalorder %s108, %s111
      %p120 = scmp.eq.s32.totalorder %s14, 15
      %p121 = por %p119, %p120
      %p122 = scmp.ne.s32.totalorder %s111, %s112
      %p123 = scmp.eq.s32.totalorder %s14, 0
      %p124 = por %p122, %p123
      %p125 = scmp.ne.s32.totalorder %s111, %s112
      %p126 = scmp.eq.s32.totalorder %s15, 15
      %p127 = por %p125, %p126
      %p129 = scmp.ne.s32.totalorder %s112, %s128
      %p130 = scmp.eq.s32.totalorder %s15, 0
      %p131 = por %p129, %p130
      %p132 = scmp.le.s32.totalorder 1, %s9
      %p133 = scmp.lt.s32.totalorder %s9, 17
      %p134 = pnand %p132, %p133
      %p135 = pneg %p134
      // Predicated region
      $region9: #{gmodel_forward.9} parent=5 // pred_check
        _
      $region10: #{gmodel_forward.9} parent=5 // pred_check_branch
        %137 = sbr.rel (%p134) target = $region12
      $region11: #{gmodel_forward.9} parent=5 // pred_region
        %s138 = ssub.s32 %s9, 1
        // Predicated region
        $region13: #{gmodel_forward.9} parent=11 // pred_check
          %p139 = pneg %p42
        $region14: #{gmodel_forward.9} parent=11 // pred_check_branch
          %141 = sbr.rel (%p139) target = $region16
        $region15: #{gmodel_forward.9} parent=11 // pred_region
          _
        $region16: #{gmodel_forward.9} parent=11 // pred_fallthru
          _
      $region12: #{gmodel_forward.9} parent=5 // pred_fallthru
        _
      %p142 = scmp.lt.s32.totalorder %s9, 16
      // Predicated region
      $region17: #{gmodel_forward.9} parent=5 // pred_check
        %p143 = pneg %p142
      $region18: #{gmodel_forward.9} parent=5 // pred_check_branch
        %145 = sbr.rel (%p143) target = $region20
      $region19: #{gmodel_forward.9} parent=5 // pred_region
        // Predicated region
        $region21: #{gmodel_forward.9} parent=19 // pred_check
          %p146 = pneg %p62
        $region22: #{gmodel_forward.9} parent=19 // pred_check_branch
          %148 = sbr.rel (%p146) target = $region24
        $region23: #{gmodel_forward.9} parent=19 // pred_region
          %p149 = scmp.lt.s32.totalorder %s16, 3
          %s150 = scalar_select %p149, %s16, 3
          %s151 = smul.addr %s150, 2
          %s152 = smul.addr %s151, 4
          %s153 = scalar_lea.vmem %s1, %s152
        $region24: #{gmodel_forward.9} parent=19 // pred_fallthru
          _
        // Predicated region
        $region25: #{gmodel_forward.9} parent=19 // pred_check
          %p154 = pneg %p90
        $region26: #{gmodel_forward.9} parent=19 // pred_check_branch
          %156 = sbr.rel (%p154) target = $region28
        $region27: #{gmodel_forward.9} parent=19 // pred_region
          %s157 = sand.u32 %s80, 1
          %s158 = sand.u32 %s80, 1
          %s159 = smul.addr %s158, 512
          %s160 = scalar_lea.vmem [#allocation2], %s159
          %s161 = smul.u32 4, %s17
          %s162 = smul.addr %s16, 512
          %s163 = sadd.s32 %s161, %s162
          %s164 = smul.addr %s163, 4
          %s165 = scalar_lea.vmem %s2, %s164
          // Predicated region
          $region29: #{gmodel_forward.9} parent=27 // pred_check
            _
          $region30: #{gmodel_forward.9} parent=27 // pred_check_branch
            %167 = sbr.rel (0) target = $region32
          $region31: #{gmodel_forward.9} parent=27 // pred_region
            // Predicated region
            $region33: #{gmodel_forward.9} parent=31 // pred_check
              _
            $region34: #{gmodel_forward.9} parent=31 // pred_check_branch
              %169 = sbr.rel (0) target = $region36
            $region35: #{gmodel_forward.9} parent=31 // pred_region
              loop: start=0, step=1, limit=1
              $region37: #{gmodel_forward.9} parent=35 // loop_pre_header
                _
              $region38: #{gmodel_forward.9} parent=35 // loop_header
                %s171 = sphi 0, %s175
                %p172 = scmp.ge.s32.totalorder %s171, 1
                %s176 = sphi %s165, %s165
                %s177 = sphi %s160, %s160
              $region39: #{gmodel_forward.9} parent=35 // loop_header_branch
                %174 = sbr.rel (%p172) target = $region43
              $region40: #{gmodel_forward.9} parent=35 // loop_body
                %v178 = vld [vmem:[%s176] sm:$0xff]
                %179 = vst [vmem:[%s177] sm:$0xff] %v178
                %v180 = vld [vmem:[%s176 + $0x8] sm:$0xff]
                %181 = vst [vmem:[%s177 + $0x8] sm:$0xff] %v180
                %v182 = vld [vmem:[%s176 + $0x40] sm:$0xff]
                %183 = vst [vmem:[%s177 + $0x10] sm:$0xff] %v182
                %v184 = vld [vmem:[%s176 + $0x48] sm:$0xff]
                %185 = vst [vmem:[%s177 + $0x18] sm:$0xff] %v184
                %v186 = vld [vmem:[%s176 + $0x80] sm:$0xff]
                %187 = vst [vmem:[%s177 + $0x20] sm:$0xff] %v186
                %v188 = vld [vmem:[%s176 + $0x88] sm:$0xff]
                %189 = vst [vmem:[%s177 + $0x28] sm:$0xff] %v188
                %v190 = vld [vmem:[%s176 + $0xc0] sm:$0xff]
                %191 = vst [vmem:[%s177 + $0x30] sm:$0xff] %v190
                %v192 = vld [vmem:[%s176 + $0xc8] sm:$0xff]
                %193 = vst [vmem:[%s177 + $0x38] sm:$0xff] %v192
                %v194 = vld [vmem:[%s176 + $0x100] sm:$0xff]
                %195 = vst [vmem:[%s177 + $0x40] sm:$0xff] %v194
                %v196 = vld [vmem:[%s176 + $0x108] sm:$0xff]
                %197 = vst [vmem:[%s177 + $0x48] sm:$0xff] %v196
                %v198 = vld [vmem:[%s176 + $0x140] sm:$0xff]
                %199 = vst [vmem:[%s177 + $0x50] sm:$0xff] %v198
                %v200 = vld [vmem:[%s176 + $0x148] sm:$0xff]
                %201 = vst [vmem:[%s177 + $0x58] sm:$0xff] %v200
                %v202 = vld [vmem:[%s176 + $0x180] sm:$0xff]
                %203 = vst [vmem:[%s177 + $0x60] sm:$0xff] %v202
                %v204 = vld [vmem:[%s176 + $0x188] sm:$0xff]
                %205 = vst [vmem:[%s177 + $0x68] sm:$0xff] %v204
                %v206 = vld [vmem:[%s176 + $0x1c0] sm:$0xff]
                %207 = vst [vmem:[%s177 + $0x70] sm:$0xff] %v206
                %v208 = vld [vmem:[%s176 + $0x1c8] sm:$0xff]
                %209 = vst [vmem:[%s177 + $0x78] sm:$0xff] %v208
                %v210 = vld [vmem:[%s176 + $0x200] sm:$0xff]
                %211 = vst [vmem:[%s177 + $0x80] sm:$0xff] %v210
                %v212 = vld [vmem:[%s176 + $0x208] sm:$0xff]
                %213 = vst [vmem:[%s177 + $0x88] sm:$0xff] %v212
                %v214 = vld [vmem:[%s176 + $0x240] sm:$0xff]
                %215 = vst [vmem:[%s177 + $0x90] sm:$0xff] %v214
                %v216 = vld [vmem:[%s176 + $0x248] sm:$0xff]
                %217 = vst [vmem:[%s177 + $0x98] sm:$0xff] %v216
                %v218 = vld [vmem:[%s176 + $0x280] sm:$0xff]
                %219 = vst [vmem:[%s177 + $0xa0] sm:$0xff] %v218
                %v220 = vld [vmem:[%s176 + $0x288] sm:$0xff]
                %221 = vst [vmem:[%s177 + $0xa8] sm:$0xff] %v220
                %v222 = vld [vmem:[%s176 + $0x2c0] sm:$0xff]
                %223 = vst [vmem:[%s177 + $0xb0] sm:$0xff] %v222
                %v224 = vld [vmem:[%s176 + $0x2c8] sm:$0xff]
                %225 = vst [vmem:[%s177 + $0xb8] sm:$0xff] %v224
                %v226 = vld [vmem:[%s176 + $0x300] sm:$0xff]
                %227 = vst [vmem:[%s177 + $0xc0] sm:$0xff] %v226
                %v228 = vld [vmem:[%s176 + $0x308] sm:$0xff]
                %229 = vst [vmem:[%s177 + $0xc8] sm:$0xff] %v228
                %v230 = vld [vmem:[%s176 + $0x340] sm:$0xff]
                %231 = vst [vmem:[%s177 + $0xd0] sm:$0xff] %v230
                %v232 = vld [vmem:[%s176 + $0x348] sm:$0xff]
                %233 = vst [vmem:[%s177 + $0xd8] sm:$0xff] %v232
                %v234 = vld [vmem:[%s176 + $0x380] sm:$0xff]
                %235 = vst [vmem:[%s177 + $0xe0] sm:$0xff] %v234
                %v236 = vld [vmem:[%s176 + $0x388] sm:$0xff]
                %237 = vst [vmem:[%s177 + $0xe8] sm:$0xff] %v236
                %v238 = vld [vmem:[%s176 + $0x3c0] sm:$0xff]
                %239 = vst [vmem:[%s177 + $0xf0] sm:$0xff] %v238
                %v240 = vld [vmem:[%s176 + $0x3c8] sm:$0xff]
                %241 = vst [vmem:[%s177 + $0xf8] sm:$0xff] %v240
                %v242 = vld [vmem:[%s176 + $0x400] sm:$0xff]
                %243 = vst [vmem:[%s177 + $0x100] sm:$0xff] %v242
                %v244 = vld [vmem:[%s176 + $0x408] sm:$0xff]
                %245 = vst [vmem:[%s177 + $0x108] sm:$0xff] %v244
                %v246 = vld [vmem:[%s176 + $0x440] sm:$0xff]
                %247 = vst [vmem:[%s177 + $0x110] sm:$0xff] %v246
                %v248 = vld [vmem:[%s176 + $0x448] sm:$0xff]
                %249 = vst [vmem:[%s177 + $0x118] sm:$0xff] %v248
                %v250 = vld [vmem:[%s176 + $0x480] sm:$0xff]
                %251 = vst [vmem:[%s177 + $0x120] sm:$0xff] %v250
                %v252 = vld [vmem:[%s176 + $0x488] sm:$0xff]
                %253 = vst [vmem:[%s177 + $0x128] sm:$0xff] %v252
                %v254 = vld [vmem:[%s176 + $0x4c0] sm:$0xff]
                %255 = vst [vmem:[%s177 + $0x130] sm:$0xff] %v254
                %v256 = vld [vmem:[%s176 + $0x4c8] sm:$0xff]
                %257 = vst [vmem:[%s177 + $0x138] sm:$0xff] %v256
                %v258 = vld [vmem:[%s176 + $0x500] sm:$0xff]
                %259 = vst [vmem:[%s177 + $0x140] sm:$0xff] %v258
                %v260 = vld [vmem:[%s176 + $0x508] sm:$0xff]
                %261 = vst [vmem:[%s177 + $0x148] sm:$0xff] %v260
                %v262 = vld [vmem:[%s176 + $0x540] sm:$0xff]
                %263 = vst [vmem:[%s177 + $0x150] sm:$0xff] %v262
                %v264 = vld [vmem:[%s176 + $0x548] sm:$0xff]
                %265 = vst [vmem:[%s177 + $0x158] sm:$0xff] %v264
                %v266 = vld [vmem:[%s176 + $0x580] sm:$0xff]
                %267 = vst [vmem:[%s177 + $0x160] sm:$0xff] %v266
                %v268 = vld [vmem:[%s176 + $0x588] sm:$0xff]
                %269 = vst [vmem:[%s177 + $0x168] sm:$0xff] %v268
                %v270 = vld [vmem:[%s176 + $0x5c0] sm:$0xff]
                %271 = vst [vmem:[%s177 + $0x170] sm:$0xff] %v270
                %v272 = vld [vmem:[%s176 + $0x5c8] sm:$0xff]
                %273 = vst [vmem:[%s177 + $0x178] sm:$0xff] %v272
                %v274 = vld [vmem:[%s176 + $0x600] sm:$0xff]
                %275 = vst [vmem:[%s177 + $0x180] sm:$0xff] %v274
                %v276 = vld [vmem:[%s176 + $0x608] sm:$0xff]
                %277 = vst [vmem:[%s177 + $0x188] sm:$0xff] %v276
                %v278 = vld [vmem:[%s176 + $0x640] sm:$0xff]
                %279 = vst [vmem:[%s177 + $0x190] sm:$0xff] %v278
                %v280 = vld [vmem:[%s176 + $0x648] sm:$0xff]
                %281 = vst [vmem:[%s177 + $0x198] sm:$0xff] %v280
                %v282 = vld [vmem:[%s176 + $0x680] sm:$0xff]
                %283 = vst [vmem:[%s177 + $0x1a0] sm:$0xff] %v282
                %v284 = vld [vmem:[%s176 + $0x688] sm:$0xff]
                %285 = vst [vmem:[%s177 + $0x1a8] sm:$0xff] %v284
                %v286 = vld [vmem:[%s176 + $0x6c0] sm:$0xff]
                %287 = vst [vmem:[%s177 + $0x1b0] sm:$0xff] %v286
                %v288 = vld [vmem:[%s176 + $0x6c8] sm:$0xff]
                %289 = vst [vmem:[%s177 + $0x1b8] sm:$0xff] %v288
                %v290 = vld [vmem:[%s176 + $0x700] sm:$0xff]
                %291 = vst [vmem:[%s177 + $0x1c0] sm:$0xff] %v290
                %v292 = vld [vmem:[%s176 + $0x708] sm:$0xff]
                %293 = vst [vmem:[%s177 + $0x1c8] sm:$0xff] %v292
                %v294 = vld [vmem:[%s176 + $0x740] sm:$0xff]
                %295 = vst [vmem:[%s177 + $0x1d0] sm:$0xff] %v294
                %v296 = vld [vmem:[%s176 + $0x748] sm:$0xff]
                %297 = vst [vmem:[%s177 + $0x1d8] sm:$0xff] %v296
                %v298 = vld [vmem:[%s176 + $0x780] sm:$0xff]
                %299 = vst [vmem:[%s177 + $0x1e0] sm:$0xff] %v298
                %v300 = vld [vmem:[%s176 + $0x788] sm:$0xff]
                %301 = vst [vmem:[%s177 + $0x1e8] sm:$0xff] %v300
                %v302 = vld [vmem:[%s176 + $0x7c0] sm:$0xff]
                %303 = vst [vmem:[%s177 + $0x1f0] sm:$0xff] %v302
                %v304 = vld [vmem:[%s176 + $0x7c8] sm:$0xff]
                %305 = vst [vmem:[%s177 + $0x1f8] sm:$0xff] %v304
              $region41: #{gmodel_forward.9} parent=35 // loop_footer
                %s175 = sadd.s32 1, %s171
              $region42: #{gmodel_forward.9} parent=35 // loop_footer_branch
                %170 = sbr.rel target = $region38
              $region43: #{gmodel_forward.9} parent=35 // loop_exit
                _
            $region36: #{gmodel_forward.9} parent=31 // pred_fallthru
              _
            // Predicated region
            $region44: #{gmodel_forward.9} parent=31 // pred_check
              _
            $region45: #{gmodel_forward.9} parent=31 // pred_check_branch
              %307 = sbr.rel target = $region47
            $region46: #{gmodel_forward.9} parent=31 // pred_region
              _
            $region47: #{gmodel_forward.9} parent=31 // pred_fallthru
              _
          $region32: #{gmodel_forward.9} parent=27 // pred_fallthru
            _
          %308 = vnop
        $region28: #{gmodel_forward.9} parent=19 // pred_fallthru
          _
      $region20: #{gmodel_forward.9} parent=5 // pred_fallthru
        _
      %p309 = scmp.le.s32.totalorder 1, %s9
      %p310 = scmp.lt.s32.totalorder %s9, 17
      %p311 = pnand %p309, %p310
      %p312 = pneg %p311
      // Predicated region
      $region48: #{gmodel_forward.9} parent=5 // pred_check
        _
      $region49: #{gmodel_forward.9} parent=5 // pred_check_branch
        %314 = sbr.rel (%p311) target = $region51
      $region50: #{gmodel_forward.9} parent=5 // pred_region
        %s315 = ssub.s32 %s9, 1
        %s316 = sand.u32 %s83, 1
        %s317 = sand.u32 %s83, 1
        %s318 = smul.addr %s317, 512
        %s319 = scalar_lea.vmem [#allocation2], %s318
        // Predicated region
        $region52: #{gmodel_forward.9} parent=50 // pred_check
          %p320 = pneg %p96
        $region53: #{gmodel_forward.9} parent=50 // pred_check_branch
          %322 = sbr.rel (%p320) target = $region55
        $region54: #{gmodel_forward.9} parent=50 // pred_region
          _
        $region55: #{gmodel_forward.9} parent=50 // pred_fallthru
          _
        %p323 = pneg %p42
        %p324 = pneg %p39
        %p325 = scmp.lt.s32.totalorder %s18, 3
        %s326 = scalar_select %p325, %s18, 3
        %s327 = smul.addr %s326, 2
        %s328 = smul.addr %s327, 4
        %s329 = scalar_lea.vmem %s1, %s328
        %p330 = pneg %p68
        %p331 = pneg %p65
        %s332 = sand.u32 %s83, 1
        %s333 = sand.u32 %s83, 1
        %s334 = smul.addr %s333, 512
        %s335 = scalar_lea.vmem [#allocation2], %s334
        %p336 = pneg %p96
        %p337 = pneg %p93
        %p338 = pneg %p124
        %p339 = pneg %p121
        %s340 = smul.u32 4, %s19
        %p341 = scmp.lt.s32.totalorder %s18, 3
        %s342 = scalar_select %p341, %s18, 3
        %p343 = scmp.lt.s32.totalorder %s340, 15
        %s344 = scalar_select %p343, %s340, 15
        %s345 = smul.addr %s342, 16
        %s346 = sadd.s32 %s344, %s345
        %s347 = smul.addr %s346, 8
        %s348 = scalar_lea.vmem %s3, %s347
        %p349 = scmp.lt.s32.totalorder %s18, 3
        %s350 = scalar_select %p349, %s18, 3
        %s351 = smul.addr %s350, 2
        %s352 = smul.addr %s351, 4
        %s353 = scalar_lea.vmem %s1, %s352
        %s354 = smul.u32 4, %s19
        %s355 = smul.u32 4, %s19
        %p356 = scmp.lt.s32.totalorder %s18, 3
        %s357 = scalar_select %p356, %s18, 3
        %p358 = scmp.lt.s32.totalorder %s355, 15
        %s359 = scalar_select %p358, %s355, 15
        %s360 = smul.addr %s357, 16
        %s361 = sadd.s32 %s359, %s360
        %s362 = smul.addr %s361, 8
        %s363 = scalar_lea.vmem %s3, %s362
        %s364 = smul.u32 4, %s19
        %v365 = vld [vmem:[%s353] sm:$0xff]
        %v366 = vld [vmem:[%s319] sm:$0xff]
        %v367 = vld [vmem:[%s319 + $0x8] sm:$0xff]
        %v368 = vld [vmem:[%s319 + $0x10] sm:$0xff]
        %v369 = vld [vmem:[%s319 + $0x18] sm:$0xff]
        %v370 = vld [vmem:[%s319 + $0x20] sm:$0xff]
        %v371 = vld [vmem:[%s319 + $0x28] sm:$0xff]
        %v372 = vld [vmem:[%s319 + $0x30] sm:$0xff]
        %v373 = vld [vmem:[%s319 + $0x38] sm:$0xff]
        %v374 = vld [vmem:[%s319 + $0x40] sm:$0xff]
        %v375 = vld [vmem:[%s319 + $0x48] sm:$0xff]
        %v376 = vld [vmem:[%s319 + $0x50] sm:$0xff]
        %v377 = vld [vmem:[%s319 + $0x58] sm:$0xff]
        %v378 = vld [vmem:[%s319 + $0x60] sm:$0xff]
        %v379 = vld [vmem:[%s319 + $0x68] sm:$0xff]
        %v380 = vld [vmem:[%s319 + $0x70] sm:$0xff]
        %v381 = vld [vmem:[%s319 + $0x78] sm:$0xff]
        %v382 = vld [vmem:[%s319 + $0x80] sm:$0xff]
        %v383 = vld [vmem:[%s319 + $0x88] sm:$0xff]
        %v384 = vld [vmem:[%s319 + $0x90] sm:$0xff]
        %v385 = vld [vmem:[%s319 + $0x98] sm:$0xff]
        %v386 = vld [vmem:[%s319 + $0xa0] sm:$0xff]
        %v387 = vld [vmem:[%s319 + $0xa8] sm:$0xff]
        %v388 = vld [vmem:[%s319 + $0xb0] sm:$0xff]
        %v389 = vld [vmem:[%s319 + $0xb8] sm:$0xff]
        %v390 = vld [vmem:[%s319 + $0xc0] sm:$0xff]
        %v391 = vld [vmem:[%s319 + $0xc8] sm:$0xff]
        %v392 = vld [vmem:[%s319 + $0xd0] sm:$0xff]
        %v393 = vld [vmem:[%s319 + $0xd8] sm:$0xff]
        %v394 = vld [vmem:[%s319 + $0xe0] sm:$0xff]
        %v395 = vld [vmem:[%s319 + $0xe8] sm:$0xff]
        %v396 = vld [vmem:[%s319 + $0xf0] sm:$0xff]
        %v397 = vld [vmem:[%s319 + $0xf8] sm:$0xff]
        %v398 = vld [vmem:[%s319 + $0x100] sm:$0xff]
        %v399 = vld [vmem:[%s319 + $0x108] sm:$0xff]
        %v400 = vld [vmem:[%s319 + $0x110] sm:$0xff]
        %v401 = vld [vmem:[%s319 + $0x118] sm:$0xff]
        %v402 = vld [vmem:[%s319 + $0x120] sm:$0xff]
        %v403 = vld [vmem:[%s319 + $0x128] sm:$0xff]
        %v404 = vld [vmem:[%s319 + $0x130] sm:$0xff]
        %v405 = vld [vmem:[%s319 + $0x138] sm:$0xff]
        %v406 = vld [vmem:[%s319 + $0x140] sm:$0xff]
        %v407 = vld [vmem:[%s319 + $0x148] sm:$0xff]
        %v408 = vld [vmem:[%s319 + $0x150] sm:$0xff]
        %v409 = vld [vmem:[%s319 + $0x158] sm:$0xff]
        %v410 = vld [vmem:[%s319 + $0x160] sm:$0xff]
        %v411 = vld [vmem:[%s319 + $0x168] sm:$0xff]
        %v412 = vld [vmem:[%s319 + $0x170] sm:$0xff]
        %v413 = vld [vmem:[%s319 + $0x178] sm:$0xff]
        %v414 = vld [vmem:[%s319 + $0x180] sm:$0xff]
        %v415 = vld [vmem:[%s319 + $0x188] sm:$0xff]
        %v416 = vld [vmem:[%s319 + $0x190] sm:$0xff]
        %v417 = vld [vmem:[%s319 + $0x198] sm:$0xff]
        %v418 = vld [vmem:[%s319 + $0x1a0] sm:$0xff]
        %v419 = vld [vmem:[%s319 + $0x1a8] sm:$0xff]
        %v420 = vld [vmem:[%s319 + $0x1b0] sm:$0xff]
        %v421 = vld [vmem:[%s319 + $0x1b8] sm:$0xff]
        %v422 = vld [vmem:[%s319 + $0x1c0] sm:$0xff]
        %v423 = vld [vmem:[%s319 + $0x1c8] sm:$0xff]
        %v424 = vld [vmem:[%s319 + $0x1d0] sm:$0xff]
        %v425 = vld [vmem:[%s319 + $0x1d8] sm:$0xff]
        %v426 = vld [vmem:[%s319 + $0x1e0] sm:$0xff]
        %v427 = vld [vmem:[%s319 + $0x1e8] sm:$0xff]
        %v428 = vld [vmem:[%s319 + $0x1f0] sm:$0xff]
        %v429 = vld [vmem:[%s319 + $0x1f8] sm:$0xff]
        %v430 = vld [vmem:[%s0] sm:$0xff]
        %432 = vset.pattern.permute.xlu0 0
        %433 = vperm.xlu0 %432, %v430
        %v434 = vpop.permute.xlu0 %433
        %v437 = vunpack.c.l.b16 %v365
        %v438 = vunpack.c.h.b16 %v365
        %v439 = vpack.c.b16 %v437, %v437
        %v440 = vpack.c.b16 %v438, %v438
        %v507 = vunpack.c.l.b16 %v366
        %v508 = vunpack.c.h.b16 %v366
        %v509 = vunpack.c.l.b16 %v367
        %v510 = vunpack.c.h.b16 %v367
        %v511 = vunpack.c.l.b16 %v368
        %v512 = vunpack.c.h.b16 %v368
        %v513 = vunpack.c.l.b16 %v369
        %v514 = vunpack.c.h.b16 %v369
        %v515 = vunpack.c.l.b16 %v370
        %v516 = vunpack.c.h.b16 %v370
        %v517 = vunpack.c.l.b16 %v371
        %v518 = vunpack.c.h.b16 %v371
        %v519 = vunpack.c.l.b16 %v372
        %v520 = vunpack.c.h.b16 %v372
        %v521 = vunpack.c.l.b16 %v373
        %v522 = vunpack.c.h.b16 %v373
        %v523 = vunpack.c.l.b16 %v374
        %v524 = vunpack.c.h.b16 %v374
        %v525 = vunpack.c.l.b16 %v375
        %v526 = vunpack.c.h.b16 %v375
        %v527 = vunpack.c.l.b16 %v376
        %v528 = vunpack.c.h.b16 %v376
        %v529 = vunpack.c.l.b16 %v377
        %v530 = vunpack.c.h.b16 %v377
        %v531 = vunpack.c.l.b16 %v378
        %v532 = vunpack.c.h.b16 %v378
        %v533 = vunpack.c.l.b16 %v379
        %v534 = vunpack.c.h.b16 %v379
        %v535 = vunpack.c.l.b16 %v380
        %v536 = vunpack.c.h.b16 %v380
        %v537 = vunpack.c.l.b16 %v381
        %v538 = vunpack.c.h.b16 %v381
        %v539 = vunpack.c.l.b16 %v382
        %v540 = vunpack.c.h.b16 %v382
        %v541 = vunpack.c.l.b16 %v383
        %v542 = vunpack.c.h.b16 %v383
        %v543 = vunpack.c.l.b16 %v384
        %v544 = vunpack.c.h.b16 %v384
        %v545 = vunpack.c.l.b16 %v385
        %v546 = vunpack.c.h.b16 %v385
        %v547 = vunpack.c.l.b16 %v386
        %v548 = vunpack.c.h.b16 %v386
        %v549 = vunpack.c.l.b16 %v387
        %v550 = vunpack.c.h.b16 %v387
        %v551 = vunpack.c.l.b16 %v388
        %v552 = vunpack.c.h.b16 %v388
        %v553 = vunpack.c.l.b16 %v389
        %v554 = vunpack.c.h.b16 %v389
        %v555 = vunpack.c.l.b16 %v390
        %v556 = vunpack.c.h.b16 %v390
        %v557 = vunpack.c.l.b16 %v391
        %v558 = vunpack.c.h.b16 %v391
        %v559 = vunpack.c.l.b16 %v392
        %v560 = vunpack.c.h.b16 %v392
        %v561 = vunpack.c.l.b16 %v393
        %v562 = vunpack.c.h.b16 %v393
        %v563 = vunpack.c.l.b16 %v394
        %v564 = vunpack.c.h.b16 %v394
        %v565 = vunpack.c.l.b16 %v395
        %v566 = vunpack.c.h.b16 %v395
        %v567 = vunpack.c.l.b16 %v396
        %v568 = vunpack.c.h.b16 %v396
        %v569 = vunpack.c.l.b16 %v397
        %v570 = vunpack.c.h.b16 %v397
        %v571 = vunpack.c.l.b16 %v398
        %v572 = vunpack.c.h.b16 %v398
        %v573 = vunpack.c.l.b16 %v399
        %v574 = vunpack.c.h.b16 %v399
        %v575 = vunpack.c.l.b16 %v400
        %v576 = vunpack.c.h.b16 %v400
        %v577 = vunpack.c.l.b16 %v401
        %v578 = vunpack.c.h.b16 %v401
        %v579 = vunpack.c.l.b16 %v402
        %v580 = vunpack.c.h.b16 %v402
        %v581 = vunpack.c.l.b16 %v403
        %v582 = vunpack.c.h.b16 %v403
        %v583 = vunpack.c.l.b16 %v404
        %v584 = vunpack.c.h.b16 %v404
        %v585 = vunpack.c.l.b16 %v405
        %v586 = vunpack.c.h.b16 %v405
        %v587 = vunpack.c.l.b16 %v406
        %v588 = vunpack.c.h.b16 %v406
        %v589 = vunpack.c.l.b16 %v407
        %v590 = vunpack.c.h.b16 %v407
        %v591 = vunpack.c.l.b16 %v408
        %v592 = vunpack.c.h.b16 %v408
        %v593 = vunpack.c.l.b16 %v409
        %v594 = vunpack.c.h.b16 %v409
        %v595 = vunpack.c.l.b16 %v410
        %v596 = vunpack.c.h.b16 %v410
        %v597 = vunpack.c.l.b16 %v411
        %v598 = vunpack.c.h.b16 %v411
        %v599 = vunpack.c.l.b16 %v412
        %v600 = vunpack.c.h.b16 %v412
        %v601 = vunpack.c.l.b16 %v413
        %v602 = vunpack.c.h.b16 %v413
        %v603 = vunpack.c.l.b16 %v414
        %v604 = vunpack.c.h.b16 %v414
        %v605 = vunpack.c.l.b16 %v415
        %v606 = vunpack.c.h.b16 %v415
        %v607 = vunpack.c.l.b16 %v416
        %v608 = vunpack.c.h.b16 %v416
        %v609 = vunpack.c.l.b16 %v417
        %v610 = vunpack.c.h.b16 %v417
        %v611 = vunpack.c.l.b16 %v418
        %v612 = vunpack.c.h.b16 %v418
        %v613 = vunpack.c.l.b16 %v419
        %v614 = vunpack.c.h.b16 %v419
        %v615 = vunpack.c.l.b16 %v420
        %v616 = vunpack.c.h.b16 %v420
        %v617 = vunpack.c.l.b16 %v421
        %v618 = vunpack.c.h.b16 %v421
        %v619 = vunpack.c.l.b16 %v422
        %v620 = vunpack.c.h.b16 %v422
        %v621 = vunpack.c.l.b16 %v423
        %v622 = vunpack.c.h.b16 %v423
        %v623 = vunpack.c.l.b16 %v424
        %v624 = vunpack.c.h.b16 %v424
        %v625 = vunpack.c.l.b16 %v425
        %v626 = vunpack.c.h.b16 %v425
        %v627 = vunpack.c.l.b16 %v426
        %v628 = vunpack.c.h.b16 %v426
        %v629 = vunpack.c.l.b16 %v427
        %v630 = vunpack.c.h.b16 %v427
        %v631 = vunpack.c.l.b16 %v428
        %v632 = vunpack.c.h.b16 %v428
        %v633 = vunpack.c.l.b16 %v429
        %v634 = vunpack.c.h.b16 %v429
        %v635 = vpack.c.b16 %v511, %v507
        %v636 = vpack.c.b16 %v512, %v508
        %v637 = vpack.c.b16 %v513, %v509
        %v638 = vpack.c.b16 %v514, %v510
        %v639 = vpack.c.b16 %v519, %v515
        %v640 = vpack.c.b16 %v520, %v516
        %v641 = vpack.c.b16 %v521, %v517
        %v642 = vpack.c.b16 %v522, %v518
        %v643 = vpack.c.b16 %v527, %v523
        %v644 = vpack.c.b16 %v528, %v524
        %v645 = vpack.c.b16 %v529, %v525
        %v646 = vpack.c.b16 %v530, %v526
        %v647 = vpack.c.b16 %v535, %v531
        %v648 = vpack.c.b16 %v536, %v532
        %v649 = vpack.c.b16 %v537, %v533
        %v650 = vpack.c.b16 %v538, %v534
        %v651 = vpack.c.b16 %v543, %v539
        %v652 = vpack.c.b16 %v544, %v540
        %v653 = vpack.c.b16 %v545, %v541
        %v654 = vpack.c.b16 %v546, %v542
        %v655 = vpack.c.b16 %v551, %v547
        %v656 = vpack.c.b16 %v552, %v548
        %v657 = vpack.c.b16 %v553, %v549
        %v658 = vpack.c.b16 %v554, %v550
        %v659 = vpack.c.b16 %v559, %v555
        %v660 = vpack.c.b16 %v560, %v556
        %v661 = vpack.c.b16 %v561, %v557
        %v662 = vpack.c.b16 %v562, %v558
        %v663 = vpack.c.b16 %v567, %v563
        %v664 = vpack.c.b16 %v568, %v564
        %v665 = vpack.c.b16 %v569, %v565
        %v666 = vpack.c.b16 %v570, %v566
        %v667 = vpack.c.b16 %v575, %v571
        %v668 = vpack.c.b16 %v576, %v572
        %v669 = vpack.c.b16 %v577, %v573
        %v670 = vpack.c.b16 %v578, %v574
        %v671 = vpack.c.b16 %v583, %v579
        %v672 = vpack.c.b16 %v584, %v580
        %v673 = vpack.c.b16 %v585, %v581
        %v674 = vpack.c.b16 %v586, %v582
        %v675 = vpack.c.b16 %v591, %v587
        %v676 = vpack.c.b16 %v592, %v588
        %v677 = vpack.c.b16 %v593, %v589
        %v678 = vpack.c.b16 %v594, %v590
        %v679 = vpack.c.b16 %v599, %v595
        %v680 = vpack.c.b16 %v600, %v596
        %v681 = vpack.c.b16 %v601, %v597
        %v682 = vpack.c.b16 %v602, %v598
        %v683 = vpack.c.b16 %v607, %v603
        %v684 = vpack.c.b16 %v608, %v604
        %v685 = vpack.c.b16 %v609, %v605
        %v686 = vpack.c.b16 %v610, %v606
        %v687 = vpack.c.b16 %v615, %v611
        %v688 = vpack.c.b16 %v616, %v612
        %v689 = vpack.c.b16 %v617, %v613
        %v690 = vpack.c.b16 %v618, %v614
        %v691 = vpack.c.b16 %v623, %v619
        %v692 = vpack.c.b16 %v624, %v620
        %v693 = vpack.c.b16 %v625, %v621
        %v694 = vpack.c.b16 %v626, %v622
        %v695 = vpack.c.b16 %v631, %v627
        %v696 = vpack.c.b16 %v632, %v628
        %v697 = vpack.c.b16 %v633, %v629
        %v698 = vpack.c.b16 %v634, %v630
        %763 = vmatprep.subr.bf16.mxu0 %v636
        %764 = vmatpush1.bf16.msra.mxu0 %v635
        %765 = vmatprep.subr.bf16.mxu0 %v640
        %766 = vmatpush1.bf16.msra.mxu0 %v639
        %767 = vmatprep.subr.bf16.mxu0 %v644
        %768 = vmatpush1.bf16.msra.mxu0 %v643
        %769 = vmatprep.subr.bf16.mxu0 %v648
        %770 = vmatpush1.bf16.msra.mxu0 %v647
        %771 = vmatprep.subr.bf16.mxu0 %v652
        %772 = vmatpush1.bf16.msra.mxu0 %v651
        %773 = vmatprep.subr.bf16.mxu0 %v656
        %774 = vmatpush1.bf16.msra.mxu0 %v655
        %775 = vmatprep.subr.bf16.mxu0 %v660
        %776 = vmatpush1.bf16.msra.mxu0 %v659
        %777 = vmatprep.subr.bf16.mxu0 %v664
        %778 = vmatpush1.bf16.msra.mxu0 %v663
        %779 = vmatprep.subr.bf16.mxu0 %v668
        %780 = vmatpush1.bf16.msra.mxu0 %v667
        %781 = vmatprep.subr.bf16.mxu0 %v672
        %782 = vmatpush1.bf16.msra.mxu0 %v671
        %783 = vmatprep.subr.bf16.mxu0 %v676
        %784 = vmatpush1.bf16.msra.mxu0 %v675
        %785 = vmatprep.subr.bf16.mxu0 %v680
        %786 = vmatpush1.bf16.msra.mxu0 %v679
        %787 = vmatprep.subr.bf16.mxu0 %v684
        %788 = vmatpush1.bf16.msra.mxu0 %v683
        %789 = vmatprep.subr.bf16.mxu0 %v688
        %790 = vmatpush1.bf16.msra.mxu0 %v687
        %791 = vmatprep.subr.bf16.mxu0 %v692
        %792 = vmatpush1.bf16.msra.mxu0 %v691
        %793 = vmatprep.subr.bf16.mxu0 %v696
        %794 = vmatpush1.bf16.msra.mxu0 %v695
        %795 = vmatprep.mubr.bf16.mxu0 %v440
        %796 = vmatmul.mubr.bf16.gmra.mrb[0].mxu0 %v439
        %v797 = vpop.f32.mrb[0].mxu0
        %v798 = vadd.f32 %v434, %v797
        %v799 = vpop.f32.mrb[0].mxu0
        %v800 = vadd.f32 %v434, %v799
        %v801 = vpop.f32.mrb[0].mxu0
        %v802 = vpop.f32.mrb[0].mxu0
        %803 = vdwg.mxu0
        %804 = vmatprep.subr.bf16.mxu0 %v638
        %805 = vmatpush1.bf16.msra.mxu0 %v637
        %806 = vmatprep.subr.bf16.mxu0 %v642
        %807 = vmatpush1.bf16.msra.mxu0 %v641
        %808 = vmatprep.subr.bf16.mxu0 %v646
        %809 = vmatpush1.bf16.msra.mxu0 %v645
        %810 = vmatprep.subr.bf16.mxu0 %v650
        %811 = vmatpush1.bf16.msra.mxu0 %v649
        %812 = vmatprep.subr.bf16.mxu0 %v654
        %813 = vmatpush1.bf16.msra.mxu0 %v653
        %814 = vmatprep.subr.bf16.mxu0 %v658
        %815 = vmatpush1.bf16.msra.mxu0 %v657
        %816 = vmatprep.subr.bf16.mxu0 %v662
        %817 = vmatpush1.bf16.msra.mxu0 %v661
        %818 = vmatprep.subr.bf16.mxu0 %v666
        %819 = vmatpush1.bf16.msra.mxu0 %v665
        %820 = vmatprep.subr.bf16.mxu0 %v670
        %821 = vmatpush1.bf16.msra.mxu0 %v669
        %822 = vmatprep.subr.bf16.mxu0 %v674
        %823 = vmatpush1.bf16.msra.mxu0 %v673
        %824 = vmatprep.subr.bf16.mxu0 %v678
        %825 = vmatpush1.bf16.msra.mxu0 %v677
        %826 = vmatprep.subr.bf16.mxu0 %v682
        %827 = vmatpush1.bf16.msra.mxu0 %v681
        %828 = vmatprep.subr.bf16.mxu0 %v686
        %829 = vmatpush1.bf16.msra.mxu0 %v685
        %830 = vmatprep.subr.bf16.mxu0 %v690
        %831 = vmatpush1.bf16.msra.mxu0 %v689
        %832 = vmatprep.subr.bf16.mxu0 %v694
        %833 = vmatpush1.bf16.msra.mxu0 %v693
        %834 = vmatprep.subr.bf16.mxu0 %v698
        %835 = vmatpush1.bf16.msra.mxu0 %v697
        %836 = vmatprep.mubr.bf16.mxu0 %v440
        %837 = vmatmul.mubr.bf16.gmra.mrb[0].mxu0 %v439
        %v838 = vpop.f32.mrb[0].mxu0
        %v839 = vadd.f32 %v434, %v838
        %v840 = vpop.f32.mrb[0].mxu0
        %v841 = vadd.f32 %v434, %v840
        %v842 = vpop.f32.mrb[0].mxu0
        %v843 = vpop.f32.mrb[0].mxu0
        %844 = vdwg.mxu0
        %v845 = vtanh.pop %v798
        %v846 = vtanh.pop %v800
        %v847 = vtanh.pop %v839
        %v848 = vtanh.pop %v841
        %849 = vst [vmem:[%s363] sm:$0xff] %v845
        %850 = vst [vmem:[%s363 + $0x8] sm:$0xff] %v846
        %851 = vst [vmem:[%s363 + $0x10] sm:$0xff] %v847
        %852 = vst [vmem:[%s363 + $0x18] sm:$0xff] %v848
        %s853 = smul.u32 4, %s19
        %p854 = scmp.lt.s32.totalorder %s18, 3
        %s855 = scalar_select %p854, %s18, 3
        %p856 = scmp.lt.s32.totalorder %s853, 15
        %s857 = scalar_select %p856, %s853, 15
        %s858 = smul.addr %s855, 16
        %s859 = sadd.s32 %s857, %s858
        %s860 = smul.addr %s859, 8
        %s861 = scalar_lea.vmem %s3, %s860
        // Predicated region
        $region56: #{gmodel_forward.9} parent=50 // pred_check
          %p862 = pneg %p121
        $region57: #{gmodel_forward.9} parent=50 // pred_check_branch
          %864 = sbr.rel (%p862) target = $region59
        $region58: #{gmodel_forward.9} parent=50 // pred_region
          %s865 = smul.u32 4, %s19
        $region59: #{gmodel_forward.9} parent=50 // pred_fallthru
          _
      $region51: #{gmodel_forward.9} parent=5 // pred_fallthru
        _
      %p866 = scmp.le.s32.totalorder 2, %s9
      // Predicated region
      $region60: #{gmodel_forward.9} parent=5 // pred_check
        %p867 = pneg %p866
      $region61: #{gmodel_forward.9} parent=5 // pred_check_branch
        %869 = sbr.rel (%p867) target = $region63
      $region62: #{gmodel_forward.9} parent=5 // pred_region
        %s870 = ssub.s32 %s9, 2
        // Predicated region
        $region64: #{gmodel_forward.9} parent=62 // pred_check
          %p871 = pneg %p127
        $region65: #{gmodel_forward.9} parent=62 // pred_check_branch
          %873 = sbr.rel (%p871) target = $region67
        $region66: #{gmodel_forward.9} parent=62 // pred_region
          %s874 = smul.u32 4, %s21
          %p875 = scmp.lt.s32.totalorder %s20, 3
          %s876 = scalar_select %p875, %s20, 3
          %p877 = scmp.lt.s32.totalorder %s874, 15
          %s878 = scalar_select %p877, %s874, 15
          %s879 = smul.addr %s876, 16
          %s880 = sadd.s32 %s878, %s879
          %s881 = smul.addr %s880, 8
          %s882 = scalar_lea.vmem %s3, %s881
        $region67: #{gmodel_forward.9} parent=62 // pred_fallthru
          _
      $region63: #{gmodel_forward.9} parent=5 // pred_fallthru
        _
    $region6: #{gmodel_forward.9} parent=1 // loop_footer
      %s13 = sadd.s32 1, %s9
    $region7: #{gmodel_forward.9} parent=1 // loop_footer_branch
      %8 = sbr.rel target = $region3
    $region8: #{gmodel_forward.9} parent=1 // loop_exit
      _

// kernel: squeeze.141
$region0: #{squeeze.141}
  %s0 = inlined_call_operand.vmem [shape: f32[4,2048], index: 0, kind: input, shape index: {}]
  %s1 = inlined_call_operand.vmem [shape: f32[2,2,2,32,32], index: 1, kind: output, shape index: {}]
  $region1: #{squeeze.141} parent=0
    #allocation0 [shape = 'u8[65536]{0}', space=vmem, size = 0x10000, scoped, tag = 'scoped mem for input reshape']
    %s3 = sshllo.u32 0, 4
    %s4 = smul.addr 4, 15
    %s5 = scalar_lea.vmem %s0, %s4
    %v6 = vld [vmem:[%s5] sm:%s3]
    %s7 = scalar_lea.vmem [#allocation0], 120
    %8 = vst [vmem:[%s7] sm:%s3] %v6
    %s9 = smul.addr 4, 14
    %s10 = scalar_lea.vmem %s0, %s9
    %v11 = vld [vmem:[%s10] sm:%s3]
    %s12 = scalar_lea.vmem [#allocation0], 112
    %13 = vst [vmem:[%s12] sm:%s3] %v11
    %s14 = smul.addr 4, 13
    %s15 = scalar_lea.vmem %s0, %s14
    %v16 = vld [vmem:[%s15] sm:%s3]
    %s17 = scalar_lea.vmem [#allocation0], 104
    %18 = vst [vmem:[%s17] sm:%s3] %v16
    %s19 = smul.addr 4, 12
    %s20 = scalar_lea.vmem %s0, %s19
    %v21 = vld [vmem:[%s20] sm:%s3]
    %s22 = scalar_lea.vmem [#allocation0], 96
    %23 = vst [vmem:[%s22] sm:%s3] %v21
    %s24 = smul.addr 4, 11
    %s25 = scalar_lea.vmem %s0, %s24
    %v26 = vld [vmem:[%s25] sm:%s3]
    %s27 = scalar_lea.vmem [#allocation0], 88
    %28 = vst [vmem:[%s27] sm:%s3] %v26
    %s29 = smul.addr 4, 10
    %s30 = scalar_lea.vmem %s0, %s29
    %v31 = vld [vmem:[%s30] sm:%s3]
    %s32 = scalar_lea.vmem [#allocation0], 80
    %33 = vst [vmem:[%s32] sm:%s3] %v31
    %s34 = smul.addr 4, 9
    %s35 = scalar_lea.vmem %s0, %s34
    %v36 = vld [vmem:[%s35] sm:%s3]
    %s37 = scalar_lea.vmem [#allocation0], 72
    %38 = vst [vmem:[%s37] sm:%s3] %v36
    %s39 = smul.addr 4, 8
    %s40 = scalar_lea.vmem %s0, %s39
    %v41 = vld [vmem:[%s40] sm:%s3]
    %s42 = scalar_lea.vmem [#allocation0], 64
    %43 = vst [vmem:[%s42] sm:%s3] %v41
    %s44 = smul.addr 4, 7
    %s45 = scalar_lea.vmem %s0, %s44
    %v46 = vld [vmem:[%s45] sm:%s3]
    %s47 = scalar_lea.vmem [#allocation0], 56
    %48 = vst [vmem:[%s47] sm:%s3] %v46
    %s49 = smul.addr 4, 6
    %s50 = scalar_lea.vmem %s0, %s49
    %v51 = vld [vmem:[%s50] sm:%s3]
    %s52 = scalar_lea.vmem [#allocation0], 48
    %53 = vst [vmem:[%s52] sm:%s3] %v51
    %s54 = smul.addr 4, 5
    %s55 = scalar_lea.vmem %s0, %s54
    %v56 = vld [vmem:[%s55] sm:%s3]
    %s57 = scalar_lea.vmem [#allocation0], 40
    %58 = vst [vmem:[%s57] sm:%s3] %v56
    %s59 = smul.addr 4, 4
    %s60 = scalar_lea.vmem %s0, %s59
    %v61 = vld [vmem:[%s60] sm:%s3]
    %s62 = scalar_lea.vmem [#allocation0], 32
    %63 = vst [vmem:[%s62] sm:%s3] %v61
    %s64 = smul.addr 4, 3
    %s65 = scalar_lea.vmem %s0, %s64
    %v66 = vld [vmem:[%s65] sm:%s3]
    %s67 = scalar_lea.vmem [#allocation0], 24
    %68 = vst [vmem:[%s67] sm:%s3] %v66
    %s69 = smul.addr 4, 2
    %s70 = scalar_lea.vmem %s0, %s69
    %v71 = vld [vmem:[%s70] sm:%s3]
    %s72 = scalar_lea.vmem [#allocation0], 16
    %73 = vst [vmem:[%s72] sm:%s3] %v71
    %s74 = scalar_lea.vmem %s0, 4
    %v75 = vld [vmem:[%s74] sm:%s3]
    %s76 = scalar_lea.vmem [#allocation0], 8
    %77 = vst [vmem:[%s76] sm:%s3] %v75
    %v78 = vld [vmem:[%s0] sm:%s3]
    %79 = vst [vmem:[#allocation0] sm:%s3] %v78
    %v80 = vld [vmem:[#allocation0] sm:$0xf]
    %vm81 = vcmask 261120
    %82 = vst.msk [vmem:[%s1] sm:$0x1] %vm81, %v80
    %s83 = scalar_lea.vmem %s1, 63
    %84 = vst.msk [vmem:[%s83] sm:$0x2] %vm81, %v80
    %s85 = scalar_lea.vmem %s1, 126
    %86 = vst.msk [vmem:[%s85] sm:$0x4] %vm81, %v80
    %s87 = scalar_lea.vmem %s1, 189
    %88 = vst.msk [vmem:[%s87] sm:$0x8] %vm81, %v80
    %s89 = scalar_lea.vmem [#allocation0], 8
    %v90 = vld [vmem:[%s89] sm:$0xf]
    %vm91 = vcmask 261120
    %s92 = scalar_lea.vmem %s1, 4
    %93 = vst.msk [vmem:[%s92] sm:$0x1] %vm91, %v90
    %s94 = scalar_lea.vmem %s1, 67
    %95 = vst.msk [vmem:[%s94] sm:$0x2] %vm91, %v90
    %s96 = scalar_lea.vmem %s1, 130
    %97 = vst.msk [vmem:[%s96] sm:$0x4] %vm91, %v90
    %s98 = scalar_lea.vmem %s1, 193
    %99 = vst.msk [vmem:[%s98] sm:$0x8] %vm91, %v90
    %s100 = scalar_lea.vmem [#allocation0], 16
    %v101 = vld [vmem:[%s100] sm:$0xf]
    %vm102 = vcmask 261120
    %s103 = scalar_lea.vmem %s1, 8
    %104 = vst.msk [vmem:[%s103] sm:$0x1] %vm102, %v101
    %s105 = scalar_lea.vmem %s1, 71
    %106 = vst.msk [vmem:[%s105] sm:$0x2] %vm102, %v101
    %s107 = scalar_lea.vmem %s1, 134
    %108 = vst.msk [vmem:[%s107] sm:$0x4] %vm102, %v101
    %s109 = scalar_lea.vmem %s1, 197
    %110 = vst.msk [vmem:[%s109] sm:$0x8] %vm102, %v101
    %s111 = scalar_lea.vmem [#allocation0], 24
    %v112 = vld [vmem:[%s111] sm:$0xf]
    %vm113 = vcmask 261120
    %s114 = scalar_lea.vmem %s1, 12
    %115 = vst.msk [vmem:[%s114] sm:$0x1] %vm113, %v112
    %s116 = scalar_lea.vmem %s1, 75
    %117 = vst.msk [vmem:[%s116] sm:$0x2] %vm113, %v112
    %s118 = scalar_lea.vmem %s1, 138
    %119 = vst.msk [vmem:[%s118] sm:$0x4] %vm113, %v112
    %s120 = scalar_lea.vmem %s1, 201
    %121 = vst.msk [vmem:[%s120] sm:$0x8] %vm113, %v112
    %s122 = scalar_lea.vmem [#allocation0], 32
    %v123 = vld [vmem:[%s122] sm:$0xf]
    %vm124 = vcmask 261120
    %s125 = scalar_lea.vmem %s1, 16
    %126 = vst.msk [vmem:[%s125] sm:$0x1] %vm124, %v123
    %s127 = scalar_lea.vmem %s1, 79
    %128 = vst.msk [vmem:[%s127] sm:$0x2] %vm124, %v123
    %s129 = scalar_lea.vmem %s1, 142
    %130 = vst.msk [vmem:[%s129] sm:$0x4] %vm124, %v123
    %s131 = scalar_lea.vmem %s1, 205
    %132 = vst.msk [vmem:[%s131] sm:$0x8] %vm124, %v123
    %s133 = scalar_lea.vmem [#allocation0], 40
    %v134 = vld [vmem:[%s133] sm:$0xf]
    %vm135 = vcmask 261120
    %s136 = scalar_lea.vmem %s1, 20
    %137 = vst.msk [vmem:[%s136] sm:$0x1] %vm135, %v134
    %s138 = scalar_lea.vmem %s1, 83
    %139 = vst.msk [vmem:[%s138] sm:$0x2] %vm135, %v134
    %s140 = scalar_lea.vmem %s1, 146
    %141 = vst.msk [vmem:[%s140] sm:$0x4] %vm135, %v134
    %s142 = scalar_lea.vmem %s1, 209
    %143 = vst.msk [vmem:[%s142] sm:$0x8] %vm135, %v134
    %s144 = scalar_lea.vmem [#allocation0], 48
    %v145 = vld [vmem:[%s144] sm:$0xf]
    %vm146 = vcmask 261120
    %s147 = scalar_lea.vmem %s1, 24
    %148 = vst.msk [vmem:[%s147] sm:$0x1] %vm146, %v145
    %s149 = scalar_lea.vmem %s1, 87
    %150 = vst.msk [vmem:[%s149] sm:$0x2] %vm146, %v145
    %s151 = scalar_lea.vmem %s1, 150
    %152 = vst.msk [vmem:[%s151] sm:$0x4] %vm146, %v145
    %s153 = scalar_lea.vmem %s1, 213
    %154 = vst.msk [vmem:[%s153] sm:$0x8] %vm146, %v145
    %s155 = scalar_lea.vmem [#allocation0], 56
    %v156 = vld [vmem:[%s155] sm:$0xf]
    %vm157 = vcmask 261120
    %s158 = scalar_lea.vmem %s1, 28
    %159 = vst.msk [vmem:[%s158] sm:$0x1] %vm157, %v156
    %s160 = scalar_lea.vmem %s1, 91
    %161 = vst.msk [vmem:[%s160] sm:$0x2] %vm157, %v156
    %s162 = scalar_lea.vmem %s1, 154
    %163 = vst.msk [vmem:[%s162] sm:$0x4] %vm157, %v156
    %s164 = scalar_lea.vmem %s1, 217
    %165 = vst.msk [vmem:[%s164] sm:$0x8] %vm157, %v156
    %s166 = scalar_lea.vmem [#allocation0], 64
    %v167 = vld [vmem:[%s166] sm:$0xf]
    %vm168 = vcmask 261120
    %s169 = scalar_lea.vmem %s1, 32
    %170 = vst.msk [vmem:[%s169] sm:$0x1] %vm168, %v167
    %s171 = scalar_lea.vmem %s1, 95
    %172 = vst.msk [vmem:[%s171] sm:$0x2] %vm168, %v167
    %s173 = scalar_lea.vmem %s1, 158
    %174 = vst.msk [vmem:[%s173] sm:$0x4] %vm168, %v167
    %s175 = scalar_lea.vmem %s1, 221
    %176 = vst.msk [vmem:[%s175] sm:$0x8] %vm168, %v167
    %s177 = scalar_lea.vmem [#allocation0], 72
    %v178 = vld [vmem:[%s177] sm:$0xf]
    %vm179 = vcmask 261120
    %s180 = scalar_lea.vmem %s1, 36
    %181 = vst.msk [vmem:[%s180] sm:$0x1] %vm179, %v178
    %s182 = scalar_lea.vmem %s1, 99
    %183 = vst.msk [vmem:[%s182] sm:$0x2] %vm179, %v178
    %s184 = scalar_lea.vmem %s1, 162
    %185 = vst.msk [vmem:[%s184] sm:$0x4] %vm179, %v178
    %s186 = scalar_lea.vmem %s1, 225
    %187 = vst.msk [vmem:[%s186] sm:$0x8] %vm179, %v178
    %s188 = scalar_lea.vmem [#allocation0], 80
    %v189 = vld [vmem:[%s188] sm:$0xf]
    %vm190 = vcmask 261120
    %s191 = scalar_lea.vmem %s1, 40
    %192 = vst.msk [vmem:[%s191] sm:$0x1] %vm190, %v189
    %s193 = scalar_lea.vmem %s1, 103
    %194 = vst.msk [vmem:[%s193] sm:$0x2] %vm190, %v189
    %s195 = scalar_lea.vmem %s1, 166
    %196 = vst.msk [vmem:[%s195] sm:$0x4] %vm190, %v189
    %s197 = scalar_lea.vmem %s1, 229
    %198 = vst.msk [vmem:[%s197] sm:$0x8] %vm190, %v189
    %s199 = scalar_lea.vmem [#allocation0], 88
    %v200 = vld [vmem:[%s199] sm:$0xf]
    %vm201 = vcmask 261120
    %s202 = scalar_lea.vmem %s1, 44
    %203 = vst.msk [vmem:[%s202] sm:$0x1] %vm201, %v200
    %s204 = scalar_lea.vmem %s1, 107
    %205 = vst.msk [vmem:[%s204] sm:$0x2] %vm201, %v200
    %s206 = scalar_lea.vmem %s1, 170
    %207 = vst.msk [vmem:[%s206] sm:$0x4] %vm201, %v200
    %s208 = scalar_lea.vmem %s1, 233
    %209 = vst.msk [vmem:[%s208] sm:$0x8] %vm201, %v200
    %s210 = scalar_lea.vmem [#allocation0], 96
    %v211 = vld [vmem:[%s210] sm:$0xf]
    %vm212 = vcmask 261120
    %s213 = scalar_lea.vmem %s1, 48
    %214 = vst.msk [vmem:[%s213] sm:$0x1] %vm212, %v211
    %s215 = scalar_lea.vmem %s1, 111
    %216 = vst.msk [vmem:[%s215] sm:$0x2] %vm212, %v211
    %s217 = scalar_lea.vmem %s1, 174
    %218 = vst.msk [vmem:[%s217] sm:$0x4] %vm212, %v211
    %s219 = scalar_lea.vmem %s1, 237
    %220 = vst.msk [vmem:[%s219] sm:$0x8] %vm212, %v211
    %s221 = scalar_lea.vmem [#allocation0], 104
    %v222 = vld [vmem:[%s221] sm:$0xf]
    %vm223 = vcmask 261120
    %s224 = scalar_lea.vmem %s1, 52
    %225 = vst.msk [vmem:[%s224] sm:$0x1] %vm223, %v222
    %s226 = scalar_lea.vmem %s1, 115
    %227 = vst.msk [vmem:[%s226] sm:$0x2] %vm223, %v222
    %s228 = scalar_lea.vmem %s1, 178
    %229 = vst.msk [vmem:[%s228] sm:$0x4] %vm223, %v222
    %s230 = scalar_lea.vmem %s1, 241
    %231 = vst.msk [vmem:[%s230] sm:$0x8] %vm223, %v222
    %s232 = scalar_lea.vmem [#allocation0], 112
    %v233 = vld [vmem:[%s232] sm:$0xf]
    %vm234 = vcmask 261120
    %s235 = scalar_lea.vmem %s1, 56
    %236 = vst.msk [vmem:[%s235] sm:$0x1] %vm234, %v233
    %s237 = scalar_lea.vmem %s1, 119
    %238 = vst.msk [vmem:[%s237] sm:$0x2] %vm234, %v233
    %s239 = scalar_lea.vmem %s1, 182
    %240 = vst.msk [vmem:[%s239] sm:$0x4] %vm234, %v233
    %s241 = scalar_lea.vmem %s1, 245
    %242 = vst.msk [vmem:[%s241] sm:$0x8] %vm234, %v233
    %s243 = scalar_lea.vmem [#allocation0], 120
    %v244 = vld [vmem:[%s243] sm:$0xf]
    %vm245 = vcmask 261120
    %s246 = scalar_lea.vmem %s1, 60
    %247 = vst.msk [vmem:[%s246] sm:$0x1] %vm245, %v244
    %s248 = scalar_lea.vmem %s1, 123
    %249 = vst.msk [vmem:[%s248] sm:$0x2] %vm245, %v244
    %s250 = scalar_lea.vmem %s1, 186
    %251 = vst.msk [vmem:[%s250] sm:$0x4] %vm245, %v244
    %s252 = scalar_lea.vmem %s1, 249
    %253 = vst.msk [vmem:[%s252] sm:$0x8] %vm245, %v244
    %v254 = vld [vmem:[#allocation0] ss:$8 sm:$0xf]
    %v255 = vld [vmem:[#allocation0] ss:$8 sm:$0xf0]
    %vm256 = vcmask 1047556
    %v257 = vsel %vm256, %v255, %v254
    %258 = vrot.lane.b32.xlu0 %v257, 96
    %v259 = vpop.permute.xlu0 %258
    %vm260 = vcmask 261120
    %s261 = scalar_lea.vmem %s1, 1
    %262 = vst.msk [vmem:[%s261] ss:$4 sm:$0xff] %vm260, %v259
    %s263 = scalar_lea.vmem [#allocation0], 1
    %v264 = vld [vmem:[%s263] ss:$8 sm:$0xf]
    %s265 = scalar_lea.vmem [#allocation0], 1
    %v266 = vld [vmem:[%s265] ss:$8 sm:$0xf0]
    %vm267 = vcmask 1047556
    %v268 = vsel %vm267, %v266, %v264
    %269 = vrot.lane.b32.xlu0 %v268, 96
    %v270 = vpop.permute.xlu0 %269
    %vm271 = vcmask 261120
    %s272 = scalar_lea.vmem %s1, 65
    %273 = vst.msk [vmem:[%s272] ss:$4 sm:$0xff] %vm271, %v270
    %s274 = scalar_lea.vmem [#allocation0], 2
    %v275 = vld [vmem:[%s274] ss:$8 sm:$0xf]
    %s276 = scalar_lea.vmem [#allocation0], 2
    %v277 = vld [vmem:[%s276] ss:$8 sm:$0xf0]
    %vm278 = vcmask 1047556
    %v279 = vsel %vm278, %v277, %v275
    %280 = vrot.lane.b32.xlu0 %v279, 96
    %v281 = vpop.permute.xlu0 %280
    %vm282 = vcmask 261120
    %s283 = scalar_lea.vmem %s1, 129
    %284 = vst.msk [vmem:[%s283] ss:$4 sm:$0xff] %vm282, %v281
    %s285 = scalar_lea.vmem [#allocation0], 3
    %v286 = vld [vmem:[%s285] ss:$8 sm:$0xf]
    %s287 = scalar_lea.vmem [#allocation0], 3
    %v288 = vld [vmem:[%s287] ss:$8 sm:$0xf0]
    %vm289 = vcmask 1047556
    %v290 = vsel %vm289, %v288, %v286
    %291 = vrot.lane.b32.xlu0 %v290, 96
    %v292 = vpop.permute.xlu0 %291
    %vm293 = vcmask 261120
    %s294 = scalar_lea.vmem %s1, 193
    %295 = vst.msk [vmem:[%s294] ss:$4 sm:$0xff] %vm293, %v292
    %s296 = scalar_lea.vmem [#allocation0], 64
    %v297 = vld [vmem:[%s296] ss:$8 sm:$0xf]
    %s298 = scalar_lea.vmem [#allocation0], 64
    %v299 = vld [vmem:[%s298] ss:$8 sm:$0xf0]
    %vm300 = vcmask 1047556
    %v301 = vsel %vm300, %v299, %v297
    %302 = vrot.lane.b32.xlu0 %v301, 96
    %v303 = vpop.permute.xlu0 %302
    %vm304 = vcmask 261120
    %s305 = scalar_lea.vmem %s1, 33
    %306 = vst.msk [vmem:[%s305] ss:$4 sm:$0xff] %vm304, %v303
    %s307 = scalar_lea.vmem [#allocation0], 65
    %v308 = vld [vmem:[%s307] ss:$8 sm:$0xf]
    %s309 = scalar_lea.vmem [#allocation0], 65
    %v310 = vld [vmem:[%s309] ss:$8 sm:$0xf0]
    %vm311 = vcmask 1047556
    %v312 = vsel %vm311, %v310, %v308
    %313 = vrot.lane.b32.xlu0 %v312, 96
    %v314 = vpop.permute.xlu0 %313
    %vm315 = vcmask 261120
    %s316 = scalar_lea.vmem %s1, 97
    %317 = vst.msk [vmem:[%s316] ss:$4 sm:$0xff] %vm315, %v314
    %s318 = scalar_lea.vmem [#allocation0], 66
    %v319 = vld [vmem:[%s318] ss:$8 sm:$0xf]
    %s320 = scalar_lea.vmem [#allocation0], 66
    %v321 = vld [vmem:[%s320] ss:$8 sm:$0xf0]
    %vm322 = vcmask 1047556
    %v323 = vsel %vm322, %v321, %v319
    %324 = vrot.lane.b32.xlu0 %v323, 96
    %v325 = vpop.permute.xlu0 %324
    %vm326 = vcmask 261120
    %s327 = scalar_lea.vmem %s1, 161
    %328 = vst.msk [vmem:[%s327] ss:$4 sm:$0xff] %vm326, %v325
    %s329 = scalar_lea.vmem [#allocation0], 67
    %v330 = vld [vmem:[%s329] ss:$8 sm:$0xf]
    %s331 = scalar_lea.vmem [#allocation0], 67
    %v332 = vld [vmem:[%s331] ss:$8 sm:$0xf0]
    %vm333 = vcmask 1047556
    %v334 = vsel %vm333, %v332, %v330
    %335 = vrot.lane.b32.xlu0 %v334, 96
    %v336 = vpop.permute.xlu0 %335
    %vm337 = vcmask 261120
    %s338 = scalar_lea.vmem %s1, 225
    %339 = vst.msk [vmem:[%s338] ss:$4 sm:$0xff] %vm337, %v336
    %v340 = vld [vmem:[#allocation0] ss:$8 sm:$0xf]
    %v341 = vld [vmem:[#allocation0] ss:$8 sm:$0xf0]
    %vm342 = vcmask 1047556
    %v343 = vsel %vm342, %v341, %v340
    %344 = vrot.lane.b32.xlu0 %v343, 64
    %v345 = vpop.permute.xlu0 %344
    %vm346 = vcmask 261120
    %s347 = scalar_lea.vmem %s1, 2
    %348 = vst.msk [vmem:[%s347] ss:$4 sm:$0xff] %vm346, %v345
    %s349 = scalar_lea.vmem [#allocation0], 1
    %v350 = vld [vmem:[%s349] ss:$8 sm:$0xf]
    %s351 = scalar_lea.vmem [#allocation0], 1
    %v352 = vld [vmem:[%s351] ss:$8 sm:$0xf0]
    %vm353 = vcmask 1047556
    %v354 = vsel %vm353, %v352, %v350
    %355 = vrot.lane.b32.xlu0 %v354, 64
    %v356 = vpop.permute.xlu0 %355
    %vm357 = vcmask 261120
    %s358 = scalar_lea.vmem %s1, 66
    %359 = vst.msk [vmem:[%s358] ss:$4 sm:$0xff] %vm357, %v356
    %s360 = scalar_lea.vmem [#allocation0], 2
    %v361 = vld [vmem:[%s360] ss:$8 sm:$0xf]
    %s362 = scalar_lea.vmem [#allocation0], 2
    %v363 = vld [vmem:[%s362] ss:$8 sm:$0xf0]
    %vm364 = vcmask 1047556
    %v365 = vsel %vm364, %v363, %v361
    %366 = vrot.lane.b32.xlu0 %v365, 64
    %v367 = vpop.permute.xlu0 %366
    %vm368 = vcmask 261120
    %s369 = scalar_lea.vmem %s1, 130
    %370 = vst.msk [vmem:[%s369] ss:$4 sm:$0xff] %vm368, %v367
    %s371 = scalar_lea.vmem [#allocation0], 3
    %v372 = vld [vmem:[%s371] ss:$8 sm:$0xf]
    %s373 = scalar_lea.vmem [#allocation0], 3
    %v374 = vld [vmem:[%s373] ss:$8 sm:$0xf0]
    %vm375 = vcmask 1047556
    %v376 = vsel %vm375, %v374, %v372
    %377 = vrot.lane.b32.xlu0 %v376, 64
    %v378 = vpop.permute.xlu0 %377
    %vm379 = vcmask 261120
    %s380 = scalar_lea.vmem %s1, 194
    %381 = vst.msk [vmem:[%s380] ss:$4 sm:$0xff] %vm379, %v378
    %s382 = scalar_lea.vmem [#allocation0], 64
    %v383 = vld [vmem:[%s382] ss:$8 sm:$0xf]
    %s384 = scalar_lea.vmem [#allocation0], 64
    %v385 = vld [vmem:[%s384] ss:$8 sm:$0xf0]
    %vm386 = vcmask 1047556
    %v387 = vsel %vm386, %v385, %v383
    %388 = vrot.lane.b32.xlu0 %v387, 64
    %v389 = vpop.permute.xlu0 %388
    %vm390 = vcmask 261120
    %s391 = scalar_lea.vmem %s1, 34
    %392 = vst.msk [vmem:[%s391] ss:$4 sm:$0xff] %vm390, %v389
    %s393 = scalar_lea.vmem [#allocation0], 65
    %v394 = vld [vmem:[%s393] ss:$8 sm:$0xf]
    %s395 = scalar_lea.vmem [#allocation0], 65
    %v396 = vld [vmem:[%s395] ss:$8 sm:$0xf0]
    %vm397 = vcmask 1047556
    %v398 = vsel %vm397, %v396, %v394
    %399 = vrot.lane.b32.xlu0 %v398, 64
    %v400 = vpop.permute.xlu0 %399
    %vm401 = vcmask 261120
    %s402 = scalar_lea.vmem %s1, 98
    %403 = vst.msk [vmem:[%s402] ss:$4 sm:$0xff] %vm401, %v400
    %s404 = scalar_lea.vmem [#allocation0], 66
    %v405 = vld [vmem:[%s404] ss:$8 sm:$0xf]
    %s406 = scalar_lea.vmem [#allocation0], 66
    %v407 = vld [vmem:[%s406] ss:$8 sm:$0xf0]
    %vm408 = vcmask 1047556
    %v409 = vsel %vm408, %v407, %v405
    %410 = vrot.lane.b32.xlu0 %v409, 64
    %v411 = vpop.permute.xlu0 %410
    %vm412 = vcmask 261120
    %s413 = scalar_lea.vmem %s1, 162
    %414 = vst.msk [vmem:[%s413] ss:$4 sm:$0xff] %vm412, %v411
    %s415 = scalar_lea.vmem [#allocation0], 67
    %v416 = vld [vmem:[%s415] ss:$8 sm:$0xf]
    %s417 = scalar_lea.vmem [#allocation0], 67
    %v418 = vld [vmem:[%s417] ss:$8 sm:$0xf0]
    %vm419 = vcmask 1047556
    %v420 = vsel %vm419, %v418, %v416
    %421 = vrot.lane.b32.xlu0 %v420, 64
    %v422 = vpop.permute.xlu0 %421
    %vm423 = vcmask 261120
    %s424 = scalar_lea.vmem %s1, 226
    %425 = vst.msk [vmem:[%s424] ss:$4 sm:$0xff] %vm423, %v422
    %v426 = vld [vmem:[#allocation0] ss:$8 sm:$0xf]
    %v427 = vld [vmem:[#allocation0] ss:$8 sm:$0xf0]
    %vm428 = vcmask 1047556
    %v429 = vsel %vm428, %v427, %v426
    %430 = vrot.lane.b32.xlu0 %v429, 32
    %v431 = vpop.permute.xlu0 %430
    %vm432 = vcmask 261120
    %s433 = scalar_lea.vmem %s1, 3
    %434 = vst.msk [vmem:[%s433] ss:$4 sm:$0xff] %vm432, %v431
    %s435 = scalar_lea.vmem [#allocation0], 1
    %v436 = vld [vmem:[%s435] ss:$8 sm:$0xf]
    %s437 = scalar_lea.vmem [#allocation0], 1
    %v438 = vld [vmem:[%s437] ss:$8 sm:$0xf0]
    %vm439 = vcmask 1047556
    %v440 = vsel %vm439, %v438, %v436
    %441 = vrot.lane.b32.xlu0 %v440, 32
    %v442 = vpop.permute.xlu0 %441
    %vm443 = vcmask 261120
    %s444 = scalar_lea.vmem %s1, 67
    %445 = vst.msk [vmem:[%s444] ss:$4 sm:$0xff] %vm443, %v442
    %s446 = scalar_lea.vmem [#allocation0], 2
    %v447 = vld [vmem:[%s446] ss:$8 sm:$0xf]
    %s448 = scalar_lea.vmem [#allocation0], 2
    %v449 = vld [vmem:[%s448] ss:$8 sm:$0xf0]
    %vm450 = vcmask 1047556
    %v451 = vsel %vm450, %v449, %v447
    %452 = vrot.lane.b32.xlu0 %v451, 32
    %v453 = vpop.permute.xlu0 %452
    %vm454 = vcmask 261120
    %s455 = scalar_lea.vmem %s1, 131
    %456 = vst.msk [vmem:[%s455] ss:$4 sm:$0xff] %vm454, %v453
    %s457 = scalar_lea.vmem [#allocation0], 3
    %v458 = vld [vmem:[%s457] ss:$8 sm:$0xf]
    %s459 = scalar_lea.vmem [#allocation0], 3
    %v460 = vld [vmem:[%s459] ss:$8 sm:$0xf0]
    %vm461 = vcmask 1047556
    %v462 = vsel %vm461, %v460, %v458
    %463 = vrot.lane.b32.xlu0 %v462, 32
    %v464 = vpop.permute.xlu0 %463
    %vm465 = vcmask 261120
    %s466 = scalar_lea.vmem %s1, 195
    %467 = vst.msk [vmem:[%s466] ss:$4 sm:$0xff] %vm465, %v464
    %s468 = scalar_lea.vmem [#allocation0], 64
    %v469 = vld [vmem:[%s468] ss:$8 sm:$0xf]
    %s470 = scalar_lea.vmem [#allocation0], 64
    %v471 = vld [vmem:[%s470] ss:$8 sm:$0xf0]
    %vm472 = vcmask 1047556
    %v473 = vsel %vm472, %v471, %v469
    %474 = vrot.lane.b32.xlu0 %v473, 32
    %v475 = vpop.permute.xlu0 %474
    %vm476 = vcmask 261120
    %s477 = scalar_lea.vmem %s1, 35
    %478 = vst.msk [vmem:[%s477] ss:$4 sm:$0xff] %vm476, %v475
    %s479 = scalar_lea.vmem [#allocation0], 65
    %v480 = vld [vmem:[%s479] ss:$8 sm:$0xf]
    %s481 = scalar_lea.vmem [#allocation0], 65
    %v482 = vld [vmem:[%s481] ss:$8 sm:$0xf0]
    %vm483 = vcmask 1047556
    %v484 = vsel %vm483, %v482, %v480
    %485 = vrot.lane.b32.xlu0 %v484, 32
    %v486 = vpop.permute.xlu0 %485
    %vm487 = vcmask 261120
    %s488 = scalar_lea.vmem %s1, 99
    %489 = vst.msk [vmem:[%s488] ss:$4 sm:$0xff] %vm487, %v486
    %s490 = scalar_lea.vmem [#allocation0], 66
    %v491 = vld [vmem:[%s490] ss:$8 sm:$0xf]
    %s492 = scalar_lea.vmem [#allocation0], 66
    %v493 = vld [vmem:[%s492] ss:$8 sm:$0xf0]
    %vm494 = vcmask 1047556
    %v495 = vsel %vm494, %v493, %v491
    %496 = vrot.lane.b32.xlu0 %v495, 32
    %v497 = vpop.permute.xlu0 %496
    %vm498 = vcmask 261120
    %s499 = scalar_lea.vmem %s1, 163
    %500 = vst.msk [vmem:[%s499] ss:$4 sm:$0xff] %vm498, %v497
    %s501 = scalar_lea.vmem [#allocation0], 67
    %v502 = vld [vmem:[%s501] ss:$8 sm:$0xf]
    %s503 = scalar_lea.vmem [#allocation0], 67
    %v504 = vld [vmem:[%s503] ss:$8 sm:$0xf0]
    %vm505 = vcmask 1047556
    %v506 = vsel %vm505, %v504, %v502
    %507 = vrot.lane.b32.xlu0 %v506, 32
    %v508 = vpop.permute.xlu0 %507
    %vm509 = vcmask 261120
    %s510 = scalar_lea.vmem %s1, 227
    %511 = vst.msk [vmem:[%s510] ss:$4 sm:$0xff] %vm509, %v508

</llo_original>
